<compile_context>
chip_gen: v7x
topology: tpu7x:2x2x1
jax: 0.10.0
libtpu: 0.0.40
codegen_flags: <defaults>
</compile_context>

<pallas_src>
import functools

import jax
import jax.numpy as jnp
from jax.experimental import pallas as pl
from jax.experimental.pallas import tpu as pltpu


# --------------------------- in-kernel building blocks ------------------------------
def _conv3x3_im2col(slab_ref, col_ref, w_ref, hs, ws, c):
    """3x3 / pad-1 / stride-1 conv of the zero-padded slab, as ONE wide matmul.

    slab_ref: (hs+2, ws+2, c) bf16 VMEM scratch (zero border, data in interior)
    col_ref : (hs*ws, 9*c)    bf16 VMEM scratch (im2col operand, K = 9*c)
    w_ref   : (9*c, cout)     bf16 weights, rows ordered (kh, kw, cin)
    returns : (hs*ws, cout)   f32
    """
    m = hs * ws
    for kh in range(3):
        for kw in range(3):
            t = kh * 3 + kw
            tap = slab_ref[kh:kh + hs, kw:kw + ws, :]          # (hs, ws, c)
            col_ref[:, t * c:(t + 1) * c] = tap.reshape(m, c)
    # single K = 9*c matmul instead of 9 skinny K=c dots
    return jnp.dot(col_ref[...], w_ref[...], preferred_element_type=jnp.float32)


def _make_row_select(m2, m1, wo, wi, stride):
    """(m2, m1) one-hot matrix selecting strided output pixels from the full grid."""
    r2 = jax.lax.broadcasted_iota(jnp.int32, (m2, m1), 0)
    r1 = jax.lax.broadcasted_iota(jnp.int32, (m2, m1), 1)
    tgt = (r2 // wo) * (stride * wi) + (r2 % wo) * stride
    return jnp.where(r1 == tgt, 1, 0).astype(jnp.bfloat16)


# ------------------------------ fused residual kernel -------------------------------
def _residual_kernel(*args, H, W, Cin, C1, stride, use_proj):
    if use_proj:
        (x_ref, w1_ref, s1_ref, b1_ref, w2_ref, s2_ref, b2_ref,
         w3_ref, b3_ref, o_ref, slab1, col1, slab2, col2) = args
    else:
        (x_ref, w1_ref, s1_ref, b1_ref, w2_ref, s2_ref, b2_ref,
         o_ref, slab1, col1, slab2, col2) = args
        w3_ref = b3_ref = None

    H1 = (H - 1) // stride + 1
    W1 = (W - 1) // stride + 1
    M1 = H * W
    M2 = H1 * W1

    x = x_ref[0]                                                  # (H, W, Cin) bf16

    # ---- conv1 + BN1 + ReLU (computed at stride 1, subsampled below) ----
    slab1[...] = jnp.zeros(slab1.shape, slab1.dtype)
    slab1[1:1 + H, 1:1 + W, :] = x
    y1 = _conv3x3_im2col(slab1, col1, w1_ref, H, W, Cin)          # (M1, C1) f32
    y1 = jnp.maximum(y1 * s1_ref[...] + b1_ref[...], 0.0)
    y1 = y1.astype(jnp.bfloat16)

    # ---- stride subsample, fully in VMEM (exact one-hot selection matmul) ----
    sel = None
    if stride == 1:
        y1s = y1                                                  # (M2, C1)
    else:
        sel = _make_row_select(M2, M1, W1, W, stride)             # (M2, M1) bf16
        y1s = jnp.dot(sel, y1,
                      preferred_element_type=jnp.float32).astype(jnp.bfloat16)

    # ---- conv2 + BN2 ----
    slab2[...] = jnp.zeros(slab2.shape, slab2.dtype)
    slab2[1:1 + H1, 1:1 + W1, :] = y1s.reshape(H1, W1, C1)
    y2 = _conv3x3_im2col(slab2, col2, w2_ref, H1, W1, C1)         # (M2, C1) f32
    y2 = y2 * s2_ref[...] + b2_ref[...]

    # ---- skip branch ----
    if use_proj:
        x2d = x.reshape(M1, Cin)
        if stride == 1:
            xs = x2d
        else:
            xs = jnp.dot(sel, x2d,
                         preferred_element_type=jnp.float32).astype(jnp.bfloat16)
        skip = jnp.dot(xs, w3_ref[...],
                       preferred_element_type=jnp.float32) + b3_ref[...]
    else:
        skip = x.reshape(M2, Cin).astype(jnp.float32)             # identity skip

    # ---- residual add + final ReLU ----
    o_ref[0] = jnp.maximum(y2 + skip, 0.0)


# ----------------------------------- module forward ---------------------------------
def _fold_bn(bn, conv_bias, eps=1e-5):
    gamma, beta, mean, var = bn
    scale = gamma / jnp.sqrt(var + eps)
    bias = beta + scale * (conv_bias - mean)
    return scale, bias


def _w3x3_to_mat(w_torch):
    """PyTorch Conv2d weight (Cout, Cin, 3, 3) -> (9*Cin, Cout), rows = (kh, kw, cin)."""
    cout, cin = w_torch.shape[0], w_torch.shape[1]
    return jnp.transpose(w_torch, (2, 3, 1, 0)).reshape(9 * cin, cout)


def residual_forward(params, x_nchw, *, use_1x1conv=False, strides=1):
    B, Cin, H, W = x_nchw.shape
    C1 = params["conv1_w"].shape[0]
    H1 = (H - 1) // strides + 1
    W1 = (W - 1) // strides + 1
    M2 = H1 * W1

    if not use_1x1conv:
        assert strides == 1 and Cin == C1, "identity skip needs Cin==Cout and stride 1"

    # single wrapper op: NCHW -> NHWC + bf16 cast (MXU-native operand dtype)
    x = jnp.transpose(x_nchw, (0, 2, 3, 1)).astype(jnp.bfloat16)

    s1, b1 = _fold_bn(params["bn1"], params["conv1_b"])
    s2, b2 = _fold_bn(params["bn2"], params["conv2_b"])
    w1 = _w3x3_to_mat(params["conv1_w"]).astype(jnp.bfloat16)
    w2 = _w3x3_to_mat(params["conv2_w"]).astype(jnp.bfloat16)

    inputs = [x, w1, s1.reshape(1, C1), b1.reshape(1, C1),
              w2, s2.reshape(1, C1), b2.reshape(1, C1)]
    in_specs = [
        pl.BlockSpec((1, H, W, Cin), lambda b: (b, 0, 0, 0)),
        pl.BlockSpec((9 * Cin, C1), lambda b: (0, 0)),
        pl.BlockSpec((1, C1), lambda b: (0, 0)),
        pl.BlockSpec((1, C1), lambda b: (0, 0)),
        pl.BlockSpec((9 * C1, C1), lambda b: (0, 0)),
        pl.BlockSpec((1, C1), lambda b: (0, 0)),
        pl.BlockSpec((1, C1), lambda b: (0, 0)),
    ]
    if use_1x1conv:
        w3 = params["conv3_w"].reshape(C1, Cin).T.astype(jnp.bfloat16)    # (Cin, C1)
        inputs += [w3, params["conv3_b"].reshape(1, C1)]
        in_specs += [pl.BlockSpec((Cin, C1), lambda b: (0, 0)),
                     pl.BlockSpec((1, C1), lambda b: (0, 0))]

    scratch = [
        pltpu.VMEM((H + 2, W + 2, Cin), jnp.bfloat16),     # padded x slab
        pltpu.VMEM((H * W, 9 * Cin), jnp.bfloat16),        # conv1 im2col (K = 9*Cin)
        pltpu.VMEM((H1 + 2, W1 + 2, C1), jnp.bfloat16),    # padded y1 slab
        pltpu.VMEM((M2, 9 * C1), jnp.bfloat16),            # conv2 im2col (K = 9*C1)
    ]

    out = pl.pallas_call(
        functools.partial(_residual_kernel, H=H, W=W, Cin=Cin, C1=C1,
                          stride=strides, use_proj=use_1x1conv),
        out_shape=jax.ShapeDtypeStruct((B, M2, C1), jnp.float32),
        grid=(B,),
        in_specs=in_specs,
        out_specs=pl.BlockSpec((1, M2, C1), lambda b: (b, 0, 0)),
        scratch_shapes=scratch,
        compiler_params=pltpu.CompilerParams(dimension_semantics=("parallel",)),
    )(*inputs)

    return jnp.transpose(out.reshape(B, H1, W1, C1), (0, 3, 1, 2))        # back to NCHW


# ---------------------------------- pure-JAX reference -------------------------------
def _bn_eval(z, gamma, beta, mean, var, eps=1e-5):
    return (z - mean) / jnp.sqrt(var + eps) * gamma + beta


def residual_ref(params, x_nchw, *, use_1x1conv=False, strides=1):
    x = jnp.transpose(x_nchw, (0, 2, 3, 1)).astype(jnp.float32)

    def conv(inp, w_torch, b, stride, pad):
        w = jnp.transpose(w_torch, (2, 3, 1, 0))                          # HWIO
        y = jax.lax.conv_general_dilated(
            inp, w, (stride, stride), pad,
            dimension_numbers=("NHWC", "HWIO", "NHWC"))
        return y + b

    y = jax.nn.relu(_bn_eval(conv(x, params["conv1_w"], params["conv1_b"],
                                  strides, ((1, 1), (1, 1))), *params["bn1"]))
    y = _bn_eval(conv(y, params["conv2_w"], params["conv2_b"], 1, ((1, 1), (1, 1))),
                 *params["bn2"])
    if use_1x1conv:
        skip = conv(x, params["conv3_w"], params["conv3_b"], strides, ((0, 0), (0, 0)))
    else:
        skip = x
    return jnp.transpose(jax.nn.relu(y + skip), (0, 3, 1, 2))


# ------------------------------------- params ---------------------------------------
def init_params(key, in_channels, num_channels, use_1x1conv):
    ks = iter(jax.random.split(key, 16))

    def conv_w(co, ci, kk):
        s = 1.0 / float(ci * kk * kk) ** 0.5
        return s * jax.random.normal(next(ks), (co, ci, kk, kk), jnp.float32)

    def vec(c, s):
        return s * jax.random.normal(next(ks), (c,), jnp.float32)

    def bn(c):
        gamma = 1.0 + 0.1 * jax.random.normal(next(ks), (c,), jnp.float32)
        beta = 0.1 * jax.random.normal(next(ks), (c,), jnp.float32)
        mean = 0.1 * jax.random.normal(next(ks), (c,), jnp.float32)
        var = jax.random.uniform(next(ks), (c,), jnp.float32, 0.5, 1.5)
        return (gamma, beta, mean, var)

    p = {
        "conv1_w": conv_w(num_channels, in_channels, 3),
        "conv1_b": vec(num_channels, 0.1),
        "conv2_w": conv_w(num_channels, num_channels, 3),
        "conv2_b": vec(num_channels, 0.1),
        "bn1": bn(num_channels),
        "bn2": bn(num_channels),
    }
    if use_1x1conv:
        p["conv3_w"] = conv_w(num_channels, in_channels, 1)
        p["conv3_b"] = vec(num_channels, 0.1)
    return p


# --------------------------------------- main ---------------------------------------
if __name__ == "__main__":
    root = jax.random.PRNGKey(0)
    kp1, kp2, kx1, kx2 = jax.random.split(root, 4)

    B, C_IN, H, W = 2, 32, 16, 16
    fwd = jax.jit(residual_forward, static_argnames=("use_1x1conv", "strides"))

    # tolerances: bf16 MXU operands vs. f32 XLA-conv reference
    MAX_TOL, MEAN_TOL = 8e-2, 1e-2

    # Case 1: Residual(32, 32) with PyTorch defaults (identity skip, stride 1).
    p1 = init_params(kp1, C_IN, C_IN, use_1x1conv=False)
    x1 = jax.random.normal(kx1, (B, C_IN, H, W), jnp.float32)
    out1 = jax.block_until_ready(fwd(p1, x1, use_1x1conv=False, strides=1))
    ref1 = jax.block_until_ready(residual_ref(p1, x1, use_1x1conv=False, strides=1))
    assert out1.shape == (B, C_IN, H, W)
    d1 = jnp.abs(out1 - ref1)
    assert float(jnp.max(d1)) < MAX_TOL, f"case1 max abs err {float(jnp.max(d1))}"
    assert float(jnp.mean(d1)) < MEAN_TOL, f"case1 mean abs err {float(jnp.mean(d1))}"

    # Case 2: Residual(32, 64, use_1x1conv=True, strides=2) (projection skip, downsample).
    C_OUT = 64
    p2 = init_params(kp2, C_IN, C_OUT, use_1x1conv=True)
    x2 = jax.random.normal(kx2, (B, C_IN, H, W), jnp.float32)
    out2 = jax.block_until_ready(fwd(p2, x2, use_1x1conv=True, strides=2))
    ref2 = jax.block_until_ready(residual_ref(p2, x2, use_1x1conv=True, strides=2))
    assert out2.shape == (B, C_OUT, H // 2, W // 2)
    d2 = jnp.abs(out2 - ref2)
    assert float(jnp.max(d2)) < MAX_TOL, f"case2 max abs err {float(jnp.max(d2))}"
    assert float(jnp.mean(d2)) < MEAN_TOL, f"case2 mean abs err {float(jnp.mean(d2))}"

    assert bool(jnp.all(jnp.isfinite(out1))) and bool(jnp.all(jnp.isfinite(out2)))
    print("KERNEL_OK")
</pallas_src>

<mosaic_0001>
module attributes {stable_mosaic.version = 11 : i64} {
  func.func @_residual_kernel(%arg0: i32, %arg1: memref<1x16x16x32xbf16, #tpu.memory_space<vmem>>, %arg2: memref<288x32xbf16, #tpu.memory_space<vmem>>, %arg3: memref<1x32xf32, #tpu.memory_space<vmem>>, %arg4: memref<1x32xf32, #tpu.memory_space<vmem>>, %arg5: memref<288x32xbf16, #tpu.memory_space<vmem>>, %arg6: memref<1x32xf32, #tpu.memory_space<vmem>>, %arg7: memref<1x32xf32, #tpu.memory_space<vmem>>, %arg8: memref<1x256x32xf32, #tpu.memory_space<vmem>>, %arg9: memref<18x18x32xbf16, #tpu.memory_space<vmem>>, %arg10: memref<256x288xbf16, #tpu.memory_space<vmem>>, %arg11: memref<18x18x32xbf16, #tpu.memory_space<vmem>>, %arg12: memref<256x288xbf16, #tpu.memory_space<vmem>>) attributes {dimension_semantics = [#tpu.dimension_semantics<parallel>], iteration_bounds = array<i64: 2>, scalar_prefetch = 0 : i64, scratch_operands = 4 : i64, tpu.core_type = #tpu.core_type<tc>, window_params = [{transform_indices = @transform_0, window_bounds = array<i64: 1, 16, 16, 32>}, {pipeline_mode = #tpu.pipeline_mode<synchronous>, transform_indices = @transform_1, window_bounds = array<i64: 288, 32>}, {pipeline_mode = #tpu.pipeline_mode<synchronous>, transform_indices = @transform_2, window_bounds = array<i64: 1, 32>}, {pipeline_mode = #tpu.pipeline_mode<synchronous>, transform_indices = @transform_3, window_bounds = array<i64: 1, 32>}, {pipeline_mode = #tpu.pipeline_mode<synchronous>, transform_indices = @transform_4, window_bounds = array<i64: 288, 32>}, {pipeline_mode = #tpu.pipeline_mode<synchronous>, transform_indices = @transform_5, window_bounds = array<i64: 1, 32>}, {pipeline_mode = #tpu.pipeline_mode<synchronous>, transform_indices = @transform_6, window_bounds = array<i64: 1, 32>}, {transform_indices = @transform_7, window_bounds = array<i64: 1, 256, 32>}]} {
    %c0 = arith.constant 0 : index
    %c0_0 = arith.constant 0 : index
    %c0_1 = arith.constant 0 : index
    %c0_2 = arith.constant 0 : index
    %0 = vector.load %arg1[%c0, %c0_0, %c0_1, %c0_2] : memref<1x16x16x32xbf16, #tpu.memory_space<vmem>>, vector<1x16x16x32xbf16>
    %1 = vector.shape_cast %0 : vector<1x16x16x32xbf16> to vector<16x16x32xbf16>
    %cst = arith.constant 0.000000e+00 : bf16
    %2 = vector.broadcast %cst : bf16 to vector<18x18x32xbf16>
    %c0_3 = arith.constant 0 : index
    %c0_4 = arith.constant 0 : index
    %c0_5 = arith.constant 0 : index
    %3 = vector.load %arg9[%c0_3, %c0_4, %c0_5] : memref<18x18x32xbf16, #tpu.memory_space<vmem>>, vector<18x18x32xbf16>
    tpu.vector_store %arg9[%c0_3, %c0_4, %c0_5], %2 {strides = array<i32>} : memref<18x18x32xbf16, #tpu.memory_space<vmem>>, vector<18x18x32xbf16>,
    %c1 = arith.constant 1 : index
    %c1_6 = arith.constant 1 : index
    %c0_7 = arith.constant 0 : index
    %4 = vector.load %arg9[%c1, %c1_6, %c0_7] : memref<18x18x32xbf16, #tpu.memory_space<vmem>>, vector<16x16x32xbf16>
    tpu.vector_store %arg9[%c1, %c1_6, %c0_7], %1 {strides = array<i32>} : memref<18x18x32xbf16, #tpu.memory_space<vmem>>, vector<16x16x32xbf16>,
    %c0_8 = arith.constant 0 : index
    %c0_9 = arith.constant 0 : index
    %c0_10 = arith.constant 0 : index
    %5 = vector.load %arg9[%c0_8, %c0_9, %c0_10] : memref<18x18x32xbf16, #tpu.memory_space<vmem>>, vector<16x16x32xbf16>
    %6 = vector.shape_cast %5 : vector<16x16x32xbf16> to vector<256x32xbf16>
    %c0_11 = arith.constant 0 : index
    %c0_12 = arith.constant 0 : index
    %7 = vector.load %arg10[%c0_11, %c0_12] : memref<256x288xbf16, #tpu.memory_space<vmem>>, vector<256x32xbf16>
    tpu.vector_store %arg10[%c0_11, %c0_12], %6 {strides = array<i32>} : memref<256x288xbf16, #tpu.memory_space<vmem>>, vector<256x32xbf16>,
    %c0_13 = arith.constant 0 : index
    %c1_14 = arith.constant 1 : index
    %c0_15 = arith.constant 0 : index
    %8 = vector.load %arg9[%c0_13, %c1_14, %c0_15] : memref<18x18x32xbf16, #tpu.memory_space<vmem>>, vector<16x16x32xbf16>
    %9 = vector.shape_cast %8 : vector<16x16x32xbf16> to vector<256x32xbf16>
    %c0_16 = arith.constant 0 : index
    %c32 = arith.constant 32 : index
    %10 = vector.load %arg10[%c0_16, %c32] : memref<256x288xbf16, #tpu.memory_space<vmem>>, vector<256x32xbf16>
    tpu.vector_store %arg10[%c0_16, %c32], %9 {strides = array<i32>} : memref<256x288xbf16, #tpu.memory_space<vmem>>, vector<256x32xbf16>,
    %c0_17 = arith.constant 0 : index
    %c2 = arith.constant 2 : index
    %c0_18 = arith.constant 0 : index
    %11 = vector.load %arg9[%c0_17, %c2, %c0_18] : memref<18x18x32xbf16, #tpu.memory_space<vmem>>, vector<16x16x32xbf16>
    %12 = vector.shape_cast %11 : vector<16x16x32xbf16> to vector<256x32xbf16>
    %c0_19 = arith.constant 0 : index
    %c64 = arith.constant 64 : index
    %13 = vector.load %arg10[%c0_19, %c64] : memref<256x288xbf16, #tpu.memory_space<vmem>>, vector<256x32xbf16>
    tpu.vector_store %arg10[%c0_19, %c64], %12 {strides = array<i32>} : memref<256x288xbf16, #tpu.memory_space<vmem>>, vector<256x32xbf16>,
    %c1_20 = arith.constant 1 : index
    %c0_21 = arith.constant 0 : index
    %c0_22 = arith.constant 0 : index
    %14 = vector.load %arg9[%c1_20, %c0_21, %c0_22] : memref<18x18x32xbf16, #tpu.memory_space<vmem>>, vector<16x16x32xbf16>
    %15 = vector.shape_cast %14 : vector<16x16x32xbf16> to vector<256x32xbf16>
    %c0_23 = arith.constant 0 : index
    %c96 = arith.constant 96 : index
    %16 = vector.load %arg10[%c0_23, %c96] : memref<256x288xbf16, #tpu.memory_space<vmem>>, vector<256x32xbf16>
    tpu.vector_store %arg10[%c0_23, %c96], %15 {strides = array<i32>} : memref<256x288xbf16, #tpu.memory_space<vmem>>, vector<256x32xbf16>,
    %c1_24 = arith.constant 1 : index
    %c1_25 = arith.constant 1 : index
    %c0_26 = arith.constant 0 : index
    %17 = vector.load %arg9[%c1_24, %c1_25, %c0_26] : memref<18x18x32xbf16, #tpu.memory_space<vmem>>, vector<16x16x32xbf16>
    %18 = vector.shape_cast %17 : vector<16x16x32xbf16> to vector<256x32xbf16>
    %c0_27 = arith.constant 0 : index
    %c128 = arith.constant 128 : index
    %19 = vector.load %arg10[%c0_27, %c128] : memref<256x288xbf16, #tpu.memory_space<vmem>>, vector<256x32xbf16>
    tpu.vector_store %arg10[%c0_27, %c128], %18 {strides = array<i32>} : memref<256x288xbf16, #tpu.memory_space<vmem>>, vector<256x32xbf16>,
    %c1_28 = arith.constant 1 : index
    %c2_29 = arith.constant 2 : index
    %c0_30 = arith.constant 0 : index
    %20 = vector.load %arg9[%c1_28, %c2_29, %c0_30] : memref<18x18x32xbf16, #tpu.memory_space<vmem>>, vector<16x16x32xbf16>
    %21 = vector.shape_cast %20 : vector<16x16x32xbf16> to vector<256x32xbf16>
    %c0_31 = arith.constant 0 : index
    %c160 = arith.constant 160 : index
    %22 = vector.load %arg10[%c0_31, %c160] : memref<256x288xbf16, #tpu.memory_space<vmem>>, vector<256x32xbf16>
    tpu.vector_store %arg10[%c0_31, %c160], %21 {strides = array<i32>} : memref<256x288xbf16, #tpu.memory_space<vmem>>, vector<256x32xbf16>,
    %c2_32 = arith.constant 2 : index
    %c0_33 = arith.constant 0 : index
    %c0_34 = arith.constant 0 : index
    %23 = vector.load %arg9[%c2_32, %c0_33, %c0_34] : memref<18x18x32xbf16, #tpu.memory_space<vmem>>, vector<16x16x32xbf16>
    %24 = vector.shape_cast %23 : vector<16x16x32xbf16> to vector<256x32xbf16>
    %c0_35 = arith.constant 0 : index
    %c192 = arith.constant 192 : index
    %25 = vector.load %arg10[%c0_35, %c192] : memref<256x288xbf16, #tpu.memory_space<vmem>>, vector<256x32xbf16>
    tpu.vector_store %arg10[%c0_35, %c192], %24 {strides = array<i32>} : memref<256x288xbf16, #tpu.memory_space<vmem>>, vector<256x32xbf16>,
    %c2_36 = arith.constant 2 : index
    %c1_37 = arith.constant 1 : index
    %c0_38 = arith.constant 0 : index
    %26 = vector.load %arg9[%c2_36, %c1_37, %c0_38] : memref<18x18x32xbf16, #tpu.memory_space<vmem>>, vector<16x16x32xbf16>
    %27 = vector.shape_cast %26 : vector<16x16x32xbf16> to vector<256x32xbf16>
    %c0_39 = arith.constant 0 : index
    %c224 = arith.constant 224 : index
    %28 = vector.load %arg10[%c0_39, %c224] : memref<256x288xbf16, #tpu.memory_space<vmem>>, vector<256x32xbf16>
    tpu.vector_store %arg10[%c0_39, %c224], %27 {strides = array<i32>} : memref<256x288xbf16, #tpu.memory_space<vmem>>, vector<256x32xbf16>,
    %c2_40 = arith.constant 2 : index
    %c2_41 = arith.constant 2 : index
    %c0_42 = arith.constant 0 : index
    %29 = vector.load %arg9[%c2_40, %c2_41, %c0_42] : memref<18x18x32xbf16, #tpu.memory_space<vmem>>, vector<16x16x32xbf16>
    %30 = vector.shape_cast %29 : vector<16x16x32xbf16> to vector<256x32xbf16>
    %c0_43 = arith.constant 0 : index
    %c256 = arith.constant 256 : index
    %31 = vector.load %arg10[%c0_43, %c256] : memref<256x288xbf16, #tpu.memory_space<vmem>>, vector<256x32xbf16>
    tpu.vector_store %arg10[%c0_43, %c256], %30 {strides = array<i32>} : memref<256x288xbf16, #tpu.memory_space<vmem>>, vector<256x32xbf16>,
    %c0_44 = arith.constant 0 : index
    %c0_45 = arith.constant 0 : index
    %32 = vector.load %arg10[%c0_44, %c0_45] : memref<256x288xbf16, #tpu.memory_space<vmem>>, vector<256x288xbf16>
    %c0_46 = arith.constant 0 : index
    %c0_47 = arith.constant 0 : index
    %33 = vector.load %arg2[%c0_46, %c0_47] : memref<288x32xbf16, #tpu.memory_space<vmem>>, vector<288x32xbf16>
    %cst_48 = arith.constant dense<0.000000e+00> : vector<256x32xf32>
    %34 = tpu.matmul %32, %33, %cst_48 {dimension_numbers = #tpu.dot_dimension_numbers<[1], [0], [0], [1], [0, 0, 1, 1], [], []>} : vector<256x288xbf16>, vector<288x32xbf16>, vector<256x32xf32> -> vector<256x32xf32>
    %c0_49 = arith.constant 0 : index
    %c0_50 = arith.constant 0 : index
    %35 = vector.load %arg3[%c0_49, %c0_50] : memref<1x32xf32, #tpu.memory_space<vmem>>, vector<1x32xf32>
    %36 = vector.broadcast %35 : vector<1x32xf32> to vector<256x32xf32>
    %37 = arith.mulf %34, %36 : vector<256x32xf32>
    %c0_51 = arith.constant 0 : index
    %c0_52 = arith.constant 0 : index
    %38 = vector.load %arg4[%c0_51, %c0_52] : memref<1x32xf32, #tpu.memory_space<vmem>>, vector<1x32xf32>
    %39 = vector.broadcast %38 : vector<1x32xf32> to vector<256x32xf32>
    %40 = arith.addf %37, %39 : vector<256x32xf32>
    %cst_53 = arith.constant 0.000000e+00 : f32
    %41 = vector.broadcast %cst_53 : f32 to vector<256x32xf32>
    %42 = arith.maximumf %40, %41 : vector<256x32xf32>
    %43 = arith.truncf %42 : vector<256x32xf32> to vector<256x32xbf16>
    %cst_54 = arith.constant 0.000000e+00 : bf16
    %44 = vector.broadcast %cst_54 : bf16 to vector<18x18x32xbf16>
    %c0_55 = arith.constant 0 : index
    %c0_56 = arith.constant 0 : index
    %c0_57 = arith.constant 0 : index
    %45 = vector.load %arg11[%c0_55, %c0_56, %c0_57] : memref<18x18x32xbf16, #tpu.memory_space<vmem>>, vector<18x18x32xbf16>
    tpu.vector_store %arg11[%c0_55, %c0_56, %c0_57], %44 {strides = array<i32>} : memref<18x18x32xbf16, #tpu.memory_space<vmem>>, vector<18x18x32xbf16>,
    %46 = vector.shape_cast %43 : vector<256x32xbf16> to vector<16x16x32xbf16>
    %c1_58 = arith.constant 1 : index
    %c1_59 = arith.constant 1 : index
    %c0_60 = arith.constant 0 : index
    %47 = vector.load %arg11[%c1_58, %c1_59, %c0_60] : memref<18x18x32xbf16, #tpu.memory_space<vmem>>, vector<16x16x32xbf16>
    tpu.vector_store %arg11[%c1_58, %c1_59, %c0_60], %46 {strides = array<i32>} : memref<18x18x32xbf16, #tpu.memory_space<vmem>>, vector<16x16x32xbf16>,
    %c0_61 = arith.constant 0 : index
    %c0_62 = arith.constant 0 : index
    %c0_63 = arith.constant 0 : index
    %48 = vector.load %arg11[%c0_61, %c0_62, %c0_63] : memref<18x18x32xbf16, #tpu.memory_space<vmem>>, vector<16x16x32xbf16>
    %49 = vector.shape_cast %48 : vector<16x16x32xbf16> to vector<256x32xbf16>
    %c0_64 = arith.constant 0 : index
    %c0_65 = arith.constant 0 : index
    %50 = vector.load %arg12[%c0_64, %c0_65] : memref<256x288xbf16, #tpu.memory_space<vmem>>, vector<256x32xbf16>
    tpu.vector_store %arg12[%c0_64, %c0_65], %49 {strides = array<i32>} : memref<256x288xbf16, #tpu.memory_space<vmem>>, vector<256x32xbf16>,
    %c0_66 = arith.constant 0 : index
    %c1_67 = arith.constant 1 : index
    %c0_68 = arith.constant 0 : index
    %51 = vector.load %arg11[%c0_66, %c1_67, %c0_68] : memref<18x18x32xbf16, #tpu.memory_space<vmem>>, vector<16x16x32xbf16>
    %52 = vector.shape_cast %51 : vector<16x16x32xbf16> to vector<256x32xbf16>
    %c0_69 = arith.constant 0 : index
    %c32_70 = arith.constant 32 : index
    %53 = vector.load %arg12[%c0_69, %c32_70] : memref<256x288xbf16, #tpu.memory_space<vmem>>, vector<256x32xbf16>
    tpu.vector_store %arg12[%c0_69, %c32_70], %52 {strides = array<i32>} : memref<256x288xbf16, #tpu.memory_space<vmem>>, vector<256x32xbf16>,
    %c0_71 = arith.constant 0 : index
    %c2_72 = arith.constant 2 : index
    %c0_73 = arith.constant 0 : index
    %54 = vector.load %arg11[%c0_71, %c2_72, %c0_73] : memref<18x18x32xbf16, #tpu.memory_space<vmem>>, vector<16x16x32xbf16>
    %55 = vector.shape_cast %54 : vector<16x16x32xbf16> to vector<256x32xbf16>
    %c0_74 = arith.constant 0 : index
    %c64_75 = arith.constant 64 : index
    %56 = vector.load %arg12[%c0_74, %c64_75] : memref<256x288xbf16, #tpu.memory_space<vmem>>, vector<256x32xbf16>
    tpu.vector_store %arg12[%c0_74, %c64_75], %55 {strides = array<i32>} : memref<256x288xbf16, #tpu.memory_space<vmem>>, vector<256x32xbf16>,
    %c1_76 = arith.constant 1 : index
    %c0_77 = arith.constant 0 : index
    %c0_78 = arith.constant 0 : index
    %57 = vector.load %arg11[%c1_76, %c0_77, %c0_78] : memref<18x18x32xbf16, #tpu.memory_space<vmem>>, vector<16x16x32xbf16>
    %58 = vector.shape_cast %57 : vector<16x16x32xbf16> to vector<256x32xbf16>
    %c0_79 = arith.constant 0 : index
    %c96_80 = arith.constant 96 : index
    %59 = vector.load %arg12[%c0_79, %c96_80] : memref<256x288xbf16, #tpu.memory_space<vmem>>, vector<256x32xbf16>
    tpu.vector_store %arg12[%c0_79, %c96_80], %58 {strides = array<i32>} : memref<256x288xbf16, #tpu.memory_space<vmem>>, vector<256x32xbf16>,
    %c1_81 = arith.constant 1 : index
    %c1_82 = arith.constant 1 : index
    %c0_83 = arith.constant 0 : index
    %60 = vector.load %arg11[%c1_81, %c1_82, %c0_83] : memref<18x18x32xbf16, #tpu.memory_space<vmem>>, vector<16x16x32xbf16>
    %61 = vector.shape_cast %60 : vector<16x16x32xbf16> to vector<256x32xbf16>
    %c0_84 = arith.constant 0 : index
    %c128_85 = arith.constant 128 : index
    %62 = vector.load %arg12[%c0_84, %c128_85] : memref<256x288xbf16, #tpu.memory_space<vmem>>, vector<256x32xbf16>
    tpu.vector_store %arg12[%c0_84, %c128_85], %61 {strides = array<i32>} : memref<256x288xbf16, #tpu.memory_space<vmem>>, vector<256x32xbf16>,
    %c1_86 = arith.constant 1 : index
    %c2_87 = arith.constant 2 : index
    %c0_88 = arith.constant 0 : index
    %63 = vector.load %arg11[%c1_86, %c2_87, %c0_88] : memref<18x18x32xbf16, #tpu.memory_space<vmem>>, vector<16x16x32xbf16>
    %64 = vector.shape_cast %63 : vector<16x16x32xbf16> to vector<256x32xbf16>
    %c0_89 = arith.constant 0 : index
    %c160_90 = arith.constant 160 : index
    %65 = vector.load %arg12[%c0_89, %c160_90] : memref<256x288xbf16, #tpu.memory_space<vmem>>, vector<256x32xbf16>
    tpu.vector_store %arg12[%c0_89, %c160_90], %64 {strides = array<i32>} : memref<256x288xbf16, #tpu.memory_space<vmem>>, vector<256x32xbf16>,
    %c2_91 = arith.constant 2 : index
    %c0_92 = arith.constant 0 : index
    %c0_93 = arith.constant 0 : index
    %66 = vector.load %arg11[%c2_91, %c0_92, %c0_93] : memref<18x18x32xbf16, #tpu.memory_space<vmem>>, vector<16x16x32xbf16>
    %67 = vector.shape_cast %66 : vector<16x16x32xbf16> to vector<256x32xbf16>
    %c0_94 = arith.constant 0 : index
    %c192_95 = arith.constant 192 : index
    %68 = vector.load %arg12[%c0_94, %c192_95] : memref<256x288xbf16, #tpu.memory_space<vmem>>, vector<256x32xbf16>
    tpu.vector_store %arg12[%c0_94, %c192_95], %67 {strides = array<i32>} : memref<256x288xbf16, #tpu.memory_space<vmem>>, vector<256x32xbf16>,
    %c2_96 = arith.constant 2 : index
    %c1_97 = arith.constant 1 : index
    %c0_98 = arith.constant 0 : index
    %69 = vector.load %arg11[%c2_96, %c1_97, %c0_98] : memref<18x18x32xbf16, #tpu.memory_space<vmem>>, vector<16x16x32xbf16>
    %70 = vector.shape_cast %69 : vector<16x16x32xbf16> to vector<256x32xbf16>
    %c0_99 = arith.constant 0 : index
    %c224_100 = arith.constant 224 : index
    %71 = vector.load %arg12[%c0_99, %c224_100] : memref<256x288xbf16, #tpu.memory_space<vmem>>, vector<256x32xbf16>
    tpu.vector_store %arg12[%c0_99, %c224_100], %70 {strides = array<i32>} : memref<256x288xbf16, #tpu.memory_space<vmem>>, vector<256x32xbf16>,
    %c2_101 = arith.constant 2 : index
    %c2_102 = arith.constant 2 : index
    %c0_103 = arith.constant 0 : index
    %72 = vector.load %arg11[%c2_101, %c2_102, %c0_103] : memref<18x18x32xbf16, #tpu.memory_space<vmem>>, vector<16x16x32xbf16>
    %73 = vector.shape_cast %72 : vector<16x16x32xbf16> to vector<256x32xbf16>
    %c0_104 = arith.constant 0 : index
    %c256_105 = arith.constant 256 : index
    %74 = vector.load %arg12[%c0_104, %c256_105] : memref<256x288xbf16, #tpu.memory_space<vmem>>, vector<256x32xbf16>
    tpu.vector_store %arg12[%c0_104, %c256_105], %73 {strides = array<i32>} : memref<256x288xbf16, #tpu.memory_space<vmem>>, vector<256x32xbf16>,
    %c0_106 = arith.constant 0 : index
    %c0_107 = arith.constant 0 : index
    %75 = vector.load %arg12[%c0_106, %c0_107] : memref<256x288xbf16, #tpu.memory_space<vmem>>, vector<256x288xbf16>
    %c0_108 = arith.constant 0 : index
    %c0_109 = arith.constant 0 : index
    %76 = vector.load %arg5[%c0_108, %c0_109] : memref<288x32xbf16, #tpu.memory_space<vmem>>, vector<288x32xbf16>
    %cst_110 = arith.constant dense<0.000000e+00> : vector<256x32xf32>
    %77 = tpu.matmul %75, %76, %cst_110 {dimension_numbers = #tpu.dot_dimension_numbers<[1], [0], [0], [1], [0, 0, 1, 1], [], []>} : vector<256x288xbf16>, vector<288x32xbf16>, vector<256x32xf32> -> vector<256x32xf32>
    %c0_111 = arith.constant 0 : index
    %c0_112 = arith.constant 0 : index
    %78 = vector.load %arg6[%c0_111, %c0_112] : memref<1x32xf32, #tpu.memory_space<vmem>>, vector<1x32xf32>
    %79 = vector.broadcast %78 : vector<1x32xf32> to vector<256x32xf32>
    %80 = arith.mulf %77, %79 : vector<256x32xf32>
    %c0_113 = arith.constant 0 : index
    %c0_114 = arith.constant 0 : index
    %81 = vector.load %arg7[%c0_113, %c0_114] : memref<1x32xf32, #tpu.memory_space<vmem>>, vector<1x32xf32>
    %82 = vector.broadcast %81 : vector<1x32xf32> to vector<256x32xf32>
    %83 = arith.addf %80, %82 : vector<256x32xf32>
    %84 = vector.shape_cast %1 : vector<16x16x32xbf16> to vector<256x32xbf16>
    %85 = arith.extf %84 : vector<256x32xbf16> to vector<256x32xf32>
    %86 = arith.addf %83, %85 : vector<256x32xf32>
    %cst_115 = arith.constant 0.000000e+00 : f32
    %87 = vector.broadcast %cst_115 : f32 to vector<256x32xf32>
    %88 = arith.maximumf %86, %87 : vector<256x32xf32>
    %c0_116 = arith.constant 0 : index
    %c0_117 = arith.constant 0 : index
    %c0_118 = arith.constant 0 : index
    %89 = vector.load %arg8[%c0_116, %c0_117, %c0_118] : memref<1x256x32xf32, #tpu.memory_space<vmem>>, vector<1x256x32xf32>
    %90 = vector.shape_cast %89 : vector<1x256x32xf32> to vector<256x32xf32>
    %91 = vector.shape_cast %88 : vector<256x32xf32> to vector<1x256x32xf32>
    tpu.vector_store %arg8[%c0_116, %c0_117, %c0_118], %91 {strides = array<i32>} : memref<1x256x32xf32, #tpu.memory_space<vmem>>, vector<1x256x32xf32>,
    return
  }
  func.func @transform_0(%arg0: i32) -> (i32, i32, i32, i32) {
    %c0_i32 = arith.constant 0 : i32
    %c0_i32_0 = arith.constant 0 : i32
    %c0_i32_1 = arith.constant 0 : i32
    %c0_i32_2 = arith.constant 0 : i32
    return %arg0, %c0_i32, %c0_i32_0, %c0_i32_1 : i32, i32, i32, i32
  }
  func.func @transform_1(%arg0: i32) -> (i32, i32) {
    %c0_i32 = arith.constant 0 : i32
    %c0_i32_0 = arith.constant 0 : i32
    %c0_i32_1 = arith.constant 0 : i32
    return %c0_i32, %c0_i32_0 : i32, i32
  }
  func.func @transform_2(%arg0: i32) -> (i32, i32) {
    %c0_i32 = arith.constant 0 : i32
    %c0_i32_0 = arith.constant 0 : i32
    %c0_i32_1 = arith.constant 0 : i32
    return %c0_i32, %c0_i32_0 : i32, i32
  }
  func.func @transform_3(%arg0: i32) -> (i32, i32) {
    %c0_i32 = arith.constant 0 : i32
    %c0_i32_0 = arith.constant 0 : i32
    %c0_i32_1 = arith.constant 0 : i32
    return %c0_i32, %c0_i32_0 : i32, i32
  }
  func.func @transform_4(%arg0: i32) -> (i32, i32) {
    %c0_i32 = arith.constant 0 : i32
    %c0_i32_0 = arith.constant 0 : i32
    %c0_i32_1 = arith.constant 0 : i32
    return %c0_i32, %c0_i32_0 : i32, i32
  }
  func.func @transform_5(%arg0: i32) -> (i32, i32) {
    %c0_i32 = arith.constant 0 : i32
    %c0_i32_0 = arith.constant 0 : i32
    %c0_i32_1 = arith.constant 0 : i32
    return %c0_i32, %c0_i32_0 : i32, i32
  }
  func.func @transform_6(%arg0: i32) -> (i32, i32) {
    %c0_i32 = arith.constant 0 : i32
    %c0_i32_0 = arith.constant 0 : i32
    %c0_i32_1 = arith.constant 0 : i32
    return %c0_i32, %c0_i32_0 : i32, i32
  }
  func.func @transform_7(%arg0: i32) -> (i32, i32, i32) {
    %c0_i32 = arith.constant 0 : i32
    %c0_i32_0 = arith.constant 0 : i32
    %c0_i32_1 = arith.constant 0 : i32
    return %arg0, %c0_i32, %c0_i32_0 : i32, i32, i32
  }
}

</mosaic_0001>

<llo_original>
// kernel: residual_forward.1
$region0: #{residual_forward.1}
  #allocation0 [shape = 'u32[]', space=smem, size = 0x4, offset = 0x4, fixed_abs, tag = 'smem constant byte address 0x4 - core index']
  #allocation1 [shape = 'u32[144,128]{1,0:T(1,128)}', space=vmem, size = 0x12000, scoped, tag = 'internal scratch']
  #allocation2 [shape = 'bf16[18,18,32]{2,1,0:T(8,128)(2,1)}', space=vmem, size = 0x1b000, scoped, tag = 'scratch operand']
  #allocation3 [shape = 'bf16[256,288]{1,0:T(16,128)(2,1)}', space=vmem, size = 0x30000, scoped, tag = 'scratch operand']
  #allocation4 [shape = 'bf16[18,18,32]{2,1,0:T(8,128)(2,1)}', space=vmem, size = 0x1b000, scoped, tag = 'scratch operand']
  #allocation5 [shape = 'bf16[256,288]{1,0:T(16,128)(2,1)}', space=vmem, size = 0x30000, scoped, tag = 'scratch operand']
  %s0 = inlined_call_operand.vmem [shape: bf16[2,16,16,32], index: 0, kind: input, shape index: {}]
  %s1 = inlined_call_operand.vmem [shape: bf16[288,32], index: 1, kind: input, shape index: {}]
  %s2 = inlined_call_operand.vmem [shape: f32[1,32], index: 2, kind: input, shape index: {}]
  %s3 = inlined_call_operand.vmem [shape: f32[1,32], index: 3, kind: input, shape index: {}]
  %s4 = inlined_call_operand.vmem [shape: bf16[288,32], index: 4, kind: input, shape index: {}]
  %s5 = inlined_call_operand.vmem [shape: f32[1,32], index: 5, kind: input, shape index: {}]
  %s6 = inlined_call_operand.vmem [shape: f32[1,32], index: 6, kind: input, shape index: {}]
  %s7 = inlined_call_operand.hbm [shape: f32[2,256,32], index: 7, kind: output, shape index: {}]
  %s8 = sld [smem:[#allocation0]]
  $region61: #{residual_forward.1} parent=0
    _
  %s10 = ssub.s32 1, %s8
  %s11 = scalar_select 0, %s10, %s8
  $region1: #{residual_forward.1} parent=0
    #allocation6 [shape = 'u8[262144]{0}', space=vmem, size = 0x40000, scoped, tag = 'output window, operand 0']
    #allocation7 [shape = 's32[2]{0}', space=sflag, size = 0x8, scoped, tag = 'scoped memory for residual_forward.1']
    %12 = vsyncpa [#allocation7], 0
    %s13 = scalar_lea.sflag [#allocation7], 1
    %14 = vsyncpa %s13, 0
    loop: start=0, step=1, limit=4
    $region2: #{residual_forward.1} parent=1 // loop_pre_header
      _
    $region3: #{residual_forward.1} parent=1 // loop_header
      %s16 = sphi 0, %s20
      %p17 = scmp.ge.s32.totalorder %s16, 4
      %s26 = sphi 0, %s28
      %s29 = sphi 0, %s26
      %s30 = sphi 0, %s29
      %s46 = sphi 0, %s30
      %s50 = sphi 0, %s50
      %s52 = sphi 0, %s50
      %s53 = sphi 0, %s52
      %s67 = sphi 0, %s53
      %s71 = sphi 0, %s71
      %s73 = sphi 0, %s71
      %s74 = sphi 0, %s73
      %s88 = sphi 0, %s74
      %s92 = sphi 0, %s92
      %s94 = sphi 0, %s92
      %s95 = sphi 0, %s94
      %s109 = sphi 0, %s95
      %s113 = sphi 0, %s113
      %s115 = sphi 0, %s113
      %s116 = sphi 0, %s115
      %s130 = sphi 0, %s116
      %s134 = sphi 0, %s134
      %s136 = sphi 0, %s134
      %s137 = sphi 0, %s136
      %s151 = sphi 0, %s137
      %s155 = sphi 0, %s155
      %s157 = sphi 0, %s155
      %s158 = sphi 0, %s157
      %s172 = sphi 0, %s158
      %s178 = sphi 0, %s180
      %s181 = sphi 0, %s178
      %s182 = sphi 0, %s181
      %s198 = sphi 0, %s182
    $region4: #{residual_forward.1} parent=1 // loop_header_branch
      %19 = sbr.rel (%p17) target = $region8
    $region5: #{residual_forward.1} parent=1 // loop_body
      %s21 = ssub.s32 %s16, 1
      %s22 = ssub.s32 %s16, 2
      %s23 = sadd.s32 %s16, 1
      %s24 = ssub.s32 %s16, %s23
      %p25 = scmp.eq.s32.totalorder %s24, 0
      %s27 = sadd.s32 %s26, 1
      %s28 = scalar_select %p25, %s26, %s27
      %p31 = pneg %p25
      %p32 = scmp.eq.s32.totalorder %s16, 1
      %p33 = por %p31, %p32
      %p34 = scmp.ne.s32.totalorder %s26, %s29
      %p35 = scmp.eq.s32.totalorder %s16, 0
      %p36 = por %p34, %p35
      %p37 = scmp.ne.s32.totalorder %s26, %s29
      %p38 = scmp.eq.s32.totalorder %s21, 1
      %p39 = por %p37, %p38
      %p40 = scmp.ne.s32.totalorder %s29, %s30
      %p41 = scmp.eq.s32.totalorder %s21, 0
      %p42 = por %p40, %p41
      %p43 = scmp.ne.s32.totalorder %s29, %s30
      %p44 = scmp.eq.s32.totalorder %s22, 1
      %p45 = por %p43, %p44
      %p47 = scmp.ne.s32.totalorder %s30, %s46
      %p48 = scmp.eq.s32.totalorder %s22, 0
      %p49 = por %p47, %p48
      %s51 = sadd.s32 %s50, 1
      %p54 = scmp.eq.s32.totalorder %s16, 1
      %p55 = scmp.ne.s32.totalorder %s50, %s52
      %p56 = scmp.eq.s32.totalorder %s16, 0
      %p57 = por %p55, %p56
      %p58 = scmp.ne.s32.totalorder %s50, %s52
      %p59 = scmp.eq.s32.totalorder %s21, 1
      %p60 = por %p58, %p59
      %p61 = scmp.ne.s32.totalorder %s52, %s53
      %p62 = scmp.eq.s32.totalorder %s21, 0
      %p63 = por %p61, %p62
      %p64 = scmp.ne.s32.totalorder %s52, %s53
      %p65 = scmp.eq.s32.totalorder %s22, 1
      %p66 = por %p64, %p65
      %p68 = scmp.ne.s32.totalorder %s53, %s67
      %p69 = scmp.eq.s32.totalorder %s22, 0
      %p70 = por %p68, %p69
      %s72 = sadd.s32 %s71, 1
      %p75 = scmp.eq.s32.totalorder %s16, 1
      %p76 = scmp.ne.s32.totalorder %s71, %s73
      %p77 = scmp.eq.s32.totalorder %s16, 0
      %p78 = por %p76, %p77
      %p79 = scmp.ne.s32.totalorder %s71, %s73
      %p80 = scmp.eq.s32.totalorder %s21, 1
      %p81 = por %p79, %p80
      %p82 = scmp.ne.s32.totalorder %s73, %s74
      %p83 = scmp.eq.s32.totalorder %s21, 0
      %p84 = por %p82, %p83
      %p85 = scmp.ne.s32.totalorder %s73, %s74
      %p86 = scmp.eq.s32.totalorder %s22, 1
      %p87 = por %p85, %p86
      %p89 = scmp.ne.s32.totalorder %s74, %s88
      %p90 = scmp.eq.s32.totalorder %s22, 0
      %p91 = por %p89, %p90
      %s93 = sadd.s32 %s92, 1
      %p96 = scmp.eq.s32.totalorder %s16, 1
      %p97 = scmp.ne.s32.totalorder %s92, %s94
      %p98 = scmp.eq.s32.totalorder %s16, 0
      %p99 = por %p97, %p98
      %p100 = scmp.ne.s32.totalorder %s92, %s94
      %p101 = scmp.eq.s32.totalorder %s21, 1
      %p102 = por %p100, %p101
      %p103 = scmp.ne.s32.totalorder %s94, %s95
      %p104 = scmp.eq.s32.totalorder %s21, 0
      %p105 = por %p103, %p104
      %p106 = scmp.ne.s32.totalorder %s94, %s95
      %p107 = scmp.eq.s32.totalorder %s22, 1
      %p108 = por %p106, %p107
      %p110 = scmp.ne.s32.totalorder %s95, %s109
      %p111 = scmp.eq.s32.totalorder %s22, 0
      %p112 = por %p110, %p111
      %s114 = sadd.s32 %s113, 1
      %p117 = scmp.eq.s32.totalorder %s16, 1
      %p118 = scmp.ne.s32.totalorder %s113, %s115
      %p119 = scmp.eq.s32.totalorder %s16, 0
      %p120 = por %p118, %p119
      %p121 = scmp.ne.s32.totalorder %s113, %s115
      %p122 = scmp.eq.s32.totalorder %s21, 1
      %p123 = por %p121, %p122
      %p124 = scmp.ne.s32.totalorder %s115, %s116
      %p125 = scmp.eq.s32.totalorder %s21, 0
      %p126 = por %p124, %p125
      %p127 = scmp.ne.s32.totalorder %s115, %s116
      %p128 = scmp.eq.s32.totalorder %s22, 1
      %p129 = por %p127, %p128
      %p131 = scmp.ne.s32.totalorder %s116, %s130
      %p132 = scmp.eq.s32.totalorder %s22, 0
      %p133 = por %p131, %p132
      %s135 = sadd.s32 %s134, 1
      %p138 = scmp.eq.s32.totalorder %s16, 1
      %p139 = scmp.ne.s32.totalorder %s134, %s136
      %p140 = scmp.eq.s32.totalorder %s16, 0
      %p141 = por %p139, %p140
      %p142 = scmp.ne.s32.totalorder %s134, %s136
      %p143 = scmp.eq.s32.totalorder %s21, 1
      %p144 = por %p142, %p143
      %p145 = scmp.ne.s32.totalorder %s136, %s137
      %p146 = scmp.eq.s32.totalorder %s21, 0
      %p147 = por %p145, %p146
      %p148 = scmp.ne.s32.totalorder %s136, %s137
      %p149 = scmp.eq.s32.totalorder %s22, 1
      %p150 = por %p148, %p149
      %p152 = scmp.ne.s32.totalorder %s137, %s151
      %p153 = scmp.eq.s32.totalorder %s22, 0
      %p154 = por %p152, %p153
      %s156 = sadd.s32 %s155, 1
      %p159 = scmp.eq.s32.totalorder %s16, 1
      %p160 = scmp.ne.s32.totalorder %s155, %s157
      %p161 = scmp.eq.s32.totalorder %s16, 0
      %p162 = por %p160, %p161
      %p163 = scmp.ne.s32.totalorder %s155, %s157
      %p164 = scmp.eq.s32.totalorder %s21, 1
      %p165 = por %p163, %p164
      %p166 = scmp.ne.s32.totalorder %s157, %s158
      %p167 = scmp.eq.s32.totalorder %s21, 0
      %p168 = por %p166, %p167
      %p169 = scmp.ne.s32.totalorder %s157, %s158
      %p170 = scmp.eq.s32.totalorder %s22, 1
      %p171 = por %p169, %p170
      %p173 = scmp.ne.s32.totalorder %s158, %s172
      %p174 = scmp.eq.s32.totalorder %s22, 0
      %p175 = por %p173, %p174
      %s176 = ssub.s32 %s16, %s23
      %p177 = scmp.eq.s32.totalorder %s176, 0
      %s179 = sadd.s32 %s178, 1
      %s180 = scalar_select %p177, %s178, %s179
      %p183 = pneg %p177
      %p184 = scmp.eq.s32.totalorder %s16, 1
      %p185 = por %p183, %p184
      %p186 = scmp.ne.s32.totalorder %s178, %s181
      %p187 = scmp.eq.s32.totalorder %s16, 0
      %p188 = por %p186, %p187
      %p189 = scmp.ne.s32.totalorder %s178, %s181
      %p190 = scmp.eq.s32.totalorder %s21, 1
      %p191 = por %p189, %p190
      %p192 = scmp.ne.s32.totalorder %s181, %s182
      %p193 = scmp.eq.s32.totalorder %s21, 0
      %p194 = por %p192, %p193
      %p195 = scmp.ne.s32.totalorder %s181, %s182
      %p196 = scmp.eq.s32.totalorder %s22, 1
      %p197 = por %p195, %p196
      %p199 = scmp.ne.s32.totalorder %s182, %s198
      %p200 = scmp.eq.s32.totalorder %s22, 0
      %p201 = por %p199, %p200
      %p202 = scmp.le.s32.totalorder 1, %s16
      %p203 = scmp.lt.s32.totalorder %s16, 3
      %p204 = pnand %p202, %p203
      %p205 = pneg %p204
      // Predicated region
      $region9: #{residual_forward.1} parent=5 // pred_check
        _
      $region10: #{residual_forward.1} parent=5 // pred_check_branch
        %207 = sbr.rel (%p204) target = $region12
      $region11: #{residual_forward.1} parent=5 // pred_region
        %s208 = ssub.s32 %s16, 1
        // Predicated region
        $region13: #{residual_forward.1} parent=11 // pred_check
          %p209 = pneg %p63
        $region14: #{residual_forward.1} parent=11 // pred_check_branch
          %211 = sbr.rel (%p209) target = $region16
        $region15: #{residual_forward.1} parent=11 // pred_region
          _
        $region16: #{residual_forward.1} parent=11 // pred_fallthru
          _
        // Predicated region
        $region17: #{residual_forward.1} parent=11 // pred_check
          %p212 = pneg %p84
        $region18: #{residual_forward.1} parent=11 // pred_check_branch
          %214 = sbr.rel (%p212) target = $region20
        $region19: #{residual_forward.1} parent=11 // pred_region
          _
        $region20: #{residual_forward.1} parent=11 // pred_fallthru
          _
        // Predicated region
        $region21: #{residual_forward.1} parent=11 // pred_check
          %p215 = pneg %p105
        $region22: #{residual_forward.1} parent=11 // pred_check_branch
          %217 = sbr.rel (%p215) target = $region24
        $region23: #{residual_forward.1} parent=11 // pred_region
          _
        $region24: #{residual_forward.1} parent=11 // pred_fallthru
          _
        // Predicated region
        $region25: #{residual_forward.1} parent=11 // pred_check
          %p218 = pneg %p126
        $region26: #{residual_forward.1} parent=11 // pred_check_branch
          %220 = sbr.rel (%p218) target = $region28
        $region27: #{residual_forward.1} parent=11 // pred_region
          _
        $region28: #{residual_forward.1} parent=11 // pred_fallthru
          _
        // Predicated region
        $region29: #{residual_forward.1} parent=11 // pred_check
          %p221 = pneg %p147
        $region30: #{residual_forward.1} parent=11 // pred_check_branch
          %223 = sbr.rel (%p221) target = $region32
        $region31: #{residual_forward.1} parent=11 // pred_region
          _
        $region32: #{residual_forward.1} parent=11 // pred_fallthru
          _
        // Predicated region
        $region33: #{residual_forward.1} parent=11 // pred_check
          %p224 = pneg %p168
        $region34: #{residual_forward.1} parent=11 // pred_check_branch
          %226 = sbr.rel (%p224) target = $region36
        $region35: #{residual_forward.1} parent=11 // pred_region
          _
        $region36: #{residual_forward.1} parent=11 // pred_fallthru
          _
      $region12: #{residual_forward.1} parent=5 // pred_fallthru
        _
      %p227 = scmp.lt.s32.totalorder %s16, 2
      // Predicated region
      $region37: #{residual_forward.1} parent=5 // pred_check
        %p228 = pneg %p227
      $region38: #{residual_forward.1} parent=5 // pred_check_branch
        %230 = sbr.rel (%p228) target = $region40
      $region39: #{residual_forward.1} parent=5 // pred_region
        // Predicated region
        $region41: #{residual_forward.1} parent=39 // pred_check
          %p231 = pneg %p36
        $region42: #{residual_forward.1} parent=39 // pred_check_branch
          %233 = sbr.rel (%p231) target = $region44
        $region43: #{residual_forward.1} parent=39 // pred_region
          %p234 = scmp.lt.s32.totalorder %s16, 1
          %s235 = scalar_select %p234, %s16, 1
          %s236 = smul.addr %s235, 32
          %s237 = smul.addr %s236, 4
          %s238 = scalar_lea.vmem %s0, %s237
        $region44: #{residual_forward.1} parent=39 // pred_fallthru
          _
      $region40: #{residual_forward.1} parent=5 // pred_fallthru
        _
      %p239 = scmp.le.s32.totalorder 1, %s16
      %p240 = scmp.lt.s32.totalorder %s16, 3
      %p241 = pnand %p239, %p240
      %p242 = pneg %p241
      // Predicated region
      $region45: #{residual_forward.1} parent=5 // pred_check
        _
      $region46: #{residual_forward.1} parent=5 // pred_check_branch
        %244 = sbr.rel (%p241) target = $region48
      $region47: #{residual_forward.1} parent=5 // pred_region
        %s245 = ssub.s32 %s16, 1
        %p246 = scmp.lt.s32.totalorder %s21, 1
        %s247 = scalar_select %p246, %s21, 1
        %s248 = smul.addr %s247, 32
        %s249 = smul.addr %s248, 4
        %s250 = scalar_lea.vmem %s0, %s249
        %p251 = pneg %p42
        %p252 = pneg %p39
        %p253 = pneg %p63
        %p254 = pneg %p60
        %p255 = pneg %p84
        %p256 = pneg %p81
        %p257 = pneg %p105
        %p258 = pneg %p102
        %p259 = pneg %p126
        %p260 = pneg %p123
        %p261 = pneg %p147
        %p262 = pneg %p144
        %p263 = pneg %p168
        %p264 = pneg %p165
        %p265 = pneg %p194
        %p266 = pneg %p191
        %s267 = sand.u32 %s181, 1
        %s268 = scalar_lea.sflag [#allocation7], %s267
        %s269 = sand.u32 %s181, 1
        %s270 = smul.addr %s269, 256
        %s271 = scalar_lea.vmem [#allocation6], %s270
        %p272 = scmp.lt.s32.totalorder %s21, 1
        %s273 = scalar_select %p272, %s21, 1
        %s274 = smul.addr %s273, 32
        %s275 = smul.addr %s274, 4
        %s276 = scalar_lea.vmem %s0, %s275
        %v278 = vld [vmem:[%s276] sm:$0xf]
        %v279 = vld [vmem:[%s276 + $0x4] sm:$0xf]
        %v280 = vld [vmem:[%s276 + $0x8] sm:$0xf]
        %v281 = vld [vmem:[%s276 + $0xc] sm:$0xf]
        %v282 = vld [vmem:[%s276 + $0x10] sm:$0xf]
        %v283 = vld [vmem:[%s276 + $0x14] sm:$0xf]
        %v284 = vld [vmem:[%s276 + $0x18] sm:$0xf]
        %v285 = vld [vmem:[%s276 + $0x1c] sm:$0xf]
        %v286 = vld [vmem:[%s276 + $0x20] sm:$0xf]
        %v287 = vld [vmem:[%s276 + $0x24] sm:$0xf]
        %v288 = vld [vmem:[%s276 + $0x28] sm:$0xf]
        %v289 = vld [vmem:[%s276 + $0x2c] sm:$0xf]
        %v290 = vld [vmem:[%s276 + $0x30] sm:$0xf]
        %v291 = vld [vmem:[%s276 + $0x34] sm:$0xf]
        %v292 = vld [vmem:[%s276 + $0x38] sm:$0xf]
        %v293 = vld [vmem:[%s276 + $0x3c] sm:$0xf]
        %v294 = vld [vmem:[%s276 + $0x40] sm:$0xf]
        %v295 = vld [vmem:[%s276 + $0x44] sm:$0xf]
        %v296 = vld [vmem:[%s276 + $0x48] sm:$0xf]
        %v297 = vld [vmem:[%s276 + $0x4c] sm:$0xf]
        %v298 = vld [vmem:[%s276 + $0x50] sm:$0xf]
        %v299 = vld [vmem:[%s276 + $0x54] sm:$0xf]
        %v300 = vld [vmem:[%s276 + $0x58] sm:$0xf]
        %v301 = vld [vmem:[%s276 + $0x5c] sm:$0xf]
        %v302 = vld [vmem:[%s276 + $0x60] sm:$0xf]
        %v303 = vld [vmem:[%s276 + $0x64] sm:$0xf]
        %v304 = vld [vmem:[%s276 + $0x68] sm:$0xf]
        %v305 = vld [vmem:[%s276 + $0x6c] sm:$0xf]
        %v306 = vld [vmem:[%s276 + $0x70] sm:$0xf]
        %v307 = vld [vmem:[%s276 + $0x74] sm:$0xf]
        %v308 = vld [vmem:[%s276 + $0x78] sm:$0xf]
        %v309 = vld [vmem:[%s276 + $0x7c] sm:$0xf]
        %vm310 = vcmask 257024
        %311 = vst.msk [vmem:[#allocation2] sm:$0xf] %vm310, 0
        %312 = vst.msk [vmem:[#allocation2 + $0x4] sm:$0xf] %vm310, 0
        %vm313 = vcmask 253952
        %314 = vst.msk [vmem:[#allocation2 + $0x8] sm:$0x1] %vm313, 0
        %315 = vst.msk [vmem:[#allocation2 + $0xc] sm:$0xf] %vm310, 0
        %316 = vst.msk [vmem:[#allocation2 + $0x10] sm:$0xf] %vm310, 0
        %317 = vst.msk [vmem:[#allocation2 + $0x14] sm:$0x1] %vm313, 0
        %318 = vst.msk [vmem:[#allocation2 + $0x18] sm:$0xf] %vm310, 0
        %319 = vst.msk [vmem:[#allocation2 + $0x1c] sm:$0xf] %vm310, 0
        %320 = vst.msk [vmem:[#allocation2 + $0x20] sm:$0x1] %vm313, 0
        %321 = vst.msk [vmem:[#allocation2 + $0x24] sm:$0xf] %vm310, 0
        %322 = vst.msk [vmem:[#allocation2 + $0x28] sm:$0xf] %vm310, 0
        %323 = vst.msk [vmem:[#allocation2 + $0x2c] sm:$0x1] %vm313, 0
        %324 = vst.msk [vmem:[#allocation2 + $0x30] sm:$0xf] %vm310, 0
        %325 = vst.msk [vmem:[#allocation2 + $0x34] sm:$0xf] %vm310, 0
        %326 = vst.msk [vmem:[#allocation2 + $0x38] sm:$0x1] %vm313, 0
        %327 = vst.msk [vmem:[#allocation2 + $0x3c] sm:$0xf] %vm310, 0
        %328 = vst.msk [vmem:[#allocation2 + $0x40] sm:$0xf] %vm310, 0
        %329 = vst.msk [vmem:[#allocation2 + $0x44] sm:$0x1] %vm313, 0
        %330 = vst.msk [vmem:[#allocation2 + $0x48] sm:$0xf] %vm310, 0
        %331 = vst.msk [vmem:[#allocation2 + $0x4c] sm:$0xf] %vm310, 0
        %332 = vst.msk [vmem:[#allocation2 + $0x50] sm:$0x1] %vm313, 0
        %333 = vst.msk [vmem:[#allocation2 + $0x54] sm:$0xf] %vm310, 0
        %334 = vst.msk [vmem:[#allocation2 + $0x58] sm:$0xf] %vm310, 0
        %335 = vst.msk [vmem:[#allocation2 + $0x5c] sm:$0x1] %vm313, 0
        %336 = vst.msk [vmem:[#allocation2 + $0x60] sm:$0xf] %vm310, 0
        %337 = vst.msk [vmem:[#allocation2 + $0x64] sm:$0xf] %vm310, 0
        %338 = vst.msk [vmem:[#allocation2 + $0x68] sm:$0x1] %vm313, 0
        %339 = vst.msk [vmem:[#allocation2 + $0x6c] sm:$0xf] %vm310, 0
        %340 = vst.msk [vmem:[#allocation2 + $0x70] sm:$0xf] %vm310, 0
        %341 = vst.msk [vmem:[#allocation2 + $0x74] sm:$0x1] %vm313, 0
        %342 = vst.msk [vmem:[#allocation2 + $0x78] sm:$0xf] %vm310, 0
        %343 = vst.msk [vmem:[#allocation2 + $0x7c] sm:$0xf] %vm310, 0
        %344 = vst.msk [vmem:[#allocation2 + $0x80] sm:$0x1] %vm313, 0
        %345 = vst.msk [vmem:[#allocation2 + $0x84] sm:$0xf] %vm310, 0
        %346 = vst.msk [vmem:[#allocation2 + $0x88] sm:$0xf] %vm310, 0
        %347 = vst.msk [vmem:[#allocation2 + $0x8c] sm:$0x1] %vm313, 0
        %348 = vst.msk [vmem:[#allocation2 + $0x90] sm:$0xf] %vm310, 0
        %349 = vst.msk [vmem:[#allocation2 + $0x94] sm:$0xf] %vm310, 0
        %350 = vst.msk [vmem:[#allocation2 + $0x98] sm:$0x1] %vm313, 0
        %351 = vst.msk [vmem:[#allocation2 + $0x9c] sm:$0xf] %vm310, 0
        %352 = vst.msk [vmem:[#allocation2 + $0xa0] sm:$0xf] %vm310, 0
        %353 = vst.msk [vmem:[#allocation2 + $0xa4] sm:$0x1] %vm313, 0
        %354 = vst.msk [vmem:[#allocation2 + $0xa8] sm:$0xf] %vm310, 0
        %355 = vst.msk [vmem:[#allocation2 + $0xac] sm:$0xf] %vm310, 0
        %356 = vst.msk [vmem:[#allocation2 + $0xb0] sm:$0x1] %vm313, 0
        %357 = vst.msk [vmem:[#allocation2 + $0xb4] sm:$0xf] %vm310, 0
        %358 = vst.msk [vmem:[#allocation2 + $0xb8] sm:$0xf] %vm310, 0
        %359 = vst.msk [vmem:[#allocation2 + $0xbc] sm:$0x1] %vm313, 0
        %360 = vst.msk [vmem:[#allocation2 + $0xc0] sm:$0xf] %vm310, 0
        %361 = vst.msk [vmem:[#allocation2 + $0xc4] sm:$0xf] %vm310, 0
        %362 = vst.msk [vmem:[#allocation2 + $0xc8] sm:$0x1] %vm313, 0
        %363 = vst.msk [vmem:[#allocation2 + $0xcc] sm:$0xf] %vm310, 0
        %364 = vst.msk [vmem:[#allocation2 + $0xd0] sm:$0xf] %vm310, 0
        %365 = vst.msk [vmem:[#allocation2 + $0xd4] sm:$0x1] %vm313, 0
        %vm366 = vsmask.f32 256
        %vm367 = vsmask.f32 4368
        %vm368 = vmor %vm366, %vm367
        %v370 = vshrl.u32 %v278, 16
        %v372 = vrot.slane %v370, 7
        %v373 = vshll.u32 %v278, 16
        %v375 = vor.u32 %v372, %v373
        %v376 = vrot.slane %v372, 4
        %v378 = vshrl.u32 %v279, 16
        %v380 = vrot.slane %v378, 7
        %v381 = vshll.u32 %v279, 16
        %v383 = vor.u32 %v380, %v381
        %v384 = vsel %vm368, %v376, %v383
        %v385 = vrot.slane %v380, 4
        %v387 = vshrl.u32 %v280, 16
        %v389 = vrot.slane %v387, 7
        %v390 = vshll.u32 %v280, 16
        %v392 = vor.u32 %v389, %v390
        %v393 = vrot.slane %v389, 4
        %v395 = vshrl.u32 %v281, 16
        %v397 = vrot.slane %v395, 7
        %v398 = vshll.u32 %v281, 16
        %v400 = vor.u32 %v397, %v398
        %v401 = vsel %vm368, %v393, %v400
        %v402 = vrot.slane %v397, 4
        %v404 = vshrl.u32 %v282, 16
        %v406 = vrot.slane %v404, 7
        %v407 = vshll.u32 %v282, 16
        %v409 = vor.u32 %v406, %v407
        %v410 = vrot.slane %v406, 4
        %v412 = vshrl.u32 %v283, 16
        %v414 = vrot.slane %v412, 7
        %v415 = vshll.u32 %v283, 16
        %v417 = vor.u32 %v414, %v415
        %v418 = vsel %vm368, %v410, %v417
        %v419 = vrot.slane %v414, 4
        %v421 = vshrl.u32 %v284, 16
        %v423 = vrot.slane %v421, 7
        %v424 = vshll.u32 %v284, 16
        %v426 = vor.u32 %v423, %v424
        %v427 = vrot.slane %v423, 4
        %v429 = vshrl.u32 %v285, 16
        %v431 = vrot.slane %v429, 7
        %v432 = vshll.u32 %v285, 16
        %v434 = vor.u32 %v431, %v432
        %v435 = vsel %vm368, %v427, %v434
        %v436 = vrot.slane %v431, 4
        %v438 = vshrl.u32 %v286, 16
        %v440 = vrot.slane %v438, 7
        %v441 = vshll.u32 %v286, 16
        %v443 = vor.u32 %v440, %v441
        %v444 = vrot.slane %v440, 4
        %v446 = vshrl.u32 %v287, 16
        %v448 = vrot.slane %v446, 7
        %v449 = vshll.u32 %v287, 16
        %v451 = vor.u32 %v448, %v449
        %v452 = vsel %vm368, %v444, %v451
        %v453 = vrot.slane %v448, 4
        %v455 = vshrl.u32 %v288, 16
        %v457 = vrot.slane %v455, 7
        %v458 = vshll.u32 %v288, 16
        %v460 = vor.u32 %v457, %v458
        %v461 = vrot.slane %v457, 4
        %v463 = vshrl.u32 %v289, 16
        %v465 = vrot.slane %v463, 7
        %v466 = vshll.u32 %v289, 16
        %v468 = vor.u32 %v465, %v466
        %v469 = vsel %vm368, %v461, %v468
        %v470 = vrot.slane %v465, 4
        %v472 = vshrl.u32 %v290, 16
        %v474 = vrot.slane %v472, 7
        %v475 = vshll.u32 %v290, 16
        %v477 = vor.u32 %v474, %v475
        %v478 = vrot.slane %v474, 4
        %v480 = vshrl.u32 %v291, 16
        %v482 = vrot.slane %v480, 7
        %v483 = vshll.u32 %v291, 16
        %v485 = vor.u32 %v482, %v483
        %v486 = vsel %vm368, %v478, %v485
        %v487 = vrot.slane %v482, 4
        %v489 = vshrl.u32 %v292, 16
        %v491 = vrot.slane %v489, 7
        %v492 = vshll.u32 %v292, 16
        %v494 = vor.u32 %v491, %v492
        %v495 = vrot.slane %v491, 4
        %v497 = vshrl.u32 %v293, 16
        %v499 = vrot.slane %v497, 7
        %v500 = vshll.u32 %v293, 16
        %v502 = vor.u32 %v499, %v500
        %v503 = vsel %vm368, %v495, %v502
        %v504 = vrot.slane %v499, 4
        %v506 = vshrl.u32 %v294, 16
        %v508 = vrot.slane %v506, 7
        %v509 = vshll.u32 %v294, 16
        %v511 = vor.u32 %v508, %v509
        %v512 = vrot.slane %v508, 4
        %v514 = vshrl.u32 %v295, 16
        %v516 = vrot.slane %v514, 7
        %v517 = vshll.u32 %v295, 16
        %v519 = vor.u32 %v516, %v517
        %v520 = vsel %vm368, %v512, %v519
        %v521 = vrot.slane %v516, 4
        %v523 = vshrl.u32 %v296, 16
        %v525 = vrot.slane %v523, 7
        %v526 = vshll.u32 %v296, 16
        %v528 = vor.u32 %v525, %v526
        %v529 = vrot.slane %v525, 4
        %v531 = vshrl.u32 %v297, 16
        %v533 = vrot.slane %v531, 7
        %v534 = vshll.u32 %v297, 16
        %v536 = vor.u32 %v533, %v534
        %v537 = vsel %vm368, %v529, %v536
        %v538 = vrot.slane %v533, 4
        %v540 = vshrl.u32 %v298, 16
        %v542 = vrot.slane %v540, 7
        %v543 = vshll.u32 %v298, 16
        %v545 = vor.u32 %v542, %v543
        %v546 = vrot.slane %v542, 4
        %v548 = vshrl.u32 %v299, 16
        %v550 = vrot.slane %v548, 7
        %v551 = vshll.u32 %v299, 16
        %v553 = vor.u32 %v550, %v551
        %v554 = vsel %vm368, %v546, %v553
        %v555 = vrot.slane %v550, 4
        %v557 = vshrl.u32 %v300, 16
        %v559 = vrot.slane %v557, 7
        %v560 = vshll.u32 %v300, 16
        %v562 = vor.u32 %v559, %v560
        %v563 = vrot.slane %v559, 4
        %v565 = vshrl.u32 %v301, 16
        %v567 = vrot.slane %v565, 7
        %v568 = vshll.u32 %v301, 16
        %v570 = vor.u32 %v567, %v568
        %v571 = vsel %vm368, %v563, %v570
        %v572 = vrot.slane %v567, 4
        %v574 = vshrl.u32 %v302, 16
        %v576 = vrot.slane %v574, 7
        %v577 = vshll.u32 %v302, 16
        %v579 = vor.u32 %v576, %v577
        %v580 = vrot.slane %v576, 4
        %v582 = vshrl.u32 %v303, 16
        %v584 = vrot.slane %v582, 7
        %v585 = vshll.u32 %v303, 16
        %v587 = vor.u32 %v584, %v585
        %v588 = vsel %vm368, %v580, %v587
        %v589 = vrot.slane %v584, 4
        %v591 = vshrl.u32 %v304, 16
        %v593 = vrot.slane %v591, 7
        %v594 = vshll.u32 %v304, 16
        %v596 = vor.u32 %v593, %v594
        %v597 = vrot.slane %v593, 4
        %v599 = vshrl.u32 %v305, 16
        %v601 = vrot.slane %v599, 7
        %v602 = vshll.u32 %v305, 16
        %v604 = vor.u32 %v601, %v602
        %v605 = vsel %vm368, %v597, %v604
        %v606 = vrot.slane %v601, 4
        %v608 = vshrl.u32 %v306, 16
        %v610 = vrot.slane %v608, 7
        %v611 = vshll.u32 %v306, 16
        %v613 = vor.u32 %v610, %v611
        %v614 = vrot.slane %v610, 4
        %v616 = vshrl.u32 %v307, 16
        %v618 = vrot.slane %v616, 7
        %v619 = vshll.u32 %v307, 16
        %v621 = vor.u32 %v618, %v619
        %v622 = vsel %vm368, %v614, %v621
        %v623 = vrot.slane %v618, 4
        %v625 = vshrl.u32 %v308, 16
        %v627 = vrot.slane %v625, 7
        %v628 = vshll.u32 %v308, 16
        %v630 = vor.u32 %v627, %v628
        %v631 = vrot.slane %v627, 4
        %v633 = vshrl.u32 %v309, 16
        %v635 = vrot.slane %v633, 7
        %v636 = vshll.u32 %v309, 16
        %v638 = vor.u32 %v635, %v636
        %v639 = vsel %vm368, %v631, %v638
        %v640 = vrot.slane %v635, 4
        %s689 = scalar_lea.vmem [#allocation2], 12
        %vm690 = vcmask 257024
        %vm691 = vsmask.f32 7938
        %vm692 = vmand %vm690, %vm691
        %v693 = vld [vmem:[%s689] sm:$0xf]
        %v694 = vsel %vm692, %v375, %v693
        %695 = vst [vmem:[%s689] sm:$0xf] %v694
        %696 = vst.msk [vmem:[%s689 + $0x4] sm:$0xf] %vm310, %v384
        %vm697 = vcmask 253952
        %vm698 = vmand %vm697, %vm366
        %v699 = vld [vmem:[%s689 + $0x8] sm:$0x1]
        %v700 = vsel %vm698, %v385, %v699
        %701 = vst [vmem:[%s689 + $0x8] sm:$0x1] %v700
        %v702 = vld [vmem:[%s689 + $0xc] sm:$0xf]
        %v703 = vsel %vm692, %v392, %v702
        %704 = vst [vmem:[%s689 + $0xc] sm:$0xf] %v703
        %705 = vst.msk [vmem:[%s689 + $0x10] sm:$0xf] %vm310, %v401
        %v706 = vld [vmem:[%s689 + $0x14] sm:$0x1]
        %v707 = vsel %vm698, %v402, %v706
        %708 = vst [vmem:[%s689 + $0x14] sm:$0x1] %v707
        %v709 = vld [vmem:[%s689 + $0x18] sm:$0xf]
        %v710 = vsel %vm692, %v409, %v709
        %711 = vst [vmem:[%s689 + $0x18] sm:$0xf] %v710
        %712 = vst.msk [vmem:[%s689 + $0x1c] sm:$0xf] %vm310, %v418
        %v713 = vld [vmem:[%s689 + $0x20] sm:$0x1]
        %v714 = vsel %vm698, %v419, %v713
        %715 = vst [vmem:[%s689 + $0x20] sm:$0x1] %v714
        %v716 = vld [vmem:[%s689 + $0x24] sm:$0xf]
        %v717 = vsel %vm692, %v426, %v716
        %718 = vst [vmem:[%s689 + $0x24] sm:$0xf] %v717
        %719 = vst.msk [vmem:[%s689 + $0x28] sm:$0xf] %vm310, %v435
        %v720 = vld [vmem:[%s689 + $0x2c] sm:$0x1]
        %v721 = vsel %vm698, %v436, %v720
        %722 = vst [vmem:[%s689 + $0x2c] sm:$0x1] %v721
        %v723 = vld [vmem:[%s689 + $0x30] sm:$0xf]
        %v724 = vsel %vm692, %v443, %v723
        %725 = vst [vmem:[%s689 + $0x30] sm:$0xf] %v724
        %726 = vst.msk [vmem:[%s689 + $0x34] sm:$0xf] %vm310, %v452
        %v727 = vld [vmem:[%s689 + $0x38] sm:$0x1]
        %v728 = vsel %vm698, %v453, %v727
        %729 = vst [vmem:[%s689 + $0x38] sm:$0x1] %v728
        %v730 = vld [vmem:[%s689 + $0x3c] sm:$0xf]
        %v731 = vsel %vm692, %v460, %v730
        %732 = vst [vmem:[%s689 + $0x3c] sm:$0xf] %v731
        %733 = vst.msk [vmem:[%s689 + $0x40] sm:$0xf] %vm310, %v469
        %v734 = vld [vmem:[%s689 + $0x44] sm:$0x1]
        %v735 = vsel %vm698, %v470, %v734
        %736 = vst [vmem:[%s689 + $0x44] sm:$0x1] %v735
        %v737 = vld [vmem:[%s689 + $0x48] sm:$0xf]
        %v738 = vsel %vm692, %v477, %v737
        %739 = vst [vmem:[%s689 + $0x48] sm:$0xf] %v738
        %740 = vst.msk [vmem:[%s689 + $0x4c] sm:$0xf] %vm310, %v486
        %v741 = vld [vmem:[%s689 + $0x50] sm:$0x1]
        %v742 = vsel %vm698, %v487, %v741
        %743 = vst [vmem:[%s689 + $0x50] sm:$0x1] %v742
        %v744 = vld [vmem:[%s689 + $0x54] sm:$0xf]
        %v745 = vsel %vm692, %v494, %v744
        %746 = vst [vmem:[%s689 + $0x54] sm:$0xf] %v745
        %747 = vst.msk [vmem:[%s689 + $0x58] sm:$0xf] %vm310, %v503
        %v748 = vld [vmem:[%s689 + $0x5c] sm:$0x1]
        %v749 = vsel %vm698, %v504, %v748
        %750 = vst [vmem:[%s689 + $0x5c] sm:$0x1] %v749
        %v751 = vld [vmem:[%s689 + $0x60] sm:$0xf]
        %v752 = vsel %vm692, %v511, %v751
        %753 = vst [vmem:[%s689 + $0x60] sm:$0xf] %v752
        %754 = vst.msk [vmem:[%s689 + $0x64] sm:$0xf] %vm310, %v520
        %v755 = vld [vmem:[%s689 + $0x68] sm:$0x1]
        %v756 = vsel %vm698, %v521, %v755
        %757 = vst [vmem:[%s689 + $0x68] sm:$0x1] %v756
        %v758 = vld [vmem:[%s689 + $0x6c] sm:$0xf]
        %v759 = vsel %vm692, %v528, %v758
        %760 = vst [vmem:[%s689 + $0x6c] sm:$0xf] %v759
        %761 = vst.msk [vmem:[%s689 + $0x70] sm:$0xf] %vm310, %v537
        %v762 = vld [vmem:[%s689 + $0x74] sm:$0x1]
        %v763 = vsel %vm698, %v538, %v762
        %764 = vst [vmem:[%s689 + $0x74] sm:$0x1] %v763
        %v765 = vld [vmem:[%s689 + $0x78] sm:$0xf]
        %v766 = vsel %vm692, %v545, %v765
        %767 = vst [vmem:[%s689 + $0x78] sm:$0xf] %v766
        %768 = vst.msk [vmem:[%s689 + $0x7c] sm:$0xf] %vm310, %v554
        %v769 = vld [vmem:[%s689 + $0x80] sm:$0x1]
        %v770 = vsel %vm698, %v555, %v769
        %771 = vst [vmem:[%s689 + $0x80] sm:$0x1] %v770
        %v772 = vld [vmem:[%s689 + $0x84] sm:$0xf]
        %v773 = vsel %vm692, %v562, %v772
        %774 = vst [vmem:[%s689 + $0x84] sm:$0xf] %v773
        %775 = vst.msk [vmem:[%s689 + $0x88] sm:$0xf] %vm310, %v571
        %v776 = vld [vmem:[%s689 + $0x8c] sm:$0x1]
        %v777 = vsel %vm698, %v572, %v776
        %778 = vst [vmem:[%s689 + $0x8c] sm:$0x1] %v777
        %v779 = vld [vmem:[%s689 + $0x90] sm:$0xf]
        %v780 = vsel %vm692, %v579, %v779
        %781 = vst [vmem:[%s689 + $0x90] sm:$0xf] %v780
        %782 = vst.msk [vmem:[%s689 + $0x94] sm:$0xf] %vm310, %v588
        %v783 = vld [vmem:[%s689 + $0x98] sm:$0x1]
        %v784 = vsel %vm698, %v589, %v783
        %785 = vst [vmem:[%s689 + $0x98] sm:$0x1] %v784
        %v786 = vld [vmem:[%s689 + $0x9c] sm:$0xf]
        %v787 = vsel %vm692, %v596, %v786
        %788 = vst [vmem:[%s689 + $0x9c] sm:$0xf] %v787
        %789 = vst.msk [vmem:[%s689 + $0xa0] sm:$0xf] %vm310, %v605
        %v790 = vld [vmem:[%s689 + $0xa4] sm:$0x1]
        %v791 = vsel %vm698, %v606, %v790
        %792 = vst [vmem:[%s689 + $0xa4] sm:$0x1] %v791
        %v793 = vld [vmem:[%s689 + $0xa8] sm:$0xf]
        %v794 = vsel %vm692, %v613, %v793
        %795 = vst [vmem:[%s689 + $0xa8] sm:$0xf] %v794
        %796 = vst.msk [vmem:[%s689 + $0xac] sm:$0xf] %vm310, %v622
        %v797 = vld [vmem:[%s689 + $0xb0] sm:$0x1]
        %v798 = vsel %vm698, %v623, %v797
        %799 = vst [vmem:[%s689 + $0xb0] sm:$0x1] %v798
        %v800 = vld [vmem:[%s689 + $0xb4] sm:$0xf]
        %v801 = vsel %vm692, %v630, %v800
        %802 = vst [vmem:[%s689 + $0xb4] sm:$0xf] %v801
        %803 = vst.msk [vmem:[%s689 + $0xb8] sm:$0xf] %vm310, %v639
        %v804 = vld [vmem:[%s689 + $0xbc] sm:$0x1]
        %v805 = vsel %vm698, %v640, %v804
        %806 = vst [vmem:[%s689 + $0xbc] sm:$0x1] %v805
        %v807 = vld [vmem:[#allocation2] sm:$0xf]
        %v808 = vld [vmem:[#allocation2 + $0x4] sm:$0xf]
        %v809 = vld [vmem:[#allocation2 + $0xc] sm:$0xf]
        %v810 = vld [vmem:[#allocation2 + $0x10] sm:$0xf]
        %v811 = vld [vmem:[#allocation2 + $0x18] sm:$0xf]
        %v812 = vld [vmem:[#allocation2 + $0x1c] sm:$0xf]
        %v813 = vld [vmem:[#allocation2 + $0x24] sm:$0xf]
        %v814 = vld [vmem:[#allocation2 + $0x28] sm:$0xf]
        %v815 = vld [vmem:[#allocation2 + $0x30] sm:$0xf]
        %v816 = vld [vmem:[#allocation2 + $0x34] sm:$0xf]
        %v817 = vld [vmem:[#allocation2 + $0x3c] sm:$0xf]
        %v818 = vld [vmem:[#allocation2 + $0x40] sm:$0xf]
        %v819 = vld [vmem:[#allocation2 + $0x48] sm:$0xf]
        %v820 = vld [vmem:[#allocation2 + $0x4c] sm:$0xf]
        %v821 = vld [vmem:[#allocation2 + $0x54] sm:$0xf]
        %v822 = vld [vmem:[#allocation2 + $0x58] sm:$0xf]
        %v823 = vld [vmem:[#allocation2 + $0x60] sm:$0xf]
        %v824 = vld [vmem:[#allocation2 + $0x64] sm:$0xf]
        %v825 = vld [vmem:[#allocation2 + $0x6c] sm:$0xf]
        %v826 = vld [vmem:[#allocation2 + $0x70] sm:$0xf]
        %v827 = vld [vmem:[#allocation2 + $0x78] sm:$0xf]
        %v828 = vld [vmem:[#allocation2 + $0x7c] sm:$0xf]
        %v829 = vld [vmem:[#allocation2 + $0x84] sm:$0xf]
        %v830 = vld [vmem:[#allocation2 + $0x88] sm:$0xf]
        %v831 = vld [vmem:[#allocation2 + $0x90] sm:$0xf]
        %v832 = vld [vmem:[#allocation2 + $0x94] sm:$0xf]
        %v833 = vld [vmem:[#allocation2 + $0x9c] sm:$0xf]
        %v834 = vld [vmem:[#allocation2 + $0xa0] sm:$0xf]
        %v835 = vld [vmem:[#allocation2 + $0xa8] sm:$0xf]
        %v836 = vld [vmem:[#allocation2 + $0xac] sm:$0xf]
        %v837 = vld [vmem:[#allocation2 + $0xb4] sm:$0xf]
        %v838 = vld [vmem:[#allocation2 + $0xb8] sm:$0xf]
        %v871 = vunpack.c.l.b16 %v807
        %v872 = vunpack.c.l.b16 %v808
        %v873 = vunpack.c.l.b16 %v809
        %v874 = vunpack.c.l.b16 %v810
        %v875 = vunpack.c.l.b16 %v811
        %v876 = vunpack.c.l.b16 %v812
        %v877 = vunpack.c.l.b16 %v813
        %v878 = vunpack.c.l.b16 %v814
        %v879 = vunpack.c.l.b16 %v815
        %v880 = vunpack.c.l.b16 %v816
        %v881 = vunpack.c.l.b16 %v817
        %v882 = vunpack.c.l.b16 %v818
        %v883 = vunpack.c.l.b16 %v819
        %v884 = vunpack.c.l.b16 %v820
        %v885 = vunpack.c.l.b16 %v821
        %v886 = vunpack.c.l.b16 %v822
        %v887 = vunpack.c.l.b16 %v823
        %v888 = vunpack.c.l.b16 %v824
        %v889 = vunpack.c.l.b16 %v825
        %v890 = vunpack.c.l.b16 %v826
        %v891 = vunpack.c.l.b16 %v827
        %v892 = vunpack.c.l.b16 %v828
        %v893 = vunpack.c.l.b16 %v829
        %v894 = vunpack.c.l.b16 %v830
        %v895 = vunpack.c.l.b16 %v831
        %v896 = vunpack.c.l.b16 %v832
        %v897 = vunpack.c.l.b16 %v833
        %v898 = vunpack.c.l.b16 %v834
        %v899 = vunpack.c.l.b16 %v835
        %v900 = vunpack.c.l.b16 %v836
        %v901 = vunpack.c.l.b16 %v837
        %v902 = vunpack.c.l.b16 %v838
        %v903 = vpack.c.b16 %v872, %v871
        %v904 = vpack.c.b16 %v874, %v873
        %v905 = vpack.c.b16 %v876, %v875
        %v906 = vpack.c.b16 %v878, %v877
        %v907 = vpack.c.b16 %v880, %v879
        %v908 = vpack.c.b16 %v882, %v881
        %v909 = vpack.c.b16 %v884, %v883
        %v910 = vpack.c.b16 %v886, %v885
        %v911 = vpack.c.b16 %v888, %v887
        %v912 = vpack.c.b16 %v890, %v889
        %v913 = vpack.c.b16 %v892, %v891
        %v914 = vpack.c.b16 %v894, %v893
        %v915 = vpack.c.b16 %v896, %v895
        %v916 = vpack.c.b16 %v898, %v897
        %v917 = vpack.c.b16 %v900, %v899
        %v918 = vpack.c.b16 %v902, %v901
        %vm935 = vcmask 261120
        %936 = vst.msk [vmem:[#allocation3] sm:$0xff] %vm935, %v903
        %937 = vst.msk [vmem:[#allocation3 + $0x18] sm:$0xff] %vm935, %v904
        %938 = vst.msk [vmem:[#allocation3 + $0x30] sm:$0xff] %vm935, %v905
        %939 = vst.msk [vmem:[#allocation3 + $0x48] sm:$0xff] %vm935, %v906
        %940 = vst.msk [vmem:[#allocation3 + $0x60] sm:$0xff] %vm935, %v907
        %941 = vst.msk [vmem:[#allocation3 + $0x78] sm:$0xff] %vm935, %v908
        %942 = vst.msk [vmem:[#allocation3 + $0x90] sm:$0xff] %vm935, %v909
        %943 = vst.msk [vmem:[#allocation3 + $0xa8] sm:$0xff] %vm935, %v910
        %944 = vst.msk [vmem:[#allocation3 + $0xc0] sm:$0xff] %vm935, %v911
        %945 = vst.msk [vmem:[#allocation3 + $0xd8] sm:$0xff] %vm935, %v912
        %946 = vst.msk [vmem:[#allocation3 + $0xf0] sm:$0xff] %vm935, %v913
        %947 = vst.msk [vmem:[#allocation3 + $0x108] sm:$0xff] %vm935, %v914
        %948 = vst.msk [vmem:[#allocation3 + $0x120] sm:$0xff] %vm935, %v915
        %949 = vst.msk [vmem:[#allocation3 + $0x138] sm:$0xff] %vm935, %v916
        %950 = vst.msk [vmem:[#allocation3 + $0x150] sm:$0xff] %vm935, %v917
        %951 = vst.msk [vmem:[#allocation3 + $0x168] sm:$0xff] %vm935, %v918
        %v952 = vld [vmem:[#allocation2] sm:$0xf]
        %v953 = vld [vmem:[#allocation2 + $0x4] sm:$0xf]
        %v954 = vld [vmem:[#allocation2 + $0x8] sm:$0x1]
        %v955 = vld [vmem:[#allocation2 + $0xc] sm:$0xf]
        %v956 = vld [vmem:[#allocation2 + $0x10] sm:$0xf]
        %v957 = vld [vmem:[#allocation2 + $0x14] sm:$0x1]
        %v958 = vld [vmem:[#allocation2 + $0x18] sm:$0xf]
        %v959 = vld [vmem:[#allocation2 + $0x1c] sm:$0xf]
        %v960 = vld [vmem:[#allocation2 + $0x20] sm:$0x1]
        %v961 = vld [vmem:[#allocation2 + $0x24] sm:$0xf]
        %v962 = vld [vmem:[#allocation2 + $0x28] sm:$0xf]
        %v963 = vld [vmem:[#allocation2 + $0x2c] sm:$0x1]
        %v964 = vld [vmem:[#allocation2 + $0x30] sm:$0xf]
        %v965 = vld [vmem:[#allocation2 + $0x34] sm:$0xf]
        %v966 = vld [vmem:[#allocation2 + $0x38] sm:$0x1]
        %v967 = vld [vmem:[#allocation2 + $0x3c] sm:$0xf]
        %v968 = vld [vmem:[#allocation2 + $0x40] sm:$0xf]
        %v969 = vld [vmem:[#allocation2 + $0x44] sm:$0x1]
        %v970 = vld [vmem:[#allocation2 + $0x48] sm:$0xf]
        %v971 = vld [vmem:[#allocation2 + $0x4c] sm:$0xf]
        %v972 = vld [vmem:[#allocation2 + $0x50] sm:$0x1]
        %v973 = vld [vmem:[#allocation2 + $0x54] sm:$0xf]
        %v974 = vld [vmem:[#allocation2 + $0x58] sm:$0xf]
        %v975 = vld [vmem:[#allocation2 + $0x5c] sm:$0x1]
        %v976 = vld [vmem:[#allocation2 + $0x60] sm:$0xf]
        %v977 = vld [vmem:[#allocation2 + $0x64] sm:$0xf]
        %v978 = vld [vmem:[#allocation2 + $0x68] sm:$0x1]
        %v979 = vld [vmem:[#allocation2 + $0x6c] sm:$0xf]
        %v980 = vld [vmem:[#allocation2 + $0x70] sm:$0xf]
        %v981 = vld [vmem:[#allocation2 + $0x74] sm:$0x1]
        %v982 = vld [vmem:[#allocation2 + $0x78] sm:$0xf]
        %v983 = vld [vmem:[#allocation2 + $0x7c] sm:$0xf]
        %v984 = vld [vmem:[#allocation2 + $0x80] sm:$0x1]
        %v985 = vld [vmem:[#allocation2 + $0x84] sm:$0xf]
        %v986 = vld [vmem:[#allocation2 + $0x88] sm:$0xf]
        %v987 = vld [vmem:[#allocation2 + $0x8c] sm:$0x1]
        %v988 = vld [vmem:[#allocation2 + $0x90] sm:$0xf]
        %v989 = vld [vmem:[#allocation2 + $0x94] sm:$0xf]
        %v990 = vld [vmem:[#allocation2 + $0x98] sm:$0x1]
        %v991 = vld [vmem:[#allocation2 + $0x9c] sm:$0xf]
        %v992 = vld [vmem:[#allocation2 + $0xa0] sm:$0xf]
        %v993 = vld [vmem:[#allocation2 + $0xa4] sm:$0x1]
        %v994 = vld [vmem:[#allocation2 + $0xa8] sm:$0xf]
        %v995 = vld [vmem:[#allocation2 + $0xac] sm:$0xf]
        %v996 = vld [vmem:[#allocation2 + $0xb0] sm:$0x1]
        %v997 = vld [vmem:[#allocation2 + $0xb4] sm:$0xf]
        %v998 = vld [vmem:[#allocation2 + $0xb8] sm:$0xf]
        %v999 = vld [vmem:[#allocation2 + $0xbc] sm:$0x1]
        %vm1000 = vsmask.f32 3328
        %vm1001 = vsmask.f32 7440
        %vm1002 = vmor %vm1000, %vm1001
        %v1004 = vshrl.u32 %v952, 16
        %v1006 = vrot.slane %v1004, 4
        %v1007 = vshll.u32 %v952, 16
        %v1009 = vrot.slane %v1007, 5
        %v1010 = vor.u32 %v1006, %v1009
        %v1011 = vrot.slane %v1010, 4
        %v1013 = vshll.u32 %v953, 16
        %v1015 = vrot.slane %v1013, 5
        %v1016 = vsel %vm1002, %v1011, %v1015
        %v1017 = vshrl.u32 %v953, 16
        %v1019 = vrot.slane %v1017, 4
        %v1020 = vor.u32 %v1019, %v1015
        %v1021 = vrot.slane %v1020, 4
        %v1023 = vshll.u32 %v954, 16
        %v1025 = vrot.slane %v1023, 5
        %v1026 = vsel %vm1002, %v1021, %v1025
        %v1028 = vshrl.u32 %v955, 16
        %v1030 = vrot.slane %v1028, 4
        %v1031 = vshll.u32 %v955, 16
        %v1033 = vrot.slane %v1031, 5
        %v1034 = vor.u32 %v1030, %v1033
        %v1035 = vrot.slane %v1034, 4
        %v1037 = vshll.u32 %v956, 16
        %v1039 = vrot.slane %v1037, 5
        %v1040 = vsel %vm1002, %v1035, %v1039
        %v1041 = vshrl.u32 %v956, 16
        %v1043 = vrot.slane %v1041, 4
        %v1044 = vor.u32 %v1043, %v1039
        %v1045 = vrot.slane %v1044, 4
        %v1047 = vshll.u32 %v957, 16
        %v1049 = vrot.slane %v1047, 5
        %v1050 = vsel %vm1002, %v1045, %v1049
        %v1052 = vshrl.u32 %v958, 16
        %v1054 = vrot.slane %v1052, 4
        %v1055 = vshll.u32 %v958, 16
        %v1057 = vrot.slane %v1055, 5
        %v1058 = vor.u32 %v1054, %v1057
        %v1059 = vrot.slane %v1058, 4
        %v1061 = vshll.u32 %v959, 16
        %v1063 = vrot.slane %v1061, 5
        %v1064 = vsel %vm1002, %v1059, %v1063
        %v1065 = vshrl.u32 %v959, 16
        %v1067 = vrot.slane %v1065, 4
        %v1068 = vor.u32 %v1067, %v1063
        %v1069 = vrot.slane %v1068, 4
        %v1071 = vshll.u32 %v960, 16
        %v1073 = vrot.slane %v1071, 5
        %v1074 = vsel %vm1002, %v1069, %v1073
        %v1076 = vshrl.u32 %v961, 16
        %v1078 = vrot.slane %v1076, 4
        %v1079 = vshll.u32 %v961, 16
        %v1081 = vrot.slane %v1079, 5
        %v1082 = vor.u32 %v1078, %v1081
        %v1083 = vrot.slane %v1082, 4
        %v1085 = vshll.u32 %v962, 16
        %v1087 = vrot.slane %v1085, 5
        %v1088 = vsel %vm1002, %v1083, %v1087
        %v1089 = vshrl.u32 %v962, 16
        %v1091 = vrot.slane %v1089, 4
        %v1092 = vor.u32 %v1091, %v1087
        %v1093 = vrot.slane %v1092, 4
        %v1095 = vshll.u32 %v963, 16
        %v1097 = vrot.slane %v1095, 5
        %v1098 = vsel %vm1002, %v1093, %v1097
        %v1100 = vshrl.u32 %v964, 16
        %v1102 = vrot.slane %v1100, 4
        %v1103 = vshll.u32 %v964, 16
        %v1105 = vrot.slane %v1103, 5
        %v1106 = vor.u32 %v1102, %v1105
        %v1107 = vrot.slane %v1106, 4
        %v1109 = vshll.u32 %v965, 16
        %v1111 = vrot.slane %v1109, 5
        %v1112 = vsel %vm1002, %v1107, %v1111
        %v1113 = vshrl.u32 %v965, 16
        %v1115 = vrot.slane %v1113, 4
        %v1116 = vor.u32 %v1115, %v1111
        %v1117 = vrot.slane %v1116, 4
        %v1119 = vshll.u32 %v966, 16
        %v1121 = vrot.slane %v1119, 5
        %v1122 = vsel %vm1002, %v1117, %v1121
        %v1124 = vshrl.u32 %v967, 16
        %v1126 = vrot.slane %v1124, 4
        %v1127 = vshll.u32 %v967, 16
        %v1129 = vrot.slane %v1127, 5
        %v1130 = vor.u32 %v1126, %v1129
        %v1131 = vrot.slane %v1130, 4
        %v1133 = vshll.u32 %v968, 16
        %v1135 = vrot.slane %v1133, 5
        %v1136 = vsel %vm1002, %v1131, %v1135
        %v1137 = vshrl.u32 %v968, 16
        %v1139 = vrot.slane %v1137, 4
        %v1140 = vor.u32 %v1139, %v1135
        %v1141 = vrot.slane %v1140, 4
        %v1143 = vshll.u32 %v969, 16
        %v1145 = vrot.slane %v1143, 5
        %v1146 = vsel %vm1002, %v1141, %v1145
        %v1148 = vshrl.u32 %v970, 16
        %v1150 = vrot.slane %v1148, 4
        %v1151 = vshll.u32 %v970, 16
        %v1153 = vrot.slane %v1151, 5
        %v1154 = vor.u32 %v1150, %v1153
        %v1155 = vrot.slane %v1154, 4
        %v1157 = vshll.u32 %v971, 16
        %v1159 = vrot.slane %v1157, 5
        %v1160 = vsel %vm1002, %v1155, %v1159
        %v1161 = vshrl.u32 %v971, 16
        %v1163 = vrot.slane %v1161, 4
        %v1164 = vor.u32 %v1163, %v1159
        %v1165 = vrot.slane %v1164, 4
        %v1167 = vshll.u32 %v972, 16
        %v1169 = vrot.slane %v1167, 5
        %v1170 = vsel %vm1002, %v1165, %v1169
        %v1172 = vshrl.u32 %v973, 16
        %v1174 = vrot.slane %v1172, 4
        %v1175 = vshll.u32 %v973, 16
        %v1177 = vrot.slane %v1175, 5
        %v1178 = vor.u32 %v1174, %v1177
        %v1179 = vrot.slane %v1178, 4
        %v1181 = vshll.u32 %v974, 16
        %v1183 = vrot.slane %v1181, 5
        %v1184 = vsel %vm1002, %v1179, %v1183
        %v1185 = vshrl.u32 %v974, 16
        %v1187 = vrot.slane %v1185, 4
        %v1188 = vor.u32 %v1187, %v1183
        %v1189 = vrot.slane %v1188, 4
        %v1191 = vshll.u32 %v975, 16
        %v1193 = vrot.slane %v1191, 5
        %v1194 = vsel %vm1002, %v1189, %v1193
        %v1196 = vshrl.u32 %v976, 16
        %v1198 = vrot.slane %v1196, 4
        %v1199 = vshll.u32 %v976, 16
        %v1201 = vrot.slane %v1199, 5
        %v1202 = vor.u32 %v1198, %v1201
        %v1203 = vrot.slane %v1202, 4
        %v1205 = vshll.u32 %v977, 16
        %v1207 = vrot.slane %v1205, 5
        %v1208 = vsel %vm1002, %v1203, %v1207
        %v1209 = vshrl.u32 %v977, 16
        %v1211 = vrot.slane %v1209, 4
        %v1212 = vor.u32 %v1211, %v1207
        %v1213 = vrot.slane %v1212, 4
        %v1215 = vshll.u32 %v978, 16
        %v1217 = vrot.slane %v1215, 5
        %v1218 = vsel %vm1002, %v1213, %v1217
        %v1220 = vshrl.u32 %v979, 16
        %v1222 = vrot.slane %v1220, 4
        %v1223 = vshll.u32 %v979, 16
        %v1225 = vrot.slane %v1223, 5
        %v1226 = vor.u32 %v1222, %v1225
        %v1227 = vrot.slane %v1226, 4
        %v1229 = vshll.u32 %v980, 16
        %v1231 = vrot.slane %v1229, 5
        %v1232 = vsel %vm1002, %v1227, %v1231
        %v1233 = vshrl.u32 %v980, 16
        %v1235 = vrot.slane %v1233, 4
        %v1236 = vor.u32 %v1235, %v1231
        %v1237 = vrot.slane %v1236, 4
        %v1239 = vshll.u32 %v981, 16
        %v1241 = vrot.slane %v1239, 5
        %v1242 = vsel %vm1002, %v1237, %v1241
        %v1244 = vshrl.u32 %v982, 16
        %v1246 = vrot.slane %v1244, 4
        %v1247 = vshll.u32 %v982, 16
        %v1249 = vrot.slane %v1247, 5
        %v1250 = vor.u32 %v1246, %v1249
        %v1251 = vrot.slane %v1250, 4
        %v1253 = vshll.u32 %v983, 16
        %v1255 = vrot.slane %v1253, 5
        %v1256 = vsel %vm1002, %v1251, %v1255
        %v1257 = vshrl.u32 %v983, 16
        %v1259 = vrot.slane %v1257, 4
        %v1260 = vor.u32 %v1259, %v1255
        %v1261 = vrot.slane %v1260, 4
        %v1263 = vshll.u32 %v984, 16
        %v1265 = vrot.slane %v1263, 5
        %v1266 = vsel %vm1002, %v1261, %v1265
        %v1268 = vshrl.u32 %v985, 16
        %v1270 = vrot.slane %v1268, 4
        %v1271 = vshll.u32 %v985, 16
        %v1273 = vrot.slane %v1271, 5
        %v1274 = vor.u32 %v1270, %v1273
        %v1275 = vrot.slane %v1274, 4
        %v1277 = vshll.u32 %v986, 16
        %v1279 = vrot.slane %v1277, 5
        %v1280 = vsel %vm1002, %v1275, %v1279
        %v1281 = vshrl.u32 %v986, 16
        %v1283 = vrot.slane %v1281, 4
        %v1284 = vor.u32 %v1283, %v1279
        %v1285 = vrot.slane %v1284, 4
        %v1287 = vshll.u32 %v987, 16
        %v1289 = vrot.slane %v1287, 5
        %v1290 = vsel %vm1002, %v1285, %v1289
        %v1292 = vshrl.u32 %v988, 16
        %v1294 = vrot.slane %v1292, 4
        %v1295 = vshll.u32 %v988, 16
        %v1297 = vrot.slane %v1295, 5
        %v1298 = vor.u32 %v1294, %v1297
        %v1299 = vrot.slane %v1298, 4
        %v1301 = vshll.u32 %v989, 16
        %v1303 = vrot.slane %v1301, 5
        %v1304 = vsel %vm1002, %v1299, %v1303
        %v1305 = vshrl.u32 %v989, 16
        %v1307 = vrot.slane %v1305, 4
        %v1308 = vor.u32 %v1307, %v1303
        %v1309 = vrot.slane %v1308, 4
        %v1311 = vshll.u32 %v990, 16
        %v1313 = vrot.slane %v1311, 5
        %v1314 = vsel %vm1002, %v1309, %v1313
        %v1316 = vshrl.u32 %v991, 16
        %v1318 = vrot.slane %v1316, 4
        %v1319 = vshll.u32 %v991, 16
        %v1321 = vrot.slane %v1319, 5
        %v1322 = vor.u32 %v1318, %v1321
        %v1323 = vrot.slane %v1322, 4
        %v1325 = vshll.u32 %v992, 16
        %v1327 = vrot.slane %v1325, 5
        %v1328 = vsel %vm1002, %v1323, %v1327
        %v1329 = vshrl.u32 %v992, 16
        %v1331 = vrot.slane %v1329, 4
        %v1332 = vor.u32 %v1331, %v1327
        %v1333 = vrot.slane %v1332, 4
        %v1335 = vshll.u32 %v993, 16
        %v1337 = vrot.slane %v1335, 5
        %v1338 = vsel %vm1002, %v1333, %v1337
        %v1340 = vshrl.u32 %v994, 16
        %v1342 = vrot.slane %v1340, 4
        %v1343 = vshll.u32 %v994, 16
        %v1345 = vrot.slane %v1343, 5
        %v1346 = vor.u32 %v1342, %v1345
        %v1347 = vrot.slane %v1346, 4
        %v1349 = vshll.u32 %v995, 16
        %v1351 = vrot.slane %v1349, 5
        %v1352 = vsel %vm1002, %v1347, %v1351
        %v1353 = vshrl.u32 %v995, 16
        %v1355 = vrot.slane %v1353, 4
        %v1356 = vor.u32 %v1355, %v1351
        %v1357 = vrot.slane %v1356, 4
        %v1359 = vshll.u32 %v996, 16
        %v1361 = vrot.slane %v1359, 5
        %v1362 = vsel %vm1002, %v1357, %v1361
        %v1364 = vshrl.u32 %v997, 16
        %v1366 = vrot.slane %v1364, 4
        %v1367 = vshll.u32 %v997, 16
        %v1369 = vrot.slane %v1367, 5
        %v1370 = vor.u32 %v1366, %v1369
        %v1371 = vrot.slane %v1370, 4
        %v1373 = vshll.u32 %v998, 16
        %v1375 = vrot.slane %v1373, 5
        %v1376 = vsel %vm1002, %v1371, %v1375
        %v1377 = vshrl.u32 %v998, 16
        %v1379 = vrot.slane %v1377, 4
        %v1380 = vor.u32 %v1379, %v1375
        %v1381 = vrot.slane %v1380, 4
        %v1383 = vshll.u32 %v999, 16
        %v1385 = vrot.slane %v1383, 5
        %v1386 = vsel %vm1002, %v1381, %v1385
        %v1387 = vunpack.c.l.b16 %v1016
        %v1388 = vunpack.c.l.b16 %v1026
        %v1389 = vunpack.c.l.b16 %v1040
        %v1390 = vunpack.c.l.b16 %v1050
        %v1391 = vunpack.c.l.b16 %v1064
        %v1392 = vunpack.c.l.b16 %v1074
        %v1393 = vunpack.c.l.b16 %v1088
        %v1394 = vunpack.c.l.b16 %v1098
        %v1395 = vunpack.c.l.b16 %v1112
        %v1396 = vunpack.c.l.b16 %v1122
        %v1397 = vunpack.c.l.b16 %v1136
        %v1398 = vunpack.c.l.b16 %v1146
        %v1399 = vunpack.c.l.b16 %v1160
        %v1400 = vunpack.c.l.b16 %v1170
        %v1401 = vunpack.c.l.b16 %v1184
        %v1402 = vunpack.c.l.b16 %v1194
        %v1403 = vunpack.c.l.b16 %v1208
        %v1404 = vunpack.c.l.b16 %v1218
        %v1405 = vunpack.c.l.b16 %v1232
        %v1406 = vunpack.c.l.b16 %v1242
        %v1407 = vunpack.c.l.b16 %v1256
        %v1408 = vunpack.c.l.b16 %v1266
        %v1409 = vunpack.c.l.b16 %v1280
        %v1410 = vunpack.c.l.b16 %v1290
        %v1411 = vunpack.c.l.b16 %v1304
        %v1412 = vunpack.c.l.b16 %v1314
        %v1413 = vunpack.c.l.b16 %v1328
        %v1414 = vunpack.c.l.b16 %v1338
        %v1415 = vunpack.c.l.b16 %v1352
        %v1416 = vunpack.c.l.b16 %v1362
        %v1417 = vunpack.c.l.b16 %v1376
        %v1418 = vunpack.c.l.b16 %v1386
        %v1419 = vpack.c.b16 %v1388, %v1387
        %v1420 = vpack.c.b16 %v1390, %v1389
        %v1421 = vpack.c.b16 %v1392, %v1391
        %v1422 = vpack.c.b16 %v1394, %v1393
        %v1423 = vpack.c.b16 %v1396, %v1395
        %v1424 = vpack.c.b16 %v1398, %v1397
        %v1425 = vpack.c.b16 %v1400, %v1399
        %v1426 = vpack.c.b16 %v1402, %v1401
        %v1427 = vpack.c.b16 %v1404, %v1403
        %v1428 = vpack.c.b16 %v1406, %v1405
        %v1429 = vpack.c.b16 %v1408, %v1407
        %v1430 = vpack.c.b16 %v1410, %v1409
        %v1431 = vpack.c.b16 %v1412, %v1411
        %v1432 = vpack.c.b16 %v1414, %v1413
        %v1433 = vpack.c.b16 %v1416, %v1415
        %v1434 = vpack.c.b16 %v1418, %v1417
        %1435 = vrot.lane.b32.xlu0 %v1419, 32
        %v1436 = vpop.permute.xlu0 %1435
        %1437 = vrot.lane.b32.xlu0 %v1420, 32
        %v1438 = vpop.permute.xlu0 %1437
        %1439 = vrot.lane.b32.xlu0 %v1421, 32
        %v1440 = vpop.permute.xlu0 %1439
        %1441 = vrot.lane.b32.xlu0 %v1422, 32
        %v1442 = vpop.permute.xlu0 %1441
        %1443 = vrot.lane.b32.xlu0 %v1423, 32
        %v1444 = vpop.permute.xlu0 %1443
        %1445 = vrot.lane.b32.xlu0 %v1424, 32
        %v1446 = vpop.permute.xlu0 %1445
        %1447 = vrot.lane.b32.xlu0 %v1425, 32
        %v1448 = vpop.permute.xlu0 %1447
        %1449 = vrot.lane.b32.xlu0 %v1426, 32
        %v1450 = vpop.permute.xlu0 %1449
        %1451 = vrot.lane.b32.xlu0 %v1427, 32
        %v1452 = vpop.permute.xlu0 %1451
        %1453 = vrot.lane.b32.xlu0 %v1428, 32
        %v1454 = vpop.permute.xlu0 %1453
        %1455 = vrot.lane.b32.xlu0 %v1429, 32
        %v1456 = vpop.permute.xlu0 %1455
        %1457 = vrot.lane.b32.xlu0 %v1430, 32
        %v1458 = vpop.permute.xlu0 %1457
        %1459 = vrot.lane.b32.xlu0 %v1431, 32
        %v1460 = vpop.permute.xlu0 %1459
        %1461 = vrot.lane.b32.xlu0 %v1432, 32
        %v1462 = vpop.permute.xlu0 %1461
        %1463 = vrot.lane.b32.xlu0 %v1433, 32
        %v1464 = vpop.permute.xlu0 %1463
        %1465 = vrot.lane.b32.xlu0 %v1434, 32
        %v1466 = vpop.permute.xlu0 %1465
        %vm1483 = vcmask 523520
        %1484 = vst.msk [vmem:[#allocation3] sm:$0xff] %vm1483, %v1436
        %1485 = vst.msk [vmem:[#allocation3 + $0x18] sm:$0xff] %vm1483, %v1438
        %1486 = vst.msk [vmem:[#allocation3 + $0x30] sm:$0xff] %vm1483, %v1440
        %1487 = vst.msk [vmem:[#allocation3 + $0x48] sm:$0xff] %vm1483, %v1442
        %1488 = vst.msk [vmem:[#allocation3 + $0x60] sm:$0xff] %vm1483, %v1444
        %1489 = vst.msk [vmem:[#allocation3 + $0x78] sm:$0xff] %vm1483, %v1446
        %1490 = vst.msk [vmem:[#allocation3 + $0x90] sm:$0xff] %vm1483, %v1448
        %1491 = vst.msk [vmem:[#allocation3 + $0xa8] sm:$0xff] %vm1483, %v1450
        %1492 = vst.msk [vmem:[#allocation3 + $0xc0] sm:$0xff] %vm1483, %v1452
        %1493 = vst.msk [vmem:[#allocation3 + $0xd8] sm:$0xff] %vm1483, %v1454
        %1494 = vst.msk [vmem:[#allocation3 + $0xf0] sm:$0xff] %vm1483, %v1456
        %1495 = vst.msk [vmem:[#allocation3 + $0x108] sm:$0xff] %vm1483, %v1458
        %1496 = vst.msk [vmem:[#allocation3 + $0x120] sm:$0xff] %vm1483, %v1460
        %1497 = vst.msk [vmem:[#allocation3 + $0x138] sm:$0xff] %vm1483, %v1462
        %1498 = vst.msk [vmem:[#allocation3 + $0x150] sm:$0xff] %vm1483, %v1464
        %1499 = vst.msk [vmem:[#allocation3 + $0x168] sm:$0xff] %vm1483, %v1466
        %v1500 = vld [vmem:[#allocation2] sm:$0xe]
        %v1501 = vld [vmem:[#allocation2 + $0x4] sm:$0xf]
        %v1502 = vld [vmem:[#allocation2 + $0x8] sm:$0x1]
        %v1503 = vld [vmem:[#allocation2 + $0xc] sm:$0xe]
        %v1504 = vld [vmem:[#allocation2 + $0x10] sm:$0xf]
        %v1505 = vld [vmem:[#allocation2 + $0x14] sm:$0x1]
        %v1506 = vld [vmem:[#allocation2 + $0x18] sm:$0xe]
        %v1507 = vld [vmem:[#allocation2 + $0x1c] sm:$0xf]
        %v1508 = vld [vmem:[#allocation2 + $0x20] sm:$0x1]
        %v1509 = vld [vmem:[#allocation2 + $0x24] sm:$0xe]
        %v1510 = vld [vmem:[#allocation2 + $0x28] sm:$0xf]
        %v1511 = vld [vmem:[#allocation2 + $0x2c] sm:$0x1]
        %v1512 = vld [vmem:[#allocation2 + $0x30] sm:$0xe]
        %v1513 = vld [vmem:[#allocation2 + $0x34] sm:$0xf]
        %v1514 = vld [vmem:[#allocation2 + $0x38] sm:$0x1]
        %v1515 = vld [vmem:[#allocation2 + $0x3c] sm:$0xe]
        %v1516 = vld [vmem:[#allocation2 + $0x40] sm:$0xf]
        %v1517 = vld [vmem:[#allocation2 + $0x44] sm:$0x1]
        %v1518 = vld [vmem:[#allocation2 + $0x48] sm:$0xe]
        %v1519 = vld [vmem:[#allocation2 + $0x4c] sm:$0xf]
        %v1520 = vld [vmem:[#allocation2 + $0x50] sm:$0x1]
        %v1521 = vld [vmem:[#allocation2 + $0x54] sm:$0xe]
        %v1522 = vld [vmem:[#allocation2 + $0x58] sm:$0xf]
        %v1523 = vld [vmem:[#allocation2 + $0x5c] sm:$0x1]
        %v1524 = vld [vmem:[#allocation2 + $0x60] sm:$0xe]
        %v1525 = vld [vmem:[#allocation2 + $0x64] sm:$0xf]
        %v1526 = vld [vmem:[#allocation2 + $0x68] sm:$0x1]
        %v1527 = vld [vmem:[#allocation2 + $0x6c] sm:$0xe]
        %v1528 = vld [vmem:[#allocation2 + $0x70] sm:$0xf]
        %v1529 = vld [vmem:[#allocation2 + $0x74] sm:$0x1]
        %v1530 = vld [vmem:[#allocation2 + $0x78] sm:$0xe]
        %v1531 = vld [vmem:[#allocation2 + $0x7c] sm:$0xf]
        %v1532 = vld [vmem:[#allocation2 + $0x80] sm:$0x1]
        %v1533 = vld [vmem:[#allocation2 + $0x84] sm:$0xe]
        %v1534 = vld [vmem:[#allocation2 + $0x88] sm:$0xf]
        %v1535 = vld [vmem:[#allocation2 + $0x8c] sm:$0x1]
        %v1536 = vld [vmem:[#allocation2 + $0x90] sm:$0xe]
        %v1537 = vld [vmem:[#allocation2 + $0x94] sm:$0xf]
        %v1538 = vld [vmem:[#allocation2 + $0x98] sm:$0x1]
        %v1539 = vld [vmem:[#allocation2 + $0x9c] sm:$0xe]
        %v1540 = vld [vmem:[#allocation2 + $0xa0] sm:$0xf]
        %v1541 = vld [vmem:[#allocation2 + $0xa4] sm:$0x1]
        %v1542 = vld [vmem:[#allocation2 + $0xa8] sm:$0xe]
        %v1543 = vld [vmem:[#allocation2 + $0xac] sm:$0xf]
        %v1544 = vld [vmem:[#allocation2 + $0xb0] sm:$0x1]
        %v1545 = vld [vmem:[#allocation2 + $0xb4] sm:$0xe]
        %v1546 = vld [vmem:[#allocation2 + $0xb8] sm:$0xf]
        %v1547 = vld [vmem:[#allocation2 + $0xbc] sm:$0x1]
        %vm1596 = vcmask 1042432
        %vm1597 = vcmask 1046532
        %vm1598 = vmor %vm1596, %vm1597
        %v1599 = vrot.slane %v1500, 5
        %v1600 = vrot.slane %v1599, 4
        %v1601 = vrot.slane %v1501, 5
        %v1602 = vsel %vm1598, %v1600, %v1601
        %v1603 = vrot.slane %v1601, 4
        %v1604 = vrot.slane %v1502, 5
        %v1605 = vsel %vm1598, %v1603, %v1604
        %v1606 = vrot.slane %v1503, 5
        %v1607 = vrot.slane %v1606, 4
        %v1608 = vrot.slane %v1504, 5
        %v1609 = vsel %vm1598, %v1607, %v1608
        %v1610 = vrot.slane %v1608, 4
        %v1611 = vrot.slane %v1505, 5
        %v1612 = vsel %vm1598, %v1610, %v1611
        %v1613 = vrot.slane %v1506, 5
        %v1614 = vrot.slane %v1613, 4
        %v1615 = vrot.slane %v1507, 5
        %v1616 = vsel %vm1598, %v1614, %v1615
        %v1617 = vrot.slane %v1615, 4
        %v1618 = vrot.slane %v1508, 5
        %v1619 = vsel %vm1598, %v1617, %v1618
        %v1620 = vrot.slane %v1509, 5
        %v1621 = vrot.slane %v1620, 4
        %v1622 = vrot.slane %v1510, 5
        %v1623 = vsel %vm1598, %v1621, %v1622
        %v1624 = vrot.slane %v1622, 4
        %v1625 = vrot.slane %v1511, 5
        %v1626 = vsel %vm1598, %v1624, %v1625
        %v1627 = vrot.slane %v1512, 5
        %v1628 = vrot.slane %v1627, 4
        %v1629 = vrot.slane %v1513, 5
        %v1630 = vsel %vm1598, %v1628, %v1629
        %v1631 = vrot.slane %v1629, 4
        %v1632 = vrot.slane %v1514, 5
        %v1633 = vsel %vm1598, %v1631, %v1632
        %v1634 = vrot.slane %v1515, 5
        %v1635 = vrot.slane %v1634, 4
        %v1636 = vrot.slane %v1516, 5
        %v1637 = vsel %vm1598, %v1635, %v1636
        %v1638 = vrot.slane %v1636, 4
        %v1639 = vrot.slane %v1517, 5
        %v1640 = vsel %vm1598, %v1638, %v1639
        %v1641 = vrot.slane %v1518, 5
        %v1642 = vrot.slane %v1641, 4
        %v1643 = vrot.slane %v1519, 5
        %v1644 = vsel %vm1598, %v1642, %v1643
        %v1645 = vrot.slane %v1643, 4
        %v1646 = vrot.slane %v1520, 5
        %v1647 = vsel %vm1598, %v1645, %v1646
        %v1648 = vrot.slane %v1521, 5
        %v1649 = vrot.slane %v1648, 4
        %v1650 = vrot.slane %v1522, 5
        %v1651 = vsel %vm1598, %v1649, %v1650
        %v1652 = vrot.slane %v1650, 4
        %v1653 = vrot.slane %v1523, 5
        %v1654 = vsel %vm1598, %v1652, %v1653
        %v1655 = vrot.slane %v1524, 5
        %v1656 = vrot.slane %v1655, 4
        %v1657 = vrot.slane %v1525, 5
        %v1658 = vsel %vm1598, %v1656, %v1657
        %v1659 = vrot.slane %v1657, 4
        %v1660 = vrot.slane %v1526, 5
        %v1661 = vsel %vm1598, %v1659, %v1660
        %v1662 = vrot.slane %v1527, 5
        %v1663 = vrot.slane %v1662, 4
        %v1664 = vrot.slane %v1528, 5
        %v1665 = vsel %vm1598, %v1663, %v1664
        %v1666 = vrot.slane %v1664, 4
        %v1667 = vrot.slane %v1529, 5
        %v1668 = vsel %vm1598, %v1666, %v1667
        %v1669 = vrot.slane %v1530, 5
        %v1670 = vrot.slane %v1669, 4
        %v1671 = vrot.slane %v1531, 5
        %v1672 = vsel %vm1598, %v1670, %v1671
        %v1673 = vrot.slane %v1671, 4
        %v1674 = vrot.slane %v1532, 5
        %v1675 = vsel %vm1598, %v1673, %v1674
        %v1676 = vrot.slane %v1533, 5
        %v1677 = vrot.slane %v1676, 4
        %v1678 = vrot.slane %v1534, 5
        %v1679 = vsel %vm1598, %v1677, %v1678
        %v1680 = vrot.slane %v1678, 4
        %v1681 = vrot.slane %v1535, 5
        %v1682 = vsel %vm1598, %v1680, %v1681
        %v1683 = vrot.slane %v1536, 5
        %v1684 = vrot.slane %v1683, 4
        %v1685 = vrot.slane %v1537, 5
        %v1686 = vsel %vm1598, %v1684, %v1685
        %v1687 = vrot.slane %v1685, 4
        %v1688 = vrot.slane %v1538, 5
        %v1689 = vsel %vm1598, %v1687, %v1688
        %v1690 = vrot.slane %v1539, 5
        %v1691 = vrot.slane %v1690, 4
        %v1692 = vrot.slane %v1540, 5
        %v1693 = vsel %vm1598, %v1691, %v1692
        %v1694 = vrot.slane %v1692, 4
        %v1695 = vrot.slane %v1541, 5
        %v1696 = vsel %vm1598, %v1694, %v1695
        %v1697 = vrot.slane %v1542, 5
        %v1698 = vrot.slane %v1697, 4
        %v1699 = vrot.slane %v1543, 5
        %v1700 = vsel %vm1598, %v1698, %v1699
        %v1701 = vrot.slane %v1699, 4
        %v1702 = vrot.slane %v1544, 5
        %v1703 = vsel %vm1598, %v1701, %v1702
        %v1704 = vrot.slane %v1545, 5
        %v1705 = vrot.slane %v1704, 4
        %v1706 = vrot.slane %v1546, 5
        %v1707 = vsel %vm1598, %v1705, %v1706
        %v1708 = vrot.slane %v1706, 4
        %v1709 = vrot.slane %v1547, 5
        %v1710 = vsel %vm1598, %v1708, %v1709
        %v1711 = vunpack.c.l.b16 %v1602
        %v1712 = vunpack.c.l.b16 %v1605
        %v1713 = vunpack.c.l.b16 %v1609
        %v1714 = vunpack.c.l.b16 %v1612
        %v1715 = vunpack.c.l.b16 %v1616
        %v1716 = vunpack.c.l.b16 %v1619
        %v1717 = vunpack.c.l.b16 %v1623
        %v1718 = vunpack.c.l.b16 %v1626
        %v1719 = vunpack.c.l.b16 %v1630
        %v1720 = vunpack.c.l.b16 %v1633
        %v1721 = vunpack.c.l.b16 %v1637
        %v1722 = vunpack.c.l.b16 %v1640
        %v1723 = vunpack.c.l.b16 %v1644
        %v1724 = vunpack.c.l.b16 %v1647
        %v1725 = vunpack.c.l.b16 %v1651
        %v1726 = vunpack.c.l.b16 %v1654
        %v1727 = vunpack.c.l.b16 %v1658
        %v1728 = vunpack.c.l.b16 %v1661
        %v1729 = vunpack.c.l.b16 %v1665
        %v1730 = vunpack.c.l.b16 %v1668
        %v1731 = vunpack.c.l.b16 %v1672
        %v1732 = vunpack.c.l.b16 %v1675
        %v1733 = vunpack.c.l.b16 %v1679
        %v1734 = vunpack.c.l.b16 %v1682
        %v1735 = vunpack.c.l.b16 %v1686
        %v1736 = vunpack.c.l.b16 %v1689
        %v1737 = vunpack.c.l.b16 %v1693
        %v1738 = vunpack.c.l.b16 %v1696
        %v1739 = vunpack.c.l.b16 %v1700
        %v1740 = vunpack.c.l.b16 %v1703
        %v1741 = vunpack.c.l.b16 %v1707
        %v1742 = vunpack.c.l.b16 %v1710
        %v1743 = vpack.c.b16 %v1712, %v1711
        %v1744 = vpack.c.b16 %v1714, %v1713
        %v1745 = vpack.c.b16 %v1716, %v1715
        %v1746 = vpack.c.b16 %v1718, %v1717
        %v1747 = vpack.c.b16 %v1720, %v1719
        %v1748 = vpack.c.b16 %v1722, %v1721
        %v1749 = vpack.c.b16 %v1724, %v1723
        %v1750 = vpack.c.b16 %v1726, %v1725
        %v1751 = vpack.c.b16 %v1728, %v1727
        %v1752 = vpack.c.b16 %v1730, %v1729
        %v1753 = vpack.c.b16 %v1732, %v1731
        %v1754 = vpack.c.b16 %v1734, %v1733
        %v1755 = vpack.c.b16 %v1736, %v1735
        %v1756 = vpack.c.b16 %v1738, %v1737
        %v1757 = vpack.c.b16 %v1740, %v1739
        %v1758 = vpack.c.b16 %v1742, %v1741
        %1759 = vrot.lane.b32.xlu0 %v1743, 64
        %v1760 = vpop.permute.xlu0 %1759
        %1761 = vrot.lane.b32.xlu0 %v1744, 64
        %v1762 = vpop.permute.xlu0 %1761
        %1763 = vrot.lane.b32.xlu0 %v1745, 64
        %v1764 = vpop.permute.xlu0 %1763
        %1765 = vrot.lane.b32.xlu0 %v1746, 64
        %v1766 = vpop.permute.xlu0 %1765
        %1767 = vrot.lane.b32.xlu0 %v1747, 64
        %v1768 = vpop.permute.xlu0 %1767
        %1769 = vrot.lane.b32.xlu0 %v1748, 64
        %v1770 = vpop.permute.xlu0 %1769
        %1771 = vrot.lane.b32.xlu0 %v1749, 64
        %v1772 = vpop.permute.xlu0 %1771
        %1773 = vrot.lane.b32.xlu0 %v1750, 64
        %v1774 = vpop.permute.xlu0 %1773
        %1775 = vrot.lane.b32.xlu0 %v1751, 64
        %v1776 = vpop.permute.xlu0 %1775
        %1777 = vrot.lane.b32.xlu0 %v1752, 64
        %v1778 = vpop.permute.xlu0 %1777
        %1779 = vrot.lane.b32.xlu0 %v1753, 64
        %v1780 = vpop.permute.xlu0 %1779
        %1781 = vrot.lane.b32.xlu0 %v1754, 64
        %v1782 = vpop.permute.xlu0 %1781
        %1783 = vrot.lane.b32.xlu0 %v1755, 64
        %v1784 = vpop.permute.xlu0 %1783
        %1785 = vrot.lane.b32.xlu0 %v1756, 64
        %v1786 = vpop.permute.xlu0 %1785
        %1787 = vrot.lane.b32.xlu0 %v1757, 64
        %v1788 = vpop.permute.xlu0 %1787
        %1789 = vrot.lane.b32.xlu0 %v1758, 64
        %v1790 = vpop.permute.xlu0 %1789
        %vm1807 = vcmask 785920
        %1808 = vst.msk [vmem:[#allocation3] sm:$0xff] %vm1807, %v1760
        %1809 = vst.msk [vmem:[#allocation3 + $0x18] sm:$0xff] %vm1807, %v1762
        %1810 = vst.msk [vmem:[#allocation3 + $0x30] sm:$0xff] %vm1807, %v1764
        %1811 = vst.msk [vmem:[#allocation3 + $0x48] sm:$0xff] %vm1807, %v1766
        %1812 = vst.msk [vmem:[#allocation3 + $0x60] sm:$0xff] %vm1807, %v1768
        %1813 = vst.msk [vmem:[#allocation3 + $0x78] sm:$0xff] %vm1807, %v1770
        %1814 = vst.msk [vmem:[#allocation3 + $0x90] sm:$0xff] %vm1807, %v1772
        %1815 = vst.msk [vmem:[#allocation3 + $0xa8] sm:$0xff] %vm1807, %v1774
        %1816 = vst.msk [vmem:[#allocation3 + $0xc0] sm:$0xff] %vm1807, %v1776
        %1817 = vst.msk [vmem:[#allocation3 + $0xd8] sm:$0xff] %vm1807, %v1778
        %1818 = vst.msk [vmem:[#allocation3 + $0xf0] sm:$0xff] %vm1807, %v1780
        %1819 = vst.msk [vmem:[#allocation3 + $0x108] sm:$0xff] %vm1807, %v1782
        %1820 = vst.msk [vmem:[#allocation3 + $0x120] sm:$0xff] %vm1807, %v1784
        %1821 = vst.msk [vmem:[#allocation3 + $0x138] sm:$0xff] %vm1807, %v1786
        %1822 = vst.msk [vmem:[#allocation3 + $0x150] sm:$0xff] %vm1807, %v1788
        %1823 = vst.msk [vmem:[#allocation3 + $0x168] sm:$0xff] %vm1807, %v1790
        %v1824 = vld [vmem:[%s689] sm:$0xf]
        %v1825 = vld [vmem:[%s689 + $0x4] sm:$0xf]
        %v1826 = vld [vmem:[%s689 + $0xc] sm:$0xf]
        %v1827 = vld [vmem:[%s689 + $0x10] sm:$0xf]
        %v1828 = vld [vmem:[%s689 + $0x18] sm:$0xf]
        %v1829 = vld [vmem:[%s689 + $0x1c] sm:$0xf]
        %v1830 = vld [vmem:[%s689 + $0x24] sm:$0xf]
        %v1831 = vld [vmem:[%s689 + $0x28] sm:$0xf]
        %v1832 = vld [vmem:[%s689 + $0x30] sm:$0xf]
        %v1833 = vld [vmem:[%s689 + $0x34] sm:$0xf]
        %v1834 = vld [vmem:[%s689 + $0x3c] sm:$0xf]
        %v1835 = vld [vmem:[%s689 + $0x40] sm:$0xf]
        %v1836 = vld [vmem:[%s689 + $0x48] sm:$0xf]
        %v1837 = vld [vmem:[%s689 + $0x4c] sm:$0xf]
        %v1838 = vld [vmem:[%s689 + $0x54] sm:$0xf]
        %v1839 = vld [vmem:[%s689 + $0x58] sm:$0xf]
        %v1840 = vld [vmem:[%s689 + $0x60] sm:$0xf]
        %v1841 = vld [vmem:[%s689 + $0x64] sm:$0xf]
        %v1842 = vld [vmem:[%s689 + $0x6c] sm:$0xf]
        %v1843 = vld [vmem:[%s689 + $0x70] sm:$0xf]
        %v1844 = vld [vmem:[%s689 + $0x78] sm:$0xf]
        %v1845 = vld [vmem:[%s689 + $0x7c] sm:$0xf]
        %v1846 = vld [vmem:[%s689 + $0x84] sm:$0xf]
        %v1847 = vld [vmem:[%s689 + $0x88] sm:$0xf]
        %v1848 = vld [vmem:[%s689 + $0x90] sm:$0xf]
        %v1849 = vld [vmem:[%s689 + $0x94] sm:$0xf]
        %v1850 = vld [vmem:[%s689 + $0x9c] sm:$0xf]
        %v1851 = vld [vmem:[%s689 + $0xa0] sm:$0xf]
        %v1852 = vld [vmem:[%s689 + $0xa8] sm:$0xf]
        %v1853 = vld [vmem:[%s689 + $0xac] sm:$0xf]
        %v1854 = vld [vmem:[%s689 + $0xb4] sm:$0xf]
        %v1855 = vld [vmem:[%s689 + $0xb8] sm:$0xf]
        %v1888 = vunpack.c.l.b16 %v1824
        %v1889 = vunpack.c.l.b16 %v1825
        %v1890 = vunpack.c.l.b16 %v1826
        %v1891 = vunpack.c.l.b16 %v1827
        %v1892 = vunpack.c.l.b16 %v1828
        %v1893 = vunpack.c.l.b16 %v1829
        %v1894 = vunpack.c.l.b16 %v1830
        %v1895 = vunpack.c.l.b16 %v1831
        %v1896 = vunpack.c.l.b16 %v1832
        %v1897 = vunpack.c.l.b16 %v1833
        %v1898 = vunpack.c.l.b16 %v1834
        %v1899 = vunpack.c.l.b16 %v1835
        %v1900 = vunpack.c.l.b16 %v1836
        %v1901 = vunpack.c.l.b16 %v1837
        %v1902 = vunpack.c.l.b16 %v1838
        %v1903 = vunpack.c.l.b16 %v1839
        %v1904 = vunpack.c.l.b16 %v1840
        %v1905 = vunpack.c.l.b16 %v1841
        %v1906 = vunpack.c.l.b16 %v1842
        %v1907 = vunpack.c.l.b16 %v1843
        %v1908 = vunpack.c.l.b16 %v1844
        %v1909 = vunpack.c.l.b16 %v1845
        %v1910 = vunpack.c.l.b16 %v1846
        %v1911 = vunpack.c.l.b16 %v1847
        %v1912 = vunpack.c.l.b16 %v1848
        %v1913 = vunpack.c.l.b16 %v1849
        %v1914 = vunpack.c.l.b16 %v1850
        %v1915 = vunpack.c.l.b16 %v1851
        %v1916 = vunpack.c.l.b16 %v1852
        %v1917 = vunpack.c.l.b16 %v1853
        %v1918 = vunpack.c.l.b16 %v1854
        %v1919 = vunpack.c.l.b16 %v1855
        %v1920 = vpack.c.b16 %v1889, %v1888
        %v1921 = vpack.c.b16 %v1891, %v1890
        %v1922 = vpack.c.b16 %v1893, %v1892
        %v1923 = vpack.c.b16 %v1895, %v1894
        %v1924 = vpack.c.b16 %v1897, %v1896
        %v1925 = vpack.c.b16 %v1899, %v1898
        %v1926 = vpack.c.b16 %v1901, %v1900
        %v1927 = vpack.c.b16 %v1903, %v1902
        %v1928 = vpack.c.b16 %v1905, %v1904
        %v1929 = vpack.c.b16 %v1907, %v1906
        %v1930 = vpack.c.b16 %v1909, %v1908
        %v1931 = vpack.c.b16 %v1911, %v1910
        %v1932 = vpack.c.b16 %v1913, %v1912
        %v1933 = vpack.c.b16 %v1915, %v1914
        %v1934 = vpack.c.b16 %v1917, %v1916
        %v1935 = vpack.c.b16 %v1919, %v1918
        %1936 = vrot.lane.b32.xlu0 %v1920, 96
        %v1937 = vpop.permute.xlu0 %1936
        %1938 = vrot.lane.b32.xlu0 %v1921, 96
        %v1939 = vpop.permute.xlu0 %1938
        %1940 = vrot.lane.b32.xlu0 %v1922, 96
        %v1941 = vpop.permute.xlu0 %1940
        %1942 = vrot.lane.b32.xlu0 %v1923, 96
        %v1943 = vpop.permute.xlu0 %1942
        %1944 = vrot.lane.b32.xlu0 %v1924, 96
        %v1945 = vpop.permute.xlu0 %1944
        %1946 = vrot.lane.b32.xlu0 %v1925, 96
        %v1947 = vpop.permute.xlu0 %1946
        %1948 = vrot.lane.b32.xlu0 %v1926, 96
        %v1949 = vpop.permute.xlu0 %1948
        %1950 = vrot.lane.b32.xlu0 %v1927, 96
        %v1951 = vpop.permute.xlu0 %1950
        %1952 = vrot.lane.b32.xlu0 %v1928, 96
        %v1953 = vpop.permute.xlu0 %1952
        %1954 = vrot.lane.b32.xlu0 %v1929, 96
        %v1955 = vpop.permute.xlu0 %1954
        %1956 = vrot.lane.b32.xlu0 %v1930, 96
        %v1957 = vpop.permute.xlu0 %1956
        %1958 = vrot.lane.b32.xlu0 %v1931, 96
        %v1959 = vpop.permute.xlu0 %1958
        %1960 = vrot.lane.b32.xlu0 %v1932, 96
        %v1961 = vpop.permute.xlu0 %1960
        %1962 = vrot.lane.b32.xlu0 %v1933, 96
        %v1963 = vpop.permute.xlu0 %1962
        %1964 = vrot.lane.b32.xlu0 %v1934, 96
        %v1965 = vpop.permute.xlu0 %1964
        %1966 = vrot.lane.b32.xlu0 %v1935, 96
        %v1967 = vpop.permute.xlu0 %1966
        %vm1984 = vcmask 1048320
        %1985 = vst.msk [vmem:[#allocation3] sm:$0xff] %vm1984, %v1937
        %1986 = vst.msk [vmem:[#allocation3 + $0x18] sm:$0xff] %vm1984, %v1939
        %1987 = vst.msk [vmem:[#allocation3 + $0x30] sm:$0xff] %vm1984, %v1941
        %1988 = vst.msk [vmem:[#allocation3 + $0x48] sm:$0xff] %vm1984, %v1943
        %1989 = vst.msk [vmem:[#allocation3 + $0x60] sm:$0xff] %vm1984, %v1945
        %1990 = vst.msk [vmem:[#allocation3 + $0x78] sm:$0xff] %vm1984, %v1947
        %1991 = vst.msk [vmem:[#allocation3 + $0x90] sm:$0xff] %vm1984, %v1949
        %1992 = vst.msk [vmem:[#allocation3 + $0xa8] sm:$0xff] %vm1984, %v1951
        %1993 = vst.msk [vmem:[#allocation3 + $0xc0] sm:$0xff] %vm1984, %v1953
        %1994 = vst.msk [vmem:[#allocation3 + $0xd8] sm:$0xff] %vm1984, %v1955
        %1995 = vst.msk [vmem:[#allocation3 + $0xf0] sm:$0xff] %vm1984, %v1957
        %1996 = vst.msk [vmem:[#allocation3 + $0x108] sm:$0xff] %vm1984, %v1959
        %1997 = vst.msk [vmem:[#allocation3 + $0x120] sm:$0xff] %vm1984, %v1961
        %1998 = vst.msk [vmem:[#allocation3 + $0x138] sm:$0xff] %vm1984, %v1963
        %1999 = vst.msk [vmem:[#allocation3 + $0x150] sm:$0xff] %vm1984, %v1965
        %2000 = vst.msk [vmem:[#allocation3 + $0x168] sm:$0xff] %vm1984, %v1967
        %v2001 = vld [vmem:[%s689] sm:$0xf]
        %v2002 = vld [vmem:[%s689 + $0x4] sm:$0xf]
        %v2003 = vld [vmem:[%s689 + $0x8] sm:$0x1]
        %v2004 = vld [vmem:[%s689 + $0xc] sm:$0xf]
        %v2005 = vld [vmem:[%s689 + $0x10] sm:$0xf]
        %v2006 = vld [vmem:[%s689 + $0x14] sm:$0x1]
        %v2007 = vld [vmem:[%s689 + $0x18] sm:$0xf]
        %v2008 = vld [vmem:[%s689 + $0x1c] sm:$0xf]
        %v2009 = vld [vmem:[%s689 + $0x20] sm:$0x1]
        %v2010 = vld [vmem:[%s689 + $0x24] sm:$0xf]
        %v2011 = vld [vmem:[%s689 + $0x28] sm:$0xf]
        %v2012 = vld [vmem:[%s689 + $0x2c] sm:$0x1]
        %v2013 = vld [vmem:[%s689 + $0x30] sm:$0xf]
        %v2014 = vld [vmem:[%s689 + $0x34] sm:$0xf]
        %v2015 = vld [vmem:[%s689 + $0x38] sm:$0x1]
        %v2016 = vld [vmem:[%s689 + $0x3c] sm:$0xf]
        %v2017 = vld [vmem:[%s689 + $0x40] sm:$0xf]
        %v2018 = vld [vmem:[%s689 + $0x44] sm:$0x1]
        %v2019 = vld [vmem:[%s689 + $0x48] sm:$0xf]
        %v2020 = vld [vmem:[%s689 + $0x4c] sm:$0xf]
        %v2021 = vld [vmem:[%s689 + $0x50] sm:$0x1]
        %v2022 = vld [vmem:[%s689 + $0x54] sm:$0xf]
        %v2023 = vld [vmem:[%s689 + $0x58] sm:$0xf]
        %v2024 = vld [vmem:[%s689 + $0x5c] sm:$0x1]
        %v2025 = vld [vmem:[%s689 + $0x60] sm:$0xf]
        %v2026 = vld [vmem:[%s689 + $0x64] sm:$0xf]
        %v2027 = vld [vmem:[%s689 + $0x68] sm:$0x1]
        %v2028 = vld [vmem:[%s689 + $0x6c] sm:$0xf]
        %v2029 = vld [vmem:[%s689 + $0x70] sm:$0xf]
        %v2030 = vld [vmem:[%s689 + $0x74] sm:$0x1]
        %v2031 = vld [vmem:[%s689 + $0x78] sm:$0xf]
        %v2032 = vld [vmem:[%s689 + $0x7c] sm:$0xf]
        %v2033 = vld [vmem:[%s689 + $0x80] sm:$0x1]
        %v2034 = vld [vmem:[%s689 + $0x84] sm:$0xf]
        %v2035 = vld [vmem:[%s689 + $0x88] sm:$0xf]
        %v2036 = vld [vmem:[%s689 + $0x8c] sm:$0x1]
        %v2037 = vld [vmem:[%s689 + $0x90] sm:$0xf]
        %v2038 = vld [vmem:[%s689 + $0x94] sm:$0xf]
        %v2039 = vld [vmem:[%s689 + $0x98] sm:$0x1]
        %v2040 = vld [vmem:[%s689 + $0x9c] sm:$0xf]
        %v2041 = vld [vmem:[%s689 + $0xa0] sm:$0xf]
        %v2042 = vld [vmem:[%s689 + $0xa4] sm:$0x1]
        %v2043 = vld [vmem:[%s689 + $0xa8] sm:$0xf]
        %v2044 = vld [vmem:[%s689 + $0xac] sm:$0xf]
        %v2045 = vld [vmem:[%s689 + $0xb0] sm:$0x1]
        %v2046 = vld [vmem:[%s689 + $0xb4] sm:$0xf]
        %v2047 = vld [vmem:[%s689 + $0xb8] sm:$0xf]
        %v2048 = vld [vmem:[%s689 + $0xbc] sm:$0x1]
        %v2050 = vshrl.u32 %v2001, 16
        %v2052 = vrot.slane %v2050, 4
        %v2053 = vshll.u32 %v2001, 16
        %v2055 = vrot.slane %v2053, 5
        %v2056 = vor.u32 %v2052, %v2055
        %v2057 = vrot.slane %v2056, 4
        %v2059 = vshll.u32 %v2002, 16
        %v2061 = vrot.slane %v2059, 5
        %v2062 = vsel %vm1002, %v2057, %v2061
        %v2063 = vshrl.u32 %v2002, 16
        %v2065 = vrot.slane %v2063, 4
        %v2066 = vor.u32 %v2065, %v2061
        %v2067 = vrot.slane %v2066, 4
        %v2069 = vshll.u32 %v2003, 16
        %v2071 = vrot.slane %v2069, 5
        %v2072 = vsel %vm1002, %v2067, %v2071
        %v2074 = vshrl.u32 %v2004, 16
        %v2076 = vrot.slane %v2074, 4
        %v2077 = vshll.u32 %v2004, 16
        %v2079 = vrot.slane %v2077, 5
        %v2080 = vor.u32 %v2076, %v2079
        %v2081 = vrot.slane %v2080, 4
        %v2083 = vshll.u32 %v2005, 16
        %v2085 = vrot.slane %v2083, 5
        %v2086 = vsel %vm1002, %v2081, %v2085
        %v2087 = vshrl.u32 %v2005, 16
        %v2089 = vrot.slane %v2087, 4
        %v2090 = vor.u32 %v2089, %v2085
        %v2091 = vrot.slane %v2090, 4
        %v2093 = vshll.u32 %v2006, 16
        %v2095 = vrot.slane %v2093, 5
        %v2096 = vsel %vm1002, %v2091, %v2095
        %v2098 = vshrl.u32 %v2007, 16
        %v2100 = vrot.slane %v2098, 4
        %v2101 = vshll.u32 %v2007, 16
        %v2103 = vrot.slane %v2101, 5
        %v2104 = vor.u32 %v2100, %v2103
        %v2105 = vrot.slane %v2104, 4
        %v2107 = vshll.u32 %v2008, 16
        %v2109 = vrot.slane %v2107, 5
        %v2110 = vsel %vm1002, %v2105, %v2109
        %v2111 = vshrl.u32 %v2008, 16
        %v2113 = vrot.slane %v2111, 4
        %v2114 = vor.u32 %v2113, %v2109
        %v2115 = vrot.slane %v2114, 4
        %v2117 = vshll.u32 %v2009, 16
        %v2119 = vrot.slane %v2117, 5
        %v2120 = vsel %vm1002, %v2115, %v2119
        %v2122 = vshrl.u32 %v2010, 16
        %v2124 = vrot.slane %v2122, 4
        %v2125 = vshll.u32 %v2010, 16
        %v2127 = vrot.slane %v2125, 5
        %v2128 = vor.u32 %v2124, %v2127
        %v2129 = vrot.slane %v2128, 4
        %v2131 = vshll.u32 %v2011, 16
        %v2133 = vrot.slane %v2131, 5
        %v2134 = vsel %vm1002, %v2129, %v2133
        %v2135 = vshrl.u32 %v2011, 16
        %v2137 = vrot.slane %v2135, 4
        %v2138 = vor.u32 %v2137, %v2133
        %v2139 = vrot.slane %v2138, 4
        %v2141 = vshll.u32 %v2012, 16
        %v2143 = vrot.slane %v2141, 5
        %v2144 = vsel %vm1002, %v2139, %v2143
        %v2146 = vshrl.u32 %v2013, 16
        %v2148 = vrot.slane %v2146, 4
        %v2149 = vshll.u32 %v2013, 16
        %v2151 = vrot.slane %v2149, 5
        %v2152 = vor.u32 %v2148, %v2151
        %v2153 = vrot.slane %v2152, 4
        %v2155 = vshll.u32 %v2014, 16
        %v2157 = vrot.slane %v2155, 5
        %v2158 = vsel %vm1002, %v2153, %v2157
        %v2159 = vshrl.u32 %v2014, 16
        %v2161 = vrot.slane %v2159, 4
        %v2162 = vor.u32 %v2161, %v2157
        %v2163 = vrot.slane %v2162, 4
        %v2165 = vshll.u32 %v2015, 16
        %v2167 = vrot.slane %v2165, 5
        %v2168 = vsel %vm1002, %v2163, %v2167
        %v2170 = vshrl.u32 %v2016, 16
        %v2172 = vrot.slane %v2170, 4
        %v2173 = vshll.u32 %v2016, 16
        %v2175 = vrot.slane %v2173, 5
        %v2176 = vor.u32 %v2172, %v2175
        %v2177 = vrot.slane %v2176, 4
        %v2179 = vshll.u32 %v2017, 16
        %v2181 = vrot.slane %v2179, 5
        %v2182 = vsel %vm1002, %v2177, %v2181
        %v2183 = vshrl.u32 %v2017, 16
        %v2185 = vrot.slane %v2183, 4
        %v2186 = vor.u32 %v2185, %v2181
        %v2187 = vrot.slane %v2186, 4
        %v2189 = vshll.u32 %v2018, 16
        %v2191 = vrot.slane %v2189, 5
        %v2192 = vsel %vm1002, %v2187, %v2191
        %v2194 = vshrl.u32 %v2019, 16
        %v2196 = vrot.slane %v2194, 4
        %v2197 = vshll.u32 %v2019, 16
        %v2199 = vrot.slane %v2197, 5
        %v2200 = vor.u32 %v2196, %v2199
        %v2201 = vrot.slane %v2200, 4
        %v2203 = vshll.u32 %v2020, 16
        %v2205 = vrot.slane %v2203, 5
        %v2206 = vsel %vm1002, %v2201, %v2205
        %v2207 = vshrl.u32 %v2020, 16
        %v2209 = vrot.slane %v2207, 4
        %v2210 = vor.u32 %v2209, %v2205
        %v2211 = vrot.slane %v2210, 4
        %v2213 = vshll.u32 %v2021, 16
        %v2215 = vrot.slane %v2213, 5
        %v2216 = vsel %vm1002, %v2211, %v2215
        %v2218 = vshrl.u32 %v2022, 16
        %v2220 = vrot.slane %v2218, 4
        %v2221 = vshll.u32 %v2022, 16
        %v2223 = vrot.slane %v2221, 5
        %v2224 = vor.u32 %v2220, %v2223
        %v2225 = vrot.slane %v2224, 4
        %v2227 = vshll.u32 %v2023, 16
        %v2229 = vrot.slane %v2227, 5
        %v2230 = vsel %vm1002, %v2225, %v2229
        %v2231 = vshrl.u32 %v2023, 16
        %v2233 = vrot.slane %v2231, 4
        %v2234 = vor.u32 %v2233, %v2229
        %v2235 = vrot.slane %v2234, 4
        %v2237 = vshll.u32 %v2024, 16
        %v2239 = vrot.slane %v2237, 5
        %v2240 = vsel %vm1002, %v2235, %v2239
        %v2242 = vshrl.u32 %v2025, 16
        %v2244 = vrot.slane %v2242, 4
        %v2245 = vshll.u32 %v2025, 16
        %v2247 = vrot.slane %v2245, 5
        %v2248 = vor.u32 %v2244, %v2247
        %v2249 = vrot.slane %v2248, 4
        %v2251 = vshll.u32 %v2026, 16
        %v2253 = vrot.slane %v2251, 5
        %v2254 = vsel %vm1002, %v2249, %v2253
        %v2255 = vshrl.u32 %v2026, 16
        %v2257 = vrot.slane %v2255, 4
        %v2258 = vor.u32 %v2257, %v2253
        %v2259 = vrot.slane %v2258, 4
        %v2261 = vshll.u32 %v2027, 16
        %v2263 = vrot.slane %v2261, 5
        %v2264 = vsel %vm1002, %v2259, %v2263
        %v2266 = vshrl.u32 %v2028, 16
        %v2268 = vrot.slane %v2266, 4
        %v2269 = vshll.u32 %v2028, 16
        %v2271 = vrot.slane %v2269, 5
        %v2272 = vor.u32 %v2268, %v2271
        %v2273 = vrot.slane %v2272, 4
        %v2275 = vshll.u32 %v2029, 16
        %v2277 = vrot.slane %v2275, 5
        %v2278 = vsel %vm1002, %v2273, %v2277
        %v2279 = vshrl.u32 %v2029, 16
        %v2281 = vrot.slane %v2279, 4
        %v2282 = vor.u32 %v2281, %v2277
        %v2283 = vrot.slane %v2282, 4
        %v2285 = vshll.u32 %v2030, 16
        %v2287 = vrot.slane %v2285, 5
        %v2288 = vsel %vm1002, %v2283, %v2287
        %v2290 = vshrl.u32 %v2031, 16
        %v2292 = vrot.slane %v2290, 4
        %v2293 = vshll.u32 %v2031, 16
        %v2295 = vrot.slane %v2293, 5
        %v2296 = vor.u32 %v2292, %v2295
        %v2297 = vrot.slane %v2296, 4
        %v2299 = vshll.u32 %v2032, 16
        %v2301 = vrot.slane %v2299, 5
        %v2302 = vsel %vm1002, %v2297, %v2301
        %v2303 = vshrl.u32 %v2032, 16
        %v2305 = vrot.slane %v2303, 4
        %v2306 = vor.u32 %v2305, %v2301
        %v2307 = vrot.slane %v2306, 4
        %v2309 = vshll.u32 %v2033, 16
        %v2311 = vrot.slane %v2309, 5
        %v2312 = vsel %vm1002, %v2307, %v2311
        %v2314 = vshrl.u32 %v2034, 16
        %v2316 = vrot.slane %v2314, 4
        %v2317 = vshll.u32 %v2034, 16
        %v2319 = vrot.slane %v2317, 5
        %v2320 = vor.u32 %v2316, %v2319
        %v2321 = vrot.slane %v2320, 4
        %v2323 = vshll.u32 %v2035, 16
        %v2325 = vrot.slane %v2323, 5
        %v2326 = vsel %vm1002, %v2321, %v2325
        %v2327 = vshrl.u32 %v2035, 16
        %v2329 = vrot.slane %v2327, 4
        %v2330 = vor.u32 %v2329, %v2325
        %v2331 = vrot.slane %v2330, 4
        %v2333 = vshll.u32 %v2036, 16
        %v2335 = vrot.slane %v2333, 5
        %v2336 = vsel %vm1002, %v2331, %v2335
        %v2338 = vshrl.u32 %v2037, 16
        %v2340 = vrot.slane %v2338, 4
        %v2341 = vshll.u32 %v2037, 16
        %v2343 = vrot.slane %v2341, 5
        %v2344 = vor.u32 %v2340, %v2343
        %v2345 = vrot.slane %v2344, 4
        %v2347 = vshll.u32 %v2038, 16
        %v2349 = vrot.slane %v2347, 5
        %v2350 = vsel %vm1002, %v2345, %v2349
        %v2351 = vshrl.u32 %v2038, 16
        %v2353 = vrot.slane %v2351, 4
        %v2354 = vor.u32 %v2353, %v2349
        %v2355 = vrot.slane %v2354, 4
        %v2357 = vshll.u32 %v2039, 16
        %v2359 = vrot.slane %v2357, 5
        %v2360 = vsel %vm1002, %v2355, %v2359
        %v2362 = vshrl.u32 %v2040, 16
        %v2364 = vrot.slane %v2362, 4
        %v2365 = vshll.u32 %v2040, 16
        %v2367 = vrot.slane %v2365, 5
        %v2368 = vor.u32 %v2364, %v2367
        %v2369 = vrot.slane %v2368, 4
        %v2371 = vshll.u32 %v2041, 16
        %v2373 = vrot.slane %v2371, 5
        %v2374 = vsel %vm1002, %v2369, %v2373
        %v2375 = vshrl.u32 %v2041, 16
        %v2377 = vrot.slane %v2375, 4
        %v2378 = vor.u32 %v2377, %v2373
        %v2379 = vrot.slane %v2378, 4
        %v2381 = vshll.u32 %v2042, 16
        %v2383 = vrot.slane %v2381, 5
        %v2384 = vsel %vm1002, %v2379, %v2383
        %v2386 = vshrl.u32 %v2043, 16
        %v2388 = vrot.slane %v2386, 4
        %v2389 = vshll.u32 %v2043, 16
        %v2391 = vrot.slane %v2389, 5
        %v2392 = vor.u32 %v2388, %v2391
        %v2393 = vrot.slane %v2392, 4
        %v2395 = vshll.u32 %v2044, 16
        %v2397 = vrot.slane %v2395, 5
        %v2398 = vsel %vm1002, %v2393, %v2397
        %v2399 = vshrl.u32 %v2044, 16
        %v2401 = vrot.slane %v2399, 4
        %v2402 = vor.u32 %v2401, %v2397
        %v2403 = vrot.slane %v2402, 4
        %v2405 = vshll.u32 %v2045, 16
        %v2407 = vrot.slane %v2405, 5
        %v2408 = vsel %vm1002, %v2403, %v2407
        %v2410 = vshrl.u32 %v2046, 16
        %v2412 = vrot.slane %v2410, 4
        %v2413 = vshll.u32 %v2046, 16
        %v2415 = vrot.slane %v2413, 5
        %v2416 = vor.u32 %v2412, %v2415
        %v2417 = vrot.slane %v2416, 4
        %v2419 = vshll.u32 %v2047, 16
        %v2421 = vrot.slane %v2419, 5
        %v2422 = vsel %vm1002, %v2417, %v2421
        %v2423 = vshrl.u32 %v2047, 16
        %v2425 = vrot.slane %v2423, 4
        %v2426 = vor.u32 %v2425, %v2421
        %v2427 = vrot.slane %v2426, 4
        %v2429 = vshll.u32 %v2048, 16
        %v2431 = vrot.slane %v2429, 5
        %v2432 = vsel %vm1002, %v2427, %v2431
        %v2433 = vunpack.c.l.b16 %v2062
        %v2434 = vunpack.c.l.b16 %v2072
        %v2435 = vunpack.c.l.b16 %v2086
        %v2436 = vunpack.c.l.b16 %v2096
        %v2437 = vunpack.c.l.b16 %v2110
        %v2438 = vunpack.c.l.b16 %v2120
        %v2439 = vunpack.c.l.b16 %v2134
        %v2440 = vunpack.c.l.b16 %v2144
        %v2441 = vunpack.c.l.b16 %v2158
        %v2442 = vunpack.c.l.b16 %v2168
        %v2443 = vunpack.c.l.b16 %v2182
        %v2444 = vunpack.c.l.b16 %v2192
        %v2445 = vunpack.c.l.b16 %v2206
        %v2446 = vunpack.c.l.b16 %v2216
        %v2447 = vunpack.c.l.b16 %v2230
        %v2448 = vunpack.c.l.b16 %v2240
        %v2449 = vunpack.c.l.b16 %v2254
        %v2450 = vunpack.c.l.b16 %v2264
        %v2451 = vunpack.c.l.b16 %v2278
        %v2452 = vunpack.c.l.b16 %v2288
        %v2453 = vunpack.c.l.b16 %v2302
        %v2454 = vunpack.c.l.b16 %v2312
        %v2455 = vunpack.c.l.b16 %v2326
        %v2456 = vunpack.c.l.b16 %v2336
        %v2457 = vunpack.c.l.b16 %v2350
        %v2458 = vunpack.c.l.b16 %v2360
        %v2459 = vunpack.c.l.b16 %v2374
        %v2460 = vunpack.c.l.b16 %v2384
        %v2461 = vunpack.c.l.b16 %v2398
        %v2462 = vunpack.c.l.b16 %v2408
        %v2463 = vunpack.c.l.b16 %v2422
        %v2464 = vunpack.c.l.b16 %v2432
        %v2465 = vpack.c.b16 %v2434, %v2433
        %v2466 = vpack.c.b16 %v2436, %v2435
        %v2467 = vpack.c.b16 %v2438, %v2437
        %v2468 = vpack.c.b16 %v2440, %v2439
        %v2469 = vpack.c.b16 %v2442, %v2441
        %v2470 = vpack.c.b16 %v2444, %v2443
        %v2471 = vpack.c.b16 %v2446, %v2445
        %v2472 = vpack.c.b16 %v2448, %v2447
        %v2473 = vpack.c.b16 %v2450, %v2449
        %v2474 = vpack.c.b16 %v2452, %v2451
        %v2475 = vpack.c.b16 %v2454, %v2453
        %v2476 = vpack.c.b16 %v2456, %v2455
        %v2477 = vpack.c.b16 %v2458, %v2457
        %v2478 = vpack.c.b16 %v2460, %v2459
        %v2479 = vpack.c.b16 %v2462, %v2461
        %v2480 = vpack.c.b16 %v2464, %v2463
        %2497 = vst.msk [vmem:[#allocation3 + $0x8] sm:$0xff] %vm935, %v2465
        %2498 = vst.msk [vmem:[#allocation3 + $0x20] sm:$0xff] %vm935, %v2466
        %2499 = vst.msk [vmem:[#allocation3 + $0x38] sm:$0xff] %vm935, %v2467
        %2500 = vst.msk [vmem:[#allocation3 + $0x50] sm:$0xff] %vm935, %v2468
        %2501 = vst.msk [vmem:[#allocation3 + $0x68] sm:$0xff] %vm935, %v2469
        %2502 = vst.msk [vmem:[#allocation3 + $0x80] sm:$0xff] %vm935, %v2470
        %2503 = vst.msk [vmem:[#allocation3 + $0x98] sm:$0xff] %vm935, %v2471
        %2504 = vst.msk [vmem:[#allocation3 + $0xb0] sm:$0xff] %vm935, %v2472
        %2505 = vst.msk [vmem:[#allocation3 + $0xc8] sm:$0xff] %vm935, %v2473
        %2506 = vst.msk [vmem:[#allocation3 + $0xe0] sm:$0xff] %vm935, %v2474
        %2507 = vst.msk [vmem:[#allocation3 + $0xf8] sm:$0xff] %vm935, %v2475
        %2508 = vst.msk [vmem:[#allocation3 + $0x110] sm:$0xff] %vm935, %v2476
        %2509 = vst.msk [vmem:[#allocation3 + $0x128] sm:$0xff] %vm935, %v2477
        %2510 = vst.msk [vmem:[#allocation3 + $0x140] sm:$0xff] %vm935, %v2478
        %2511 = vst.msk [vmem:[#allocation3 + $0x158] sm:$0xff] %vm935, %v2479
        %2512 = vst.msk [vmem:[#allocation3 + $0x170] sm:$0xff] %vm935, %v2480
        %v2513 = vld [vmem:[%s689] sm:$0xe]
        %v2514 = vld [vmem:[%s689 + $0x4] sm:$0xf]
        %v2515 = vld [vmem:[%s689 + $0x8] sm:$0x1]
        %v2516 = vld [vmem:[%s689 + $0xc] sm:$0xe]
        %v2517 = vld [vmem:[%s689 + $0x10] sm:$0xf]
        %v2518 = vld [vmem:[%s689 + $0x14] sm:$0x1]
        %v2519 = vld [vmem:[%s689 + $0x18] sm:$0xe]
        %v2520 = vld [vmem:[%s689 + $0x1c] sm:$0xf]
        %v2521 = vld [vmem:[%s689 + $0x20] sm:$0x1]
        %v2522 = vld [vmem:[%s689 + $0x24] sm:$0xe]
        %v2523 = vld [vmem:[%s689 + $0x28] sm:$0xf]
        %v2524 = vld [vmem:[%s689 + $0x2c] sm:$0x1]
        %v2525 = vld [vmem:[%s689 + $0x30] sm:$0xe]
        %v2526 = vld [vmem:[%s689 + $0x34] sm:$0xf]
        %v2527 = vld [vmem:[%s689 + $0x38] sm:$0x1]
        %v2528 = vld [vmem:[%s689 + $0x3c] sm:$0xe]
        %v2529 = vld [vmem:[%s689 + $0x40] sm:$0xf]
        %v2530 = vld [vmem:[%s689 + $0x44] sm:$0x1]
        %v2531 = vld [vmem:[%s689 + $0x48] sm:$0xe]
        %v2532 = vld [vmem:[%s689 + $0x4c] sm:$0xf]
        %v2533 = vld [vmem:[%s689 + $0x50] sm:$0x1]
        %v2534 = vld [vmem:[%s689 + $0x54] sm:$0xe]
        %v2535 = vld [vmem:[%s689 + $0x58] sm:$0xf]
        %v2536 = vld [vmem:[%s689 + $0x5c] sm:$0x1]
        %v2537 = vld [vmem:[%s689 + $0x60] sm:$0xe]
        %v2538 = vld [vmem:[%s689 + $0x64] sm:$0xf]
        %v2539 = vld [vmem:[%s689 + $0x68] sm:$0x1]
        %v2540 = vld [vmem:[%s689 + $0x6c] sm:$0xe]
        %v2541 = vld [vmem:[%s689 + $0x70] sm:$0xf]
        %v2542 = vld [vmem:[%s689 + $0x74] sm:$0x1]
        %v2543 = vld [vmem:[%s689 + $0x78] sm:$0xe]
        %v2544 = vld [vmem:[%s689 + $0x7c] sm:$0xf]
        %v2545 = vld [vmem:[%s689 + $0x80] sm:$0x1]
        %v2546 = vld [vmem:[%s689 + $0x84] sm:$0xe]
        %v2547 = vld [vmem:[%s689 + $0x88] sm:$0xf]
        %v2548 = vld [vmem:[%s689 + $0x8c] sm:$0x1]
        %v2549 = vld [vmem:[%s689 + $0x90] sm:$0xe]
        %v2550 = vld [vmem:[%s689 + $0x94] sm:$0xf]
        %v2551 = vld [vmem:[%s689 + $0x98] sm:$0x1]
        %v2552 = vld [vmem:[%s689 + $0x9c] sm:$0xe]
        %v2553 = vld [vmem:[%s689 + $0xa0] sm:$0xf]
        %v2554 = vld [vmem:[%s689 + $0xa4] sm:$0x1]
        %v2555 = vld [vmem:[%s689 + $0xa8] sm:$0xe]
        %v2556 = vld [vmem:[%s689 + $0xac] sm:$0xf]
        %v2557 = vld [vmem:[%s689 + $0xb0] sm:$0x1]
        %v2558 = vld [vmem:[%s689 + $0xb4] sm:$0xe]
        %v2559 = vld [vmem:[%s689 + $0xb8] sm:$0xf]
        %v2560 = vld [vmem:[%s689 + $0xbc] sm:$0x1]
        %v2609 = vrot.slane %v2513, 5
        %v2610 = vrot.slane %v2609, 4
        %v2611 = vrot.slane %v2514, 5
        %v2612 = vsel %vm1598, %v2610, %v2611
        %v2613 = vrot.slane %v2611, 4
        %v2614 = vrot.slane %v2515, 5
        %v2615 = vsel %vm1598, %v2613, %v2614
        %v2616 = vrot.slane %v2516, 5
        %v2617 = vrot.slane %v2616, 4
        %v2618 = vrot.slane %v2517, 5
        %v2619 = vsel %vm1598, %v2617, %v2618
        %v2620 = vrot.slane %v2618, 4
        %v2621 = vrot.slane %v2518, 5
        %v2622 = vsel %vm1598, %v2620, %v2621
        %v2623 = vrot.slane %v2519, 5
        %v2624 = vrot.slane %v2623, 4
        %v2625 = vrot.slane %v2520, 5
        %v2626 = vsel %vm1598, %v2624, %v2625
        %v2627 = vrot.slane %v2625, 4
        %v2628 = vrot.slane %v2521, 5
        %v2629 = vsel %vm1598, %v2627, %v2628
        %v2630 = vrot.slane %v2522, 5
        %v2631 = vrot.slane %v2630, 4
        %v2632 = vrot.slane %v2523, 5
        %v2633 = vsel %vm1598, %v2631, %v2632
        %v2634 = vrot.slane %v2632, 4
        %v2635 = vrot.slane %v2524, 5
        %v2636 = vsel %vm1598, %v2634, %v2635
        %v2637 = vrot.slane %v2525, 5
        %v2638 = vrot.slane %v2637, 4
        %v2639 = vrot.slane %v2526, 5
        %v2640 = vsel %vm1598, %v2638, %v2639
        %v2641 = vrot.slane %v2639, 4
        %v2642 = vrot.slane %v2527, 5
        %v2643 = vsel %vm1598, %v2641, %v2642
        %v2644 = vrot.slane %v2528, 5
        %v2645 = vrot.slane %v2644, 4
        %v2646 = vrot.slane %v2529, 5
        %v2647 = vsel %vm1598, %v2645, %v2646
        %v2648 = vrot.slane %v2646, 4
        %v2649 = vrot.slane %v2530, 5
        %v2650 = vsel %vm1598, %v2648, %v2649
        %v2651 = vrot.slane %v2531, 5
        %v2652 = vrot.slane %v2651, 4
        %v2653 = vrot.slane %v2532, 5
        %v2654 = vsel %vm1598, %v2652, %v2653
        %v2655 = vrot.slane %v2653, 4
        %v2656 = vrot.slane %v2533, 5
        %v2657 = vsel %vm1598, %v2655, %v2656
        %v2658 = vrot.slane %v2534, 5
        %v2659 = vrot.slane %v2658, 4
        %v2660 = vrot.slane %v2535, 5
        %v2661 = vsel %vm1598, %v2659, %v2660
        %v2662 = vrot.slane %v2660, 4
        %v2663 = vrot.slane %v2536, 5
        %v2664 = vsel %vm1598, %v2662, %v2663
        %v2665 = vrot.slane %v2537, 5
        %v2666 = vrot.slane %v2665, 4
        %v2667 = vrot.slane %v2538, 5
        %v2668 = vsel %vm1598, %v2666, %v2667
        %v2669 = vrot.slane %v2667, 4
        %v2670 = vrot.slane %v2539, 5
        %v2671 = vsel %vm1598, %v2669, %v2670
        %v2672 = vrot.slane %v2540, 5
        %v2673 = vrot.slane %v2672, 4
        %v2674 = vrot.slane %v2541, 5
        %v2675 = vsel %vm1598, %v2673, %v2674
        %v2676 = vrot.slane %v2674, 4
        %v2677 = vrot.slane %v2542, 5
        %v2678 = vsel %vm1598, %v2676, %v2677
        %v2679 = vrot.slane %v2543, 5
        %v2680 = vrot.slane %v2679, 4
        %v2681 = vrot.slane %v2544, 5
        %v2682 = vsel %vm1598, %v2680, %v2681
        %v2683 = vrot.slane %v2681, 4
        %v2684 = vrot.slane %v2545, 5
        %v2685 = vsel %vm1598, %v2683, %v2684
        %v2686 = vrot.slane %v2546, 5
        %v2687 = vrot.slane %v2686, 4
        %v2688 = vrot.slane %v2547, 5
        %v2689 = vsel %vm1598, %v2687, %v2688
        %v2690 = vrot.slane %v2688, 4
        %v2691 = vrot.slane %v2548, 5
        %v2692 = vsel %vm1598, %v2690, %v2691
        %v2693 = vrot.slane %v2549, 5
        %v2694 = vrot.slane %v2693, 4
        %v2695 = vrot.slane %v2550, 5
        %v2696 = vsel %vm1598, %v2694, %v2695
        %v2697 = vrot.slane %v2695, 4
        %v2698 = vrot.slane %v2551, 5
        %v2699 = vsel %vm1598, %v2697, %v2698
        %v2700 = vrot.slane %v2552, 5
        %v2701 = vrot.slane %v2700, 4
        %v2702 = vrot.slane %v2553, 5
        %v2703 = vsel %vm1598, %v2701, %v2702
        %v2704 = vrot.slane %v2702, 4
        %v2705 = vrot.slane %v2554, 5
        %v2706 = vsel %vm1598, %v2704, %v2705
        %v2707 = vrot.slane %v2555, 5
        %v2708 = vrot.slane %v2707, 4
        %v2709 = vrot.slane %v2556, 5
        %v2710 = vsel %vm1598, %v2708, %v2709
        %v2711 = vrot.slane %v2709, 4
        %v2712 = vrot.slane %v2557, 5
        %v2713 = vsel %vm1598, %v2711, %v2712
        %v2714 = vrot.slane %v2558, 5
        %v2715 = vrot.slane %v2714, 4
        %v2716 = vrot.slane %v2559, 5
        %v2717 = vsel %vm1598, %v2715, %v2716
        %v2718 = vrot.slane %v2716, 4
        %v2719 = vrot.slane %v2560, 5
        %v2720 = vsel %vm1598, %v2718, %v2719
        %v2721 = vunpack.c.l.b16 %v2612
        %v2722 = vunpack.c.l.b16 %v2615
        %v2723 = vunpack.c.l.b16 %v2619
        %v2724 = vunpack.c.l.b16 %v2622
        %v2725 = vunpack.c.l.b16 %v2626
        %v2726 = vunpack.c.l.b16 %v2629
        %v2727 = vunpack.c.l.b16 %v2633
        %v2728 = vunpack.c.l.b16 %v2636
        %v2729 = vunpack.c.l.b16 %v2640
        %v2730 = vunpack.c.l.b16 %v2643
        %v2731 = vunpack.c.l.b16 %v2647
        %v2732 = vunpack.c.l.b16 %v2650
        %v2733 = vunpack.c.l.b16 %v2654
        %v2734 = vunpack.c.l.b16 %v2657
        %v2735 = vunpack.c.l.b16 %v2661
        %v2736 = vunpack.c.l.b16 %v2664
        %v2737 = vunpack.c.l.b16 %v2668
        %v2738 = vunpack.c.l.b16 %v2671
        %v2739 = vunpack.c.l.b16 %v2675
        %v2740 = vunpack.c.l.b16 %v2678
        %v2741 = vunpack.c.l.b16 %v2682
        %v2742 = vunpack.c.l.b16 %v2685
        %v2743 = vunpack.c.l.b16 %v2689
        %v2744 = vunpack.c.l.b16 %v2692
        %v2745 = vunpack.c.l.b16 %v2696
        %v2746 = vunpack.c.l.b16 %v2699
        %v2747 = vunpack.c.l.b16 %v2703
        %v2748 = vunpack.c.l.b16 %v2706
        %v2749 = vunpack.c.l.b16 %v2710
        %v2750 = vunpack.c.l.b16 %v2713
        %v2751 = vunpack.c.l.b16 %v2717
        %v2752 = vunpack.c.l.b16 %v2720
        %v2753 = vpack.c.b16 %v2722, %v2721
        %v2754 = vpack.c.b16 %v2724, %v2723
        %v2755 = vpack.c.b16 %v2726, %v2725
        %v2756 = vpack.c.b16 %v2728, %v2727
        %v2757 = vpack.c.b16 %v2730, %v2729
        %v2758 = vpack.c.b16 %v2732, %v2731
        %v2759 = vpack.c.b16 %v2734, %v2733
        %v2760 = vpack.c.b16 %v2736, %v2735
        %v2761 = vpack.c.b16 %v2738, %v2737
        %v2762 = vpack.c.b16 %v2740, %v2739
        %v2763 = vpack.c.b16 %v2742, %v2741
        %v2764 = vpack.c.b16 %v2744, %v2743
        %v2765 = vpack.c.b16 %v2746, %v2745
        %v2766 = vpack.c.b16 %v2748, %v2747
        %v2767 = vpack.c.b16 %v2750, %v2749
        %v2768 = vpack.c.b16 %v2752, %v2751
        %2769 = vrot.lane.b32.xlu0 %v2753, 32
        %v2770 = vpop.permute.xlu0 %2769
        %2771 = vrot.lane.b32.xlu0 %v2754, 32
        %v2772 = vpop.permute.xlu0 %2771
        %2773 = vrot.lane.b32.xlu0 %v2755, 32
        %v2774 = vpop.permute.xlu0 %2773
        %2775 = vrot.lane.b32.xlu0 %v2756, 32
        %v2776 = vpop.permute.xlu0 %2775
        %2777 = vrot.lane.b32.xlu0 %v2757, 32
        %v2778 = vpop.permute.xlu0 %2777
        %2779 = vrot.lane.b32.xlu0 %v2758, 32
        %v2780 = vpop.permute.xlu0 %2779
        %2781 = vrot.lane.b32.xlu0 %v2759, 32
        %v2782 = vpop.permute.xlu0 %2781
        %2783 = vrot.lane.b32.xlu0 %v2760, 32
        %v2784 = vpop.permute.xlu0 %2783
        %2785 = vrot.lane.b32.xlu0 %v2761, 32
        %v2786 = vpop.permute.xlu0 %2785
        %2787 = vrot.lane.b32.xlu0 %v2762, 32
        %v2788 = vpop.permute.xlu0 %2787
        %2789 = vrot.lane.b32.xlu0 %v2763, 32
        %v2790 = vpop.permute.xlu0 %2789
        %2791 = vrot.lane.b32.xlu0 %v2764, 32
        %v2792 = vpop.permute.xlu0 %2791
        %2793 = vrot.lane.b32.xlu0 %v2765, 32
        %v2794 = vpop.permute.xlu0 %2793
        %2795 = vrot.lane.b32.xlu0 %v2766, 32
        %v2796 = vpop.permute.xlu0 %2795
        %2797 = vrot.lane.b32.xlu0 %v2767, 32
        %v2798 = vpop.permute.xlu0 %2797
        %2799 = vrot.lane.b32.xlu0 %v2768, 32
        %v2800 = vpop.permute.xlu0 %2799
        %2817 = vst.msk [vmem:[#allocation3 + $0x8] sm:$0xff] %vm1483, %v2770
        %2818 = vst.msk [vmem:[#allocation3 + $0x20] sm:$0xff] %vm1483, %v2772
        %2819 = vst.msk [vmem:[#allocation3 + $0x38] sm:$0xff] %vm1483, %v2774
        %2820 = vst.msk [vmem:[#allocation3 + $0x50] sm:$0xff] %vm1483, %v2776
        %2821 = vst.msk [vmem:[#allocation3 + $0x68] sm:$0xff] %vm1483, %v2778
        %2822 = vst.msk [vmem:[#allocation3 + $0x80] sm:$0xff] %vm1483, %v2780
        %2823 = vst.msk [vmem:[#allocation3 + $0x98] sm:$0xff] %vm1483, %v2782
        %2824 = vst.msk [vmem:[#allocation3 + $0xb0] sm:$0xff] %vm1483, %v2784
        %2825 = vst.msk [vmem:[#allocation3 + $0xc8] sm:$0xff] %vm1483, %v2786
        %2826 = vst.msk [vmem:[#allocation3 + $0xe0] sm:$0xff] %vm1483, %v2788
        %2827 = vst.msk [vmem:[#allocation3 + $0xf8] sm:$0xff] %vm1483, %v2790
        %2828 = vst.msk [vmem:[#allocation3 + $0x110] sm:$0xff] %vm1483, %v2792
        %2829 = vst.msk [vmem:[#allocation3 + $0x128] sm:$0xff] %vm1483, %v2794
        %2830 = vst.msk [vmem:[#allocation3 + $0x140] sm:$0xff] %vm1483, %v2796
        %2831 = vst.msk [vmem:[#allocation3 + $0x158] sm:$0xff] %vm1483, %v2798
        %2832 = vst.msk [vmem:[#allocation3 + $0x170] sm:$0xff] %vm1483, %v2800
        %s2833 = scalar_lea.vmem [#allocation2], 24
        %v2834 = vld [vmem:[%s2833] sm:$0xf]
        %v2835 = vld [vmem:[%s2833 + $0x4] sm:$0xf]
        %v2836 = vld [vmem:[%s2833 + $0xc] sm:$0xf]
        %v2837 = vld [vmem:[%s2833 + $0x10] sm:$0xf]
        %v2838 = vld [vmem:[%s2833 + $0x18] sm:$0xf]
        %v2839 = vld [vmem:[%s2833 + $0x1c] sm:$0xf]
        %v2840 = vld [vmem:[%s2833 + $0x24] sm:$0xf]
        %v2841 = vld [vmem:[%s2833 + $0x28] sm:$0xf]
        %v2842 = vld [vmem:[%s2833 + $0x30] sm:$0xf]
        %v2843 = vld [vmem:[%s2833 + $0x34] sm:$0xf]
        %v2844 = vld [vmem:[%s2833 + $0x3c] sm:$0xf]
        %v2845 = vld [vmem:[%s2833 + $0x40] sm:$0xf]
        %v2846 = vld [vmem:[%s2833 + $0x48] sm:$0xf]
        %v2847 = vld [vmem:[%s2833 + $0x4c] sm:$0xf]
        %v2848 = vld [vmem:[%s2833 + $0x54] sm:$0xf]
        %v2849 = vld [vmem:[%s2833 + $0x58] sm:$0xf]
        %v2850 = vld [vmem:[%s2833 + $0x60] sm:$0xf]
        %v2851 = vld [vmem:[%s2833 + $0x64] sm:$0xf]
        %v2852 = vld [vmem:[%s2833 + $0x6c] sm:$0xf]
        %v2853 = vld [vmem:[%s2833 + $0x70] sm:$0xf]
        %v2854 = vld [vmem:[%s2833 + $0x78] sm:$0xf]
        %v2855 = vld [vmem:[%s2833 + $0x7c] sm:$0xf]
        %v2856 = vld [vmem:[%s2833 + $0x84] sm:$0xf]
        %v2857 = vld [vmem:[%s2833 + $0x88] sm:$0xf]
        %v2858 = vld [vmem:[%s2833 + $0x90] sm:$0xf]
        %v2859 = vld [vmem:[%s2833 + $0x94] sm:$0xf]
        %v2860 = vld [vmem:[%s2833 + $0x9c] sm:$0xf]
        %v2861 = vld [vmem:[%s2833 + $0xa0] sm:$0xf]
        %v2862 = vld [vmem:[%s2833 + $0xa8] sm:$0xf]
        %v2863 = vld [vmem:[%s2833 + $0xac] sm:$0xf]
        %v2864 = vld [vmem:[%s2833 + $0xb4] sm:$0xf]
        %v2865 = vld [vmem:[%s2833 + $0xb8] sm:$0xf]
        %v2898 = vunpack.c.l.b16 %v2834
        %v2899 = vunpack.c.l.b16 %v2835
        %v2900 = vunpack.c.l.b16 %v2836
        %v2901 = vunpack.c.l.b16 %v2837
        %v2902 = vunpack.c.l.b16 %v2838
        %v2903 = vunpack.c.l.b16 %v2839
        %v2904 = vunpack.c.l.b16 %v2840
        %v2905 = vunpack.c.l.b16 %v2841
        %v2906 = vunpack.c.l.b16 %v2842
        %v2907 = vunpack.c.l.b16 %v2843
        %v2908 = vunpack.c.l.b16 %v2844
        %v2909 = vunpack.c.l.b16 %v2845
        %v2910 = vunpack.c.l.b16 %v2846
        %v2911 = vunpack.c.l.b16 %v2847
        %v2912 = vunpack.c.l.b16 %v2848
        %v2913 = vunpack.c.l.b16 %v2849
        %v2914 = vunpack.c.l.b16 %v2850
        %v2915 = vunpack.c.l.b16 %v2851
        %v2916 = vunpack.c.l.b16 %v2852
        %v2917 = vunpack.c.l.b16 %v2853
        %v2918 = vunpack.c.l.b16 %v2854
        %v2919 = vunpack.c.l.b16 %v2855
        %v2920 = vunpack.c.l.b16 %v2856
        %v2921 = vunpack.c.l.b16 %v2857
        %v2922 = vunpack.c.l.b16 %v2858
        %v2923 = vunpack.c.l.b16 %v2859
        %v2924 = vunpack.c.l.b16 %v2860
        %v2925 = vunpack.c.l.b16 %v2861
        %v2926 = vunpack.c.l.b16 %v2862
        %v2927 = vunpack.c.l.b16 %v2863
        %v2928 = vunpack.c.l.b16 %v2864
        %v2929 = vunpack.c.l.b16 %v2865
        %v2930 = vpack.c.b16 %v2899, %v2898
        %v2931 = vpack.c.b16 %v2901, %v2900
        %v2932 = vpack.c.b16 %v2903, %v2902
        %v2933 = vpack.c.b16 %v2905, %v2904
        %v2934 = vpack.c.b16 %v2907, %v2906
        %v2935 = vpack.c.b16 %v2909, %v2908
        %v2936 = vpack.c.b16 %v2911, %v2910
        %v2937 = vpack.c.b16 %v2913, %v2912
        %v2938 = vpack.c.b16 %v2915, %v2914
        %v2939 = vpack.c.b16 %v2917, %v2916
        %v2940 = vpack.c.b16 %v2919, %v2918
        %v2941 = vpack.c.b16 %v2921, %v2920
        %v2942 = vpack.c.b16 %v2923, %v2922
        %v2943 = vpack.c.b16 %v2925, %v2924
        %v2944 = vpack.c.b16 %v2927, %v2926
        %v2945 = vpack.c.b16 %v2929, %v2928
        %2946 = vrot.lane.b32.xlu0 %v2930, 64
        %v2947 = vpop.permute.xlu0 %2946
        %2948 = vrot.lane.b32.xlu0 %v2931, 64
        %v2949 = vpop.permute.xlu0 %2948
        %2950 = vrot.lane.b32.xlu0 %v2932, 64
        %v2951 = vpop.permute.xlu0 %2950
        %2952 = vrot.lane.b32.xlu0 %v2933, 64
        %v2953 = vpop.permute.xlu0 %2952
        %2954 = vrot.lane.b32.xlu0 %v2934, 64
        %v2955 = vpop.permute.xlu0 %2954
        %2956 = vrot.lane.b32.xlu0 %v2935, 64
        %v2957 = vpop.permute.xlu0 %2956
        %2958 = vrot.lane.b32.xlu0 %v2936, 64
        %v2959 = vpop.permute.xlu0 %2958
        %2960 = vrot.lane.b32.xlu0 %v2937, 64
        %v2961 = vpop.permute.xlu0 %2960
        %2962 = vrot.lane.b32.xlu0 %v2938, 64
        %v2963 = vpop.permute.xlu0 %2962
        %2964 = vrot.lane.b32.xlu0 %v2939, 64
        %v2965 = vpop.permute.xlu0 %2964
        %2966 = vrot.lane.b32.xlu0 %v2940, 64
        %v2967 = vpop.permute.xlu0 %2966
        %2968 = vrot.lane.b32.xlu0 %v2941, 64
        %v2969 = vpop.permute.xlu0 %2968
        %2970 = vrot.lane.b32.xlu0 %v2942, 64
        %v2971 = vpop.permute.xlu0 %2970
        %2972 = vrot.lane.b32.xlu0 %v2943, 64
        %v2973 = vpop.permute.xlu0 %2972
        %2974 = vrot.lane.b32.xlu0 %v2944, 64
        %v2975 = vpop.permute.xlu0 %2974
        %2976 = vrot.lane.b32.xlu0 %v2945, 64
        %v2977 = vpop.permute.xlu0 %2976
        %2994 = vst.msk [vmem:[#allocation3 + $0x8] sm:$0xff] %vm1807, %v2947
        %2995 = vst.msk [vmem:[#allocation3 + $0x20] sm:$0xff] %vm1807, %v2949
        %2996 = vst.msk [vmem:[#allocation3 + $0x38] sm:$0xff] %vm1807, %v2951
        %2997 = vst.msk [vmem:[#allocation3 + $0x50] sm:$0xff] %vm1807, %v2953
        %2998 = vst.msk [vmem:[#allocation3 + $0x68] sm:$0xff] %vm1807, %v2955
        %2999 = vst.msk [vmem:[#allocation3 + $0x80] sm:$0xff] %vm1807, %v2957
        %3000 = vst.msk [vmem:[#allocation3 + $0x98] sm:$0xff] %vm1807, %v2959
        %3001 = vst.msk [vmem:[#allocation3 + $0xb0] sm:$0xff] %vm1807, %v2961
        %3002 = vst.msk [vmem:[#allocation3 + $0xc8] sm:$0xff] %vm1807, %v2963
        %3003 = vst.msk [vmem:[#allocation3 + $0xe0] sm:$0xff] %vm1807, %v2965
        %3004 = vst.msk [vmem:[#allocation3 + $0xf8] sm:$0xff] %vm1807, %v2967
        %3005 = vst.msk [vmem:[#allocation3 + $0x110] sm:$0xff] %vm1807, %v2969
        %3006 = vst.msk [vmem:[#allocation3 + $0x128] sm:$0xff] %vm1807, %v2971
        %3007 = vst.msk [vmem:[#allocation3 + $0x140] sm:$0xff] %vm1807, %v2973
        %3008 = vst.msk [vmem:[#allocation3 + $0x158] sm:$0xff] %vm1807, %v2975
        %3009 = vst.msk [vmem:[#allocation3 + $0x170] sm:$0xff] %vm1807, %v2977
        %v3010 = vld [vmem:[%s2833] sm:$0xf]
        %v3011 = vld [vmem:[%s2833 + $0x4] sm:$0xf]
        %v3012 = vld [vmem:[%s2833 + $0x8] sm:$0x1]
        %v3013 = vld [vmem:[%s2833 + $0xc] sm:$0xf]
        %v3014 = vld [vmem:[%s2833 + $0x10] sm:$0xf]
        %v3015 = vld [vmem:[%s2833 + $0x14] sm:$0x1]
        %v3016 = vld [vmem:[%s2833 + $0x18] sm:$0xf]
        %v3017 = vld [vmem:[%s2833 + $0x1c] sm:$0xf]
        %v3018 = vld [vmem:[%s2833 + $0x20] sm:$0x1]
        %v3019 = vld [vmem:[%s2833 + $0x24] sm:$0xf]
        %v3020 = vld [vmem:[%s2833 + $0x28] sm:$0xf]
        %v3021 = vld [vmem:[%s2833 + $0x2c] sm:$0x1]
        %v3022 = vld [vmem:[%s2833 + $0x30] sm:$0xf]
        %v3023 = vld [vmem:[%s2833 + $0x34] sm:$0xf]
        %v3024 = vld [vmem:[%s2833 + $0x38] sm:$0x1]
        %v3025 = vld [vmem:[%s2833 + $0x3c] sm:$0xf]
        %v3026 = vld [vmem:[%s2833 + $0x40] sm:$0xf]
        %v3027 = vld [vmem:[%s2833 + $0x44] sm:$0x1]
        %v3028 = vld [vmem:[%s2833 + $0x48] sm:$0xf]
        %v3029 = vld [vmem:[%s2833 + $0x4c] sm:$0xf]
        %v3030 = vld [vmem:[%s2833 + $0x50] sm:$0x1]
        %v3031 = vld [vmem:[%s2833 + $0x54] sm:$0xf]
        %v3032 = vld [vmem:[%s2833 + $0x58] sm:$0xf]
        %v3033 = vld [vmem:[%s2833 + $0x5c] sm:$0x1]
        %v3034 = vld [vmem:[%s2833 + $0x60] sm:$0xf]
        %v3035 = vld [vmem:[%s2833 + $0x64] sm:$0xf]
        %v3036 = vld [vmem:[%s2833 + $0x68] sm:$0x1]
        %v3037 = vld [vmem:[%s2833 + $0x6c] sm:$0xf]
        %v3038 = vld [vmem:[%s2833 + $0x70] sm:$0xf]
        %v3039 = vld [vmem:[%s2833 + $0x74] sm:$0x1]
        %v3040 = vld [vmem:[%s2833 + $0x78] sm:$0xf]
        %v3041 = vld [vmem:[%s2833 + $0x7c] sm:$0xf]
        %v3042 = vld [vmem:[%s2833 + $0x80] sm:$0x1]
        %v3043 = vld [vmem:[%s2833 + $0x84] sm:$0xf]
        %v3044 = vld [vmem:[%s2833 + $0x88] sm:$0xf]
        %v3045 = vld [vmem:[%s2833 + $0x8c] sm:$0x1]
        %v3046 = vld [vmem:[%s2833 + $0x90] sm:$0xf]
        %v3047 = vld [vmem:[%s2833 + $0x94] sm:$0xf]
        %v3048 = vld [vmem:[%s2833 + $0x98] sm:$0x1]
        %v3049 = vld [vmem:[%s2833 + $0x9c] sm:$0xf]
        %v3050 = vld [vmem:[%s2833 + $0xa0] sm:$0xf]
        %v3051 = vld [vmem:[%s2833 + $0xa4] sm:$0x1]
        %v3052 = vld [vmem:[%s2833 + $0xa8] sm:$0xf]
        %v3053 = vld [vmem:[%s2833 + $0xac] sm:$0xf]
        %v3054 = vld [vmem:[%s2833 + $0xb0] sm:$0x1]
        %v3055 = vld [vmem:[%s2833 + $0xb4] sm:$0xf]
        %v3056 = vld [vmem:[%s2833 + $0xb8] sm:$0xf]
        %v3057 = vld [vmem:[%s2833 + $0xbc] sm:$0x1]
        %v3059 = vshrl.u32 %v3010, 16
        %v3061 = vrot.slane %v3059, 4
        %v3062 = vshll.u32 %v3010, 16
        %v3064 = vrot.slane %v3062, 5
        %v3065 = vor.u32 %v3061, %v3064
        %v3066 = vrot.slane %v3065, 4
        %v3068 = vshll.u32 %v3011, 16
        %v3070 = vrot.slane %v3068, 5
        %v3071 = vsel %vm1002, %v3066, %v3070
        %v3072 = vshrl.u32 %v3011, 16
        %v3074 = vrot.slane %v3072, 4
        %v3075 = vor.u32 %v3074, %v3070
        %v3076 = vrot.slane %v3075, 4
        %v3078 = vshll.u32 %v3012, 16
        %v3080 = vrot.slane %v3078, 5
        %v3081 = vsel %vm1002, %v3076, %v3080
        %v3083 = vshrl.u32 %v3013, 16
        %v3085 = vrot.slane %v3083, 4
        %v3086 = vshll.u32 %v3013, 16
        %v3088 = vrot.slane %v3086, 5
        %v3089 = vor.u32 %v3085, %v3088
        %v3090 = vrot.slane %v3089, 4
        %v3092 = vshll.u32 %v3014, 16
        %v3094 = vrot.slane %v3092, 5
        %v3095 = vsel %vm1002, %v3090, %v3094
        %v3096 = vshrl.u32 %v3014, 16
        %v3098 = vrot.slane %v3096, 4
        %v3099 = vor.u32 %v3098, %v3094
        %v3100 = vrot.slane %v3099, 4
        %v3102 = vshll.u32 %v3015, 16
        %v3104 = vrot.slane %v3102, 5
        %v3105 = vsel %vm1002, %v3100, %v3104
        %v3107 = vshrl.u32 %v3016, 16
        %v3109 = vrot.slane %v3107, 4
        %v3110 = vshll.u32 %v3016, 16
        %v3112 = vrot.slane %v3110, 5
        %v3113 = vor.u32 %v3109, %v3112
        %v3114 = vrot.slane %v3113, 4
        %v3116 = vshll.u32 %v3017, 16
        %v3118 = vrot.slane %v3116, 5
        %v3119 = vsel %vm1002, %v3114, %v3118
        %v3120 = vshrl.u32 %v3017, 16
        %v3122 = vrot.slane %v3120, 4
        %v3123 = vor.u32 %v3122, %v3118
        %v3124 = vrot.slane %v3123, 4
        %v3126 = vshll.u32 %v3018, 16
        %v3128 = vrot.slane %v3126, 5
        %v3129 = vsel %vm1002, %v3124, %v3128
        %v3131 = vshrl.u32 %v3019, 16
        %v3133 = vrot.slane %v3131, 4
        %v3134 = vshll.u32 %v3019, 16
        %v3136 = vrot.slane %v3134, 5
        %v3137 = vor.u32 %v3133, %v3136
        %v3138 = vrot.slane %v3137, 4
        %v3140 = vshll.u32 %v3020, 16
        %v3142 = vrot.slane %v3140, 5
        %v3143 = vsel %vm1002, %v3138, %v3142
        %v3144 = vshrl.u32 %v3020, 16
        %v3146 = vrot.slane %v3144, 4
        %v3147 = vor.u32 %v3146, %v3142
        %v3148 = vrot.slane %v3147, 4
        %v3150 = vshll.u32 %v3021, 16
        %v3152 = vrot.slane %v3150, 5
        %v3153 = vsel %vm1002, %v3148, %v3152
        %v3155 = vshrl.u32 %v3022, 16
        %v3157 = vrot.slane %v3155, 4
        %v3158 = vshll.u32 %v3022, 16
        %v3160 = vrot.slane %v3158, 5
        %v3161 = vor.u32 %v3157, %v3160
        %v3162 = vrot.slane %v3161, 4
        %v3164 = vshll.u32 %v3023, 16
        %v3166 = vrot.slane %v3164, 5
        %v3167 = vsel %vm1002, %v3162, %v3166
        %v3168 = vshrl.u32 %v3023, 16
        %v3170 = vrot.slane %v3168, 4
        %v3171 = vor.u32 %v3170, %v3166
        %v3172 = vrot.slane %v3171, 4
        %v3174 = vshll.u32 %v3024, 16
        %v3176 = vrot.slane %v3174, 5
        %v3177 = vsel %vm1002, %v3172, %v3176
        %v3179 = vshrl.u32 %v3025, 16
        %v3181 = vrot.slane %v3179, 4
        %v3182 = vshll.u32 %v3025, 16
        %v3184 = vrot.slane %v3182, 5
        %v3185 = vor.u32 %v3181, %v3184
        %v3186 = vrot.slane %v3185, 4
        %v3188 = vshll.u32 %v3026, 16
        %v3190 = vrot.slane %v3188, 5
        %v3191 = vsel %vm1002, %v3186, %v3190
        %v3192 = vshrl.u32 %v3026, 16
        %v3194 = vrot.slane %v3192, 4
        %v3195 = vor.u32 %v3194, %v3190
        %v3196 = vrot.slane %v3195, 4
        %v3198 = vshll.u32 %v3027, 16
        %v3200 = vrot.slane %v3198, 5
        %v3201 = vsel %vm1002, %v3196, %v3200
        %v3203 = vshrl.u32 %v3028, 16
        %v3205 = vrot.slane %v3203, 4
        %v3206 = vshll.u32 %v3028, 16
        %v3208 = vrot.slane %v3206, 5
        %v3209 = vor.u32 %v3205, %v3208
        %v3210 = vrot.slane %v3209, 4
        %v3212 = vshll.u32 %v3029, 16
        %v3214 = vrot.slane %v3212, 5
        %v3215 = vsel %vm1002, %v3210, %v3214
        %v3216 = vshrl.u32 %v3029, 16
        %v3218 = vrot.slane %v3216, 4
        %v3219 = vor.u32 %v3218, %v3214
        %v3220 = vrot.slane %v3219, 4
        %v3222 = vshll.u32 %v3030, 16
        %v3224 = vrot.slane %v3222, 5
        %v3225 = vsel %vm1002, %v3220, %v3224
        %v3227 = vshrl.u32 %v3031, 16
        %v3229 = vrot.slane %v3227, 4
        %v3230 = vshll.u32 %v3031, 16
        %v3232 = vrot.slane %v3230, 5
        %v3233 = vor.u32 %v3229, %v3232
        %v3234 = vrot.slane %v3233, 4
        %v3236 = vshll.u32 %v3032, 16
        %v3238 = vrot.slane %v3236, 5
        %v3239 = vsel %vm1002, %v3234, %v3238
        %v3240 = vshrl.u32 %v3032, 16
        %v3242 = vrot.slane %v3240, 4
        %v3243 = vor.u32 %v3242, %v3238
        %v3244 = vrot.slane %v3243, 4
        %v3246 = vshll.u32 %v3033, 16
        %v3248 = vrot.slane %v3246, 5
        %v3249 = vsel %vm1002, %v3244, %v3248
        %v3251 = vshrl.u32 %v3034, 16
        %v3253 = vrot.slane %v3251, 4
        %v3254 = vshll.u32 %v3034, 16
        %v3256 = vrot.slane %v3254, 5
        %v3257 = vor.u32 %v3253, %v3256
        %v3258 = vrot.slane %v3257, 4
        %v3260 = vshll.u32 %v3035, 16
        %v3262 = vrot.slane %v3260, 5
        %v3263 = vsel %vm1002, %v3258, %v3262
        %v3264 = vshrl.u32 %v3035, 16
        %v3266 = vrot.slane %v3264, 4
        %v3267 = vor.u32 %v3266, %v3262
        %v3268 = vrot.slane %v3267, 4
        %v3270 = vshll.u32 %v3036, 16
        %v3272 = vrot.slane %v3270, 5
        %v3273 = vsel %vm1002, %v3268, %v3272
        %v3275 = vshrl.u32 %v3037, 16
        %v3277 = vrot.slane %v3275, 4
        %v3278 = vshll.u32 %v3037, 16
        %v3280 = vrot.slane %v3278, 5
        %v3281 = vor.u32 %v3277, %v3280
        %v3282 = vrot.slane %v3281, 4
        %v3284 = vshll.u32 %v3038, 16
        %v3286 = vrot.slane %v3284, 5
        %v3287 = vsel %vm1002, %v3282, %v3286
        %v3288 = vshrl.u32 %v3038, 16
        %v3290 = vrot.slane %v3288, 4
        %v3291 = vor.u32 %v3290, %v3286
        %v3292 = vrot.slane %v3291, 4
        %v3294 = vshll.u32 %v3039, 16
        %v3296 = vrot.slane %v3294, 5
        %v3297 = vsel %vm1002, %v3292, %v3296
        %v3299 = vshrl.u32 %v3040, 16
        %v3301 = vrot.slane %v3299, 4
        %v3302 = vshll.u32 %v3040, 16
        %v3304 = vrot.slane %v3302, 5
        %v3305 = vor.u32 %v3301, %v3304
        %v3306 = vrot.slane %v3305, 4
        %v3308 = vshll.u32 %v3041, 16
        %v3310 = vrot.slane %v3308, 5
        %v3311 = vsel %vm1002, %v3306, %v3310
        %v3312 = vshrl.u32 %v3041, 16
        %v3314 = vrot.slane %v3312, 4
        %v3315 = vor.u32 %v3314, %v3310
        %v3316 = vrot.slane %v3315, 4
        %v3318 = vshll.u32 %v3042, 16
        %v3320 = vrot.slane %v3318, 5
        %v3321 = vsel %vm1002, %v3316, %v3320
        %v3323 = vshrl.u32 %v3043, 16
        %v3325 = vrot.slane %v3323, 4
        %v3326 = vshll.u32 %v3043, 16
        %v3328 = vrot.slane %v3326, 5
        %v3329 = vor.u32 %v3325, %v3328
        %v3330 = vrot.slane %v3329, 4
        %v3332 = vshll.u32 %v3044, 16
        %v3334 = vrot.slane %v3332, 5
        %v3335 = vsel %vm1002, %v3330, %v3334
        %v3336 = vshrl.u32 %v3044, 16
        %v3338 = vrot.slane %v3336, 4
        %v3339 = vor.u32 %v3338, %v3334
        %v3340 = vrot.slane %v3339, 4
        %v3342 = vshll.u32 %v3045, 16
        %v3344 = vrot.slane %v3342, 5
        %v3345 = vsel %vm1002, %v3340, %v3344
        %v3347 = vshrl.u32 %v3046, 16
        %v3349 = vrot.slane %v3347, 4
        %v3350 = vshll.u32 %v3046, 16
        %v3352 = vrot.slane %v3350, 5
        %v3353 = vor.u32 %v3349, %v3352
        %v3354 = vrot.slane %v3353, 4
        %v3356 = vshll.u32 %v3047, 16
        %v3358 = vrot.slane %v3356, 5
        %v3359 = vsel %vm1002, %v3354, %v3358
        %v3360 = vshrl.u32 %v3047, 16
        %v3362 = vrot.slane %v3360, 4
        %v3363 = vor.u32 %v3362, %v3358
        %v3364 = vrot.slane %v3363, 4
        %v3366 = vshll.u32 %v3048, 16
        %v3368 = vrot.slane %v3366, 5
        %v3369 = vsel %vm1002, %v3364, %v3368
        %v3371 = vshrl.u32 %v3049, 16
        %v3373 = vrot.slane %v3371, 4
        %v3374 = vshll.u32 %v3049, 16
        %v3376 = vrot.slane %v3374, 5
        %v3377 = vor.u32 %v3373, %v3376
        %v3378 = vrot.slane %v3377, 4
        %v3380 = vshll.u32 %v3050, 16
        %v3382 = vrot.slane %v3380, 5
        %v3383 = vsel %vm1002, %v3378, %v3382
        %v3384 = vshrl.u32 %v3050, 16
        %v3386 = vrot.slane %v3384, 4
        %v3387 = vor.u32 %v3386, %v3382
        %v3388 = vrot.slane %v3387, 4
        %v3390 = vshll.u32 %v3051, 16
        %v3392 = vrot.slane %v3390, 5
        %v3393 = vsel %vm1002, %v3388, %v3392
        %v3395 = vshrl.u32 %v3052, 16
        %v3397 = vrot.slane %v3395, 4
        %v3398 = vshll.u32 %v3052, 16
        %v3400 = vrot.slane %v3398, 5
        %v3401 = vor.u32 %v3397, %v3400
        %v3402 = vrot.slane %v3401, 4
        %v3404 = vshll.u32 %v3053, 16
        %v3406 = vrot.slane %v3404, 5
        %v3407 = vsel %vm1002, %v3402, %v3406
        %v3408 = vshrl.u32 %v3053, 16
        %v3410 = vrot.slane %v3408, 4
        %v3411 = vor.u32 %v3410, %v3406
        %v3412 = vrot.slane %v3411, 4
        %v3414 = vshll.u32 %v3054, 16
        %v3416 = vrot.slane %v3414, 5
        %v3417 = vsel %vm1002, %v3412, %v3416
        %v3419 = vshrl.u32 %v3055, 16
        %v3421 = vrot.slane %v3419, 4
        %v3422 = vshll.u32 %v3055, 16
        %v3424 = vrot.slane %v3422, 5
        %v3425 = vor.u32 %v3421, %v3424
        %v3426 = vrot.slane %v3425, 4
        %v3428 = vshll.u32 %v3056, 16
        %v3430 = vrot.slane %v3428, 5
        %v3431 = vsel %vm1002, %v3426, %v3430
        %v3432 = vshrl.u32 %v3056, 16
        %v3434 = vrot.slane %v3432, 4
        %v3435 = vor.u32 %v3434, %v3430
        %v3436 = vrot.slane %v3435, 4
        %v3438 = vshll.u32 %v3057, 16
        %v3440 = vrot.slane %v3438, 5
        %v3441 = vsel %vm1002, %v3436, %v3440
        %v3442 = vunpack.c.l.b16 %v3071
        %v3443 = vunpack.c.l.b16 %v3081
        %v3444 = vunpack.c.l.b16 %v3095
        %v3445 = vunpack.c.l.b16 %v3105
        %v3446 = vunpack.c.l.b16 %v3119
        %v3447 = vunpack.c.l.b16 %v3129
        %v3448 = vunpack.c.l.b16 %v3143
        %v3449 = vunpack.c.l.b16 %v3153
        %v3450 = vunpack.c.l.b16 %v3167
        %v3451 = vunpack.c.l.b16 %v3177
        %v3452 = vunpack.c.l.b16 %v3191
        %v3453 = vunpack.c.l.b16 %v3201
        %v3454 = vunpack.c.l.b16 %v3215
        %v3455 = vunpack.c.l.b16 %v3225
        %v3456 = vunpack.c.l.b16 %v3239
        %v3457 = vunpack.c.l.b16 %v3249
        %v3458 = vunpack.c.l.b16 %v3263
        %v3459 = vunpack.c.l.b16 %v3273
        %v3460 = vunpack.c.l.b16 %v3287
        %v3461 = vunpack.c.l.b16 %v3297
        %v3462 = vunpack.c.l.b16 %v3311
        %v3463 = vunpack.c.l.b16 %v3321
        %v3464 = vunpack.c.l.b16 %v3335
        %v3465 = vunpack.c.l.b16 %v3345
        %v3466 = vunpack.c.l.b16 %v3359
        %v3467 = vunpack.c.l.b16 %v3369
        %v3468 = vunpack.c.l.b16 %v3383
        %v3469 = vunpack.c.l.b16 %v3393
        %v3470 = vunpack.c.l.b16 %v3407
        %v3471 = vunpack.c.l.b16 %v3417
        %v3472 = vunpack.c.l.b16 %v3431
        %v3473 = vunpack.c.l.b16 %v3441
        %v3474 = vpack.c.b16 %v3443, %v3442
        %v3475 = vpack.c.b16 %v3445, %v3444
        %v3476 = vpack.c.b16 %v3447, %v3446
        %v3477 = vpack.c.b16 %v3449, %v3448
        %v3478 = vpack.c.b16 %v3451, %v3450
        %v3479 = vpack.c.b16 %v3453, %v3452
        %v3480 = vpack.c.b16 %v3455, %v3454
        %v3481 = vpack.c.b16 %v3457, %v3456
        %v3482 = vpack.c.b16 %v3459, %v3458
        %v3483 = vpack.c.b16 %v3461, %v3460
        %v3484 = vpack.c.b16 %v3463, %v3462
        %v3485 = vpack.c.b16 %v3465, %v3464
        %v3486 = vpack.c.b16 %v3467, %v3466
        %v3487 = vpack.c.b16 %v3469, %v3468
        %v3488 = vpack.c.b16 %v3471, %v3470
        %v3489 = vpack.c.b16 %v3473, %v3472
        %3490 = vrot.lane.b32.xlu0 %v3474, 96
        %v3491 = vpop.permute.xlu0 %3490
        %3492 = vrot.lane.b32.xlu0 %v3475, 96
        %v3493 = vpop.permute.xlu0 %3492
        %3494 = vrot.lane.b32.xlu0 %v3476, 96
        %v3495 = vpop.permute.xlu0 %3494
        %3496 = vrot.lane.b32.xlu0 %v3477, 96
        %v3497 = vpop.permute.xlu0 %3496
        %3498 = vrot.lane.b32.xlu0 %v3478, 96
        %v3499 = vpop.permute.xlu0 %3498
        %3500 = vrot.lane.b32.xlu0 %v3479, 96
        %v3501 = vpop.permute.xlu0 %3500
        %3502 = vrot.lane.b32.xlu0 %v3480, 96
        %v3503 = vpop.permute.xlu0 %3502
        %3504 = vrot.lane.b32.xlu0 %v3481, 96
        %v3505 = vpop.permute.xlu0 %3504
        %3506 = vrot.lane.b32.xlu0 %v3482, 96
        %v3507 = vpop.permute.xlu0 %3506
        %3508 = vrot.lane.b32.xlu0 %v3483, 96
        %v3509 = vpop.permute.xlu0 %3508
        %3510 = vrot.lane.b32.xlu0 %v3484, 96
        %v3511 = vpop.permute.xlu0 %3510
        %3512 = vrot.lane.b32.xlu0 %v3485, 96
        %v3513 = vpop.permute.xlu0 %3512
        %3514 = vrot.lane.b32.xlu0 %v3486, 96
        %v3515 = vpop.permute.xlu0 %3514
        %3516 = vrot.lane.b32.xlu0 %v3487, 96
        %v3517 = vpop.permute.xlu0 %3516
        %3518 = vrot.lane.b32.xlu0 %v3488, 96
        %v3519 = vpop.permute.xlu0 %3518
        %3520 = vrot.lane.b32.xlu0 %v3489, 96
        %v3521 = vpop.permute.xlu0 %3520
        %3538 = vst.msk [vmem:[#allocation3 + $0x8] sm:$0xff] %vm1984, %v3491
        %3539 = vst.msk [vmem:[#allocation3 + $0x20] sm:$0xff] %vm1984, %v3493
        %3540 = vst.msk [vmem:[#allocation3 + $0x38] sm:$0xff] %vm1984, %v3495
        %3541 = vst.msk [vmem:[#allocation3 + $0x50] sm:$0xff] %vm1984, %v3497
        %3542 = vst.msk [vmem:[#allocation3 + $0x68] sm:$0xff] %vm1984, %v3499
        %3543 = vst.msk [vmem:[#allocation3 + $0x80] sm:$0xff] %vm1984, %v3501
        %3544 = vst.msk [vmem:[#allocation3 + $0x98] sm:$0xff] %vm1984, %v3503
        %3545 = vst.msk [vmem:[#allocation3 + $0xb0] sm:$0xff] %vm1984, %v3505
        %3546 = vst.msk [vmem:[#allocation3 + $0xc8] sm:$0xff] %vm1984, %v3507
        %3547 = vst.msk [vmem:[#allocation3 + $0xe0] sm:$0xff] %vm1984, %v3509
        %3548 = vst.msk [vmem:[#allocation3 + $0xf8] sm:$0xff] %vm1984, %v3511
        %3549 = vst.msk [vmem:[#allocation3 + $0x110] sm:$0xff] %vm1984, %v3513
        %3550 = vst.msk [vmem:[#allocation3 + $0x128] sm:$0xff] %vm1984, %v3515
        %3551 = vst.msk [vmem:[#allocation3 + $0x140] sm:$0xff] %vm1984, %v3517
        %3552 = vst.msk [vmem:[#allocation3 + $0x158] sm:$0xff] %vm1984, %v3519
        %3553 = vst.msk [vmem:[#allocation3 + $0x170] sm:$0xff] %vm1984, %v3521
        %v3554 = vld [vmem:[%s2833] sm:$0xe]
        %v3555 = vld [vmem:[%s2833 + $0x4] sm:$0xf]
        %v3556 = vld [vmem:[%s2833 + $0x8] sm:$0x1]
        %v3557 = vld [vmem:[%s2833 + $0xc] sm:$0xe]
        %v3558 = vld [vmem:[%s2833 + $0x10] sm:$0xf]
        %v3559 = vld [vmem:[%s2833 + $0x14] sm:$0x1]
        %v3560 = vld [vmem:[%s2833 + $0x18] sm:$0xe]
        %v3561 = vld [vmem:[%s2833 + $0x1c] sm:$0xf]
        %v3562 = vld [vmem:[%s2833 + $0x20] sm:$0x1]
        %v3563 = vld [vmem:[%s2833 + $0x24] sm:$0xe]
        %v3564 = vld [vmem:[%s2833 + $0x28] sm:$0xf]
        %v3565 = vld [vmem:[%s2833 + $0x2c] sm:$0x1]
        %v3566 = vld [vmem:[%s2833 + $0x30] sm:$0xe]
        %v3567 = vld [vmem:[%s2833 + $0x34] sm:$0xf]
        %v3568 = vld [vmem:[%s2833 + $0x38] sm:$0x1]
        %v3569 = vld [vmem:[%s2833 + $0x3c] sm:$0xe]
        %v3570 = vld [vmem:[%s2833 + $0x40] sm:$0xf]
        %v3571 = vld [vmem:[%s2833 + $0x44] sm:$0x1]
        %v3572 = vld [vmem:[%s2833 + $0x48] sm:$0xe]
        %v3573 = vld [vmem:[%s2833 + $0x4c] sm:$0xf]
        %v3574 = vld [vmem:[%s2833 + $0x50] sm:$0x1]
        %v3575 = vld [vmem:[%s2833 + $0x54] sm:$0xe]
        %v3576 = vld [vmem:[%s2833 + $0x58] sm:$0xf]
        %v3577 = vld [vmem:[%s2833 + $0x5c] sm:$0x1]
        %v3578 = vld [vmem:[%s2833 + $0x60] sm:$0xe]
        %v3579 = vld [vmem:[%s2833 + $0x64] sm:$0xf]
        %v3580 = vld [vmem:[%s2833 + $0x68] sm:$0x1]
        %v3581 = vld [vmem:[%s2833 + $0x6c] sm:$0xe]
        %v3582 = vld [vmem:[%s2833 + $0x70] sm:$0xf]
        %v3583 = vld [vmem:[%s2833 + $0x74] sm:$0x1]
        %v3584 = vld [vmem:[%s2833 + $0x78] sm:$0xe]
        %v3585 = vld [vmem:[%s2833 + $0x7c] sm:$0xf]
        %v3586 = vld [vmem:[%s2833 + $0x80] sm:$0x1]
        %v3587 = vld [vmem:[%s2833 + $0x84] sm:$0xe]
        %v3588 = vld [vmem:[%s2833 + $0x88] sm:$0xf]
        %v3589 = vld [vmem:[%s2833 + $0x8c] sm:$0x1]
        %v3590 = vld [vmem:[%s2833 + $0x90] sm:$0xe]
        %v3591 = vld [vmem:[%s2833 + $0x94] sm:$0xf]
        %v3592 = vld [vmem:[%s2833 + $0x98] sm:$0x1]
        %v3593 = vld [vmem:[%s2833 + $0x9c] sm:$0xe]
        %v3594 = vld [vmem:[%s2833 + $0xa0] sm:$0xf]
        %v3595 = vld [vmem:[%s2833 + $0xa4] sm:$0x1]
        %v3596 = vld [vmem:[%s2833 + $0xa8] sm:$0xe]
        %v3597 = vld [vmem:[%s2833 + $0xac] sm:$0xf]
        %v3598 = vld [vmem:[%s2833 + $0xb0] sm:$0x1]
        %v3599 = vld [vmem:[%s2833 + $0xb4] sm:$0xe]
        %v3600 = vld [vmem:[%s2833 + $0xb8] sm:$0xf]
        %v3601 = vld [vmem:[%s2833 + $0xbc] sm:$0x1]
        %v3650 = vrot.slane %v3554, 5
        %v3651 = vrot.slane %v3650, 4
        %v3652 = vrot.slane %v3555, 5
        %v3653 = vsel %vm1598, %v3651, %v3652
        %v3654 = vrot.slane %v3652, 4
        %v3655 = vrot.slane %v3556, 5
        %v3656 = vsel %vm1598, %v3654, %v3655
        %v3657 = vrot.slane %v3557, 5
        %v3658 = vrot.slane %v3657, 4
        %v3659 = vrot.slane %v3558, 5
        %v3660 = vsel %vm1598, %v3658, %v3659
        %v3661 = vrot.slane %v3659, 4
        %v3662 = vrot.slane %v3559, 5
        %v3663 = vsel %vm1598, %v3661, %v3662
        %v3664 = vrot.slane %v3560, 5
        %v3665 = vrot.slane %v3664, 4
        %v3666 = vrot.slane %v3561, 5
        %v3667 = vsel %vm1598, %v3665, %v3666
        %v3668 = vrot.slane %v3666, 4
        %v3669 = vrot.slane %v3562, 5
        %v3670 = vsel %vm1598, %v3668, %v3669
        %v3671 = vrot.slane %v3563, 5
        %v3672 = vrot.slane %v3671, 4
        %v3673 = vrot.slane %v3564, 5
        %v3674 = vsel %vm1598, %v3672, %v3673
        %v3675 = vrot.slane %v3673, 4
        %v3676 = vrot.slane %v3565, 5
        %v3677 = vsel %vm1598, %v3675, %v3676
        %v3678 = vrot.slane %v3566, 5
        %v3679 = vrot.slane %v3678, 4
        %v3680 = vrot.slane %v3567, 5
        %v3681 = vsel %vm1598, %v3679, %v3680
        %v3682 = vrot.slane %v3680, 4
        %v3683 = vrot.slane %v3568, 5
        %v3684 = vsel %vm1598, %v3682, %v3683
        %v3685 = vrot.slane %v3569, 5
        %v3686 = vrot.slane %v3685, 4
        %v3687 = vrot.slane %v3570, 5
        %v3688 = vsel %vm1598, %v3686, %v3687
        %v3689 = vrot.slane %v3687, 4
        %v3690 = vrot.slane %v3571, 5
        %v3691 = vsel %vm1598, %v3689, %v3690
        %v3692 = vrot.slane %v3572, 5
        %v3693 = vrot.slane %v3692, 4
        %v3694 = vrot.slane %v3573, 5
        %v3695 = vsel %vm1598, %v3693, %v3694
        %v3696 = vrot.slane %v3694, 4
        %v3697 = vrot.slane %v3574, 5
        %v3698 = vsel %vm1598, %v3696, %v3697
        %v3699 = vrot.slane %v3575, 5
        %v3700 = vrot.slane %v3699, 4
        %v3701 = vrot.slane %v3576, 5
        %v3702 = vsel %vm1598, %v3700, %v3701
        %v3703 = vrot.slane %v3701, 4
        %v3704 = vrot.slane %v3577, 5
        %v3705 = vsel %vm1598, %v3703, %v3704
        %v3706 = vrot.slane %v3578, 5
        %v3707 = vrot.slane %v3706, 4
        %v3708 = vrot.slane %v3579, 5
        %v3709 = vsel %vm1598, %v3707, %v3708
        %v3710 = vrot.slane %v3708, 4
        %v3711 = vrot.slane %v3580, 5
        %v3712 = vsel %vm1598, %v3710, %v3711
        %v3713 = vrot.slane %v3581, 5
        %v3714 = vrot.slane %v3713, 4
        %v3715 = vrot.slane %v3582, 5
        %v3716 = vsel %vm1598, %v3714, %v3715
        %v3717 = vrot.slane %v3715, 4
        %v3718 = vrot.slane %v3583, 5
        %v3719 = vsel %vm1598, %v3717, %v3718
        %v3720 = vrot.slane %v3584, 5
        %v3721 = vrot.slane %v3720, 4
        %v3722 = vrot.slane %v3585, 5
        %v3723 = vsel %vm1598, %v3721, %v3722
        %v3724 = vrot.slane %v3722, 4
        %v3725 = vrot.slane %v3586, 5
        %v3726 = vsel %vm1598, %v3724, %v3725
        %v3727 = vrot.slane %v3587, 5
        %v3728 = vrot.slane %v3727, 4
        %v3729 = vrot.slane %v3588, 5
        %v3730 = vsel %vm1598, %v3728, %v3729
        %v3731 = vrot.slane %v3729, 4
        %v3732 = vrot.slane %v3589, 5
        %v3733 = vsel %vm1598, %v3731, %v3732
        %v3734 = vrot.slane %v3590, 5
        %v3735 = vrot.slane %v3734, 4
        %v3736 = vrot.slane %v3591, 5
        %v3737 = vsel %vm1598, %v3735, %v3736
        %v3738 = vrot.slane %v3736, 4
        %v3739 = vrot.slane %v3592, 5
        %v3740 = vsel %vm1598, %v3738, %v3739
        %v3741 = vrot.slane %v3593, 5
        %v3742 = vrot.slane %v3741, 4
        %v3743 = vrot.slane %v3594, 5
        %v3744 = vsel %vm1598, %v3742, %v3743
        %v3745 = vrot.slane %v3743, 4
        %v3746 = vrot.slane %v3595, 5
        %v3747 = vsel %vm1598, %v3745, %v3746
        %v3748 = vrot.slane %v3596, 5
        %v3749 = vrot.slane %v3748, 4
        %v3750 = vrot.slane %v3597, 5
        %v3751 = vsel %vm1598, %v3749, %v3750
        %v3752 = vrot.slane %v3750, 4
        %v3753 = vrot.slane %v3598, 5
        %v3754 = vsel %vm1598, %v3752, %v3753
        %v3755 = vrot.slane %v3599, 5
        %v3756 = vrot.slane %v3755, 4
        %v3757 = vrot.slane %v3600, 5
        %v3758 = vsel %vm1598, %v3756, %v3757
        %v3759 = vrot.slane %v3757, 4
        %v3760 = vrot.slane %v3601, 5
        %v3761 = vsel %vm1598, %v3759, %v3760
        %v3762 = vunpack.c.l.b16 %v3653
        %v3763 = vunpack.c.l.b16 %v3656
        %v3764 = vunpack.c.l.b16 %v3660
        %v3765 = vunpack.c.l.b16 %v3663
        %v3766 = vunpack.c.l.b16 %v3667
        %v3767 = vunpack.c.l.b16 %v3670
        %v3768 = vunpack.c.l.b16 %v3674
        %v3769 = vunpack.c.l.b16 %v3677
        %v3770 = vunpack.c.l.b16 %v3681
        %v3771 = vunpack.c.l.b16 %v3684
        %v3772 = vunpack.c.l.b16 %v3688
        %v3773 = vunpack.c.l.b16 %v3691
        %v3774 = vunpack.c.l.b16 %v3695
        %v3775 = vunpack.c.l.b16 %v3698
        %v3776 = vunpack.c.l.b16 %v3702
        %v3777 = vunpack.c.l.b16 %v3705
        %v3778 = vunpack.c.l.b16 %v3709
        %v3779 = vunpack.c.l.b16 %v3712
        %v3780 = vunpack.c.l.b16 %v3716
        %v3781 = vunpack.c.l.b16 %v3719
        %v3782 = vunpack.c.l.b16 %v3723
        %v3783 = vunpack.c.l.b16 %v3726
        %v3784 = vunpack.c.l.b16 %v3730
        %v3785 = vunpack.c.l.b16 %v3733
        %v3786 = vunpack.c.l.b16 %v3737
        %v3787 = vunpack.c.l.b16 %v3740
        %v3788 = vunpack.c.l.b16 %v3744
        %v3789 = vunpack.c.l.b16 %v3747
        %v3790 = vunpack.c.l.b16 %v3751
        %v3791 = vunpack.c.l.b16 %v3754
        %v3792 = vunpack.c.l.b16 %v3758
        %v3793 = vunpack.c.l.b16 %v3761
        %v3794 = vpack.c.b16 %v3763, %v3762
        %v3795 = vpack.c.b16 %v3765, %v3764
        %v3796 = vpack.c.b16 %v3767, %v3766
        %v3797 = vpack.c.b16 %v3769, %v3768
        %v3798 = vpack.c.b16 %v3771, %v3770
        %v3799 = vpack.c.b16 %v3773, %v3772
        %v3800 = vpack.c.b16 %v3775, %v3774
        %v3801 = vpack.c.b16 %v3777, %v3776
        %v3802 = vpack.c.b16 %v3779, %v3778
        %v3803 = vpack.c.b16 %v3781, %v3780
        %v3804 = vpack.c.b16 %v3783, %v3782
        %v3805 = vpack.c.b16 %v3785, %v3784
        %v3806 = vpack.c.b16 %v3787, %v3786
        %v3807 = vpack.c.b16 %v3789, %v3788
        %v3808 = vpack.c.b16 %v3791, %v3790
        %v3809 = vpack.c.b16 %v3793, %v3792
        %3826 = vst.msk [vmem:[#allocation3 + $0x10] sm:$0xff] %vm935, %v3794
        %3827 = vst.msk [vmem:[#allocation3 + $0x28] sm:$0xff] %vm935, %v3795
        %3828 = vst.msk [vmem:[#allocation3 + $0x40] sm:$0xff] %vm935, %v3796
        %3829 = vst.msk [vmem:[#allocation3 + $0x58] sm:$0xff] %vm935, %v3797
        %3830 = vst.msk [vmem:[#allocation3 + $0x70] sm:$0xff] %vm935, %v3798
        %3831 = vst.msk [vmem:[#allocation3 + $0x88] sm:$0xff] %vm935, %v3799
        %3832 = vst.msk [vmem:[#allocation3 + $0xa0] sm:$0xff] %vm935, %v3800
        %3833 = vst.msk [vmem:[#allocation3 + $0xb8] sm:$0xff] %vm935, %v3801
        %3834 = vst.msk [vmem:[#allocation3 + $0xd0] sm:$0xff] %vm935, %v3802
        %3835 = vst.msk [vmem:[#allocation3 + $0xe8] sm:$0xff] %vm935, %v3803
        %3836 = vst.msk [vmem:[#allocation3 + $0x100] sm:$0xff] %vm935, %v3804
        %3837 = vst.msk [vmem:[#allocation3 + $0x118] sm:$0xff] %vm935, %v3805
        %3838 = vst.msk [vmem:[#allocation3 + $0x130] sm:$0xff] %vm935, %v3806
        %3839 = vst.msk [vmem:[#allocation3 + $0x148] sm:$0xff] %vm935, %v3807
        %3840 = vst.msk [vmem:[#allocation3 + $0x160] sm:$0xff] %vm935, %v3808
        %3841 = vst.msk [vmem:[#allocation3 + $0x178] sm:$0xff] %vm935, %v3809
        %v3842 = vld [vmem:[#allocation3] sm:$0xff]
        %v3843 = vld [vmem:[#allocation3 + $0x8] sm:$0xff]
        %v3844 = vld [vmem:[#allocation3 + $0x10] sm:$0xff]
        %v3845 = vld [vmem:[#allocation3 + $0x18] sm:$0xff]
        %v3846 = vld [vmem:[#allocation3 + $0x20] sm:$0xff]
        %v3847 = vld [vmem:[#allocation3 + $0x28] sm:$0xff]
        %v3848 = vld [vmem:[#allocation3 + $0x30] sm:$0xff]
        %v3849 = vld [vmem:[#allocation3 + $0x38] sm:$0xff]
        %v3850 = vld [vmem:[#allocation3 + $0x40] sm:$0xff]
        %v3851 = vld [vmem:[#allocation3 + $0x48] sm:$0xff]
        %v3852 = vld [vmem:[#allocation3 + $0x50] sm:$0xff]
        %v3853 = vld [vmem:[#allocation3 + $0x58] sm:$0xff]
        %v3854 = vld [vmem:[#allocation3 + $0x60] sm:$0xff]
        %v3855 = vld [vmem:[#allocation3 + $0x68] sm:$0xff]
        %v3856 = vld [vmem:[#allocation3 + $0x70] sm:$0xff]
        %v3857 = vld [vmem:[#allocation3 + $0x78] sm:$0xff]
        %v3858 = vld [vmem:[#allocation3 + $0x80] sm:$0xff]
        %v3859 = vld [vmem:[#allocation3 + $0x88] sm:$0xff]
        %v3860 = vld [vmem:[#allocation3 + $0x90] sm:$0xff]
        %v3861 = vld [vmem:[#allocation3 + $0x98] sm:$0xff]
        %v3862 = vld [vmem:[#allocation3 + $0xa0] sm:$0xff]
        %v3863 = vld [vmem:[#allocation3 + $0xa8] sm:$0xff]
        %v3864 = vld [vmem:[#allocation3 + $0xb0] sm:$0xff]
        %v3865 = vld [vmem:[#allocation3 + $0xb8] sm:$0xff]
        %v3866 = vld [vmem:[#allocation3 + $0xc0] sm:$0xff]
        %v3867 = vld [vmem:[#allocation3 + $0xc8] sm:$0xff]
        %v3868 = vld [vmem:[#allocation3 + $0xd0] sm:$0xff]
        %v3869 = vld [vmem:[#allocation3 + $0xd8] sm:$0xff]
        %v3870 = vld [vmem:[#allocation3 + $0xe0] sm:$0xff]
        %v3871 = vld [vmem:[#allocation3 + $0xe8] sm:$0xff]
        %v3872 = vld [vmem:[#allocation3 + $0xf0] sm:$0xff]
        %v3873 = vld [vmem:[#allocation3 + $0xf8] sm:$0xff]
        %v3874 = vld [vmem:[#allocation3 + $0x100] sm:$0xff]
        %v3875 = vld [vmem:[#allocation3 + $0x108] sm:$0xff]
        %v3876 = vld [vmem:[#allocation3 + $0x110] sm:$0xff]
        %v3877 = vld [vmem:[#allocation3 + $0x118] sm:$0xff]
        %v3878 = vld [vmem:[#allocation3 + $0x120] sm:$0xff]
        %v3879 = vld [vmem:[#allocation3 + $0x128] sm:$0xff]
        %v3880 = vld [vmem:[#allocation3 + $0x130] sm:$0xff]
        %v3881 = vld [vmem:[#allocation3 + $0x138] sm:$0xff]
        %v3882 = vld [vmem:[#allocation3 + $0x140] sm:$0xff]
        %v3883 = vld [vmem:[#allocation3 + $0x148] sm:$0xff]
        %v3884 = vld [vmem:[#allocation3 + $0x150] sm:$0xff]
        %v3885 = vld [vmem:[#allocation3 + $0x158] sm:$0xff]
        %v3886 = vld [vmem:[#allocation3 + $0x160] sm:$0xff]
        %v3887 = vld [vmem:[#allocation3 + $0x168] sm:$0xff]
        %v3888 = vld [vmem:[#allocation3 + $0x170] sm:$0xff]
        %v3889 = vld [vmem:[#allocation3 + $0x178] sm:$0xff]
        %v3890 = vld [vmem:[%s1] sm:$0xf]
        %v3891 = vld [vmem:[%s1 + $0x4] sm:$0xf]
        %v3892 = vld [vmem:[%s1 + $0x8] sm:$0xf]
        %v3893 = vld [vmem:[%s1 + $0xc] sm:$0xf]
        %v3894 = vld [vmem:[%s1 + $0x10] sm:$0xf]
        %v3895 = vld [vmem:[%s1 + $0x14] sm:$0xf]
        %v3896 = vld [vmem:[%s1 + $0x18] sm:$0xf]
        %v3897 = vld [vmem:[%s1 + $0x1c] sm:$0xf]
        %v3898 = vld [vmem:[%s1 + $0x20] sm:$0xf]
        %v3899 = vld [vmem:[%s1 + $0x24] sm:$0xf]
        %v3900 = vld [vmem:[%s1 + $0x28] sm:$0xf]
        %v3901 = vld [vmem:[%s1 + $0x2c] sm:$0xf]
        %v3902 = vld [vmem:[%s1 + $0x30] sm:$0xf]
        %v3903 = vld [vmem:[%s1 + $0x34] sm:$0xf]
        %v3904 = vld [vmem:[%s1 + $0x38] sm:$0xf]
        %v3905 = vld [vmem:[%s1 + $0x3c] sm:$0xf]
        %v3906 = vld [vmem:[%s1 + $0x40] sm:$0xf]
        %v3907 = vld [vmem:[%s1 + $0x44] sm:$0xf]
        %v3908 = vld [vmem:[%s1 + $0x48] sm:$0xf]
        %v3909 = vld [vmem:[%s1 + $0x4c] sm:$0xf]
        %v3910 = vld [vmem:[%s1 + $0x50] sm:$0xf]
        %v3911 = vld [vmem:[%s1 + $0x54] sm:$0xf]
        %v3912 = vld [vmem:[%s1 + $0x58] sm:$0xf]
        %v3913 = vld [vmem:[%s1 + $0x5c] sm:$0xf]
        %v3914 = vld [vmem:[%s1 + $0x60] sm:$0xf]
        %v3915 = vld [vmem:[%s1 + $0x64] sm:$0xf]
        %v3916 = vld [vmem:[%s1 + $0x68] sm:$0xf]
        %v3917 = vld [vmem:[%s1 + $0x6c] sm:$0xf]
        %v3918 = vld [vmem:[%s1 + $0x70] sm:$0xf]
        %v3919 = vld [vmem:[%s1 + $0x74] sm:$0xf]
        %v3920 = vld [vmem:[%s1 + $0x78] sm:$0xf]
        %v3921 = vld [vmem:[%s1 + $0x7c] sm:$0xf]
        %v3922 = vld [vmem:[%s1 + $0x80] sm:$0xf]
        %v3923 = vld [vmem:[%s1 + $0x84] sm:$0xf]
        %v3924 = vld [vmem:[%s1 + $0x88] sm:$0xf]
        %v3925 = vld [vmem:[%s1 + $0x8c] sm:$0xf]
        %v3962 = vunpack.c.l.b16 %v3890
        %v3963 = vunpack.c.l.b16 %v3891
        %v3964 = vunpack.c.l.b16 %v3892
        %v3965 = vunpack.c.l.b16 %v3893
        %v3966 = vunpack.c.l.b16 %v3894
        %v3967 = vunpack.c.l.b16 %v3895
        %v3968 = vunpack.c.l.b16 %v3896
        %v3969 = vunpack.c.l.b16 %v3897
        %v3970 = vunpack.c.l.b16 %v3898
        %v3971 = vunpack.c.l.b16 %v3899
        %v3972 = vunpack.c.l.b16 %v3900
        %v3973 = vunpack.c.l.b16 %v3901
        %v3974 = vunpack.c.l.b16 %v3902
        %v3975 = vunpack.c.l.b16 %v3903
        %v3976 = vunpack.c.l.b16 %v3904
        %v3977 = vunpack.c.l.b16 %v3905
        %v3978 = vunpack.c.l.b16 %v3906
        %v3979 = vunpack.c.l.b16 %v3907
        %v3980 = vunpack.c.l.b16 %v3908
        %v3981 = vunpack.c.l.b16 %v3909
        %v3982 = vunpack.c.l.b16 %v3910
        %v3983 = vunpack.c.l.b16 %v3911
        %v3984 = vunpack.c.l.b16 %v3912
        %v3985 = vunpack.c.l.b16 %v3913
        %v3986 = vunpack.c.l.b16 %v3914
        %v3987 = vunpack.c.l.b16 %v3915
        %v3988 = vunpack.c.l.b16 %v3916
        %v3989 = vunpack.c.l.b16 %v3917
        %v3990 = vunpack.c.l.b16 %v3918
        %v3991 = vunpack.c.l.b16 %v3919
        %v3992 = vunpack.c.l.b16 %v3920
        %v3993 = vunpack.c.l.b16 %v3921
        %v3994 = vunpack.c.l.b16 %v3922
        %v3995 = vunpack.c.l.b16 %v3923
        %v3996 = vunpack.c.l.b16 %v3924
        %v3997 = vunpack.c.l.b16 %v3925
        %v3998 = vpack.c.b16 %v3963, %v3962
        %v3999 = vpack.c.b16 %v3965, %v3964
        %v4000 = vpack.c.b16 %v3967, %v3966
        %v4001 = vpack.c.b16 %v3969, %v3968
        %v4002 = vpack.c.b16 %v3971, %v3970
        %v4003 = vpack.c.b16 %v3973, %v3972
        %v4004 = vpack.c.b16 %v3975, %v3974
        %v4005 = vpack.c.b16 %v3977, %v3976
        %v4006 = vpack.c.b16 %v3979, %v3978
        %v4007 = vpack.c.b16 %v3981, %v3980
        %v4008 = vpack.c.b16 %v3983, %v3982
        %v4009 = vpack.c.b16 %v3985, %v3984
        %v4010 = vpack.c.b16 %v3987, %v3986
        %v4011 = vpack.c.b16 %v3989, %v3988
        %v4012 = vpack.c.b16 %v3991, %v3990
        %v4013 = vpack.c.b16 %v3993, %v3992
        %v4014 = vpack.c.b16 %v3995, %v3994
        %v4015 = vpack.c.b16 %v3997, %v3996
        %v4035 = vsel %vm935, %v3844, 0
        %v4038 = vsel %vm935, %v3847, 0
        %v4041 = vsel %vm935, %v3850, 0
        %v4044 = vsel %vm935, %v3853, 0
        %v4047 = vsel %vm935, %v3856, 0
        %v4050 = vsel %vm935, %v3859, 0
        %v4053 = vsel %vm935, %v3862, 0
        %v4056 = vsel %vm935, %v3865, 0
        %v4059 = vsel %vm935, %v3868, 0
        %v4062 = vsel %vm935, %v3871, 0
        %v4065 = vsel %vm935, %v3874, 0
        %v4068 = vsel %vm935, %v3877, 0
        %v4071 = vsel %vm935, %v3880, 0
        %v4074 = vsel %vm935, %v3883, 0
        %v4077 = vsel %vm935, %v3886, 0
        %v4080 = vsel %vm935, %v3889, 0
        %4082 = vmatprep.subr.bf16.mxu0 0
        %4083 = vmatpush1.bf16.msra.mxu0 %v3998
        %4084 = vmatprep.subr.bf16.mxu0 0
        %4085 = vmatpush1.bf16.msra.mxu0 %v3999
        %4086 = vmatprep.subr.bf16.mxu0 0
        %4087 = vmatpush1.bf16.msra.mxu0 %v4000
        %4088 = vmatprep.subr.bf16.mxu0 0
        %4089 = vmatpush1.bf16.msra.mxu0 %v4001
        %4090 = vmatprep.subr.bf16.mxu0 0
        %4091 = vmatpush1.bf16.msra.mxu0 %v4002
        %4092 = vmatprep.subr.bf16.mxu0 0
        %4093 = vmatpush1.bf16.msra.mxu0 %v4003
        %4094 = vmatprep.subr.bf16.mxu0 0
        %4095 = vmatpush1.bf16.msra.mxu0 %v4004
        %4096 = vmatprep.subr.bf16.mxu0 0
        %4097 = vmatpush1.bf16.msra.mxu0 %v4005
        %4098 = vmatprep.subr.bf16.mxu0 0
        %4099 = vmatpush1.bf16.msra.mxu0 %v4006
        %4100 = vmatprep.subr.bf16.mxu0 0
        %4101 = vmatpush1.bf16.msra.mxu0 %v4007
        %4102 = vmatprep.subr.bf16.mxu0 0
        %4103 = vmatpush1.bf16.msra.mxu0 %v4008
        %4104 = vmatprep.subr.bf16.mxu0 0
        %4105 = vmatpush1.bf16.msra.mxu0 %v4009
        %4106 = vmatprep.subr.bf16.mxu0 0
        %4107 = vmatpush1.bf16.msra.mxu0 %v4010
        %4108 = vmatprep.subr.bf16.mxu0 0
        %4109 = vmatpush1.bf16.msra.mxu0 %v4011
        %4110 = vmatprep.subr.bf16.mxu0 0
        %4111 = vmatpush1.bf16.msra.mxu0 %v4012
        %4112 = vmatprep.subr.bf16.mxu0 0
        %4113 = vmatpush1.bf16.msra.mxu0 %v4013
        %4114 = vmatprep.mubr.bf16.mxu0 %v3843
        %4115 = vmatmul.mubr.bf16.gmra.mrb[0].mxu0 %v3842
        %v4116 = vpop.f32.mrb[0].mxu0
        %v4117 = vadd.f32 0.0, %v4116
        %v4118 = vpop.f32.mrb[0].mxu0
        %v4119 = vpop.f32.mrb[0].mxu0
        %v4120 = vadd.f32 0.0, %v4119
        %v4121 = vpop.f32.mrb[0].mxu0
        %4122 = vmatprep.mubr.bf16.mxu0 %v3846
        %4123 = vmatmul.mubr.bf16.gmra.mrb[0].mxu0 %v3845
        %v4124 = vpop.f32.mrb[0].mxu0
        %v4125 = vadd.f32 0.0, %v4124
        %v4126 = vpop.f32.mrb[0].mxu0
        %v4127 = vpop.f32.mrb[0].mxu0
        %v4128 = vadd.f32 0.0, %v4127
        %v4129 = vpop.f32.mrb[0].mxu0
        %4130 = vmatprep.mubr.bf16.mxu0 %v3849
        %4131 = vmatmul.mubr.bf16.gmra.mrb[0].mxu0 %v3848
        %v4132 = vpop.f32.mrb[0].mxu0
        %v4133 = vadd.f32 0.0, %v4132
        %v4134 = vpop.f32.mrb[0].mxu0
        %v4135 = vpop.f32.mrb[0].mxu0
        %v4136 = vadd.f32 0.0, %v4135
        %v4137 = vpop.f32.mrb[0].mxu0
        %4138 = vmatprep.mubr.bf16.mxu0 %v3852
        %4139 = vmatmul.mubr.bf16.gmra.mrb[0].mxu0 %v3851
        %v4140 = vpop.f32.mrb[0].mxu0
        %v4141 = vadd.f32 0.0, %v4140
        %v4142 = vpop.f32.mrb[0].mxu0
        %v4143 = vpop.f32.mrb[0].mxu0
        %v4144 = vadd.f32 0.0, %v4143
        %v4145 = vpop.f32.mrb[0].mxu0
        %4146 = vmatprep.mubr.bf16.mxu0 %v3855
        %4147 = vmatmul.mubr.bf16.gmra.mrb[0].mxu0 %v3854
        %v4148 = vpop.f32.mrb[0].mxu0
        %v4149 = vadd.f32 0.0, %v4148
        %v4150 = vpop.f32.mrb[0].mxu0
        %v4151 = vpop.f32.mrb[0].mxu0
        %v4152 = vadd.f32 0.0, %v4151
        %v4153 = vpop.f32.mrb[0].mxu0
        %4154 = vmatprep.mubr.bf16.mxu0 %v3858
        %4155 = vmatmul.mubr.bf16.gmra.mrb[0].mxu0 %v3857
        %v4156 = vpop.f32.mrb[0].mxu0
        %v4157 = vadd.f32 0.0, %v4156
        %v4158 = vpop.f32.mrb[0].mxu0
        %v4159 = vpop.f32.mrb[0].mxu0
        %v4160 = vadd.f32 0.0, %v4159
        %v4161 = vpop.f32.mrb[0].mxu0
        %4162 = vmatprep.mubr.bf16.mxu0 %v3861
        %4163 = vmatmul.mubr.bf16.gmra.mrb[0].mxu0 %v3860
        %v4164 = vpop.f32.mrb[0].mxu0
        %v4165 = vadd.f32 0.0, %v4164
        %v4166 = vpop.f32.mrb[0].mxu0
        %v4167 = vpop.f32.mrb[0].mxu0
        %v4168 = vadd.f32 0.0, %v4167
        %v4169 = vpop.f32.mrb[0].mxu0
        %4170 = vmatprep.mubr.bf16.mxu0 %v3864
        %4171 = vmatmul.mubr.bf16.gmra.mrb[0].mxu0 %v3863
        %v4172 = vpop.f32.mrb[0].mxu0
        %v4173 = vadd.f32 0.0, %v4172
        %v4174 = vpop.f32.mrb[0].mxu0
        %v4175 = vpop.f32.mrb[0].mxu0
        %v4176 = vadd.f32 0.0, %v4175
        %v4177 = vpop.f32.mrb[0].mxu0
        %4178 = vmatprep.mubr.bf16.mxu0 %v3867
        %4179 = vmatmul.mubr.bf16.gmra.mrb[0].mxu0 %v3866
        %v4180 = vpop.f32.mrb[0].mxu0
        %v4181 = vadd.f32 0.0, %v4180
        %v4182 = vpop.f32.mrb[0].mxu0
        %v4183 = vpop.f32.mrb[0].mxu0
        %v4184 = vadd.f32 0.0, %v4183
        %v4185 = vpop.f32.mrb[0].mxu0
        %4186 = vmatprep.mubr.bf16.mxu0 %v3870
        %4187 = vmatmul.mubr.bf16.gmra.mrb[0].mxu0 %v3869
        %v4188 = vpop.f32.mrb[0].mxu0
        %v4189 = vadd.f32 0.0, %v4188
        %v4190 = vpop.f32.mrb[0].mxu0
        %v4191 = vpop.f32.mrb[0].mxu0
        %v4192 = vadd.f32 0.0, %v4191
        %v4193 = vpop.f32.mrb[0].mxu0
        %4194 = vmatprep.mubr.bf16.mxu0 %v3873
        %4195 = vmatmul.mubr.bf16.gmra.mrb[0].mxu0 %v3872
        %v4196 = vpop.f32.mrb[0].mxu0
        %v4197 = vadd.f32 0.0, %v4196
        %v4198 = vpop.f32.mrb[0].mxu0
        %v4199 = vpop.f32.mrb[0].mxu0
        %v4200 = vadd.f32 0.0, %v4199
        %v4201 = vpop.f32.mrb[0].mxu0
        %4202 = vmatprep.mubr.bf16.mxu0 %v3876
        %4203 = vmatmul.mubr.bf16.gmra.mrb[0].mxu0 %v3875
        %v4204 = vpop.f32.mrb[0].mxu0
        %v4205 = vadd.f32 0.0, %v4204
        %v4206 = vpop.f32.mrb[0].mxu0
        %v4207 = vpop.f32.mrb[0].mxu0
        %v4208 = vadd.f32 0.0, %v4207
        %v4209 = vpop.f32.mrb[0].mxu0
        %4210 = vmatprep.mubr.bf16.mxu0 %v3879
        %4211 = vmatmul.mubr.bf16.gmra.mrb[0].mxu0 %v3878
        %v4212 = vpop.f32.mrb[0].mxu0
        %v4213 = vadd.f32 0.0, %v4212
        %v4214 = vpop.f32.mrb[0].mxu0
        %v4215 = vpop.f32.mrb[0].mxu0
        %v4216 = vadd.f32 0.0, %v4215
        %v4217 = vpop.f32.mrb[0].mxu0
        %4218 = vmatprep.mubr.bf16.mxu0 %v3882
        %4219 = vmatmul.mubr.bf16.gmra.mrb[0].mxu0 %v3881
        %v4220 = vpop.f32.mrb[0].mxu0
        %v4221 = vadd.f32 0.0, %v4220
        %v4222 = vpop.f32.mrb[0].mxu0
        %v4223 = vpop.f32.mrb[0].mxu0
        %v4224 = vadd.f32 0.0, %v4223
        %v4225 = vpop.f32.mrb[0].mxu0
        %4226 = vmatprep.mubr.bf16.mxu0 %v3885
        %4227 = vmatmul.mubr.bf16.gmra.mrb[0].mxu0 %v3884
        %v4228 = vpop.f32.mrb[0].mxu0
        %v4229 = vadd.f32 0.0, %v4228
        %v4230 = vpop.f32.mrb[0].mxu0
        %v4231 = vpop.f32.mrb[0].mxu0
        %v4232 = vadd.f32 0.0, %v4231
        %v4233 = vpop.f32.mrb[0].mxu0
        %4234 = vmatprep.mubr.bf16.mxu0 %v3888
        %4235 = vmatmul.mubr.bf16.gmra.mrb[0].mxu0 %v3887
        %v4236 = vpop.f32.mrb[0].mxu0
        %v4237 = vadd.f32 0.0, %v4236
        %v4238 = vpop.f32.mrb[0].mxu0
        %v4239 = vpop.f32.mrb[0].mxu0
        %v4240 = vadd.f32 0.0, %v4239
        %v4241 = vpop.f32.mrb[0].mxu0
        %4242 = vdwg.mxu0
        %4243 = vmatprep.subr.bf16.mxu0 0
        %4244 = vmatpush1.bf16.msra.mxu0 %v4014
        %4245 = vmatprep.subr.bf16.mxu0 0
        %4246 = vmatpush1.bf16.msra.mxu0 %v4015
        %4247 = vmatprep.subr.bf16.mxu0 0
        %4248 = vmatpush1.bf16.msra.mxu0 0
        %4249 = vmatprep.subr.bf16.mxu0 0
        %4250 = vmatpush1.bf16.msra.mxu0 0
        %4251 = vmatprep.subr.bf16.mxu0 0
        %4252 = vmatpush1.bf16.msra.mxu0 0
        %4253 = vmatprep.subr.bf16.mxu0 0
        %4254 = vmatpush1.bf16.msra.mxu0 0
        %4255 = vmatprep.subr.bf16.mxu0 0
        %4256 = vmatpush1.bf16.msra.mxu0 0
        %4257 = vmatprep.subr.bf16.mxu0 0
        %4258 = vmatpush1.bf16.msra.mxu0 0
        %4259 = vmatprep.subr.bf16.mxu0 0
        %4260 = vmatpush1.bf16.msra.mxu0 0
        %4261 = vmatprep.subr.bf16.mxu0 0
        %4262 = vmatpush1.bf16.msra.mxu0 0
        %4263 = vmatprep.subr.bf16.mxu0 0
        %4264 = vmatpush1.bf16.msra.mxu0 0
        %4265 = vmatprep.subr.bf16.mxu0 0
        %4266 = vmatpush1.bf16.msra.mxu0 0
        %4267 = vmatprep.subr.bf16.mxu0 0
        %4268 = vmatpush1.bf16.msra.mxu0 0
        %4269 = vmatprep.subr.bf16.mxu0 0
        %4270 = vmatpush1.bf16.msra.mxu0 0
        %4271 = vmatprep.subr.bf16.mxu0 0
        %4272 = vmatpush1.bf16.msra.mxu0 0
        %4273 = vmatprep.subr.bf16.mxu0 0
        %4274 = vmatpush1.bf16.msra.mxu0 0
        %4275 = vmatprep.mubr.bf16.mxu0 0
        %4276 = vmatmul.mubr.bf16.gmra.mrb[0].mxu0 %v4035
        %v4277 = vpop.f32.mrb[0].mxu0
        %v4278 = vadd.f32 %v4117, %v4277
        %v4279 = vpop.f32.mrb[0].mxu0
        %v4280 = vpop.f32.mrb[0].mxu0
        %v4281 = vadd.f32 %v4120, %v4280
        %v4282 = vpop.f32.mrb[0].mxu0
        %4283 = vmatprep.mubr.bf16.mxu0 0
        %4284 = vmatmul.mubr.bf16.gmra.mrb[0].mxu0 %v4038
        %v4285 = vpop.f32.mrb[0].mxu0
        %v4286 = vadd.f32 %v4125, %v4285
        %v4287 = vpop.f32.mrb[0].mxu0
        %v4288 = vpop.f32.mrb[0].mxu0
        %v4289 = vadd.f32 %v4128, %v4288
        %v4290 = vpop.f32.mrb[0].mxu0
        %4291 = vmatprep.mubr.bf16.mxu0 0
        %4292 = vmatmul.mubr.bf16.gmra.mrb[0].mxu0 %v4041
        %v4293 = vpop.f32.mrb[0].mxu0
        %v4294 = vadd.f32 %v4133, %v4293
        %v4295 = vpop.f32.mrb[0].mxu0
        %v4296 = vpop.f32.mrb[0].mxu0
        %v4297 = vadd.f32 %v4136, %v4296
        %v4298 = vpop.f32.mrb[0].mxu0
        %4299 = vmatprep.mubr.bf16.mxu0 0
        %4300 = vmatmul.mubr.bf16.gmra.mrb[0].mxu0 %v4044
        %v4301 = vpop.f32.mrb[0].mxu0
        %v4302 = vadd.f32 %v4141, %v4301
        %v4303 = vpop.f32.mrb[0].mxu0
        %v4304 = vpop.f32.mrb[0].mxu0
        %v4305 = vadd.f32 %v4144, %v4304
        %v4306 = vpop.f32.mrb[0].mxu0
        %4307 = vmatprep.mubr.bf16.mxu0 0
        %4308 = vmatmul.mubr.bf16.gmra.mrb[0].mxu0 %v4047
        %v4309 = vpop.f32.mrb[0].mxu0
        %v4310 = vadd.f32 %v4149, %v4309
        %v4311 = vpop.f32.mrb[0].mxu0
        %v4312 = vpop.f32.mrb[0].mxu0
        %v4313 = vadd.f32 %v4152, %v4312
        %v4314 = vpop.f32.mrb[0].mxu0
        %4315 = vmatprep.mubr.bf16.mxu0 0
        %4316 = vmatmul.mubr.bf16.gmra.mrb[0].mxu0 %v4050
        %v4317 = vpop.f32.mrb[0].mxu0
        %v4318 = vadd.f32 %v4157, %v4317
        %v4319 = vpop.f32.mrb[0].mxu0
        %v4320 = vpop.f32.mrb[0].mxu0
        %v4321 = vadd.f32 %v4160, %v4320
        %v4322 = vpop.f32.mrb[0].mxu0
        %4323 = vmatprep.mubr.bf16.mxu0 0
        %4324 = vmatmul.mubr.bf16.gmra.mrb[0].mxu0 %v4053
        %v4325 = vpop.f32.mrb[0].mxu0
        %v4326 = vadd.f32 %v4165, %v4325
        %v4327 = vpop.f32.mrb[0].mxu0
        %v4328 = vpop.f32.mrb[0].mxu0
        %v4329 = vadd.f32 %v4168, %v4328
        %v4330 = vpop.f32.mrb[0].mxu0
        %4331 = vmatprep.mubr.bf16.mxu0 0
        %4332 = vmatmul.mubr.bf16.gmra.mrb[0].mxu0 %v4056
        %v4333 = vpop.f32.mrb[0].mxu0
        %v4334 = vadd.f32 %v4173, %v4333
        %v4335 = vpop.f32.mrb[0].mxu0
        %v4336 = vpop.f32.mrb[0].mxu0
        %v4337 = vadd.f32 %v4176, %v4336
        %v4338 = vpop.f32.mrb[0].mxu0
        %4339 = vmatprep.mubr.bf16.mxu0 0
        %4340 = vmatmul.mubr.bf16.gmra.mrb[0].mxu0 %v4059
        %v4341 = vpop.f32.mrb[0].mxu0
        %v4342 = vadd.f32 %v4181, %v4341
        %v4343 = vpop.f32.mrb[0].mxu0
        %v4344 = vpop.f32.mrb[0].mxu0
        %v4345 = vadd.f32 %v4184, %v4344
        %v4346 = vpop.f32.mrb[0].mxu0
        %4347 = vmatprep.mubr.bf16.mxu0 0
        %4348 = vmatmul.mubr.bf16.gmra.mrb[0].mxu0 %v4062
        %v4349 = vpop.f32.mrb[0].mxu0
        %v4350 = vadd.f32 %v4189, %v4349
        %v4351 = vpop.f32.mrb[0].mxu0
        %v4352 = vpop.f32.mrb[0].mxu0
        %v4353 = vadd.f32 %v4192, %v4352
        %v4354 = vpop.f32.mrb[0].mxu0
        %4355 = vmatprep.mubr.bf16.mxu0 0
        %4356 = vmatmul.mubr.bf16.gmra.mrb[0].mxu0 %v4065
        %v4357 = vpop.f32.mrb[0].mxu0
        %v4358 = vadd.f32 %v4197, %v4357
        %v4359 = vpop.f32.mrb[0].mxu0
        %v4360 = vpop.f32.mrb[0].mxu0
        %v4361 = vadd.f32 %v4200, %v4360
        %v4362 = vpop.f32.mrb[0].mxu0
        %4363 = vmatprep.mubr.bf16.mxu0 0
        %4364 = vmatmul.mubr.bf16.gmra.mrb[0].mxu0 %v4068
        %v4365 = vpop.f32.mrb[0].mxu0
        %v4366 = vadd.f32 %v4205, %v4365
        %v4367 = vpop.f32.mrb[0].mxu0
        %v4368 = vpop.f32.mrb[0].mxu0
        %v4369 = vadd.f32 %v4208, %v4368
        %v4370 = vpop.f32.mrb[0].mxu0
        %4371 = vmatprep.mubr.bf16.mxu0 0
        %4372 = vmatmul.mubr.bf16.gmra.mrb[0].mxu0 %v4071
        %v4373 = vpop.f32.mrb[0].mxu0
        %v4374 = vadd.f32 %v4213, %v4373
        %v4375 = vpop.f32.mrb[0].mxu0
        %v4376 = vpop.f32.mrb[0].mxu0
        %v4377 = vadd.f32 %v4216, %v4376
        %v4378 = vpop.f32.mrb[0].mxu0
        %4379 = vmatprep.mubr.bf16.mxu0 0
        %4380 = vmatmul.mubr.bf16.gmra.mrb[0].mxu0 %v4074
        %v4381 = vpop.f32.mrb[0].mxu0
        %v4382 = vadd.f32 %v4221, %v4381
        %v4383 = vpop.f32.mrb[0].mxu0
        %v4384 = vpop.f32.mrb[0].mxu0
        %v4385 = vadd.f32 %v4224, %v4384
        %v4386 = vpop.f32.mrb[0].mxu0
        %4387 = vmatprep.mubr.bf16.mxu0 0
        %4388 = vmatmul.mubr.bf16.gmra.mrb[0].mxu0 %v4077
        %v4389 = vpop.f32.mrb[0].mxu0
        %v4390 = vadd.f32 %v4229, %v4389
        %v4391 = vpop.f32.mrb[0].mxu0
        %v4392 = vpop.f32.mrb[0].mxu0
        %v4393 = vadd.f32 %v4232, %v4392
        %v4394 = vpop.f32.mrb[0].mxu0
        %4395 = vmatprep.mubr.bf16.mxu0 0
        %4396 = vmatmul.mubr.bf16.gmra.mrb[0].mxu0 %v4080
        %v4397 = vpop.f32.mrb[0].mxu0
        %v4398 = vadd.f32 %v4237, %v4397
        %v4399 = vpop.f32.mrb[0].mxu0
        %v4400 = vpop.f32.mrb[0].mxu0
        %v4401 = vadd.f32 %v4240, %v4400
        %v4402 = vpop.f32.mrb[0].mxu0
        %4403 = vdwg.mxu0
        %v4404 = vld [vmem:[%s2] sm:$0x1]
        %v4406 = vlaneseq
        %v4407 = vshrl.u32 %v4406, 7
        %v4408 = vsub.s32 0, %v4407
        %v4409 = vrot.slane %v4404, %v4408
        %v4411 = vmul.f32 %v4278, %v4409
        %v4412 = vmul.f32 %v4281, %v4409
        %v4413 = vmul.f32 %v4286, %v4409
        %v4414 = vmul.f32 %v4289, %v4409
        %v4415 = vmul.f32 %v4294, %v4409
        %v4416 = vmul.f32 %v4297, %v4409
        %v4417 = vmul.f32 %v4302, %v4409
        %v4418 = vmul.f32 %v4305, %v4409
        %v4419 = vmul.f32 %v4310, %v4409
        %v4420 = vmul.f32 %v4313, %v4409
        %v4421 = vmul.f32 %v4318, %v4409
        %v4422 = vmul.f32 %v4321, %v4409
        %v4423 = vmul.f32 %v4326, %v4409
        %v4424 = vmul.f32 %v4329, %v4409
        %v4425 = vmul.f32 %v4334, %v4409
        %v4426 = vmul.f32 %v4337, %v4409
        %v4427 = vmul.f32 %v4342, %v4409
        %v4428 = vmul.f32 %v4345, %v4409
        %v4429 = vmul.f32 %v4350, %v4409
        %v4430 = vmul.f32 %v4353, %v4409
        %v4431 = vmul.f32 %v4358, %v4409
        %v4432 = vmul.f32 %v4361, %v4409
        %v4433 = vmul.f32 %v4366, %v4409
        %v4434 = vmul.f32 %v4369, %v4409
        %v4435 = vmul.f32 %v4374, %v4409
        %v4436 = vmul.f32 %v4377, %v4409
        %v4437 = vmul.f32 %v4382, %v4409
        %v4438 = vmul.f32 %v4385, %v4409
        %v4439 = vmul.f32 %v4390, %v4409
        %v4440 = vmul.f32 %v4393, %v4409
        %v4441 = vmul.f32 %v4398, %v4409
        %v4442 = vmul.f32 %v4401, %v4409
        %v4443 = vld [vmem:[%s3] sm:$0x1]
        %v4445 = vlaneseq
        %v4446 = vshrl.u32 %v4445, 7
        %v4447 = vsub.s32 0, %v4446
        %v4448 = vrot.slane %v4443, %v4447
        %v4450 = vadd.f32 %v4411, %v4448
        %v4451 = vadd.f32 %v4412, %v4448
        %v4452 = vadd.f32 %v4413, %v4448
        %v4453 = vadd.f32 %v4414, %v4448
        %v4454 = vadd.f32 %v4415, %v4448
        %v4455 = vadd.f32 %v4416, %v4448
        %v4456 = vadd.f32 %v4417, %v4448
        %v4457 = vadd.f32 %v4418, %v4448
        %v4458 = vadd.f32 %v4419, %v4448
        %v4459 = vadd.f32 %v4420, %v4448
        %v4460 = vadd.f32 %v4421, %v4448
        %v4461 = vadd.f32 %v4422, %v4448
        %v4462 = vadd.f32 %v4423, %v4448
        %v4463 = vadd.f32 %v4424, %v4448
        %v4464 = vadd.f32 %v4425, %v4448
        %v4465 = vadd.f32 %v4426, %v4448
        %v4466 = vadd.f32 %v4427, %v4448
        %v4467 = vadd.f32 %v4428, %v4448
        %v4468 = vadd.f32 %v4429, %v4448
        %v4469 = vadd.f32 %v4430, %v4448
        %v4470 = vadd.f32 %v4431, %v4448
        %v4471 = vadd.f32 %v4432, %v4448
        %v4472 = vadd.f32 %v4433, %v4448
        %v4473 = vadd.f32 %v4434, %v4448
        %v4474 = vadd.f32 %v4435, %v4448
        %v4475 = vadd.f32 %v4436, %v4448
        %v4476 = vadd.f32 %v4437, %v4448
        %v4477 = vadd.f32 %v4438, %v4448
        %v4478 = vadd.f32 %v4439, %v4448
        %v4479 = vadd.f32 %v4440, %v4448
        %v4480 = vadd.f32 %v4441, %v4448
        %v4481 = vadd.f32 %v4442, %v4448
        %v4482 = vmax.f32 %v4450, 0.0
        %v4483 = vmax.f32 %v4451, 0.0
        %v4484 = vmax.f32 %v4452, 0.0
        %v4485 = vmax.f32 %v4453, 0.0
        %v4486 = vmax.f32 %v4454, 0.0
        %v4487 = vmax.f32 %v4455, 0.0
        %v4488 = vmax.f32 %v4456, 0.0
        %v4489 = vmax.f32 %v4457, 0.0
        %v4490 = vmax.f32 %v4458, 0.0
        %v4491 = vmax.f32 %v4459, 0.0
        %v4492 = vmax.f32 %v4460, 0.0
        %v4493 = vmax.f32 %v4461, 0.0
        %v4494 = vmax.f32 %v4462, 0.0
        %v4495 = vmax.f32 %v4463, 0.0
        %v4496 = vmax.f32 %v4464, 0.0
        %v4497 = vmax.f32 %v4465, 0.0
        %v4498 = vmax.f32 %v4466, 0.0
        %v4499 = vmax.f32 %v4467, 0.0
        %v4500 = vmax.f32 %v4468, 0.0
        %v4501 = vmax.f32 %v4469, 0.0
        %v4502 = vmax.f32 %v4470, 0.0
        %v4503 = vmax.f32 %v4471, 0.0
        %v4504 = vmax.f32 %v4472, 0.0
        %v4505 = vmax.f32 %v4473, 0.0
        %v4506 = vmax.f32 %v4474, 0.0
        %v4507 = vmax.f32 %v4475, 0.0
        %v4508 = vmax.f32 %v4476, 0.0
        %v4509 = vmax.f32 %v4477, 0.0
        %v4510 = vmax.f32 %v4478, 0.0
        %v4511 = vmax.f32 %v4479, 0.0
        %v4512 = vmax.f32 %v4480, 0.0
        %v4513 = vmax.f32 %v4481, 0.0
        %v4514 = vpack.c.bf16 %v4483, %v4482
        %v4515 = vpack.c.bf16 %v4485, %v4484
        %v4516 = vpack.c.bf16 %v4487, %v4486
        %v4517 = vpack.c.bf16 %v4489, %v4488
        %v4518 = vpack.c.bf16 %v4491, %v4490
        %v4519 = vpack.c.bf16 %v4493, %v4492
        %v4520 = vpack.c.bf16 %v4495, %v4494
        %v4521 = vpack.c.bf16 %v4497, %v4496
        %v4522 = vpack.c.bf16 %v4499, %v4498
        %v4523 = vpack.c.bf16 %v4501, %v4500
        %v4524 = vpack.c.bf16 %v4503, %v4502
        %v4525 = vpack.c.bf16 %v4505, %v4504
        %v4526 = vpack.c.bf16 %v4507, %v4506
        %v4527 = vpack.c.bf16 %v4509, %v4508
        %v4528 = vpack.c.bf16 %v4511, %v4510
        %v4529 = vpack.c.bf16 %v4513, %v4512
        %4530 = vst.msk [vmem:[#allocation4] sm:$0xf] %vm310, 0
        %4531 = vst.msk [vmem:[#allocation4 + $0x4] sm:$0xf] %vm310, 0
        %4532 = vst.msk [vmem:[#allocation4 + $0x8] sm:$0x1] %vm313, 0
        %4533 = vst.msk [vmem:[#allocation4 + $0xc] sm:$0xf] %vm310, 0
        %4534 = vst.msk [vmem:[#allocation4 + $0x10] sm:$0xf] %vm310, 0
        %4535 = vst.msk [vmem:[#allocation4 + $0x14] sm:$0x1] %vm313, 0
        %4536 = vst.msk [vmem:[#allocation4 + $0x18] sm:$0xf] %vm310, 0
        %4537 = vst.msk [vmem:[#allocation4 + $0x1c] sm:$0xf] %vm310, 0
        %4538 = vst.msk [vmem:[#allocation4 + $0x20] sm:$0x1] %vm313, 0
        %4539 = vst.msk [vmem:[#allocation4 + $0x24] sm:$0xf] %vm310, 0
        %4540 = vst.msk [vmem:[#allocation4 + $0x28] sm:$0xf] %vm310, 0
        %4541 = vst.msk [vmem:[#allocation4 + $0x2c] sm:$0x1] %vm313, 0
        %4542 = vst.msk [vmem:[#allocation4 + $0x30] sm:$0xf] %vm310, 0
        %4543 = vst.msk [vmem:[#allocation4 + $0x34] sm:$0xf] %vm310, 0
        %4544 = vst.msk [vmem:[#allocation4 + $0x38] sm:$0x1] %vm313, 0
        %4545 = vst.msk [vmem:[#allocation4 + $0x3c] sm:$0xf] %vm310, 0
        %4546 = vst.msk [vmem:[#allocation4 + $0x40] sm:$0xf] %vm310, 0
        %4547 = vst.msk [vmem:[#allocation4 + $0x44] sm:$0x1] %vm313, 0
        %4548 = vst.msk [vmem:[#allocation4 + $0x48] sm:$0xf] %vm310, 0
        %4549 = vst.msk [vmem:[#allocation4 + $0x4c] sm:$0xf] %vm310, 0
        %4550 = vst.msk [vmem:[#allocation4 + $0x50] sm:$0x1] %vm313, 0
        %4551 = vst.msk [vmem:[#allocation4 + $0x54] sm:$0xf] %vm310, 0
        %4552 = vst.msk [vmem:[#allocation4 + $0x58] sm:$0xf] %vm310, 0
        %4553 = vst.msk [vmem:[#allocation4 + $0x5c] sm:$0x1] %vm313, 0
        %4554 = vst.msk [vmem:[#allocation4 + $0x60] sm:$0xf] %vm310, 0
        %4555 = vst.msk [vmem:[#allocation4 + $0x64] sm:$0xf] %vm310, 0
        %4556 = vst.msk [vmem:[#allocation4 + $0x68] sm:$0x1] %vm313, 0
        %4557 = vst.msk [vmem:[#allocation4 + $0x6c] sm:$0xf] %vm310, 0
        %4558 = vst.msk [vmem:[#allocation4 + $0x70] sm:$0xf] %vm310, 0
        %4559 = vst.msk [vmem:[#allocation4 + $0x74] sm:$0x1] %vm313, 0
        %4560 = vst.msk [vmem:[#allocation4 + $0x78] sm:$0xf] %vm310, 0
        %4561 = vst.msk [vmem:[#allocation4 + $0x7c] sm:$0xf] %vm310, 0
        %4562 = vst.msk [vmem:[#allocation4 + $0x80] sm:$0x1] %vm313, 0
        %4563 = vst.msk [vmem:[#allocation4 + $0x84] sm:$0xf] %vm310, 0
        %4564 = vst.msk [vmem:[#allocation4 + $0x88] sm:$0xf] %vm310, 0
        %4565 = vst.msk [vmem:[#allocation4 + $0x8c] sm:$0x1] %vm313, 0
        %4566 = vst.msk [vmem:[#allocation4 + $0x90] sm:$0xf] %vm310, 0
        %4567 = vst.msk [vmem:[#allocation4 + $0x94] sm:$0xf] %vm310, 0
        %4568 = vst.msk [vmem:[#allocation4 + $0x98] sm:$0x1] %vm313, 0
        %4569 = vst.msk [vmem:[#allocation4 + $0x9c] sm:$0xf] %vm310, 0
        %4570 = vst.msk [vmem:[#allocation4 + $0xa0] sm:$0xf] %vm310, 0
        %4571 = vst.msk [vmem:[#allocation4 + $0xa4] sm:$0x1] %vm313, 0
        %4572 = vst.msk [vmem:[#allocation4 + $0xa8] sm:$0xf] %vm310, 0
        %4573 = vst.msk [vmem:[#allocation4 + $0xac] sm:$0xf] %vm310, 0
        %4574 = vst.msk [vmem:[#allocation4 + $0xb0] sm:$0x1] %vm313, 0
        %4575 = vst.msk [vmem:[#allocation4 + $0xb4] sm:$0xf] %vm310, 0
        %4576 = vst.msk [vmem:[#allocation4 + $0xb8] sm:$0xf] %vm310, 0
        %4577 = vst.msk [vmem:[#allocation4 + $0xbc] sm:$0x1] %vm313, 0
        %4578 = vst.msk [vmem:[#allocation4 + $0xc0] sm:$0xf] %vm310, 0
        %4579 = vst.msk [vmem:[#allocation4 + $0xc4] sm:$0xf] %vm310, 0
        %4580 = vst.msk [vmem:[#allocation4 + $0xc8] sm:$0x1] %vm313, 0
        %4581 = vst.msk [vmem:[#allocation4 + $0xcc] sm:$0xf] %vm310, 0
        %4582 = vst.msk [vmem:[#allocation4 + $0xd0] sm:$0xf] %vm310, 0
        %4583 = vst.msk [vmem:[#allocation4 + $0xd4] sm:$0x1] %vm313, 0
        %v4600 = vunpack.c.l.b16 %v4514
        %v4601 = vunpack.c.h.b16 %v4514
        %v4602 = vunpack.c.l.b16 %v4515
        %v4603 = vunpack.c.h.b16 %v4515
        %v4604 = vunpack.c.l.b16 %v4516
        %v4605 = vunpack.c.h.b16 %v4516
        %v4606 = vunpack.c.l.b16 %v4517
        %v4607 = vunpack.c.h.b16 %v4517
        %v4608 = vunpack.c.l.b16 %v4518
        %v4609 = vunpack.c.h.b16 %v4518
        %v4610 = vunpack.c.l.b16 %v4519
        %v4611 = vunpack.c.h.b16 %v4519
        %v4612 = vunpack.c.l.b16 %v4520
        %v4613 = vunpack.c.h.b16 %v4520
        %v4614 = vunpack.c.l.b16 %v4521
        %v4615 = vunpack.c.h.b16 %v4521
        %v4616 = vunpack.c.l.b16 %v4522
        %v4617 = vunpack.c.h.b16 %v4522
        %v4618 = vunpack.c.l.b16 %v4523
        %v4619 = vunpack.c.h.b16 %v4523
        %v4620 = vunpack.c.l.b16 %v4524
        %v4621 = vunpack.c.h.b16 %v4524
        %v4622 = vunpack.c.l.b16 %v4525
        %v4623 = vunpack.c.h.b16 %v4525
        %v4624 = vunpack.c.l.b16 %v4526
        %v4625 = vunpack.c.h.b16 %v4526
        %v4626 = vunpack.c.l.b16 %v4527
        %v4627 = vunpack.c.h.b16 %v4527
        %v4628 = vunpack.c.l.b16 %v4528
        %v4629 = vunpack.c.h.b16 %v4528
        %v4630 = vunpack.c.l.b16 %v4529
        %v4631 = vunpack.c.h.b16 %v4529
        %v4632 = vpack.c.b16 %v4600, %v4600
        %v4633 = vpack.c.b16 %v4601, %v4601
        %v4634 = vpack.c.b16 %v4602, %v4602
        %v4635 = vpack.c.b16 %v4603, %v4603
        %v4636 = vpack.c.b16 %v4604, %v4604
        %v4637 = vpack.c.b16 %v4605, %v4605
        %v4638 = vpack.c.b16 %v4606, %v4606
        %v4639 = vpack.c.b16 %v4607, %v4607
        %v4640 = vpack.c.b16 %v4608, %v4608
        %v4641 = vpack.c.b16 %v4609, %v4609
        %v4642 = vpack.c.b16 %v4610, %v4610
        %v4643 = vpack.c.b16 %v4611, %v4611
        %v4644 = vpack.c.b16 %v4612, %v4612
        %v4645 = vpack.c.b16 %v4613, %v4613
        %v4646 = vpack.c.b16 %v4614, %v4614
        %v4647 = vpack.c.b16 %v4615, %v4615
        %v4648 = vpack.c.b16 %v4616, %v4616
        %v4649 = vpack.c.b16 %v4617, %v4617
        %v4650 = vpack.c.b16 %v4618, %v4618
        %v4651 = vpack.c.b16 %v4619, %v4619
        %v4652 = vpack.c.b16 %v4620, %v4620
        %v4653 = vpack.c.b16 %v4621, %v4621
        %v4654 = vpack.c.b16 %v4622, %v4622
        %v4655 = vpack.c.b16 %v4623, %v4623
        %v4656 = vpack.c.b16 %v4624, %v4624
        %v4657 = vpack.c.b16 %v4625, %v4625
        %v4658 = vpack.c.b16 %v4626, %v4626
        %v4659 = vpack.c.b16 %v4627, %v4627
        %v4660 = vpack.c.b16 %v4628, %v4628
        %v4661 = vpack.c.b16 %v4629, %v4629
        %v4662 = vpack.c.b16 %v4630, %v4630
        %v4663 = vpack.c.b16 %v4631, %v4631
        %v4665 = vshrl.u32 %v4632, 16
        %v4667 = vrot.slane %v4665, 7
        %v4668 = vshll.u32 %v4632, 16
        %v4670 = vor.u32 %v4667, %v4668
        %v4671 = vrot.slane %v4667, 4
        %v4673 = vshrl.u32 %v4633, 16
        %v4675 = vrot.slane %v4673, 7
        %v4676 = vshll.u32 %v4633, 16
        %v4678 = vor.u32 %v4675, %v4676
        %v4679 = vsel %vm368, %v4671, %v4678
        %v4680 = vrot.slane %v4675, 4
        %v4682 = vshrl.u32 %v4634, 16
        %v4684 = vrot.slane %v4682, 7
        %v4685 = vshll.u32 %v4634, 16
        %v4687 = vor.u32 %v4684, %v4685
        %v4688 = vrot.slane %v4684, 4
        %v4690 = vshrl.u32 %v4635, 16
        %v4692 = vrot.slane %v4690, 7
        %v4693 = vshll.u32 %v4635, 16
        %v4695 = vor.u32 %v4692, %v4693
        %v4696 = vsel %vm368, %v4688, %v4695
        %v4697 = vrot.slane %v4692, 4
        %v4699 = vshrl.u32 %v4636, 16
        %v4701 = vrot.slane %v4699, 7
        %v4702 = vshll.u32 %v4636, 16
        %v4704 = vor.u32 %v4701, %v4702
        %v4705 = vrot.slane %v4701, 4
        %v4707 = vshrl.u32 %v4637, 16
        %v4709 = vrot.slane %v4707, 7
        %v4710 = vshll.u32 %v4637, 16
        %v4712 = vor.u32 %v4709, %v4710
        %v4713 = vsel %vm368, %v4705, %v4712
        %v4714 = vrot.slane %v4709, 4
        %v4716 = vshrl.u32 %v4638, 16
        %v4718 = vrot.slane %v4716, 7
        %v4719 = vshll.u32 %v4638, 16
        %v4721 = vor.u32 %v4718, %v4719
        %v4722 = vrot.slane %v4718, 4
        %v4724 = vshrl.u32 %v4639, 16
        %v4726 = vrot.slane %v4724, 7
        %v4727 = vshll.u32 %v4639, 16
        %v4729 = vor.u32 %v4726, %v4727
        %v4730 = vsel %vm368, %v4722, %v4729
        %v4731 = vrot.slane %v4726, 4
        %v4733 = vshrl.u32 %v4640, 16
        %v4735 = vrot.slane %v4733, 7
        %v4736 = vshll.u32 %v4640, 16
        %v4738 = vor.u32 %v4735, %v4736
        %v4739 = vrot.slane %v4735, 4
        %v4741 = vshrl.u32 %v4641, 16
        %v4743 = vrot.slane %v4741, 7
        %v4744 = vshll.u32 %v4641, 16
        %v4746 = vor.u32 %v4743, %v4744
        %v4747 = vsel %vm368, %v4739, %v4746
        %v4748 = vrot.slane %v4743, 4
        %v4750 = vshrl.u32 %v4642, 16
        %v4752 = vrot.slane %v4750, 7
        %v4753 = vshll.u32 %v4642, 16
        %v4755 = vor.u32 %v4752, %v4753
        %v4756 = vrot.slane %v4752, 4
        %v4758 = vshrl.u32 %v4643, 16
        %v4760 = vrot.slane %v4758, 7
        %v4761 = vshll.u32 %v4643, 16
        %v4763 = vor.u32 %v4760, %v4761
        %v4764 = vsel %vm368, %v4756, %v4763
        %v4765 = vrot.slane %v4760, 4
        %v4767 = vshrl.u32 %v4644, 16
        %v4769 = vrot.slane %v4767, 7
        %v4770 = vshll.u32 %v4644, 16
        %v4772 = vor.u32 %v4769, %v4770
        %v4773 = vrot.slane %v4769, 4
        %v4775 = vshrl.u32 %v4645, 16
        %v4777 = vrot.slane %v4775, 7
        %v4778 = vshll.u32 %v4645, 16
        %v4780 = vor.u32 %v4777, %v4778
        %v4781 = vsel %vm368, %v4773, %v4780
        %v4782 = vrot.slane %v4777, 4
        %v4784 = vshrl.u32 %v4646, 16
        %v4786 = vrot.slane %v4784, 7
        %v4787 = vshll.u32 %v4646, 16
        %v4789 = vor.u32 %v4786, %v4787
        %v4790 = vrot.slane %v4786, 4
        %v4792 = vshrl.u32 %v4647, 16
        %v4794 = vrot.slane %v4792, 7
        %v4795 = vshll.u32 %v4647, 16
        %v4797 = vor.u32 %v4794, %v4795
        %v4798 = vsel %vm368, %v4790, %v4797
        %v4799 = vrot.slane %v4794, 4
        %v4801 = vshrl.u32 %v4648, 16
        %v4803 = vrot.slane %v4801, 7
        %v4804 = vshll.u32 %v4648, 16
        %v4806 = vor.u32 %v4803, %v4804
        %v4807 = vrot.slane %v4803, 4
        %v4809 = vshrl.u32 %v4649, 16
        %v4811 = vrot.slane %v4809, 7
        %v4812 = vshll.u32 %v4649, 16
        %v4814 = vor.u32 %v4811, %v4812
        %v4815 = vsel %vm368, %v4807, %v4814
        %v4816 = vrot.slane %v4811, 4
        %v4818 = vshrl.u32 %v4650, 16
        %v4820 = vrot.slane %v4818, 7
        %v4821 = vshll.u32 %v4650, 16
        %v4823 = vor.u32 %v4820, %v4821
        %v4824 = vrot.slane %v4820, 4
        %v4826 = vshrl.u32 %v4651, 16
        %v4828 = vrot.slane %v4826, 7
        %v4829 = vshll.u32 %v4651, 16
        %v4831 = vor.u32 %v4828, %v4829
        %v4832 = vsel %vm368, %v4824, %v4831
        %v4833 = vrot.slane %v4828, 4
        %v4835 = vshrl.u32 %v4652, 16
        %v4837 = vrot.slane %v4835, 7
        %v4838 = vshll.u32 %v4652, 16
        %v4840 = vor.u32 %v4837, %v4838
        %v4841 = vrot.slane %v4837, 4
        %v4843 = vshrl.u32 %v4653, 16
        %v4845 = vrot.slane %v4843, 7
        %v4846 = vshll.u32 %v4653, 16
        %v4848 = vor.u32 %v4845, %v4846
        %v4849 = vsel %vm368, %v4841, %v4848
        %v4850 = vrot.slane %v4845, 4
        %v4852 = vshrl.u32 %v4654, 16
        %v4854 = vrot.slane %v4852, 7
        %v4855 = vshll.u32 %v4654, 16
        %v4857 = vor.u32 %v4854, %v4855
        %v4858 = vrot.slane %v4854, 4
        %v4860 = vshrl.u32 %v4655, 16
        %v4862 = vrot.slane %v4860, 7
        %v4863 = vshll.u32 %v4655, 16
        %v4865 = vor.u32 %v4862, %v4863
        %v4866 = vsel %vm368, %v4858, %v4865
        %v4867 = vrot.slane %v4862, 4
        %v4869 = vshrl.u32 %v4656, 16
        %v4871 = vrot.slane %v4869, 7
        %v4872 = vshll.u32 %v4656, 16
        %v4874 = vor.u32 %v4871, %v4872
        %v4875 = vrot.slane %v4871, 4
        %v4877 = vshrl.u32 %v4657, 16
        %v4879 = vrot.slane %v4877, 7
        %v4880 = vshll.u32 %v4657, 16
        %v4882 = vor.u32 %v4879, %v4880
        %v4883 = vsel %vm368, %v4875, %v4882
        %v4884 = vrot.slane %v4879, 4
        %v4886 = vshrl.u32 %v4658, 16
        %v4888 = vrot.slane %v4886, 7
        %v4889 = vshll.u32 %v4658, 16
        %v4891 = vor.u32 %v4888, %v4889
        %v4892 = vrot.slane %v4888, 4
        %v4894 = vshrl.u32 %v4659, 16
        %v4896 = vrot.slane %v4894, 7
        %v4897 = vshll.u32 %v4659, 16
        %v4899 = vor.u32 %v4896, %v4897
        %v4900 = vsel %vm368, %v4892, %v4899
        %v4901 = vrot.slane %v4896, 4
        %v4903 = vshrl.u32 %v4660, 16
        %v4905 = vrot.slane %v4903, 7
        %v4906 = vshll.u32 %v4660, 16
        %v4908 = vor.u32 %v4905, %v4906
        %v4909 = vrot.slane %v4905, 4
        %v4911 = vshrl.u32 %v4661, 16
        %v4913 = vrot.slane %v4911, 7
        %v4914 = vshll.u32 %v4661, 16
        %v4916 = vor.u32 %v4913, %v4914
        %v4917 = vsel %vm368, %v4909, %v4916
        %v4918 = vrot.slane %v4913, 4
        %v4920 = vshrl.u32 %v4662, 16
        %v4922 = vrot.slane %v4920, 7
        %v4923 = vshll.u32 %v4662, 16
        %v4925 = vor.u32 %v4922, %v4923
        %v4926 = vrot.slane %v4922, 4
        %v4928 = vshrl.u32 %v4663, 16
        %v4930 = vrot.slane %v4928, 7
        %v4931 = vshll.u32 %v4663, 16
        %v4933 = vor.u32 %v4930, %v4931
        %v4934 = vsel %vm368, %v4926, %v4933
        %v4935 = vrot.slane %v4930, 4
        %s4984 = scalar_lea.vmem [#allocation4], 12
        %v4985 = vld [vmem:[%s4984] sm:$0xf]
        %v4986 = vsel %vm692, %v4670, %v4985
        %4987 = vst [vmem:[%s4984] sm:$0xf] %v4986
        %4988 = vst.msk [vmem:[%s4984 + $0x4] sm:$0xf] %vm310, %v4679
        %v4989 = vld [vmem:[%s4984 + $0x8] sm:$0x1]
        %v4990 = vsel %vm698, %v4680, %v4989
        %4991 = vst [vmem:[%s4984 + $0x8] sm:$0x1] %v4990
        %v4992 = vld [vmem:[%s4984 + $0xc] sm:$0xf]
        %v4993 = vsel %vm692, %v4687, %v4992
        %4994 = vst [vmem:[%s4984 + $0xc] sm:$0xf] %v4993
        %4995 = vst.msk [vmem:[%s4984 + $0x10] sm:$0xf] %vm310, %v4696
        %v4996 = vld [vmem:[%s4984 + $0x14] sm:$0x1]
        %v4997 = vsel %vm698, %v4697, %v4996
        %4998 = vst [vmem:[%s4984 + $0x14] sm:$0x1] %v4997
        %v4999 = vld [vmem:[%s4984 + $0x18] sm:$0xf]
        %v5000 = vsel %vm692, %v4704, %v4999
        %5001 = vst [vmem:[%s4984 + $0x18] sm:$0xf] %v5000
        %5002 = vst.msk [vmem:[%s4984 + $0x1c] sm:$0xf] %vm310, %v4713
        %v5003 = vld [vmem:[%s4984 + $0x20] sm:$0x1]
        %v5004 = vsel %vm698, %v4714, %v5003
        %5005 = vst [vmem:[%s4984 + $0x20] sm:$0x1] %v5004
        %v5006 = vld [vmem:[%s4984 + $0x24] sm:$0xf]
        %v5007 = vsel %vm692, %v4721, %v5006
        %5008 = vst [vmem:[%s4984 + $0x24] sm:$0xf] %v5007
        %5009 = vst.msk [vmem:[%s4984 + $0x28] sm:$0xf] %vm310, %v4730
        %v5010 = vld [vmem:[%s4984 + $0x2c] sm:$0x1]
        %v5011 = vsel %vm698, %v4731, %v5010
        %5012 = vst [vmem:[%s4984 + $0x2c] sm:$0x1] %v5011
        %v5013 = vld [vmem:[%s4984 + $0x30] sm:$0xf]
        %v5014 = vsel %vm692, %v4738, %v5013
        %5015 = vst [vmem:[%s4984 + $0x30] sm:$0xf] %v5014
        %5016 = vst.msk [vmem:[%s4984 + $0x34] sm:$0xf] %vm310, %v4747
        %v5017 = vld [vmem:[%s4984 + $0x38] sm:$0x1]
        %v5018 = vsel %vm698, %v4748, %v5017
        %5019 = vst [vmem:[%s4984 + $0x38] sm:$0x1] %v5018
        %v5020 = vld [vmem:[%s4984 + $0x3c] sm:$0xf]
        %v5021 = vsel %vm692, %v4755, %v5020
        %5022 = vst [vmem:[%s4984 + $0x3c] sm:$0xf] %v5021
        %5023 = vst.msk [vmem:[%s4984 + $0x40] sm:$0xf] %vm310, %v4764
        %v5024 = vld [vmem:[%s4984 + $0x44] sm:$0x1]
        %v5025 = vsel %vm698, %v4765, %v5024
        %5026 = vst [vmem:[%s4984 + $0x44] sm:$0x1] %v5025
        %v5027 = vld [vmem:[%s4984 + $0x48] sm:$0xf]
        %v5028 = vsel %vm692, %v4772, %v5027
        %5029 = vst [vmem:[%s4984 + $0x48] sm:$0xf] %v5028
        %5030 = vst.msk [vmem:[%s4984 + $0x4c] sm:$0xf] %vm310, %v4781
        %v5031 = vld [vmem:[%s4984 + $0x50] sm:$0x1]
        %v5032 = vsel %vm698, %v4782, %v5031
        %5033 = vst [vmem:[%s4984 + $0x50] sm:$0x1] %v5032
        %v5034 = vld [vmem:[%s4984 + $0x54] sm:$0xf]
        %v5035 = vsel %vm692, %v4789, %v5034
        %5036 = vst [vmem:[%s4984 + $0x54] sm:$0xf] %v5035
        %5037 = vst.msk [vmem:[%s4984 + $0x58] sm:$0xf] %vm310, %v4798
        %v5038 = vld [vmem:[%s4984 + $0x5c] sm:$0x1]
        %v5039 = vsel %vm698, %v4799, %v5038
        %5040 = vst [vmem:[%s4984 + $0x5c] sm:$0x1] %v5039
        %v5041 = vld [vmem:[%s4984 + $0x60] sm:$0xf]
        %v5042 = vsel %vm692, %v4806, %v5041
        %5043 = vst [vmem:[%s4984 + $0x60] sm:$0xf] %v5042
        %5044 = vst.msk [vmem:[%s4984 + $0x64] sm:$0xf] %vm310, %v4815
        %v5045 = vld [vmem:[%s4984 + $0x68] sm:$0x1]
        %v5046 = vsel %vm698, %v4816, %v5045
        %5047 = vst [vmem:[%s4984 + $0x68] sm:$0x1] %v5046
        %v5048 = vld [vmem:[%s4984 + $0x6c] sm:$0xf]
        %v5049 = vsel %vm692, %v4823, %v5048
        %5050 = vst [vmem:[%s4984 + $0x6c] sm:$0xf] %v5049
        %5051 = vst.msk [vmem:[%s4984 + $0x70] sm:$0xf] %vm310, %v4832
        %v5052 = vld [vmem:[%s4984 + $0x74] sm:$0x1]
        %v5053 = vsel %vm698, %v4833, %v5052
        %5054 = vst [vmem:[%s4984 + $0x74] sm:$0x1] %v5053
        %v5055 = vld [vmem:[%s4984 + $0x78] sm:$0xf]
        %v5056 = vsel %vm692, %v4840, %v5055
        %5057 = vst [vmem:[%s4984 + $0x78] sm:$0xf] %v5056
        %5058 = vst.msk [vmem:[%s4984 + $0x7c] sm:$0xf] %vm310, %v4849
        %v5059 = vld [vmem:[%s4984 + $0x80] sm:$0x1]
        %v5060 = vsel %vm698, %v4850, %v5059
        %5061 = vst [vmem:[%s4984 + $0x80] sm:$0x1] %v5060
        %v5062 = vld [vmem:[%s4984 + $0x84] sm:$0xf]
        %v5063 = vsel %vm692, %v4857, %v5062
        %5064 = vst [vmem:[%s4984 + $0x84] sm:$0xf] %v5063
        %5065 = vst.msk [vmem:[%s4984 + $0x88] sm:$0xf] %vm310, %v4866
        %v5066 = vld [vmem:[%s4984 + $0x8c] sm:$0x1]
        %v5067 = vsel %vm698, %v4867, %v5066
        %5068 = vst [vmem:[%s4984 + $0x8c] sm:$0x1] %v5067
        %v5069 = vld [vmem:[%s4984 + $0x90] sm:$0xf]
        %v5070 = vsel %vm692, %v4874, %v5069
        %5071 = vst [vmem:[%s4984 + $0x90] sm:$0xf] %v5070
        %5072 = vst.msk [vmem:[%s4984 + $0x94] sm:$0xf] %vm310, %v4883
        %v5073 = vld [vmem:[%s4984 + $0x98] sm:$0x1]
        %v5074 = vsel %vm698, %v4884, %v5073
        %5075 = vst [vmem:[%s4984 + $0x98] sm:$0x1] %v5074
        %v5076 = vld [vmem:[%s4984 + $0x9c] sm:$0xf]
        %v5077 = vsel %vm692, %v4891, %v5076
        %5078 = vst [vmem:[%s4984 + $0x9c] sm:$0xf] %v5077
        %5079 = vst.msk [vmem:[%s4984 + $0xa0] sm:$0xf] %vm310, %v4900
        %v5080 = vld [vmem:[%s4984 + $0xa4] sm:$0x1]
        %v5081 = vsel %vm698, %v4901, %v5080
        %5082 = vst [vmem:[%s4984 + $0xa4] sm:$0x1] %v5081
        %v5083 = vld [vmem:[%s4984 + $0xa8] sm:$0xf]
        %v5084 = vsel %vm692, %v4908, %v5083
        %5085 = vst [vmem:[%s4984 + $0xa8] sm:$0xf] %v5084
        %5086 = vst.msk [vmem:[%s4984 + $0xac] sm:$0xf] %vm310, %v4917
        %v5087 = vld [vmem:[%s4984 + $0xb0] sm:$0x1]
        %v5088 = vsel %vm698, %v4918, %v5087
        %5089 = vst [vmem:[%s4984 + $0xb0] sm:$0x1] %v5088
        %v5090 = vld [vmem:[%s4984 + $0xb4] sm:$0xf]
        %v5091 = vsel %vm692, %v4925, %v5090
        %5092 = vst [vmem:[%s4984 + $0xb4] sm:$0xf] %v5091
        %5093 = vst.msk [vmem:[%s4984 + $0xb8] sm:$0xf] %vm310, %v4934
        %v5094 = vld [vmem:[%s4984 + $0xbc] sm:$0x1]
        %v5095 = vsel %vm698, %v4935, %v5094
        %5096 = vst [vmem:[%s4984 + $0xbc] sm:$0x1] %v5095
        %v5097 = vld [vmem:[#allocation4] sm:$0xf]
        %v5098 = vld [vmem:[#allocation4 + $0x4] sm:$0xf]
        %v5099 = vld [vmem:[#allocation4 + $0xc] sm:$0xf]
        %v5100 = vld [vmem:[#allocation4 + $0x10] sm:$0xf]
        %v5101 = vld [vmem:[#allocation4 + $0x18] sm:$0xf]
        %v5102 = vld [vmem:[#allocation4 + $0x1c] sm:$0xf]
        %v5103 = vld [vmem:[#allocation4 + $0x24] sm:$0xf]
        %v5104 = vld [vmem:[#allocation4 + $0x28] sm:$0xf]
        %v5105 = vld [vmem:[#allocation4 + $0x30] sm:$0xf]
        %v5106 = vld [vmem:[#allocation4 + $0x34] sm:$0xf]
        %v5107 = vld [vmem:[#allocation4 + $0x3c] sm:$0xf]
        %v5108 = vld [vmem:[#allocation4 + $0x40] sm:$0xf]
        %v5109 = vld [vmem:[#allocation4 + $0x48] sm:$0xf]
        %v5110 = vld [vmem:[#allocation4 + $0x4c] sm:$0xf]
        %v5111 = vld [vmem:[#allocation4 + $0x54] sm:$0xf]
        %v5112 = vld [vmem:[#allocation4 + $0x58] sm:$0xf]
        %v5113 = vld [vmem:[#allocation4 + $0x60] sm:$0xf]
        %v5114 = vld [vmem:[#allocation4 + $0x64] sm:$0xf]
        %v5115 = vld [vmem:[#allocation4 + $0x6c] sm:$0xf]
        %v5116 = vld [vmem:[#allocation4 + $0x70] sm:$0xf]
        %v5117 = vld [vmem:[#allocation4 + $0x78] sm:$0xf]
        %v5118 = vld [vmem:[#allocation4 + $0x7c] sm:$0xf]
        %v5119 = vld [vmem:[#allocation4 + $0x84] sm:$0xf]
        %v5120 = vld [vmem:[#allocation4 + $0x88] sm:$0xf]
        %v5121 = vld [vmem:[#allocation4 + $0x90] sm:$0xf]
        %v5122 = vld [vmem:[#allocation4 + $0x94] sm:$0xf]
        %v5123 = vld [vmem:[#allocation4 + $0x9c] sm:$0xf]
        %v5124 = vld [vmem:[#allocation4 + $0xa0] sm:$0xf]
        %v5125 = vld [vmem:[#allocation4 + $0xa8] sm:$0xf]
        %v5126 = vld [vmem:[#allocation4 + $0xac] sm:$0xf]
        %v5127 = vld [vmem:[#allocation4 + $0xb4] sm:$0xf]
        %v5128 = vld [vmem:[#allocation4 + $0xb8] sm:$0xf]
        %v5161 = vunpack.c.l.b16 %v5097
        %v5162 = vunpack.c.l.b16 %v5098
        %v5163 = vunpack.c.l.b16 %v5099
        %v5164 = vunpack.c.l.b16 %v5100
        %v5165 = vunpack.c.l.b16 %v5101
        %v5166 = vunpack.c.l.b16 %v5102
        %v5167 = vunpack.c.l.b16 %v5103
        %v5168 = vunpack.c.l.b16 %v5104
        %v5169 = vunpack.c.l.b16 %v5105
        %v5170 = vunpack.c.l.b16 %v5106
        %v5171 = vunpack.c.l.b16 %v5107
        %v5172 = vunpack.c.l.b16 %v5108
        %v5173 = vunpack.c.l.b16 %v5109
        %v5174 = vunpack.c.l.b16 %v5110
        %v5175 = vunpack.c.l.b16 %v5111
        %v5176 = vunpack.c.l.b16 %v5112
        %v5177 = vunpack.c.l.b16 %v5113
        %v5178 = vunpack.c.l.b16 %v5114
        %v5179 = vunpack.c.l.b16 %v5115
        %v5180 = vunpack.c.l.b16 %v5116
        %v5181 = vunpack.c.l.b16 %v5117
        %v5182 = vunpack.c.l.b16 %v5118
        %v5183 = vunpack.c.l.b16 %v5119
        %v5184 = vunpack.c.l.b16 %v5120
        %v5185 = vunpack.c.l.b16 %v5121
        %v5186 = vunpack.c.l.b16 %v5122
        %v5187 = vunpack.c.l.b16 %v5123
        %v5188 = vunpack.c.l.b16 %v5124
        %v5189 = vunpack.c.l.b16 %v5125
        %v5190 = vunpack.c.l.b16 %v5126
        %v5191 = vunpack.c.l.b16 %v5127
        %v5192 = vunpack.c.l.b16 %v5128
        %v5193 = vpack.c.b16 %v5162, %v5161
        %v5194 = vpack.c.b16 %v5164, %v5163
        %v5195 = vpack.c.b16 %v5166, %v5165
        %v5196 = vpack.c.b16 %v5168, %v5167
        %v5197 = vpack.c.b16 %v5170, %v5169
        %v5198 = vpack.c.b16 %v5172, %v5171
        %v5199 = vpack.c.b16 %v5174, %v5173
        %v5200 = vpack.c.b16 %v5176, %v5175
        %v5201 = vpack.c.b16 %v5178, %v5177
        %v5202 = vpack.c.b16 %v5180, %v5179
        %v5203 = vpack.c.b16 %v5182, %v5181
        %v5204 = vpack.c.b16 %v5184, %v5183
        %v5205 = vpack.c.b16 %v5186, %v5185
        %v5206 = vpack.c.b16 %v5188, %v5187
        %v5207 = vpack.c.b16 %v5190, %v5189
        %v5208 = vpack.c.b16 %v5192, %v5191
        %5225 = vst.msk [vmem:[#allocation5] sm:$0xff] %vm935, %v5193
        %5226 = vst.msk [vmem:[#allocation5 + $0x18] sm:$0xff] %vm935, %v5194
        %5227 = vst.msk [vmem:[#allocation5 + $0x30] sm:$0xff] %vm935, %v5195
        %5228 = vst.msk [vmem:[#allocation5 + $0x48] sm:$0xff] %vm935, %v5196
        %5229 = vst.msk [vmem:[#allocation5 + $0x60] sm:$0xff] %vm935, %v5197
        %5230 = vst.msk [vmem:[#allocation5 + $0x78] sm:$0xff] %vm935, %v5198
        %5231 = vst.msk [vmem:[#allocation5 + $0x90] sm:$0xff] %vm935, %v5199
        %5232 = vst.msk [vmem:[#allocation5 + $0xa8] sm:$0xff] %vm935, %v5200
        %5233 = vst.msk [vmem:[#allocation5 + $0xc0] sm:$0xff] %vm935, %v5201
        %5234 = vst.msk [vmem:[#allocation5 + $0xd8] sm:$0xff] %vm935, %v5202
        %5235 = vst.msk [vmem:[#allocation5 + $0xf0] sm:$0xff] %vm935, %v5203
        %5236 = vst.msk [vmem:[#allocation5 + $0x108] sm:$0xff] %vm935, %v5204
        %5237 = vst.msk [vmem:[#allocation5 + $0x120] sm:$0xff] %vm935, %v5205
        %5238 = vst.msk [vmem:[#allocation5 + $0x138] sm:$0xff] %vm935, %v5206
        %5239 = vst.msk [vmem:[#allocation5 + $0x150] sm:$0xff] %vm935, %v5207
        %5240 = vst.msk [vmem:[#allocation5 + $0x168] sm:$0xff] %vm935, %v5208
        %v5241 = vld [vmem:[#allocation4] sm:$0xf]
        %v5242 = vld [vmem:[#allocation4 + $0x4] sm:$0xf]
        %v5243 = vld [vmem:[#allocation4 + $0x8] sm:$0x1]
        %v5244 = vld [vmem:[#allocation4 + $0xc] sm:$0xf]
        %v5245 = vld [vmem:[#allocation4 + $0x10] sm:$0xf]
        %v5246 = vld [vmem:[#allocation4 + $0x14] sm:$0x1]
        %v5247 = vld [vmem:[#allocation4 + $0x18] sm:$0xf]
        %v5248 = vld [vmem:[#allocation4 + $0x1c] sm:$0xf]
        %v5249 = vld [vmem:[#allocation4 + $0x20] sm:$0x1]
        %v5250 = vld [vmem:[#allocation4 + $0x24] sm:$0xf]
        %v5251 = vld [vmem:[#allocation4 + $0x28] sm:$0xf]
        %v5252 = vld [vmem:[#allocation4 + $0x2c] sm:$0x1]
        %v5253 = vld [vmem:[#allocation4 + $0x30] sm:$0xf]
        %v5254 = vld [vmem:[#allocation4 + $0x34] sm:$0xf]
        %v5255 = vld [vmem:[#allocation4 + $0x38] sm:$0x1]
        %v5256 = vld [vmem:[#allocation4 + $0x3c] sm:$0xf]
        %v5257 = vld [vmem:[#allocation4 + $0x40] sm:$0xf]
        %v5258 = vld [vmem:[#allocation4 + $0x44] sm:$0x1]
        %v5259 = vld [vmem:[#allocation4 + $0x48] sm:$0xf]
        %v5260 = vld [vmem:[#allocation4 + $0x4c] sm:$0xf]
        %v5261 = vld [vmem:[#allocation4 + $0x50] sm:$0x1]
        %v5262 = vld [vmem:[#allocation4 + $0x54] sm:$0xf]
        %v5263 = vld [vmem:[#allocation4 + $0x58] sm:$0xf]
        %v5264 = vld [vmem:[#allocation4 + $0x5c] sm:$0x1]
        %v5265 = vld [vmem:[#allocation4 + $0x60] sm:$0xf]
        %v5266 = vld [vmem:[#allocation4 + $0x64] sm:$0xf]
        %v5267 = vld [vmem:[#allocation4 + $0x68] sm:$0x1]
        %v5268 = vld [vmem:[#allocation4 + $0x6c] sm:$0xf]
        %v5269 = vld [vmem:[#allocation4 + $0x70] sm:$0xf]
        %v5270 = vld [vmem:[#allocation4 + $0x74] sm:$0x1]
        %v5271 = vld [vmem:[#allocation4 + $0x78] sm:$0xf]
        %v5272 = vld [vmem:[#allocation4 + $0x7c] sm:$0xf]
        %v5273 = vld [vmem:[#allocation4 + $0x80] sm:$0x1]
        %v5274 = vld [vmem:[#allocation4 + $0x84] sm:$0xf]
        %v5275 = vld [vmem:[#allocation4 + $0x88] sm:$0xf]
        %v5276 = vld [vmem:[#allocation4 + $0x8c] sm:$0x1]
        %v5277 = vld [vmem:[#allocation4 + $0x90] sm:$0xf]
        %v5278 = vld [vmem:[#allocation4 + $0x94] sm:$0xf]
        %v5279 = vld [vmem:[#allocation4 + $0x98] sm:$0x1]
        %v5280 = vld [vmem:[#allocation4 + $0x9c] sm:$0xf]
        %v5281 = vld [vmem:[#allocation4 + $0xa0] sm:$0xf]
        %v5282 = vld [vmem:[#allocation4 + $0xa4] sm:$0x1]
        %v5283 = vld [vmem:[#allocation4 + $0xa8] sm:$0xf]
        %v5284 = vld [vmem:[#allocation4 + $0xac] sm:$0xf]
        %v5285 = vld [vmem:[#allocation4 + $0xb0] sm:$0x1]
        %v5286 = vld [vmem:[#allocation4 + $0xb4] sm:$0xf]
        %v5287 = vld [vmem:[#allocation4 + $0xb8] sm:$0xf]
        %v5288 = vld [vmem:[#allocation4 + $0xbc] sm:$0x1]
        %v5290 = vshrl.u32 %v5241, 16
        %v5292 = vrot.slane %v5290, 4
        %v5293 = vshll.u32 %v5241, 16
        %v5295 = vrot.slane %v5293, 5
        %v5296 = vor.u32 %v5292, %v5295
        %v5297 = vrot.slane %v5296, 4
        %v5299 = vshll.u32 %v5242, 16
        %v5301 = vrot.slane %v5299, 5
        %v5302 = vsel %vm1002, %v5297, %v5301
        %v5303 = vshrl.u32 %v5242, 16
        %v5305 = vrot.slane %v5303, 4
        %v5306 = vor.u32 %v5305, %v5301
        %v5307 = vrot.slane %v5306, 4
        %v5309 = vshll.u32 %v5243, 16
        %v5311 = vrot.slane %v5309, 5
        %v5312 = vsel %vm1002, %v5307, %v5311
        %v5314 = vshrl.u32 %v5244, 16
        %v5316 = vrot.slane %v5314, 4
        %v5317 = vshll.u32 %v5244, 16
        %v5319 = vrot.slane %v5317, 5
        %v5320 = vor.u32 %v5316, %v5319
        %v5321 = vrot.slane %v5320, 4
        %v5323 = vshll.u32 %v5245, 16
        %v5325 = vrot.slane %v5323, 5
        %v5326 = vsel %vm1002, %v5321, %v5325
        %v5327 = vshrl.u32 %v5245, 16
        %v5329 = vrot.slane %v5327, 4
        %v5330 = vor.u32 %v5329, %v5325
        %v5331 = vrot.slane %v5330, 4
        %v5333 = vshll.u32 %v5246, 16
        %v5335 = vrot.slane %v5333, 5
        %v5336 = vsel %vm1002, %v5331, %v5335
        %v5338 = vshrl.u32 %v5247, 16
        %v5340 = vrot.slane %v5338, 4
        %v5341 = vshll.u32 %v5247, 16
        %v5343 = vrot.slane %v5341, 5
        %v5344 = vor.u32 %v5340, %v5343
        %v5345 = vrot.slane %v5344, 4
        %v5347 = vshll.u32 %v5248, 16
        %v5349 = vrot.slane %v5347, 5
        %v5350 = vsel %vm1002, %v5345, %v5349
        %v5351 = vshrl.u32 %v5248, 16
        %v5353 = vrot.slane %v5351, 4
        %v5354 = vor.u32 %v5353, %v5349
        %v5355 = vrot.slane %v5354, 4
        %v5357 = vshll.u32 %v5249, 16
        %v5359 = vrot.slane %v5357, 5
        %v5360 = vsel %vm1002, %v5355, %v5359
        %v5362 = vshrl.u32 %v5250, 16
        %v5364 = vrot.slane %v5362, 4
        %v5365 = vshll.u32 %v5250, 16
        %v5367 = vrot.slane %v5365, 5
        %v5368 = vor.u32 %v5364, %v5367
        %v5369 = vrot.slane %v5368, 4
        %v5371 = vshll.u32 %v5251, 16
        %v5373 = vrot.slane %v5371, 5
        %v5374 = vsel %vm1002, %v5369, %v5373
        %v5375 = vshrl.u32 %v5251, 16
        %v5377 = vrot.slane %v5375, 4
        %v5378 = vor.u32 %v5377, %v5373
        %v5379 = vrot.slane %v5378, 4
        %v5381 = vshll.u32 %v5252, 16
        %v5383 = vrot.slane %v5381, 5
        %v5384 = vsel %vm1002, %v5379, %v5383
        %v5386 = vshrl.u32 %v5253, 16
        %v5388 = vrot.slane %v5386, 4
        %v5389 = vshll.u32 %v5253, 16
        %v5391 = vrot.slane %v5389, 5
        %v5392 = vor.u32 %v5388, %v5391
        %v5393 = vrot.slane %v5392, 4
        %v5395 = vshll.u32 %v5254, 16
        %v5397 = vrot.slane %v5395, 5
        %v5398 = vsel %vm1002, %v5393, %v5397
        %v5399 = vshrl.u32 %v5254, 16
        %v5401 = vrot.slane %v5399, 4
        %v5402 = vor.u32 %v5401, %v5397
        %v5403 = vrot.slane %v5402, 4
        %v5405 = vshll.u32 %v5255, 16
        %v5407 = vrot.slane %v5405, 5
        %v5408 = vsel %vm1002, %v5403, %v5407
        %v5410 = vshrl.u32 %v5256, 16
        %v5412 = vrot.slane %v5410, 4
        %v5413 = vshll.u32 %v5256, 16
        %v5415 = vrot.slane %v5413, 5
        %v5416 = vor.u32 %v5412, %v5415
        %v5417 = vrot.slane %v5416, 4
        %v5419 = vshll.u32 %v5257, 16
        %v5421 = vrot.slane %v5419, 5
        %v5422 = vsel %vm1002, %v5417, %v5421
        %v5423 = vshrl.u32 %v5257, 16
        %v5425 = vrot.slane %v5423, 4
        %v5426 = vor.u32 %v5425, %v5421
        %v5427 = vrot.slane %v5426, 4
        %v5429 = vshll.u32 %v5258, 16
        %v5431 = vrot.slane %v5429, 5
        %v5432 = vsel %vm1002, %v5427, %v5431
        %v5434 = vshrl.u32 %v5259, 16
        %v5436 = vrot.slane %v5434, 4
        %v5437 = vshll.u32 %v5259, 16
        %v5439 = vrot.slane %v5437, 5
        %v5440 = vor.u32 %v5436, %v5439
        %v5441 = vrot.slane %v5440, 4
        %v5443 = vshll.u32 %v5260, 16
        %v5445 = vrot.slane %v5443, 5
        %v5446 = vsel %vm1002, %v5441, %v5445
        %v5447 = vshrl.u32 %v5260, 16
        %v5449 = vrot.slane %v5447, 4
        %v5450 = vor.u32 %v5449, %v5445
        %v5451 = vrot.slane %v5450, 4
        %v5453 = vshll.u32 %v5261, 16
        %v5455 = vrot.slane %v5453, 5
        %v5456 = vsel %vm1002, %v5451, %v5455
        %v5458 = vshrl.u32 %v5262, 16
        %v5460 = vrot.slane %v5458, 4
        %v5461 = vshll.u32 %v5262, 16
        %v5463 = vrot.slane %v5461, 5
        %v5464 = vor.u32 %v5460, %v5463
        %v5465 = vrot.slane %v5464, 4
        %v5467 = vshll.u32 %v5263, 16
        %v5469 = vrot.slane %v5467, 5
        %v5470 = vsel %vm1002, %v5465, %v5469
        %v5471 = vshrl.u32 %v5263, 16
        %v5473 = vrot.slane %v5471, 4
        %v5474 = vor.u32 %v5473, %v5469
        %v5475 = vrot.slane %v5474, 4
        %v5477 = vshll.u32 %v5264, 16
        %v5479 = vrot.slane %v5477, 5
        %v5480 = vsel %vm1002, %v5475, %v5479
        %v5482 = vshrl.u32 %v5265, 16
        %v5484 = vrot.slane %v5482, 4
        %v5485 = vshll.u32 %v5265, 16
        %v5487 = vrot.slane %v5485, 5
        %v5488 = vor.u32 %v5484, %v5487
        %v5489 = vrot.slane %v5488, 4
        %v5491 = vshll.u32 %v5266, 16
        %v5493 = vrot.slane %v5491, 5
        %v5494 = vsel %vm1002, %v5489, %v5493
        %v5495 = vshrl.u32 %v5266, 16
        %v5497 = vrot.slane %v5495, 4
        %v5498 = vor.u32 %v5497, %v5493
        %v5499 = vrot.slane %v5498, 4
        %v5501 = vshll.u32 %v5267, 16
        %v5503 = vrot.slane %v5501, 5
        %v5504 = vsel %vm1002, %v5499, %v5503
        %v5506 = vshrl.u32 %v5268, 16
        %v5508 = vrot.slane %v5506, 4
        %v5509 = vshll.u32 %v5268, 16
        %v5511 = vrot.slane %v5509, 5
        %v5512 = vor.u32 %v5508, %v5511
        %v5513 = vrot.slane %v5512, 4
        %v5515 = vshll.u32 %v5269, 16
        %v5517 = vrot.slane %v5515, 5
        %v5518 = vsel %vm1002, %v5513, %v5517
        %v5519 = vshrl.u32 %v5269, 16
        %v5521 = vrot.slane %v5519, 4
        %v5522 = vor.u32 %v5521, %v5517
        %v5523 = vrot.slane %v5522, 4
        %v5525 = vshll.u32 %v5270, 16
        %v5527 = vrot.slane %v5525, 5
        %v5528 = vsel %vm1002, %v5523, %v5527
        %v5530 = vshrl.u32 %v5271, 16
        %v5532 = vrot.slane %v5530, 4
        %v5533 = vshll.u32 %v5271, 16
        %v5535 = vrot.slane %v5533, 5
        %v5536 = vor.u32 %v5532, %v5535
        %v5537 = vrot.slane %v5536, 4
        %v5539 = vshll.u32 %v5272, 16
        %v5541 = vrot.slane %v5539, 5
        %v5542 = vsel %vm1002, %v5537, %v5541
        %v5543 = vshrl.u32 %v5272, 16
        %v5545 = vrot.slane %v5543, 4
        %v5546 = vor.u32 %v5545, %v5541
        %v5547 = vrot.slane %v5546, 4
        %v5549 = vshll.u32 %v5273, 16
        %v5551 = vrot.slane %v5549, 5
        %v5552 = vsel %vm1002, %v5547, %v5551
        %v5554 = vshrl.u32 %v5274, 16
        %v5556 = vrot.slane %v5554, 4
        %v5557 = vshll.u32 %v5274, 16
        %v5559 = vrot.slane %v5557, 5
        %v5560 = vor.u32 %v5556, %v5559
        %v5561 = vrot.slane %v5560, 4
        %v5563 = vshll.u32 %v5275, 16
        %v5565 = vrot.slane %v5563, 5
        %v5566 = vsel %vm1002, %v5561, %v5565
        %v5567 = vshrl.u32 %v5275, 16
        %v5569 = vrot.slane %v5567, 4
        %v5570 = vor.u32 %v5569, %v5565
        %v5571 = vrot.slane %v5570, 4
        %v5573 = vshll.u32 %v5276, 16
        %v5575 = vrot.slane %v5573, 5
        %v5576 = vsel %vm1002, %v5571, %v5575
        %v5578 = vshrl.u32 %v5277, 16
        %v5580 = vrot.slane %v5578, 4
        %v5581 = vshll.u32 %v5277, 16
        %v5583 = vrot.slane %v5581, 5
        %v5584 = vor.u32 %v5580, %v5583
        %v5585 = vrot.slane %v5584, 4
        %v5587 = vshll.u32 %v5278, 16
        %v5589 = vrot.slane %v5587, 5
        %v5590 = vsel %vm1002, %v5585, %v5589
        %v5591 = vshrl.u32 %v5278, 16
        %v5593 = vrot.slane %v5591, 4
        %v5594 = vor.u32 %v5593, %v5589
        %v5595 = vrot.slane %v5594, 4
        %v5597 = vshll.u32 %v5279, 16
        %v5599 = vrot.slane %v5597, 5
        %v5600 = vsel %vm1002, %v5595, %v5599
        %v5602 = vshrl.u32 %v5280, 16
        %v5604 = vrot.slane %v5602, 4
        %v5605 = vshll.u32 %v5280, 16
        %v5607 = vrot.slane %v5605, 5
        %v5608 = vor.u32 %v5604, %v5607
        %v5609 = vrot.slane %v5608, 4
        %v5611 = vshll.u32 %v5281, 16
        %v5613 = vrot.slane %v5611, 5
        %v5614 = vsel %vm1002, %v5609, %v5613
        %v5615 = vshrl.u32 %v5281, 16
        %v5617 = vrot.slane %v5615, 4
        %v5618 = vor.u32 %v5617, %v5613
        %v5619 = vrot.slane %v5618, 4
        %v5621 = vshll.u32 %v5282, 16
        %v5623 = vrot.slane %v5621, 5
        %v5624 = vsel %vm1002, %v5619, %v5623
        %v5626 = vshrl.u32 %v5283, 16
        %v5628 = vrot.slane %v5626, 4
        %v5629 = vshll.u32 %v5283, 16
        %v5631 = vrot.slane %v5629, 5
        %v5632 = vor.u32 %v5628, %v5631
        %v5633 = vrot.slane %v5632, 4
        %v5635 = vshll.u32 %v5284, 16
        %v5637 = vrot.slane %v5635, 5
        %v5638 = vsel %vm1002, %v5633, %v5637
        %v5639 = vshrl.u32 %v5284, 16
        %v5641 = vrot.slane %v5639, 4
        %v5642 = vor.u32 %v5641, %v5637
        %v5643 = vrot.slane %v5642, 4
        %v5645 = vshll.u32 %v5285, 16
        %v5647 = vrot.slane %v5645, 5
        %v5648 = vsel %vm1002, %v5643, %v5647
        %v5650 = vshrl.u32 %v5286, 16
        %v5652 = vrot.slane %v5650, 4
        %v5653 = vshll.u32 %v5286, 16
        %v5655 = vrot.slane %v5653, 5
        %v5656 = vor.u32 %v5652, %v5655
        %v5657 = vrot.slane %v5656, 4
        %v5659 = vshll.u32 %v5287, 16
        %v5661 = vrot.slane %v5659, 5
        %v5662 = vsel %vm1002, %v5657, %v5661
        %v5663 = vshrl.u32 %v5287, 16
        %v5665 = vrot.slane %v5663, 4
        %v5666 = vor.u32 %v5665, %v5661
        %v5667 = vrot.slane %v5666, 4
        %v5669 = vshll.u32 %v5288, 16
        %v5671 = vrot.slane %v5669, 5
        %v5672 = vsel %vm1002, %v5667, %v5671
        %v5673 = vunpack.c.l.b16 %v5302
        %v5674 = vunpack.c.l.b16 %v5312
        %v5675 = vunpack.c.l.b16 %v5326
        %v5676 = vunpack.c.l.b16 %v5336
        %v5677 = vunpack.c.l.b16 %v5350
        %v5678 = vunpack.c.l.b16 %v5360
        %v5679 = vunpack.c.l.b16 %v5374
        %v5680 = vunpack.c.l.b16 %v5384
        %v5681 = vunpack.c.l.b16 %v5398
        %v5682 = vunpack.c.l.b16 %v5408
        %v5683 = vunpack.c.l.b16 %v5422
        %v5684 = vunpack.c.l.b16 %v5432
        %v5685 = vunpack.c.l.b16 %v5446
        %v5686 = vunpack.c.l.b16 %v5456
        %v5687 = vunpack.c.l.b16 %v5470
        %v5688 = vunpack.c.l.b16 %v5480
        %v5689 = vunpack.c.l.b16 %v5494
        %v5690 = vunpack.c.l.b16 %v5504
        %v5691 = vunpack.c.l.b16 %v5518
        %v5692 = vunpack.c.l.b16 %v5528
        %v5693 = vunpack.c.l.b16 %v5542
        %v5694 = vunpack.c.l.b16 %v5552
        %v5695 = vunpack.c.l.b16 %v5566
        %v5696 = vunpack.c.l.b16 %v5576
        %v5697 = vunpack.c.l.b16 %v5590
        %v5698 = vunpack.c.l.b16 %v5600
        %v5699 = vunpack.c.l.b16 %v5614
        %v5700 = vunpack.c.l.b16 %v5624
        %v5701 = vunpack.c.l.b16 %v5638
        %v5702 = vunpack.c.l.b16 %v5648
        %v5703 = vunpack.c.l.b16 %v5662
        %v5704 = vunpack.c.l.b16 %v5672
        %v5705 = vpack.c.b16 %v5674, %v5673
        %v5706 = vpack.c.b16 %v5676, %v5675
        %v5707 = vpack.c.b16 %v5678, %v5677
        %v5708 = vpack.c.b16 %v5680, %v5679
        %v5709 = vpack.c.b16 %v5682, %v5681
        %v5710 = vpack.c.b16 %v5684, %v5683
        %v5711 = vpack.c.b16 %v5686, %v5685
        %v5712 = vpack.c.b16 %v5688, %v5687
        %v5713 = vpack.c.b16 %v5690, %v5689
        %v5714 = vpack.c.b16 %v5692, %v5691
        %v5715 = vpack.c.b16 %v5694, %v5693
        %v5716 = vpack.c.b16 %v5696, %v5695
        %v5717 = vpack.c.b16 %v5698, %v5697
        %v5718 = vpack.c.b16 %v5700, %v5699
        %v5719 = vpack.c.b16 %v5702, %v5701
        %v5720 = vpack.c.b16 %v5704, %v5703
        %5721 = vrot.lane.b32.xlu0 %v5705, 32
        %v5722 = vpop.permute.xlu0 %5721
        %5723 = vrot.lane.b32.xlu0 %v5706, 32
        %v5724 = vpop.permute.xlu0 %5723
        %5725 = vrot.lane.b32.xlu0 %v5707, 32
        %v5726 = vpop.permute.xlu0 %5725
        %5727 = vrot.lane.b32.xlu0 %v5708, 32
        %v5728 = vpop.permute.xlu0 %5727
        %5729 = vrot.lane.b32.xlu0 %v5709, 32
        %v5730 = vpop.permute.xlu0 %5729
        %5731 = vrot.lane.b32.xlu0 %v5710, 32
        %v5732 = vpop.permute.xlu0 %5731
        %5733 = vrot.lane.b32.xlu0 %v5711, 32
        %v5734 = vpop.permute.xlu0 %5733
        %5735 = vrot.lane.b32.xlu0 %v5712, 32
        %v5736 = vpop.permute.xlu0 %5735
        %5737 = vrot.lane.b32.xlu0 %v5713, 32
        %v5738 = vpop.permute.xlu0 %5737
        %5739 = vrot.lane.b32.xlu0 %v5714, 32
        %v5740 = vpop.permute.xlu0 %5739
        %5741 = vrot.lane.b32.xlu0 %v5715, 32
        %v5742 = vpop.permute.xlu0 %5741
        %5743 = vrot.lane.b32.xlu0 %v5716, 32
        %v5744 = vpop.permute.xlu0 %5743
        %5745 = vrot.lane.b32.xlu0 %v5717, 32
        %v5746 = vpop.permute.xlu0 %5745
        %5747 = vrot.lane.b32.xlu0 %v5718, 32
        %v5748 = vpop.permute.xlu0 %5747
        %5749 = vrot.lane.b32.xlu0 %v5719, 32
        %v5750 = vpop.permute.xlu0 %5749
        %5751 = vrot.lane.b32.xlu0 %v5720, 32
        %v5752 = vpop.permute.xlu0 %5751
        %5769 = vst.msk [vmem:[#allocation5] sm:$0xff] %vm1483, %v5722
        %5770 = vst.msk [vmem:[#allocation5 + $0x18] sm:$0xff] %vm1483, %v5724
        %5771 = vst.msk [vmem:[#allocation5 + $0x30] sm:$0xff] %vm1483, %v5726
        %5772 = vst.msk [vmem:[#allocation5 + $0x48] sm:$0xff] %vm1483, %v5728
        %5773 = vst.msk [vmem:[#allocation5 + $0x60] sm:$0xff] %vm1483, %v5730
        %5774 = vst.msk [vmem:[#allocation5 + $0x78] sm:$0xff] %vm1483, %v5732
        %5775 = vst.msk [vmem:[#allocation5 + $0x90] sm:$0xff] %vm1483, %v5734
        %5776 = vst.msk [vmem:[#allocation5 + $0xa8] sm:$0xff] %vm1483, %v5736
        %5777 = vst.msk [vmem:[#allocation5 + $0xc0] sm:$0xff] %vm1483, %v5738
        %5778 = vst.msk [vmem:[#allocation5 + $0xd8] sm:$0xff] %vm1483, %v5740
        %5779 = vst.msk [vmem:[#allocation5 + $0xf0] sm:$0xff] %vm1483, %v5742
        %5780 = vst.msk [vmem:[#allocation5 + $0x108] sm:$0xff] %vm1483, %v5744
        %5781 = vst.msk [vmem:[#allocation5 + $0x120] sm:$0xff] %vm1483, %v5746
        %5782 = vst.msk [vmem:[#allocation5 + $0x138] sm:$0xff] %vm1483, %v5748
        %5783 = vst.msk [vmem:[#allocation5 + $0x150] sm:$0xff] %vm1483, %v5750
        %5784 = vst.msk [vmem:[#allocation5 + $0x168] sm:$0xff] %vm1483, %v5752
        %v5785 = vld [vmem:[#allocation4] sm:$0xe]
        %v5786 = vld [vmem:[#allocation4 + $0x4] sm:$0xf]
        %v5787 = vld [vmem:[#allocation4 + $0x8] sm:$0x1]
        %v5788 = vld [vmem:[#allocation4 + $0xc] sm:$0xe]
        %v5789 = vld [vmem:[#allocation4 + $0x10] sm:$0xf]
        %v5790 = vld [vmem:[#allocation4 + $0x14] sm:$0x1]
        %v5791 = vld [vmem:[#allocation4 + $0x18] sm:$0xe]
        %v5792 = vld [vmem:[#allocation4 + $0x1c] sm:$0xf]
        %v5793 = vld [vmem:[#allocation4 + $0x20] sm:$0x1]
        %v5794 = vld [vmem:[#allocation4 + $0x24] sm:$0xe]
        %v5795 = vld [vmem:[#allocation4 + $0x28] sm:$0xf]
        %v5796 = vld [vmem:[#allocation4 + $0x2c] sm:$0x1]
        %v5797 = vld [vmem:[#allocation4 + $0x30] sm:$0xe]
        %v5798 = vld [vmem:[#allocation4 + $0x34] sm:$0xf]
        %v5799 = vld [vmem:[#allocation4 + $0x38] sm:$0x1]
        %v5800 = vld [vmem:[#allocation4 + $0x3c] sm:$0xe]
        %v5801 = vld [vmem:[#allocation4 + $0x40] sm:$0xf]
        %v5802 = vld [vmem:[#allocation4 + $0x44] sm:$0x1]
        %v5803 = vld [vmem:[#allocation4 + $0x48] sm:$0xe]
        %v5804 = vld [vmem:[#allocation4 + $0x4c] sm:$0xf]
        %v5805 = vld [vmem:[#allocation4 + $0x50] sm:$0x1]
        %v5806 = vld [vmem:[#allocation4 + $0x54] sm:$0xe]
        %v5807 = vld [vmem:[#allocation4 + $0x58] sm:$0xf]
        %v5808 = vld [vmem:[#allocation4 + $0x5c] sm:$0x1]
        %v5809 = vld [vmem:[#allocation4 + $0x60] sm:$0xe]
        %v5810 = vld [vmem:[#allocation4 + $0x64] sm:$0xf]
        %v5811 = vld [vmem:[#allocation4 + $0x68] sm:$0x1]
        %v5812 = vld [vmem:[#allocation4 + $0x6c] sm:$0xe]
        %v5813 = vld [vmem:[#allocation4 + $0x70] sm:$0xf]
        %v5814 = vld [vmem:[#allocation4 + $0x74] sm:$0x1]
        %v5815 = vld [vmem:[#allocation4 + $0x78] sm:$0xe]
        %v5816 = vld [vmem:[#allocation4 + $0x7c] sm:$0xf]
        %v5817 = vld [vmem:[#allocation4 + $0x80] sm:$0x1]
        %v5818 = vld [vmem:[#allocation4 + $0x84] sm:$0xe]
        %v5819 = vld [vmem:[#allocation4 + $0x88] sm:$0xf]
        %v5820 = vld [vmem:[#allocation4 + $0x8c] sm:$0x1]
        %v5821 = vld [vmem:[#allocation4 + $0x90] sm:$0xe]
        %v5822 = vld [vmem:[#allocation4 + $0x94] sm:$0xf]
        %v5823 = vld [vmem:[#allocation4 + $0x98] sm:$0x1]
        %v5824 = vld [vmem:[#allocation4 + $0x9c] sm:$0xe]
        %v5825 = vld [vmem:[#allocation4 + $0xa0] sm:$0xf]
        %v5826 = vld [vmem:[#allocation4 + $0xa4] sm:$0x1]
        %v5827 = vld [vmem:[#allocation4 + $0xa8] sm:$0xe]
        %v5828 = vld [vmem:[#allocation4 + $0xac] sm:$0xf]
        %v5829 = vld [vmem:[#allocation4 + $0xb0] sm:$0x1]
        %v5830 = vld [vmem:[#allocation4 + $0xb4] sm:$0xe]
        %v5831 = vld [vmem:[#allocation4 + $0xb8] sm:$0xf]
        %v5832 = vld [vmem:[#allocation4 + $0xbc] sm:$0x1]
        %v5881 = vrot.slane %v5785, 5
        %v5882 = vrot.slane %v5881, 4
        %v5883 = vrot.slane %v5786, 5
        %v5884 = vsel %vm1598, %v5882, %v5883
        %v5885 = vrot.slane %v5883, 4
        %v5886 = vrot.slane %v5787, 5
        %v5887 = vsel %vm1598, %v5885, %v5886
        %v5888 = vrot.slane %v5788, 5
        %v5889 = vrot.slane %v5888, 4
        %v5890 = vrot.slane %v5789, 5
        %v5891 = vsel %vm1598, %v5889, %v5890
        %v5892 = vrot.slane %v5890, 4
        %v5893 = vrot.slane %v5790, 5
        %v5894 = vsel %vm1598, %v5892, %v5893
        %v5895 = vrot.slane %v5791, 5
        %v5896 = vrot.slane %v5895, 4
        %v5897 = vrot.slane %v5792, 5
        %v5898 = vsel %vm1598, %v5896, %v5897
        %v5899 = vrot.slane %v5897, 4
        %v5900 = vrot.slane %v5793, 5
        %v5901 = vsel %vm1598, %v5899, %v5900
        %v5902 = vrot.slane %v5794, 5
        %v5903 = vrot.slane %v5902, 4
        %v5904 = vrot.slane %v5795, 5
        %v5905 = vsel %vm1598, %v5903, %v5904
        %v5906 = vrot.slane %v5904, 4
        %v5907 = vrot.slane %v5796, 5
        %v5908 = vsel %vm1598, %v5906, %v5907
        %v5909 = vrot.slane %v5797, 5
        %v5910 = vrot.slane %v5909, 4
        %v5911 = vrot.slane %v5798, 5
        %v5912 = vsel %vm1598, %v5910, %v5911
        %v5913 = vrot.slane %v5911, 4
        %v5914 = vrot.slane %v5799, 5
        %v5915 = vsel %vm1598, %v5913, %v5914
        %v5916 = vrot.slane %v5800, 5
        %v5917 = vrot.slane %v5916, 4
        %v5918 = vrot.slane %v5801, 5
        %v5919 = vsel %vm1598, %v5917, %v5918
        %v5920 = vrot.slane %v5918, 4
        %v5921 = vrot.slane %v5802, 5
        %v5922 = vsel %vm1598, %v5920, %v5921
        %v5923 = vrot.slane %v5803, 5
        %v5924 = vrot.slane %v5923, 4
        %v5925 = vrot.slane %v5804, 5
        %v5926 = vsel %vm1598, %v5924, %v5925
        %v5927 = vrot.slane %v5925, 4
        %v5928 = vrot.slane %v5805, 5
        %v5929 = vsel %vm1598, %v5927, %v5928
        %v5930 = vrot.slane %v5806, 5
        %v5931 = vrot.slane %v5930, 4
        %v5932 = vrot.slane %v5807, 5
        %v5933 = vsel %vm1598, %v5931, %v5932
        %v5934 = vrot.slane %v5932, 4
        %v5935 = vrot.slane %v5808, 5
        %v5936 = vsel %vm1598, %v5934, %v5935
        %v5937 = vrot.slane %v5809, 5
        %v5938 = vrot.slane %v5937, 4
        %v5939 = vrot.slane %v5810, 5
        %v5940 = vsel %vm1598, %v5938, %v5939
        %v5941 = vrot.slane %v5939, 4
        %v5942 = vrot.slane %v5811, 5
        %v5943 = vsel %vm1598, %v5941, %v5942
        %v5944 = vrot.slane %v5812, 5
        %v5945 = vrot.slane %v5944, 4
        %v5946 = vrot.slane %v5813, 5
        %v5947 = vsel %vm1598, %v5945, %v5946
        %v5948 = vrot.slane %v5946, 4
        %v5949 = vrot.slane %v5814, 5
        %v5950 = vsel %vm1598, %v5948, %v5949
        %v5951 = vrot.slane %v5815, 5
        %v5952 = vrot.slane %v5951, 4
        %v5953 = vrot.slane %v5816, 5
        %v5954 = vsel %vm1598, %v5952, %v5953
        %v5955 = vrot.slane %v5953, 4
        %v5956 = vrot.slane %v5817, 5
        %v5957 = vsel %vm1598, %v5955, %v5956
        %v5958 = vrot.slane %v5818, 5
        %v5959 = vrot.slane %v5958, 4
        %v5960 = vrot.slane %v5819, 5
        %v5961 = vsel %vm1598, %v5959, %v5960
        %v5962 = vrot.slane %v5960, 4
        %v5963 = vrot.slane %v5820, 5
        %v5964 = vsel %vm1598, %v5962, %v5963
        %v5965 = vrot.slane %v5821, 5
        %v5966 = vrot.slane %v5965, 4
        %v5967 = vrot.slane %v5822, 5
        %v5968 = vsel %vm1598, %v5966, %v5967
        %v5969 = vrot.slane %v5967, 4
        %v5970 = vrot.slane %v5823, 5
        %v5971 = vsel %vm1598, %v5969, %v5970
        %v5972 = vrot.slane %v5824, 5
        %v5973 = vrot.slane %v5972, 4
        %v5974 = vrot.slane %v5825, 5
        %v5975 = vsel %vm1598, %v5973, %v5974
        %v5976 = vrot.slane %v5974, 4
        %v5977 = vrot.slane %v5826, 5
        %v5978 = vsel %vm1598, %v5976, %v5977
        %v5979 = vrot.slane %v5827, 5
        %v5980 = vrot.slane %v5979, 4
        %v5981 = vrot.slane %v5828, 5
        %v5982 = vsel %vm1598, %v5980, %v5981
        %v5983 = vrot.slane %v5981, 4
        %v5984 = vrot.slane %v5829, 5
        %v5985 = vsel %vm1598, %v5983, %v5984
        %v5986 = vrot.slane %v5830, 5
        %v5987 = vrot.slane %v5986, 4
        %v5988 = vrot.slane %v5831, 5
        %v5989 = vsel %vm1598, %v5987, %v5988
        %v5990 = vrot.slane %v5988, 4
        %v5991 = vrot.slane %v5832, 5
        %v5992 = vsel %vm1598, %v5990, %v5991
        %v5993 = vunpack.c.l.b16 %v5884
        %v5994 = vunpack.c.l.b16 %v5887
        %v5995 = vunpack.c.l.b16 %v5891
        %v5996 = vunpack.c.l.b16 %v5894
        %v5997 = vunpack.c.l.b16 %v5898
        %v5998 = vunpack.c.l.b16 %v5901
        %v5999 = vunpack.c.l.b16 %v5905
        %v6000 = vunpack.c.l.b16 %v5908
        %v6001 = vunpack.c.l.b16 %v5912
        %v6002 = vunpack.c.l.b16 %v5915
        %v6003 = vunpack.c.l.b16 %v5919
        %v6004 = vunpack.c.l.b16 %v5922
        %v6005 = vunpack.c.l.b16 %v5926
        %v6006 = vunpack.c.l.b16 %v5929
        %v6007 = vunpack.c.l.b16 %v5933
        %v6008 = vunpack.c.l.b16 %v5936
        %v6009 = vunpack.c.l.b16 %v5940
        %v6010 = vunpack.c.l.b16 %v5943
        %v6011 = vunpack.c.l.b16 %v5947
        %v6012 = vunpack.c.l.b16 %v5950
        %v6013 = vunpack.c.l.b16 %v5954
        %v6014 = vunpack.c.l.b16 %v5957
        %v6015 = vunpack.c.l.b16 %v5961
        %v6016 = vunpack.c.l.b16 %v5964
        %v6017 = vunpack.c.l.b16 %v5968
        %v6018 = vunpack.c.l.b16 %v5971
        %v6019 = vunpack.c.l.b16 %v5975
        %v6020 = vunpack.c.l.b16 %v5978
        %v6021 = vunpack.c.l.b16 %v5982
        %v6022 = vunpack.c.l.b16 %v5985
        %v6023 = vunpack.c.l.b16 %v5989
        %v6024 = vunpack.c.l.b16 %v5992
        %v6025 = vpack.c.b16 %v5994, %v5993
        %v6026 = vpack.c.b16 %v5996, %v5995
        %v6027 = vpack.c.b16 %v5998, %v5997
        %v6028 = vpack.c.b16 %v6000, %v5999
        %v6029 = vpack.c.b16 %v6002, %v6001
        %v6030 = vpack.c.b16 %v6004, %v6003
        %v6031 = vpack.c.b16 %v6006, %v6005
        %v6032 = vpack.c.b16 %v6008, %v6007
        %v6033 = vpack.c.b16 %v6010, %v6009
        %v6034 = vpack.c.b16 %v6012, %v6011
        %v6035 = vpack.c.b16 %v6014, %v6013
        %v6036 = vpack.c.b16 %v6016, %v6015
        %v6037 = vpack.c.b16 %v6018, %v6017
        %v6038 = vpack.c.b16 %v6020, %v6019
        %v6039 = vpack.c.b16 %v6022, %v6021
        %v6040 = vpack.c.b16 %v6024, %v6023
        %6041 = vrot.lane.b32.xlu0 %v6025, 64
        %v6042 = vpop.permute.xlu0 %6041
        %6043 = vrot.lane.b32.xlu0 %v6026, 64
        %v6044 = vpop.permute.xlu0 %6043
        %6045 = vrot.lane.b32.xlu0 %v6027, 64
        %v6046 = vpop.permute.xlu0 %6045
        %6047 = vrot.lane.b32.xlu0 %v6028, 64
        %v6048 = vpop.permute.xlu0 %6047
        %6049 = vrot.lane.b32.xlu0 %v6029, 64
        %v6050 = vpop.permute.xlu0 %6049
        %6051 = vrot.lane.b32.xlu0 %v6030, 64
        %v6052 = vpop.permute.xlu0 %6051
        %6053 = vrot.lane.b32.xlu0 %v6031, 64
        %v6054 = vpop.permute.xlu0 %6053
        %6055 = vrot.lane.b32.xlu0 %v6032, 64
        %v6056 = vpop.permute.xlu0 %6055
        %6057 = vrot.lane.b32.xlu0 %v6033, 64
        %v6058 = vpop.permute.xlu0 %6057
        %6059 = vrot.lane.b32.xlu0 %v6034, 64
        %v6060 = vpop.permute.xlu0 %6059
        %6061 = vrot.lane.b32.xlu0 %v6035, 64
        %v6062 = vpop.permute.xlu0 %6061
        %6063 = vrot.lane.b32.xlu0 %v6036, 64
        %v6064 = vpop.permute.xlu0 %6063
        %6065 = vrot.lane.b32.xlu0 %v6037, 64
        %v6066 = vpop.permute.xlu0 %6065
        %6067 = vrot.lane.b32.xlu0 %v6038, 64
        %v6068 = vpop.permute.xlu0 %6067
        %6069 = vrot.lane.b32.xlu0 %v6039, 64
        %v6070 = vpop.permute.xlu0 %6069
        %6071 = vrot.lane.b32.xlu0 %v6040, 64
        %v6072 = vpop.permute.xlu0 %6071
        %6089 = vst.msk [vmem:[#allocation5] sm:$0xff] %vm1807, %v6042
        %6090 = vst.msk [vmem:[#allocation5 + $0x18] sm:$0xff] %vm1807, %v6044
        %6091 = vst.msk [vmem:[#allocation5 + $0x30] sm:$0xff] %vm1807, %v6046
        %6092 = vst.msk [vmem:[#allocation5 + $0x48] sm:$0xff] %vm1807, %v6048
        %6093 = vst.msk [vmem:[#allocation5 + $0x60] sm:$0xff] %vm1807, %v6050
        %6094 = vst.msk [vmem:[#allocation5 + $0x78] sm:$0xff] %vm1807, %v6052
        %6095 = vst.msk [vmem:[#allocation5 + $0x90] sm:$0xff] %vm1807, %v6054
        %6096 = vst.msk [vmem:[#allocation5 + $0xa8] sm:$0xff] %vm1807, %v6056
        %6097 = vst.msk [vmem:[#allocation5 + $0xc0] sm:$0xff] %vm1807, %v6058
        %6098 = vst.msk [vmem:[#allocation5 + $0xd8] sm:$0xff] %vm1807, %v6060
        %6099 = vst.msk [vmem:[#allocation5 + $0xf0] sm:$0xff] %vm1807, %v6062
        %6100 = vst.msk [vmem:[#allocation5 + $0x108] sm:$0xff] %vm1807, %v6064
        %6101 = vst.msk [vmem:[#allocation5 + $0x120] sm:$0xff] %vm1807, %v6066
        %6102 = vst.msk [vmem:[#allocation5 + $0x138] sm:$0xff] %vm1807, %v6068
        %6103 = vst.msk [vmem:[#allocation5 + $0x150] sm:$0xff] %vm1807, %v6070
        %6104 = vst.msk [vmem:[#allocation5 + $0x168] sm:$0xff] %vm1807, %v6072
        %v6105 = vld [vmem:[%s4984] sm:$0xf]
        %v6106 = vld [vmem:[%s4984 + $0x4] sm:$0xf]
        %v6107 = vld [vmem:[%s4984 + $0xc] sm:$0xf]
        %v6108 = vld [vmem:[%s4984 + $0x10] sm:$0xf]
        %v6109 = vld [vmem:[%s4984 + $0x18] sm:$0xf]
        %v6110 = vld [vmem:[%s4984 + $0x1c] sm:$0xf]
        %v6111 = vld [vmem:[%s4984 + $0x24] sm:$0xf]
        %v6112 = vld [vmem:[%s4984 + $0x28] sm:$0xf]
        %v6113 = vld [vmem:[%s4984 + $0x30] sm:$0xf]
        %v6114 = vld [vmem:[%s4984 + $0x34] sm:$0xf]
        %v6115 = vld [vmem:[%s4984 + $0x3c] sm:$0xf]
        %v6116 = vld [vmem:[%s4984 + $0x40] sm:$0xf]
        %v6117 = vld [vmem:[%s4984 + $0x48] sm:$0xf]
        %v6118 = vld [vmem:[%s4984 + $0x4c] sm:$0xf]
        %v6119 = vld [vmem:[%s4984 + $0x54] sm:$0xf]
        %v6120 = vld [vmem:[%s4984 + $0x58] sm:$0xf]
        %v6121 = vld [vmem:[%s4984 + $0x60] sm:$0xf]
        %v6122 = vld [vmem:[%s4984 + $0x64] sm:$0xf]
        %v6123 = vld [vmem:[%s4984 + $0x6c] sm:$0xf]
        %v6124 = vld [vmem:[%s4984 + $0x70] sm:$0xf]
        %v6125 = vld [vmem:[%s4984 + $0x78] sm:$0xf]
        %v6126 = vld [vmem:[%s4984 + $0x7c] sm:$0xf]
        %v6127 = vld [vmem:[%s4984 + $0x84] sm:$0xf]
        %v6128 = vld [vmem:[%s4984 + $0x88] sm:$0xf]
        %v6129 = vld [vmem:[%s4984 + $0x90] sm:$0xf]
        %v6130 = vld [vmem:[%s4984 + $0x94] sm:$0xf]
        %v6131 = vld [vmem:[%s4984 + $0x9c] sm:$0xf]
        %v6132 = vld [vmem:[%s4984 + $0xa0] sm:$0xf]
        %v6133 = vld [vmem:[%s4984 + $0xa8] sm:$0xf]
        %v6134 = vld [vmem:[%s4984 + $0xac] sm:$0xf]
        %v6135 = vld [vmem:[%s4984 + $0xb4] sm:$0xf]
        %v6136 = vld [vmem:[%s4984 + $0xb8] sm:$0xf]
        %v6169 = vunpack.c.l.b16 %v6105
        %v6170 = vunpack.c.l.b16 %v6106
        %v6171 = vunpack.c.l.b16 %v6107
        %v6172 = vunpack.c.l.b16 %v6108
        %v6173 = vunpack.c.l.b16 %v6109
        %v6174 = vunpack.c.l.b16 %v6110
        %v6175 = vunpack.c.l.b16 %v6111
        %v6176 = vunpack.c.l.b16 %v6112
        %v6177 = vunpack.c.l.b16 %v6113
        %v6178 = vunpack.c.l.b16 %v6114
        %v6179 = vunpack.c.l.b16 %v6115
        %v6180 = vunpack.c.l.b16 %v6116
        %v6181 = vunpack.c.l.b16 %v6117
        %v6182 = vunpack.c.l.b16 %v6118
        %v6183 = vunpack.c.l.b16 %v6119
        %v6184 = vunpack.c.l.b16 %v6120
        %v6185 = vunpack.c.l.b16 %v6121
        %v6186 = vunpack.c.l.b16 %v6122
        %v6187 = vunpack.c.l.b16 %v6123
        %v6188 = vunpack.c.l.b16 %v6124
        %v6189 = vunpack.c.l.b16 %v6125
        %v6190 = vunpack.c.l.b16 %v6126
        %v6191 = vunpack.c.l.b16 %v6127
        %v6192 = vunpack.c.l.b16 %v6128
        %v6193 = vunpack.c.l.b16 %v6129
        %v6194 = vunpack.c.l.b16 %v6130
        %v6195 = vunpack.c.l.b16 %v6131
        %v6196 = vunpack.c.l.b16 %v6132
        %v6197 = vunpack.c.l.b16 %v6133
        %v6198 = vunpack.c.l.b16 %v6134
        %v6199 = vunpack.c.l.b16 %v6135
        %v6200 = vunpack.c.l.b16 %v6136
        %v6201 = vpack.c.b16 %v6170, %v6169
        %v6202 = vpack.c.b16 %v6172, %v6171
        %v6203 = vpack.c.b16 %v6174, %v6173
        %v6204 = vpack.c.b16 %v6176, %v6175
        %v6205 = vpack.c.b16 %v6178, %v6177
        %v6206 = vpack.c.b16 %v6180, %v6179
        %v6207 = vpack.c.b16 %v6182, %v6181
        %v6208 = vpack.c.b16 %v6184, %v6183
        %v6209 = vpack.c.b16 %v6186, %v6185
        %v6210 = vpack.c.b16 %v6188, %v6187
        %v6211 = vpack.c.b16 %v6190, %v6189
        %v6212 = vpack.c.b16 %v6192, %v6191
        %v6213 = vpack.c.b16 %v6194, %v6193
        %v6214 = vpack.c.b16 %v6196, %v6195
        %v6215 = vpack.c.b16 %v6198, %v6197
        %v6216 = vpack.c.b16 %v6200, %v6199
        %6217 = vrot.lane.b32.xlu0 %v6201, 96
        %v6218 = vpop.permute.xlu0 %6217
        %6219 = vrot.lane.b32.xlu0 %v6202, 96
        %v6220 = vpop.permute.xlu0 %6219
        %6221 = vrot.lane.b32.xlu0 %v6203, 96
        %v6222 = vpop.permute.xlu0 %6221
        %6223 = vrot.lane.b32.xlu0 %v6204, 96
        %v6224 = vpop.permute.xlu0 %6223
        %6225 = vrot.lane.b32.xlu0 %v6205, 96
        %v6226 = vpop.permute.xlu0 %6225
        %6227 = vrot.lane.b32.xlu0 %v6206, 96
        %v6228 = vpop.permute.xlu0 %6227
        %6229 = vrot.lane.b32.xlu0 %v6207, 96
        %v6230 = vpop.permute.xlu0 %6229
        %6231 = vrot.lane.b32.xlu0 %v6208, 96
        %v6232 = vpop.permute.xlu0 %6231
        %6233 = vrot.lane.b32.xlu0 %v6209, 96
        %v6234 = vpop.permute.xlu0 %6233
        %6235 = vrot.lane.b32.xlu0 %v6210, 96
        %v6236 = vpop.permute.xlu0 %6235
        %6237 = vrot.lane.b32.xlu0 %v6211, 96
        %v6238 = vpop.permute.xlu0 %6237
        %6239 = vrot.lane.b32.xlu0 %v6212, 96
        %v6240 = vpop.permute.xlu0 %6239
        %6241 = vrot.lane.b32.xlu0 %v6213, 96
        %v6242 = vpop.permute.xlu0 %6241
        %6243 = vrot.lane.b32.xlu0 %v6214, 96
        %v6244 = vpop.permute.xlu0 %6243
        %6245 = vrot.lane.b32.xlu0 %v6215, 96
        %v6246 = vpop.permute.xlu0 %6245
        %6247 = vrot.lane.b32.xlu0 %v6216, 96
        %v6248 = vpop.permute.xlu0 %6247
        %6265 = vst.msk [vmem:[#allocation5] sm:$0xff] %vm1984, %v6218
        %6266 = vst.msk [vmem:[#allocation5 + $0x18] sm:$0xff] %vm1984, %v6220
        %6267 = vst.msk [vmem:[#allocation5 + $0x30] sm:$0xff] %vm1984, %v6222
        %6268 = vst.msk [vmem:[#allocation5 + $0x48] sm:$0xff] %vm1984, %v6224
        %6269 = vst.msk [vmem:[#allocation5 + $0x60] sm:$0xff] %vm1984, %v6226
        %6270 = vst.msk [vmem:[#allocation5 + $0x78] sm:$0xff] %vm1984, %v6228
        %6271 = vst.msk [vmem:[#allocation5 + $0x90] sm:$0xff] %vm1984, %v6230
        %6272 = vst.msk [vmem:[#allocation5 + $0xa8] sm:$0xff] %vm1984, %v6232
        %6273 = vst.msk [vmem:[#allocation5 + $0xc0] sm:$0xff] %vm1984, %v6234
        %6274 = vst.msk [vmem:[#allocation5 + $0xd8] sm:$0xff] %vm1984, %v6236
        %6275 = vst.msk [vmem:[#allocation5 + $0xf0] sm:$0xff] %vm1984, %v6238
        %6276 = vst.msk [vmem:[#allocation5 + $0x108] sm:$0xff] %vm1984, %v6240
        %6277 = vst.msk [vmem:[#allocation5 + $0x120] sm:$0xff] %vm1984, %v6242
        %6278 = vst.msk [vmem:[#allocation5 + $0x138] sm:$0xff] %vm1984, %v6244
        %6279 = vst.msk [vmem:[#allocation5 + $0x150] sm:$0xff] %vm1984, %v6246
        %6280 = vst.msk [vmem:[#allocation5 + $0x168] sm:$0xff] %vm1984, %v6248
        %v6281 = vld [vmem:[%s4984] sm:$0xf]
        %v6282 = vld [vmem:[%s4984 + $0x4] sm:$0xf]
        %v6283 = vld [vmem:[%s4984 + $0x8] sm:$0x1]
        %v6284 = vld [vmem:[%s4984 + $0xc] sm:$0xf]
        %v6285 = vld [vmem:[%s4984 + $0x10] sm:$0xf]
        %v6286 = vld [vmem:[%s4984 + $0x14] sm:$0x1]
        %v6287 = vld [vmem:[%s4984 + $0x18] sm:$0xf]
        %v6288 = vld [vmem:[%s4984 + $0x1c] sm:$0xf]
        %v6289 = vld [vmem:[%s4984 + $0x20] sm:$0x1]
        %v6290 = vld [vmem:[%s4984 + $0x24] sm:$0xf]
        %v6291 = vld [vmem:[%s4984 + $0x28] sm:$0xf]
        %v6292 = vld [vmem:[%s4984 + $0x2c] sm:$0x1]
        %v6293 = vld [vmem:[%s4984 + $0x30] sm:$0xf]
        %v6294 = vld [vmem:[%s4984 + $0x34] sm:$0xf]
        %v6295 = vld [vmem:[%s4984 + $0x38] sm:$0x1]
        %v6296 = vld [vmem:[%s4984 + $0x3c] sm:$0xf]
        %v6297 = vld [vmem:[%s4984 + $0x40] sm:$0xf]
        %v6298 = vld [vmem:[%s4984 + $0x44] sm:$0x1]
        %v6299 = vld [vmem:[%s4984 + $0x48] sm:$0xf]
        %v6300 = vld [vmem:[%s4984 + $0x4c] sm:$0xf]
        %v6301 = vld [vmem:[%s4984 + $0x50] sm:$0x1]
        %v6302 = vld [vmem:[%s4984 + $0x54] sm:$0xf]
        %v6303 = vld [vmem:[%s4984 + $0x58] sm:$0xf]
        %v6304 = vld [vmem:[%s4984 + $0x5c] sm:$0x1]
        %v6305 = vld [vmem:[%s4984 + $0x60] sm:$0xf]
        %v6306 = vld [vmem:[%s4984 + $0x64] sm:$0xf]
        %v6307 = vld [vmem:[%s4984 + $0x68] sm:$0x1]
        %v6308 = vld [vmem:[%s4984 + $0x6c] sm:$0xf]
        %v6309 = vld [vmem:[%s4984 + $0x70] sm:$0xf]
        %v6310 = vld [vmem:[%s4984 + $0x74] sm:$0x1]
        %v6311 = vld [vmem:[%s4984 + $0x78] sm:$0xf]
        %v6312 = vld [vmem:[%s4984 + $0x7c] sm:$0xf]
        %v6313 = vld [vmem:[%s4984 + $0x80] sm:$0x1]
        %v6314 = vld [vmem:[%s4984 + $0x84] sm:$0xf]
        %v6315 = vld [vmem:[%s4984 + $0x88] sm:$0xf]
        %v6316 = vld [vmem:[%s4984 + $0x8c] sm:$0x1]
        %v6317 = vld [vmem:[%s4984 + $0x90] sm:$0xf]
        %v6318 = vld [vmem:[%s4984 + $0x94] sm:$0xf]
        %v6319 = vld [vmem:[%s4984 + $0x98] sm:$0x1]
        %v6320 = vld [vmem:[%s4984 + $0x9c] sm:$0xf]
        %v6321 = vld [vmem:[%s4984 + $0xa0] sm:$0xf]
        %v6322 = vld [vmem:[%s4984 + $0xa4] sm:$0x1]
        %v6323 = vld [vmem:[%s4984 + $0xa8] sm:$0xf]
        %v6324 = vld [vmem:[%s4984 + $0xac] sm:$0xf]
        %v6325 = vld [vmem:[%s4984 + $0xb0] sm:$0x1]
        %v6326 = vld [vmem:[%s4984 + $0xb4] sm:$0xf]
        %v6327 = vld [vmem:[%s4984 + $0xb8] sm:$0xf]
        %v6328 = vld [vmem:[%s4984 + $0xbc] sm:$0x1]
        %v6330 = vshrl.u32 %v6281, 16
        %v6332 = vrot.slane %v6330, 4
        %v6333 = vshll.u32 %v6281, 16
        %v6335 = vrot.slane %v6333, 5
        %v6336 = vor.u32 %v6332, %v6335
        %v6337 = vrot.slane %v6336, 4
        %v6339 = vshll.u32 %v6282, 16
        %v6341 = vrot.slane %v6339, 5
        %v6342 = vsel %vm1002, %v6337, %v6341
        %v6343 = vshrl.u32 %v6282, 16
        %v6345 = vrot.slane %v6343, 4
        %v6346 = vor.u32 %v6345, %v6341
        %v6347 = vrot.slane %v6346, 4
        %v6349 = vshll.u32 %v6283, 16
        %v6351 = vrot.slane %v6349, 5
        %v6352 = vsel %vm1002, %v6347, %v6351
        %v6354 = vshrl.u32 %v6284, 16
        %v6356 = vrot.slane %v6354, 4
        %v6357 = vshll.u32 %v6284, 16
        %v6359 = vrot.slane %v6357, 5
        %v6360 = vor.u32 %v6356, %v6359
        %v6361 = vrot.slane %v6360, 4
        %v6363 = vshll.u32 %v6285, 16
        %v6365 = vrot.slane %v6363, 5
        %v6366 = vsel %vm1002, %v6361, %v6365
        %v6367 = vshrl.u32 %v6285, 16
        %v6369 = vrot.slane %v6367, 4
        %v6370 = vor.u32 %v6369, %v6365
        %v6371 = vrot.slane %v6370, 4
        %v6373 = vshll.u32 %v6286, 16
        %v6375 = vrot.slane %v6373, 5
        %v6376 = vsel %vm1002, %v6371, %v6375
        %v6378 = vshrl.u32 %v6287, 16
        %v6380 = vrot.slane %v6378, 4
        %v6381 = vshll.u32 %v6287, 16
        %v6383 = vrot.slane %v6381, 5
        %v6384 = vor.u32 %v6380, %v6383
        %v6385 = vrot.slane %v6384, 4
        %v6387 = vshll.u32 %v6288, 16
        %v6389 = vrot.slane %v6387, 5
        %v6390 = vsel %vm1002, %v6385, %v6389
        %v6391 = vshrl.u32 %v6288, 16
        %v6393 = vrot.slane %v6391, 4
        %v6394 = vor.u32 %v6393, %v6389
        %v6395 = vrot.slane %v6394, 4
        %v6397 = vshll.u32 %v6289, 16
        %v6399 = vrot.slane %v6397, 5
        %v6400 = vsel %vm1002, %v6395, %v6399
        %v6402 = vshrl.u32 %v6290, 16
        %v6404 = vrot.slane %v6402, 4
        %v6405 = vshll.u32 %v6290, 16
        %v6407 = vrot.slane %v6405, 5
        %v6408 = vor.u32 %v6404, %v6407
        %v6409 = vrot.slane %v6408, 4
        %v6411 = vshll.u32 %v6291, 16
        %v6413 = vrot.slane %v6411, 5
        %v6414 = vsel %vm1002, %v6409, %v6413
        %v6415 = vshrl.u32 %v6291, 16
        %v6417 = vrot.slane %v6415, 4
        %v6418 = vor.u32 %v6417, %v6413
        %v6419 = vrot.slane %v6418, 4
        %v6421 = vshll.u32 %v6292, 16
        %v6423 = vrot.slane %v6421, 5
        %v6424 = vsel %vm1002, %v6419, %v6423
        %v6426 = vshrl.u32 %v6293, 16
        %v6428 = vrot.slane %v6426, 4
        %v6429 = vshll.u32 %v6293, 16
        %v6431 = vrot.slane %v6429, 5
        %v6432 = vor.u32 %v6428, %v6431
        %v6433 = vrot.slane %v6432, 4
        %v6435 = vshll.u32 %v6294, 16
        %v6437 = vrot.slane %v6435, 5
        %v6438 = vsel %vm1002, %v6433, %v6437
        %v6439 = vshrl.u32 %v6294, 16
        %v6441 = vrot.slane %v6439, 4
        %v6442 = vor.u32 %v6441, %v6437
        %v6443 = vrot.slane %v6442, 4
        %v6445 = vshll.u32 %v6295, 16
        %v6447 = vrot.slane %v6445, 5
        %v6448 = vsel %vm1002, %v6443, %v6447
        %v6450 = vshrl.u32 %v6296, 16
        %v6452 = vrot.slane %v6450, 4
        %v6453 = vshll.u32 %v6296, 16
        %v6455 = vrot.slane %v6453, 5
        %v6456 = vor.u32 %v6452, %v6455
        %v6457 = vrot.slane %v6456, 4
        %v6459 = vshll.u32 %v6297, 16
        %v6461 = vrot.slane %v6459, 5
        %v6462 = vsel %vm1002, %v6457, %v6461
        %v6463 = vshrl.u32 %v6297, 16
        %v6465 = vrot.slane %v6463, 4
        %v6466 = vor.u32 %v6465, %v6461
        %v6467 = vrot.slane %v6466, 4
        %v6469 = vshll.u32 %v6298, 16
        %v6471 = vrot.slane %v6469, 5
        %v6472 = vsel %vm1002, %v6467, %v6471
        %v6474 = vshrl.u32 %v6299, 16
        %v6476 = vrot.slane %v6474, 4
        %v6477 = vshll.u32 %v6299, 16
        %v6479 = vrot.slane %v6477, 5
        %v6480 = vor.u32 %v6476, %v6479
        %v6481 = vrot.slane %v6480, 4
        %v6483 = vshll.u32 %v6300, 16
        %v6485 = vrot.slane %v6483, 5
        %v6486 = vsel %vm1002, %v6481, %v6485
        %v6487 = vshrl.u32 %v6300, 16
        %v6489 = vrot.slane %v6487, 4
        %v6490 = vor.u32 %v6489, %v6485
        %v6491 = vrot.slane %v6490, 4
        %v6493 = vshll.u32 %v6301, 16
        %v6495 = vrot.slane %v6493, 5
        %v6496 = vsel %vm1002, %v6491, %v6495
        %v6498 = vshrl.u32 %v6302, 16
        %v6500 = vrot.slane %v6498, 4
        %v6501 = vshll.u32 %v6302, 16
        %v6503 = vrot.slane %v6501, 5
        %v6504 = vor.u32 %v6500, %v6503
        %v6505 = vrot.slane %v6504, 4
        %v6507 = vshll.u32 %v6303, 16
        %v6509 = vrot.slane %v6507, 5
        %v6510 = vsel %vm1002, %v6505, %v6509
        %v6511 = vshrl.u32 %v6303, 16
        %v6513 = vrot.slane %v6511, 4
        %v6514 = vor.u32 %v6513, %v6509
        %v6515 = vrot.slane %v6514, 4
        %v6517 = vshll.u32 %v6304, 16
        %v6519 = vrot.slane %v6517, 5
        %v6520 = vsel %vm1002, %v6515, %v6519
        %v6522 = vshrl.u32 %v6305, 16
        %v6524 = vrot.slane %v6522, 4
        %v6525 = vshll.u32 %v6305, 16
        %v6527 = vrot.slane %v6525, 5
        %v6528 = vor.u32 %v6524, %v6527
        %v6529 = vrot.slane %v6528, 4
        %v6531 = vshll.u32 %v6306, 16
        %v6533 = vrot.slane %v6531, 5
        %v6534 = vsel %vm1002, %v6529, %v6533
        %v6535 = vshrl.u32 %v6306, 16
        %v6537 = vrot.slane %v6535, 4
        %v6538 = vor.u32 %v6537, %v6533
        %v6539 = vrot.slane %v6538, 4
        %v6541 = vshll.u32 %v6307, 16
        %v6543 = vrot.slane %v6541, 5
        %v6544 = vsel %vm1002, %v6539, %v6543
        %v6546 = vshrl.u32 %v6308, 16
        %v6548 = vrot.slane %v6546, 4
        %v6549 = vshll.u32 %v6308, 16
        %v6551 = vrot.slane %v6549, 5
        %v6552 = vor.u32 %v6548, %v6551
        %v6553 = vrot.slane %v6552, 4
        %v6555 = vshll.u32 %v6309, 16
        %v6557 = vrot.slane %v6555, 5
        %v6558 = vsel %vm1002, %v6553, %v6557
        %v6559 = vshrl.u32 %v6309, 16
        %v6561 = vrot.slane %v6559, 4
        %v6562 = vor.u32 %v6561, %v6557
        %v6563 = vrot.slane %v6562, 4
        %v6565 = vshll.u32 %v6310, 16
        %v6567 = vrot.slane %v6565, 5
        %v6568 = vsel %vm1002, %v6563, %v6567
        %v6570 = vshrl.u32 %v6311, 16
        %v6572 = vrot.slane %v6570, 4
        %v6573 = vshll.u32 %v6311, 16
        %v6575 = vrot.slane %v6573, 5
        %v6576 = vor.u32 %v6572, %v6575
        %v6577 = vrot.slane %v6576, 4
        %v6579 = vshll.u32 %v6312, 16
        %v6581 = vrot.slane %v6579, 5
        %v6582 = vsel %vm1002, %v6577, %v6581
        %v6583 = vshrl.u32 %v6312, 16
        %v6585 = vrot.slane %v6583, 4
        %v6586 = vor.u32 %v6585, %v6581
        %v6587 = vrot.slane %v6586, 4
        %v6589 = vshll.u32 %v6313, 16
        %v6591 = vrot.slane %v6589, 5
        %v6592 = vsel %vm1002, %v6587, %v6591
        %v6594 = vshrl.u32 %v6314, 16
        %v6596 = vrot.slane %v6594, 4
        %v6597 = vshll.u32 %v6314, 16
        %v6599 = vrot.slane %v6597, 5
        %v6600 = vor.u32 %v6596, %v6599
        %v6601 = vrot.slane %v6600, 4
        %v6603 = vshll.u32 %v6315, 16
        %v6605 = vrot.slane %v6603, 5
        %v6606 = vsel %vm1002, %v6601, %v6605
        %v6607 = vshrl.u32 %v6315, 16
        %v6609 = vrot.slane %v6607, 4
        %v6610 = vor.u32 %v6609, %v6605
        %v6611 = vrot.slane %v6610, 4
        %v6613 = vshll.u32 %v6316, 16
        %v6615 = vrot.slane %v6613, 5
        %v6616 = vsel %vm1002, %v6611, %v6615
        %v6618 = vshrl.u32 %v6317, 16
        %v6620 = vrot.slane %v6618, 4
        %v6621 = vshll.u32 %v6317, 16
        %v6623 = vrot.slane %v6621, 5
        %v6624 = vor.u32 %v6620, %v6623
        %v6625 = vrot.slane %v6624, 4
        %v6627 = vshll.u32 %v6318, 16
        %v6629 = vrot.slane %v6627, 5
        %v6630 = vsel %vm1002, %v6625, %v6629
        %v6631 = vshrl.u32 %v6318, 16
        %v6633 = vrot.slane %v6631, 4
        %v6634 = vor.u32 %v6633, %v6629
        %v6635 = vrot.slane %v6634, 4
        %v6637 = vshll.u32 %v6319, 16
        %v6639 = vrot.slane %v6637, 5
        %v6640 = vsel %vm1002, %v6635, %v6639
        %v6642 = vshrl.u32 %v6320, 16
        %v6644 = vrot.slane %v6642, 4
        %v6645 = vshll.u32 %v6320, 16
        %v6647 = vrot.slane %v6645, 5
        %v6648 = vor.u32 %v6644, %v6647
        %v6649 = vrot.slane %v6648, 4
        %v6651 = vshll.u32 %v6321, 16
        %v6653 = vrot.slane %v6651, 5
        %v6654 = vsel %vm1002, %v6649, %v6653
        %v6655 = vshrl.u32 %v6321, 16
        %v6657 = vrot.slane %v6655, 4
        %v6658 = vor.u32 %v6657, %v6653
        %v6659 = vrot.slane %v6658, 4
        %v6661 = vshll.u32 %v6322, 16
        %v6663 = vrot.slane %v6661, 5
        %v6664 = vsel %vm1002, %v6659, %v6663
        %v6666 = vshrl.u32 %v6323, 16
        %v6668 = vrot.slane %v6666, 4
        %v6669 = vshll.u32 %v6323, 16
        %v6671 = vrot.slane %v6669, 5
        %v6672 = vor.u32 %v6668, %v6671
        %v6673 = vrot.slane %v6672, 4
        %v6675 = vshll.u32 %v6324, 16
        %v6677 = vrot.slane %v6675, 5
        %v6678 = vsel %vm1002, %v6673, %v6677
        %v6679 = vshrl.u32 %v6324, 16
        %v6681 = vrot.slane %v6679, 4
        %v6682 = vor.u32 %v6681, %v6677
        %v6683 = vrot.slane %v6682, 4
        %v6685 = vshll.u32 %v6325, 16
        %v6687 = vrot.slane %v6685, 5
        %v6688 = vsel %vm1002, %v6683, %v6687
        %v6690 = vshrl.u32 %v6326, 16
        %v6692 = vrot.slane %v6690, 4
        %v6693 = vshll.u32 %v6326, 16
        %v6695 = vrot.slane %v6693, 5
        %v6696 = vor.u32 %v6692, %v6695
        %v6697 = vrot.slane %v6696, 4
        %v6699 = vshll.u32 %v6327, 16
        %v6701 = vrot.slane %v6699, 5
        %v6702 = vsel %vm1002, %v6697, %v6701
        %v6703 = vshrl.u32 %v6327, 16
        %v6705 = vrot.slane %v6703, 4
        %v6706 = vor.u32 %v6705, %v6701
        %v6707 = vrot.slane %v6706, 4
        %v6709 = vshll.u32 %v6328, 16
        %v6711 = vrot.slane %v6709, 5
        %v6712 = vsel %vm1002, %v6707, %v6711
        %v6713 = vunpack.c.l.b16 %v6342
        %v6714 = vunpack.c.l.b16 %v6352
        %v6715 = vunpack.c.l.b16 %v6366
        %v6716 = vunpack.c.l.b16 %v6376
        %v6717 = vunpack.c.l.b16 %v6390
        %v6718 = vunpack.c.l.b16 %v6400
        %v6719 = vunpack.c.l.b16 %v6414
        %v6720 = vunpack.c.l.b16 %v6424
        %v6721 = vunpack.c.l.b16 %v6438
        %v6722 = vunpack.c.l.b16 %v6448
        %v6723 = vunpack.c.l.b16 %v6462
        %v6724 = vunpack.c.l.b16 %v6472
        %v6725 = vunpack.c.l.b16 %v6486
        %v6726 = vunpack.c.l.b16 %v6496
        %v6727 = vunpack.c.l.b16 %v6510
        %v6728 = vunpack.c.l.b16 %v6520
        %v6729 = vunpack.c.l.b16 %v6534
        %v6730 = vunpack.c.l.b16 %v6544
        %v6731 = vunpack.c.l.b16 %v6558
        %v6732 = vunpack.c.l.b16 %v6568
        %v6733 = vunpack.c.l.b16 %v6582
        %v6734 = vunpack.c.l.b16 %v6592
        %v6735 = vunpack.c.l.b16 %v6606
        %v6736 = vunpack.c.l.b16 %v6616
        %v6737 = vunpack.c.l.b16 %v6630
        %v6738 = vunpack.c.l.b16 %v6640
        %v6739 = vunpack.c.l.b16 %v6654
        %v6740 = vunpack.c.l.b16 %v6664
        %v6741 = vunpack.c.l.b16 %v6678
        %v6742 = vunpack.c.l.b16 %v6688
        %v6743 = vunpack.c.l.b16 %v6702
        %v6744 = vunpack.c.l.b16 %v6712
        %v6745 = vpack.c.b16 %v6714, %v6713
        %v6746 = vpack.c.b16 %v6716, %v6715
        %v6747 = vpack.c.b16 %v6718, %v6717
        %v6748 = vpack.c.b16 %v6720, %v6719
        %v6749 = vpack.c.b16 %v6722, %v6721
        %v6750 = vpack.c.b16 %v6724, %v6723
        %v6751 = vpack.c.b16 %v6726, %v6725
        %v6752 = vpack.c.b16 %v6728, %v6727
        %v6753 = vpack.c.b16 %v6730, %v6729
        %v6754 = vpack.c.b16 %v6732, %v6731
        %v6755 = vpack.c.b16 %v6734, %v6733
        %v6756 = vpack.c.b16 %v6736, %v6735
        %v6757 = vpack.c.b16 %v6738, %v6737
        %v6758 = vpack.c.b16 %v6740, %v6739
        %v6759 = vpack.c.b16 %v6742, %v6741
        %v6760 = vpack.c.b16 %v6744, %v6743
        %6777 = vst.msk [vmem:[#allocation5 + $0x8] sm:$0xff] %vm935, %v6745
        %6778 = vst.msk [vmem:[#allocation5 + $0x20] sm:$0xff] %vm935, %v6746
        %6779 = vst.msk [vmem:[#allocation5 + $0x38] sm:$0xff] %vm935, %v6747
        %6780 = vst.msk [vmem:[#allocation5 + $0x50] sm:$0xff] %vm935, %v6748
        %6781 = vst.msk [vmem:[#allocation5 + $0x68] sm:$0xff] %vm935, %v6749
        %6782 = vst.msk [vmem:[#allocation5 + $0x80] sm:$0xff] %vm935, %v6750
        %6783 = vst.msk [vmem:[#allocation5 + $0x98] sm:$0xff] %vm935, %v6751
        %6784 = vst.msk [vmem:[#allocation5 + $0xb0] sm:$0xff] %vm935, %v6752
        %6785 = vst.msk [vmem:[#allocation5 + $0xc8] sm:$0xff] %vm935, %v6753
        %6786 = vst.msk [vmem:[#allocation5 + $0xe0] sm:$0xff] %vm935, %v6754
        %6787 = vst.msk [vmem:[#allocation5 + $0xf8] sm:$0xff] %vm935, %v6755
        %6788 = vst.msk [vmem:[#allocation5 + $0x110] sm:$0xff] %vm935, %v6756
        %6789 = vst.msk [vmem:[#allocation5 + $0x128] sm:$0xff] %vm935, %v6757
        %6790 = vst.msk [vmem:[#allocation5 + $0x140] sm:$0xff] %vm935, %v6758
        %6791 = vst.msk [vmem:[#allocation5 + $0x158] sm:$0xff] %vm935, %v6759
        %6792 = vst.msk [vmem:[#allocation5 + $0x170] sm:$0xff] %vm935, %v6760
        %v6793 = vld [vmem:[%s4984] sm:$0xe]
        %v6794 = vld [vmem:[%s4984 + $0x4] sm:$0xf]
        %v6795 = vld [vmem:[%s4984 + $0x8] sm:$0x1]
        %v6796 = vld [vmem:[%s4984 + $0xc] sm:$0xe]
        %v6797 = vld [vmem:[%s4984 + $0x10] sm:$0xf]
        %v6798 = vld [vmem:[%s4984 + $0x14] sm:$0x1]
        %v6799 = vld [vmem:[%s4984 + $0x18] sm:$0xe]
        %v6800 = vld [vmem:[%s4984 + $0x1c] sm:$0xf]
        %v6801 = vld [vmem:[%s4984 + $0x20] sm:$0x1]
        %v6802 = vld [vmem:[%s4984 + $0x24] sm:$0xe]
        %v6803 = vld [vmem:[%s4984 + $0x28] sm:$0xf]
        %v6804 = vld [vmem:[%s4984 + $0x2c] sm:$0x1]
        %v6805 = vld [vmem:[%s4984 + $0x30] sm:$0xe]
        %v6806 = vld [vmem:[%s4984 + $0x34] sm:$0xf]
        %v6807 = vld [vmem:[%s4984 + $0x38] sm:$0x1]
        %v6808 = vld [vmem:[%s4984 + $0x3c] sm:$0xe]
        %v6809 = vld [vmem:[%s4984 + $0x40] sm:$0xf]
        %v6810 = vld [vmem:[%s4984 + $0x44] sm:$0x1]
        %v6811 = vld [vmem:[%s4984 + $0x48] sm:$0xe]
        %v6812 = vld [vmem:[%s4984 + $0x4c] sm:$0xf]
        %v6813 = vld [vmem:[%s4984 + $0x50] sm:$0x1]
        %v6814 = vld [vmem:[%s4984 + $0x54] sm:$0xe]
        %v6815 = vld [vmem:[%s4984 + $0x58] sm:$0xf]
        %v6816 = vld [vmem:[%s4984 + $0x5c] sm:$0x1]
        %v6817 = vld [vmem:[%s4984 + $0x60] sm:$0xe]
        %v6818 = vld [vmem:[%s4984 + $0x64] sm:$0xf]
        %v6819 = vld [vmem:[%s4984 + $0x68] sm:$0x1]
        %v6820 = vld [vmem:[%s4984 + $0x6c] sm:$0xe]
        %v6821 = vld [vmem:[%s4984 + $0x70] sm:$0xf]
        %v6822 = vld [vmem:[%s4984 + $0x74] sm:$0x1]
        %v6823 = vld [vmem:[%s4984 + $0x78] sm:$0xe]
        %v6824 = vld [vmem:[%s4984 + $0x7c] sm:$0xf]
        %v6825 = vld [vmem:[%s4984 + $0x80] sm:$0x1]
        %v6826 = vld [vmem:[%s4984 + $0x84] sm:$0xe]
        %v6827 = vld [vmem:[%s4984 + $0x88] sm:$0xf]
        %v6828 = vld [vmem:[%s4984 + $0x8c] sm:$0x1]
        %v6829 = vld [vmem:[%s4984 + $0x90] sm:$0xe]
        %v6830 = vld [vmem:[%s4984 + $0x94] sm:$0xf]
        %v6831 = vld [vmem:[%s4984 + $0x98] sm:$0x1]
        %v6832 = vld [vmem:[%s4984 + $0x9c] sm:$0xe]
        %v6833 = vld [vmem:[%s4984 + $0xa0] sm:$0xf]
        %v6834 = vld [vmem:[%s4984 + $0xa4] sm:$0x1]
        %v6835 = vld [vmem:[%s4984 + $0xa8] sm:$0xe]
        %v6836 = vld [vmem:[%s4984 + $0xac] sm:$0xf]
        %v6837 = vld [vmem:[%s4984 + $0xb0] sm:$0x1]
        %v6838 = vld [vmem:[%s4984 + $0xb4] sm:$0xe]
        %v6839 = vld [vmem:[%s4984 + $0xb8] sm:$0xf]
        %v6840 = vld [vmem:[%s4984 + $0xbc] sm:$0x1]
        %v6889 = vrot.slane %v6793, 5
        %v6890 = vrot.slane %v6889, 4
        %v6891 = vrot.slane %v6794, 5
        %v6892 = vsel %vm1598, %v6890, %v6891
        %v6893 = vrot.slane %v6891, 4
        %v6894 = vrot.slane %v6795, 5
        %v6895 = vsel %vm1598, %v6893, %v6894
        %v6896 = vrot.slane %v6796, 5
        %v6897 = vrot.slane %v6896, 4
        %v6898 = vrot.slane %v6797, 5
        %v6899 = vsel %vm1598, %v6897, %v6898
        %v6900 = vrot.slane %v6898, 4
        %v6901 = vrot.slane %v6798, 5
        %v6902 = vsel %vm1598, %v6900, %v6901
        %v6903 = vrot.slane %v6799, 5
        %v6904 = vrot.slane %v6903, 4
        %v6905 = vrot.slane %v6800, 5
        %v6906 = vsel %vm1598, %v6904, %v6905
        %v6907 = vrot.slane %v6905, 4
        %v6908 = vrot.slane %v6801, 5
        %v6909 = vsel %vm1598, %v6907, %v6908
        %v6910 = vrot.slane %v6802, 5
        %v6911 = vrot.slane %v6910, 4
        %v6912 = vrot.slane %v6803, 5
        %v6913 = vsel %vm1598, %v6911, %v6912
        %v6914 = vrot.slane %v6912, 4
        %v6915 = vrot.slane %v6804, 5
        %v6916 = vsel %vm1598, %v6914, %v6915
        %v6917 = vrot.slane %v6805, 5
        %v6918 = vrot.slane %v6917, 4
        %v6919 = vrot.slane %v6806, 5
        %v6920 = vsel %vm1598, %v6918, %v6919
        %v6921 = vrot.slane %v6919, 4
        %v6922 = vrot.slane %v6807, 5
        %v6923 = vsel %vm1598, %v6921, %v6922
        %v6924 = vrot.slane %v6808, 5
        %v6925 = vrot.slane %v6924, 4
        %v6926 = vrot.slane %v6809, 5
        %v6927 = vsel %vm1598, %v6925, %v6926
        %v6928 = vrot.slane %v6926, 4
        %v6929 = vrot.slane %v6810, 5
        %v6930 = vsel %vm1598, %v6928, %v6929
        %v6931 = vrot.slane %v6811, 5
        %v6932 = vrot.slane %v6931, 4
        %v6933 = vrot.slane %v6812, 5
        %v6934 = vsel %vm1598, %v6932, %v6933
        %v6935 = vrot.slane %v6933, 4
        %v6936 = vrot.slane %v6813, 5
        %v6937 = vsel %vm1598, %v6935, %v6936
        %v6938 = vrot.slane %v6814, 5
        %v6939 = vrot.slane %v6938, 4
        %v6940 = vrot.slane %v6815, 5
        %v6941 = vsel %vm1598, %v6939, %v6940
        %v6942 = vrot.slane %v6940, 4
        %v6943 = vrot.slane %v6816, 5
        %v6944 = vsel %vm1598, %v6942, %v6943
        %v6945 = vrot.slane %v6817, 5
        %v6946 = vrot.slane %v6945, 4
        %v6947 = vrot.slane %v6818, 5
        %v6948 = vsel %vm1598, %v6946, %v6947
        %v6949 = vrot.slane %v6947, 4
        %v6950 = vrot.slane %v6819, 5
        %v6951 = vsel %vm1598, %v6949, %v6950
        %v6952 = vrot.slane %v6820, 5
        %v6953 = vrot.slane %v6952, 4
        %v6954 = vrot.slane %v6821, 5
        %v6955 = vsel %vm1598, %v6953, %v6954
        %v6956 = vrot.slane %v6954, 4
        %v6957 = vrot.slane %v6822, 5
        %v6958 = vsel %vm1598, %v6956, %v6957
        %v6959 = vrot.slane %v6823, 5
        %v6960 = vrot.slane %v6959, 4
        %v6961 = vrot.slane %v6824, 5
        %v6962 = vsel %vm1598, %v6960, %v6961
        %v6963 = vrot.slane %v6961, 4
        %v6964 = vrot.slane %v6825, 5
        %v6965 = vsel %vm1598, %v6963, %v6964
        %v6966 = vrot.slane %v6826, 5
        %v6967 = vrot.slane %v6966, 4
        %v6968 = vrot.slane %v6827, 5
        %v6969 = vsel %vm1598, %v6967, %v6968
        %v6970 = vrot.slane %v6968, 4
        %v6971 = vrot.slane %v6828, 5
        %v6972 = vsel %vm1598, %v6970, %v6971
        %v6973 = vrot.slane %v6829, 5
        %v6974 = vrot.slane %v6973, 4
        %v6975 = vrot.slane %v6830, 5
        %v6976 = vsel %vm1598, %v6974, %v6975
        %v6977 = vrot.slane %v6975, 4
        %v6978 = vrot.slane %v6831, 5
        %v6979 = vsel %vm1598, %v6977, %v6978
        %v6980 = vrot.slane %v6832, 5
        %v6981 = vrot.slane %v6980, 4
        %v6982 = vrot.slane %v6833, 5
        %v6983 = vsel %vm1598, %v6981, %v6982
        %v6984 = vrot.slane %v6982, 4
        %v6985 = vrot.slane %v6834, 5
        %v6986 = vsel %vm1598, %v6984, %v6985
        %v6987 = vrot.slane %v6835, 5
        %v6988 = vrot.slane %v6987, 4
        %v6989 = vrot.slane %v6836, 5
        %v6990 = vsel %vm1598, %v6988, %v6989
        %v6991 = vrot.slane %v6989, 4
        %v6992 = vrot.slane %v6837, 5
        %v6993 = vsel %vm1598, %v6991, %v6992
        %v6994 = vrot.slane %v6838, 5
        %v6995 = vrot.slane %v6994, 4
        %v6996 = vrot.slane %v6839, 5
        %v6997 = vsel %vm1598, %v6995, %v6996
        %v6998 = vrot.slane %v6996, 4
        %v6999 = vrot.slane %v6840, 5
        %v7000 = vsel %vm1598, %v6998, %v6999
        %v7001 = vunpack.c.l.b16 %v6892
        %v7002 = vunpack.c.l.b16 %v6895
        %v7003 = vunpack.c.l.b16 %v6899
        %v7004 = vunpack.c.l.b16 %v6902
        %v7005 = vunpack.c.l.b16 %v6906
        %v7006 = vunpack.c.l.b16 %v6909
        %v7007 = vunpack.c.l.b16 %v6913
        %v7008 = vunpack.c.l.b16 %v6916
        %v7009 = vunpack.c.l.b16 %v6920
        %v7010 = vunpack.c.l.b16 %v6923
        %v7011 = vunpack.c.l.b16 %v6927
        %v7012 = vunpack.c.l.b16 %v6930
        %v7013 = vunpack.c.l.b16 %v6934
        %v7014 = vunpack.c.l.b16 %v6937
        %v7015 = vunpack.c.l.b16 %v6941
        %v7016 = vunpack.c.l.b16 %v6944
        %v7017 = vunpack.c.l.b16 %v6948
        %v7018 = vunpack.c.l.b16 %v6951
        %v7019 = vunpack.c.l.b16 %v6955
        %v7020 = vunpack.c.l.b16 %v6958
        %v7021 = vunpack.c.l.b16 %v6962
        %v7022 = vunpack.c.l.b16 %v6965
        %v7023 = vunpack.c.l.b16 %v6969
        %v7024 = vunpack.c.l.b16 %v6972
        %v7025 = vunpack.c.l.b16 %v6976
        %v7026 = vunpack.c.l.b16 %v6979
        %v7027 = vunpack.c.l.b16 %v6983
        %v7028 = vunpack.c.l.b16 %v6986
        %v7029 = vunpack.c.l.b16 %v6990
        %v7030 = vunpack.c.l.b16 %v6993
        %v7031 = vunpack.c.l.b16 %v6997
        %v7032 = vunpack.c.l.b16 %v7000
        %v7033 = vpack.c.b16 %v7002, %v7001
        %v7034 = vpack.c.b16 %v7004, %v7003
        %v7035 = vpack.c.b16 %v7006, %v7005
        %v7036 = vpack.c.b16 %v7008, %v7007
        %v7037 = vpack.c.b16 %v7010, %v7009
        %v7038 = vpack.c.b16 %v7012, %v7011
        %v7039 = vpack.c.b16 %v7014, %v7013
        %v7040 = vpack.c.b16 %v7016, %v7015
        %v7041 = vpack.c.b16 %v7018, %v7017
        %v7042 = vpack.c.b16 %v7020, %v7019
        %v7043 = vpack.c.b16 %v7022, %v7021
        %v7044 = vpack.c.b16 %v7024, %v7023
        %v7045 = vpack.c.b16 %v7026, %v7025
        %v7046 = vpack.c.b16 %v7028, %v7027
        %v7047 = vpack.c.b16 %v7030, %v7029
        %v7048 = vpack.c.b16 %v7032, %v7031
        %7049 = vrot.lane.b32.xlu0 %v7033, 32
        %v7050 = vpop.permute.xlu0 %7049
        %7051 = vrot.lane.b32.xlu0 %v7034, 32
        %v7052 = vpop.permute.xlu0 %7051
        %7053 = vrot.lane.b32.xlu0 %v7035, 32
        %v7054 = vpop.permute.xlu0 %7053
        %7055 = vrot.lane.b32.xlu0 %v7036, 32
        %v7056 = vpop.permute.xlu0 %7055
        %7057 = vrot.lane.b32.xlu0 %v7037, 32
        %v7058 = vpop.permute.xlu0 %7057
        %7059 = vrot.lane.b32.xlu0 %v7038, 32
        %v7060 = vpop.permute.xlu0 %7059
        %7061 = vrot.lane.b32.xlu0 %v7039, 32
        %v7062 = vpop.permute.xlu0 %7061
        %7063 = vrot.lane.b32.xlu0 %v7040, 32
        %v7064 = vpop.permute.xlu0 %7063
        %7065 = vrot.lane.b32.xlu0 %v7041, 32
        %v7066 = vpop.permute.xlu0 %7065
        %7067 = vrot.lane.b32.xlu0 %v7042, 32
        %v7068 = vpop.permute.xlu0 %7067
        %7069 = vrot.lane.b32.xlu0 %v7043, 32
        %v7070 = vpop.permute.xlu0 %7069
        %7071 = vrot.lane.b32.xlu0 %v7044, 32
        %v7072 = vpop.permute.xlu0 %7071
        %7073 = vrot.lane.b32.xlu0 %v7045, 32
        %v7074 = vpop.permute.xlu0 %7073
        %7075 = vrot.lane.b32.xlu0 %v7046, 32
        %v7076 = vpop.permute.xlu0 %7075
        %7077 = vrot.lane.b32.xlu0 %v7047, 32
        %v7078 = vpop.permute.xlu0 %7077
        %7079 = vrot.lane.b32.xlu0 %v7048, 32
        %v7080 = vpop.permute.xlu0 %7079
        %7097 = vst.msk [vmem:[#allocation5 + $0x8] sm:$0xff] %vm1483, %v7050
        %7098 = vst.msk [vmem:[#allocation5 + $0x20] sm:$0xff] %vm1483, %v7052
        %7099 = vst.msk [vmem:[#allocation5 + $0x38] sm:$0xff] %vm1483, %v7054
        %7100 = vst.msk [vmem:[#allocation5 + $0x50] sm:$0xff] %vm1483, %v7056
        %7101 = vst.msk [vmem:[#allocation5 + $0x68] sm:$0xff] %vm1483, %v7058
        %7102 = vst.msk [vmem:[#allocation5 + $0x80] sm:$0xff] %vm1483, %v7060
        %7103 = vst.msk [vmem:[#allocation5 + $0x98] sm:$0xff] %vm1483, %v7062
        %7104 = vst.msk [vmem:[#allocation5 + $0xb0] sm:$0xff] %vm1483, %v7064
        %7105 = vst.msk [vmem:[#allocation5 + $0xc8] sm:$0xff] %vm1483, %v7066
        %7106 = vst.msk [vmem:[#allocation5 + $0xe0] sm:$0xff] %vm1483, %v7068
        %7107 = vst.msk [vmem:[#allocation5 + $0xf8] sm:$0xff] %vm1483, %v7070
        %7108 = vst.msk [vmem:[#allocation5 + $0x110] sm:$0xff] %vm1483, %v7072
        %7109 = vst.msk [vmem:[#allocation5 + $0x128] sm:$0xff] %vm1483, %v7074
        %7110 = vst.msk [vmem:[#allocation5 + $0x140] sm:$0xff] %vm1483, %v7076
        %7111 = vst.msk [vmem:[#allocation5 + $0x158] sm:$0xff] %vm1483, %v7078
        %7112 = vst.msk [vmem:[#allocation5 + $0x170] sm:$0xff] %vm1483, %v7080
        %s7113 = scalar_lea.vmem [#allocation4], 24
        %v7114 = vld [vmem:[%s7113] sm:$0xf]
        %v7115 = vld [vmem:[%s7113 + $0x4] sm:$0xf]
        %v7116 = vld [vmem:[%s7113 + $0xc] sm:$0xf]
        %v7117 = vld [vmem:[%s7113 + $0x10] sm:$0xf]
        %v7118 = vld [vmem:[%s7113 + $0x18] sm:$0xf]
        %v7119 = vld [vmem:[%s7113 + $0x1c] sm:$0xf]
        %v7120 = vld [vmem:[%s7113 + $0x24] sm:$0xf]
        %v7121 = vld [vmem:[%s7113 + $0x28] sm:$0xf]
        %v7122 = vld [vmem:[%s7113 + $0x30] sm:$0xf]
        %v7123 = vld [vmem:[%s7113 + $0x34] sm:$0xf]
        %v7124 = vld [vmem:[%s7113 + $0x3c] sm:$0xf]
        %v7125 = vld [vmem:[%s7113 + $0x40] sm:$0xf]
        %v7126 = vld [vmem:[%s7113 + $0x48] sm:$0xf]
        %v7127 = vld [vmem:[%s7113 + $0x4c] sm:$0xf]
        %v7128 = vld [vmem:[%s7113 + $0x54] sm:$0xf]
        %v7129 = vld [vmem:[%s7113 + $0x58] sm:$0xf]
        %v7130 = vld [vmem:[%s7113 + $0x60] sm:$0xf]
        %v7131 = vld [vmem:[%s7113 + $0x64] sm:$0xf]
        %v7132 = vld [vmem:[%s7113 + $0x6c] sm:$0xf]
        %v7133 = vld [vmem:[%s7113 + $0x70] sm:$0xf]
        %v7134 = vld [vmem:[%s7113 + $0x78] sm:$0xf]
        %v7135 = vld [vmem:[%s7113 + $0x7c] sm:$0xf]
        %v7136 = vld [vmem:[%s7113 + $0x84] sm:$0xf]
        %v7137 = vld [vmem:[%s7113 + $0x88] sm:$0xf]
        %v7138 = vld [vmem:[%s7113 + $0x90] sm:$0xf]
        %v7139 = vld [vmem:[%s7113 + $0x94] sm:$0xf]
        %v7140 = vld [vmem:[%s7113 + $0x9c] sm:$0xf]
        %v7141 = vld [vmem:[%s7113 + $0xa0] sm:$0xf]
        %v7142 = vld [vmem:[%s7113 + $0xa8] sm:$0xf]
        %v7143 = vld [vmem:[%s7113 + $0xac] sm:$0xf]
        %v7144 = vld [vmem:[%s7113 + $0xb4] sm:$0xf]
        %v7145 = vld [vmem:[%s7113 + $0xb8] sm:$0xf]
        %v7178 = vunpack.c.l.b16 %v7114
        %v7179 = vunpack.c.l.b16 %v7115
        %v7180 = vunpack.c.l.b16 %v7116
        %v7181 = vunpack.c.l.b16 %v7117
        %v7182 = vunpack.c.l.b16 %v7118
        %v7183 = vunpack.c.l.b16 %v7119
        %v7184 = vunpack.c.l.b16 %v7120
        %v7185 = vunpack.c.l.b16 %v7121
        %v7186 = vunpack.c.l.b16 %v7122
        %v7187 = vunpack.c.l.b16 %v7123
        %v7188 = vunpack.c.l.b16 %v7124
        %v7189 = vunpack.c.l.b16 %v7125
        %v7190 = vunpack.c.l.b16 %v7126
        %v7191 = vunpack.c.l.b16 %v7127
        %v7192 = vunpack.c.l.b16 %v7128
        %v7193 = vunpack.c.l.b16 %v7129
        %v7194 = vunpack.c.l.b16 %v7130
        %v7195 = vunpack.c.l.b16 %v7131
        %v7196 = vunpack.c.l.b16 %v7132
        %v7197 = vunpack.c.l.b16 %v7133
        %v7198 = vunpack.c.l.b16 %v7134
        %v7199 = vunpack.c.l.b16 %v7135
        %v7200 = vunpack.c.l.b16 %v7136
        %v7201 = vunpack.c.l.b16 %v7137
        %v7202 = vunpack.c.l.b16 %v7138
        %v7203 = vunpack.c.l.b16 %v7139
        %v7204 = vunpack.c.l.b16 %v7140
        %v7205 = vunpack.c.l.b16 %v7141
        %v7206 = vunpack.c.l.b16 %v7142
        %v7207 = vunpack.c.l.b16 %v7143
        %v7208 = vunpack.c.l.b16 %v7144
        %v7209 = vunpack.c.l.b16 %v7145
        %v7210 = vpack.c.b16 %v7179, %v7178
        %v7211 = vpack.c.b16 %v7181, %v7180
        %v7212 = vpack.c.b16 %v7183, %v7182
        %v7213 = vpack.c.b16 %v7185, %v7184
        %v7214 = vpack.c.b16 %v7187, %v7186
        %v7215 = vpack.c.b16 %v7189, %v7188
        %v7216 = vpack.c.b16 %v7191, %v7190
        %v7217 = vpack.c.b16 %v7193, %v7192
        %v7218 = vpack.c.b16 %v7195, %v7194
        %v7219 = vpack.c.b16 %v7197, %v7196
        %v7220 = vpack.c.b16 %v7199, %v7198
        %v7221 = vpack.c.b16 %v7201, %v7200
        %v7222 = vpack.c.b16 %v7203, %v7202
        %v7223 = vpack.c.b16 %v7205, %v7204
        %v7224 = vpack.c.b16 %v7207, %v7206
        %v7225 = vpack.c.b16 %v7209, %v7208
        %7226 = vrot.lane.b32.xlu0 %v7210, 64
        %v7227 = vpop.permute.xlu0 %7226
        %7228 = vrot.lane.b32.xlu0 %v7211, 64
        %v7229 = vpop.permute.xlu0 %7228
        %7230 = vrot.lane.b32.xlu0 %v7212, 64
        %v7231 = vpop.permute.xlu0 %7230
        %7232 = vrot.lane.b32.xlu0 %v7213, 64
        %v7233 = vpop.permute.xlu0 %7232
        %7234 = vrot.lane.b32.xlu0 %v7214, 64
        %v7235 = vpop.permute.xlu0 %7234
        %7236 = vrot.lane.b32.xlu0 %v7215, 64
        %v7237 = vpop.permute.xlu0 %7236
        %7238 = vrot.lane.b32.xlu0 %v7216, 64
        %v7239 = vpop.permute.xlu0 %7238
        %7240 = vrot.lane.b32.xlu0 %v7217, 64
        %v7241 = vpop.permute.xlu0 %7240
        %7242 = vrot.lane.b32.xlu0 %v7218, 64
        %v7243 = vpop.permute.xlu0 %7242
        %7244 = vrot.lane.b32.xlu0 %v7219, 64
        %v7245 = vpop.permute.xlu0 %7244
        %7246 = vrot.lane.b32.xlu0 %v7220, 64
        %v7247 = vpop.permute.xlu0 %7246
        %7248 = vrot.lane.b32.xlu0 %v7221, 64
        %v7249 = vpop.permute.xlu0 %7248
        %7250 = vrot.lane.b32.xlu0 %v7222, 64
        %v7251 = vpop.permute.xlu0 %7250
        %7252 = vrot.lane.b32.xlu0 %v7223, 64
        %v7253 = vpop.permute.xlu0 %7252
        %7254 = vrot.lane.b32.xlu0 %v7224, 64
        %v7255 = vpop.permute.xlu0 %7254
        %7256 = vrot.lane.b32.xlu0 %v7225, 64
        %v7257 = vpop.permute.xlu0 %7256
        %7274 = vst.msk [vmem:[#allocation5 + $0x8] sm:$0xff] %vm1807, %v7227
        %7275 = vst.msk [vmem:[#allocation5 + $0x20] sm:$0xff] %vm1807, %v7229
        %7276 = vst.msk [vmem:[#allocation5 + $0x38] sm:$0xff] %vm1807, %v7231
        %7277 = vst.msk [vmem:[#allocation5 + $0x50] sm:$0xff] %vm1807, %v7233
        %7278 = vst.msk [vmem:[#allocation5 + $0x68] sm:$0xff] %vm1807, %v7235
        %7279 = vst.msk [vmem:[#allocation5 + $0x80] sm:$0xff] %vm1807, %v7237
        %7280 = vst.msk [vmem:[#allocation5 + $0x98] sm:$0xff] %vm1807, %v7239
        %7281 = vst.msk [vmem:[#allocation5 + $0xb0] sm:$0xff] %vm1807, %v7241
        %7282 = vst.msk [vmem:[#allocation5 + $0xc8] sm:$0xff] %vm1807, %v7243
        %7283 = vst.msk [vmem:[#allocation5 + $0xe0] sm:$0xff] %vm1807, %v7245
        %7284 = vst.msk [vmem:[#allocation5 + $0xf8] sm:$0xff] %vm1807, %v7247
        %7285 = vst.msk [vmem:[#allocation5 + $0x110] sm:$0xff] %vm1807, %v7249
        %7286 = vst.msk [vmem:[#allocation5 + $0x128] sm:$0xff] %vm1807, %v7251
        %7287 = vst.msk [vmem:[#allocation5 + $0x140] sm:$0xff] %vm1807, %v7253
        %7288 = vst.msk [vmem:[#allocation5 + $0x158] sm:$0xff] %vm1807, %v7255
        %7289 = vst.msk [vmem:[#allocation5 + $0x170] sm:$0xff] %vm1807, %v7257
        %v7290 = vld [vmem:[%s7113] sm:$0xf]
        %v7291 = vld [vmem:[%s7113 + $0x4] sm:$0xf]
        %v7292 = vld [vmem:[%s7113 + $0x8] sm:$0x1]
        %v7293 = vld [vmem:[%s7113 + $0xc] sm:$0xf]
        %v7294 = vld [vmem:[%s7113 + $0x10] sm:$0xf]
        %v7295 = vld [vmem:[%s7113 + $0x14] sm:$0x1]
        %v7296 = vld [vmem:[%s7113 + $0x18] sm:$0xf]
        %v7297 = vld [vmem:[%s7113 + $0x1c] sm:$0xf]
        %v7298 = vld [vmem:[%s7113 + $0x20] sm:$0x1]
        %v7299 = vld [vmem:[%s7113 + $0x24] sm:$0xf]
        %v7300 = vld [vmem:[%s7113 + $0x28] sm:$0xf]
        %v7301 = vld [vmem:[%s7113 + $0x2c] sm:$0x1]
        %v7302 = vld [vmem:[%s7113 + $0x30] sm:$0xf]
        %v7303 = vld [vmem:[%s7113 + $0x34] sm:$0xf]
        %v7304 = vld [vmem:[%s7113 + $0x38] sm:$0x1]
        %v7305 = vld [vmem:[%s7113 + $0x3c] sm:$0xf]
        %v7306 = vld [vmem:[%s7113 + $0x40] sm:$0xf]
        %v7307 = vld [vmem:[%s7113 + $0x44] sm:$0x1]
        %v7308 = vld [vmem:[%s7113 + $0x48] sm:$0xf]
        %v7309 = vld [vmem:[%s7113 + $0x4c] sm:$0xf]
        %v7310 = vld [vmem:[%s7113 + $0x50] sm:$0x1]
        %v7311 = vld [vmem:[%s7113 + $0x54] sm:$0xf]
        %v7312 = vld [vmem:[%s7113 + $0x58] sm:$0xf]
        %v7313 = vld [vmem:[%s7113 + $0x5c] sm:$0x1]
        %v7314 = vld [vmem:[%s7113 + $0x60] sm:$0xf]
        %v7315 = vld [vmem:[%s7113 + $0x64] sm:$0xf]
        %v7316 = vld [vmem:[%s7113 + $0x68] sm:$0x1]
        %v7317 = vld [vmem:[%s7113 + $0x6c] sm:$0xf]
        %v7318 = vld [vmem:[%s7113 + $0x70] sm:$0xf]
        %v7319 = vld [vmem:[%s7113 + $0x74] sm:$0x1]
        %v7320 = vld [vmem:[%s7113 + $0x78] sm:$0xf]
        %v7321 = vld [vmem:[%s7113 + $0x7c] sm:$0xf]
        %v7322 = vld [vmem:[%s7113 + $0x80] sm:$0x1]
        %v7323 = vld [vmem:[%s7113 + $0x84] sm:$0xf]
        %v7324 = vld [vmem:[%s7113 + $0x88] sm:$0xf]
        %v7325 = vld [vmem:[%s7113 + $0x8c] sm:$0x1]
        %v7326 = vld [vmem:[%s7113 + $0x90] sm:$0xf]
        %v7327 = vld [vmem:[%s7113 + $0x94] sm:$0xf]
        %v7328 = vld [vmem:[%s7113 + $0x98] sm:$0x1]
        %v7329 = vld [vmem:[%s7113 + $0x9c] sm:$0xf]
        %v7330 = vld [vmem:[%s7113 + $0xa0] sm:$0xf]
        %v7331 = vld [vmem:[%s7113 + $0xa4] sm:$0x1]
        %v7332 = vld [vmem:[%s7113 + $0xa8] sm:$0xf]
        %v7333 = vld [vmem:[%s7113 + $0xac] sm:$0xf]
        %v7334 = vld [vmem:[%s7113 + $0xb0] sm:$0x1]
        %v7335 = vld [vmem:[%s7113 + $0xb4] sm:$0xf]
        %v7336 = vld [vmem:[%s7113 + $0xb8] sm:$0xf]
        %v7337 = vld [vmem:[%s7113 + $0xbc] sm:$0x1]
        %v7339 = vshrl.u32 %v7290, 16
        %v7341 = vrot.slane %v7339, 4
        %v7342 = vshll.u32 %v7290, 16
        %v7344 = vrot.slane %v7342, 5
        %v7345 = vor.u32 %v7341, %v7344
        %v7346 = vrot.slane %v7345, 4
        %v7348 = vshll.u32 %v7291, 16
        %v7350 = vrot.slane %v7348, 5
        %v7351 = vsel %vm1002, %v7346, %v7350
        %v7352 = vshrl.u32 %v7291, 16
        %v7354 = vrot.slane %v7352, 4
        %v7355 = vor.u32 %v7354, %v7350
        %v7356 = vrot.slane %v7355, 4
        %v7358 = vshll.u32 %v7292, 16
        %v7360 = vrot.slane %v7358, 5
        %v7361 = vsel %vm1002, %v7356, %v7360
        %v7363 = vshrl.u32 %v7293, 16
        %v7365 = vrot.slane %v7363, 4
        %v7366 = vshll.u32 %v7293, 16
        %v7368 = vrot.slane %v7366, 5
        %v7369 = vor.u32 %v7365, %v7368
        %v7370 = vrot.slane %v7369, 4
        %v7372 = vshll.u32 %v7294, 16
        %v7374 = vrot.slane %v7372, 5
        %v7375 = vsel %vm1002, %v7370, %v7374
        %v7376 = vshrl.u32 %v7294, 16
        %v7378 = vrot.slane %v7376, 4
        %v7379 = vor.u32 %v7378, %v7374
        %v7380 = vrot.slane %v7379, 4
        %v7382 = vshll.u32 %v7295, 16
        %v7384 = vrot.slane %v7382, 5
        %v7385 = vsel %vm1002, %v7380, %v7384
        %v7387 = vshrl.u32 %v7296, 16
        %v7389 = vrot.slane %v7387, 4
        %v7390 = vshll.u32 %v7296, 16
        %v7392 = vrot.slane %v7390, 5
        %v7393 = vor.u32 %v7389, %v7392
        %v7394 = vrot.slane %v7393, 4
        %v7396 = vshll.u32 %v7297, 16
        %v7398 = vrot.slane %v7396, 5
        %v7399 = vsel %vm1002, %v7394, %v7398
        %v7400 = vshrl.u32 %v7297, 16
        %v7402 = vrot.slane %v7400, 4
        %v7403 = vor.u32 %v7402, %v7398
        %v7404 = vrot.slane %v7403, 4
        %v7406 = vshll.u32 %v7298, 16
        %v7408 = vrot.slane %v7406, 5
        %v7409 = vsel %vm1002, %v7404, %v7408
        %v7411 = vshrl.u32 %v7299, 16
        %v7413 = vrot.slane %v7411, 4
        %v7414 = vshll.u32 %v7299, 16
        %v7416 = vrot.slane %v7414, 5
        %v7417 = vor.u32 %v7413, %v7416
        %v7418 = vrot.slane %v7417, 4
        %v7420 = vshll.u32 %v7300, 16
        %v7422 = vrot.slane %v7420, 5
        %v7423 = vsel %vm1002, %v7418, %v7422
        %v7424 = vshrl.u32 %v7300, 16
        %v7426 = vrot.slane %v7424, 4
        %v7427 = vor.u32 %v7426, %v7422
        %v7428 = vrot.slane %v7427, 4
        %v7430 = vshll.u32 %v7301, 16
        %v7432 = vrot.slane %v7430, 5
        %v7433 = vsel %vm1002, %v7428, %v7432
        %v7435 = vshrl.u32 %v7302, 16
        %v7437 = vrot.slane %v7435, 4
        %v7438 = vshll.u32 %v7302, 16
        %v7440 = vrot.slane %v7438, 5
        %v7441 = vor.u32 %v7437, %v7440
        %v7442 = vrot.slane %v7441, 4
        %v7444 = vshll.u32 %v7303, 16
        %v7446 = vrot.slane %v7444, 5
        %v7447 = vsel %vm1002, %v7442, %v7446
        %v7448 = vshrl.u32 %v7303, 16
        %v7450 = vrot.slane %v7448, 4
        %v7451 = vor.u32 %v7450, %v7446
        %v7452 = vrot.slane %v7451, 4
        %v7454 = vshll.u32 %v7304, 16
        %v7456 = vrot.slane %v7454, 5
        %v7457 = vsel %vm1002, %v7452, %v7456
        %v7459 = vshrl.u32 %v7305, 16
        %v7461 = vrot.slane %v7459, 4
        %v7462 = vshll.u32 %v7305, 16
        %v7464 = vrot.slane %v7462, 5
        %v7465 = vor.u32 %v7461, %v7464
        %v7466 = vrot.slane %v7465, 4
        %v7468 = vshll.u32 %v7306, 16
        %v7470 = vrot.slane %v7468, 5
        %v7471 = vsel %vm1002, %v7466, %v7470
        %v7472 = vshrl.u32 %v7306, 16
        %v7474 = vrot.slane %v7472, 4
        %v7475 = vor.u32 %v7474, %v7470
        %v7476 = vrot.slane %v7475, 4
        %v7478 = vshll.u32 %v7307, 16
        %v7480 = vrot.slane %v7478, 5
        %v7481 = vsel %vm1002, %v7476, %v7480
        %v7483 = vshrl.u32 %v7308, 16
        %v7485 = vrot.slane %v7483, 4
        %v7486 = vshll.u32 %v7308, 16
        %v7488 = vrot.slane %v7486, 5
        %v7489 = vor.u32 %v7485, %v7488
        %v7490 = vrot.slane %v7489, 4
        %v7492 = vshll.u32 %v7309, 16
        %v7494 = vrot.slane %v7492, 5
        %v7495 = vsel %vm1002, %v7490, %v7494
        %v7496 = vshrl.u32 %v7309, 16
        %v7498 = vrot.slane %v7496, 4
        %v7499 = vor.u32 %v7498, %v7494
        %v7500 = vrot.slane %v7499, 4
        %v7502 = vshll.u32 %v7310, 16
        %v7504 = vrot.slane %v7502, 5
        %v7505 = vsel %vm1002, %v7500, %v7504
        %v7507 = vshrl.u32 %v7311, 16
        %v7509 = vrot.slane %v7507, 4
        %v7510 = vshll.u32 %v7311, 16
        %v7512 = vrot.slane %v7510, 5
        %v7513 = vor.u32 %v7509, %v7512
        %v7514 = vrot.slane %v7513, 4
        %v7516 = vshll.u32 %v7312, 16
        %v7518 = vrot.slane %v7516, 5
        %v7519 = vsel %vm1002, %v7514, %v7518
        %v7520 = vshrl.u32 %v7312, 16
        %v7522 = vrot.slane %v7520, 4
        %v7523 = vor.u32 %v7522, %v7518
        %v7524 = vrot.slane %v7523, 4
        %v7526 = vshll.u32 %v7313, 16
        %v7528 = vrot.slane %v7526, 5
        %v7529 = vsel %vm1002, %v7524, %v7528
        %v7531 = vshrl.u32 %v7314, 16
        %v7533 = vrot.slane %v7531, 4
        %v7534 = vshll.u32 %v7314, 16
        %v7536 = vrot.slane %v7534, 5
        %v7537 = vor.u32 %v7533, %v7536
        %v7538 = vrot.slane %v7537, 4
        %v7540 = vshll.u32 %v7315, 16
        %v7542 = vrot.slane %v7540, 5
        %v7543 = vsel %vm1002, %v7538, %v7542
        %v7544 = vshrl.u32 %v7315, 16
        %v7546 = vrot.slane %v7544, 4
        %v7547 = vor.u32 %v7546, %v7542
        %v7548 = vrot.slane %v7547, 4
        %v7550 = vshll.u32 %v7316, 16
        %v7552 = vrot.slane %v7550, 5
        %v7553 = vsel %vm1002, %v7548, %v7552
        %v7555 = vshrl.u32 %v7317, 16
        %v7557 = vrot.slane %v7555, 4
        %v7558 = vshll.u32 %v7317, 16
        %v7560 = vrot.slane %v7558, 5
        %v7561 = vor.u32 %v7557, %v7560
        %v7562 = vrot.slane %v7561, 4
        %v7564 = vshll.u32 %v7318, 16
        %v7566 = vrot.slane %v7564, 5
        %v7567 = vsel %vm1002, %v7562, %v7566
        %v7568 = vshrl.u32 %v7318, 16
        %v7570 = vrot.slane %v7568, 4
        %v7571 = vor.u32 %v7570, %v7566
        %v7572 = vrot.slane %v7571, 4
        %v7574 = vshll.u32 %v7319, 16
        %v7576 = vrot.slane %v7574, 5
        %v7577 = vsel %vm1002, %v7572, %v7576
        %v7579 = vshrl.u32 %v7320, 16
        %v7581 = vrot.slane %v7579, 4
        %v7582 = vshll.u32 %v7320, 16
        %v7584 = vrot.slane %v7582, 5
        %v7585 = vor.u32 %v7581, %v7584
        %v7586 = vrot.slane %v7585, 4
        %v7588 = vshll.u32 %v7321, 16
        %v7590 = vrot.slane %v7588, 5
        %v7591 = vsel %vm1002, %v7586, %v7590
        %v7592 = vshrl.u32 %v7321, 16
        %v7594 = vrot.slane %v7592, 4
        %v7595 = vor.u32 %v7594, %v7590
        %v7596 = vrot.slane %v7595, 4
        %v7598 = vshll.u32 %v7322, 16
        %v7600 = vrot.slane %v7598, 5
        %v7601 = vsel %vm1002, %v7596, %v7600
        %v7603 = vshrl.u32 %v7323, 16
        %v7605 = vrot.slane %v7603, 4
        %v7606 = vshll.u32 %v7323, 16
        %v7608 = vrot.slane %v7606, 5
        %v7609 = vor.u32 %v7605, %v7608
        %v7610 = vrot.slane %v7609, 4
        %v7612 = vshll.u32 %v7324, 16
        %v7614 = vrot.slane %v7612, 5
        %v7615 = vsel %vm1002, %v7610, %v7614
        %v7616 = vshrl.u32 %v7324, 16
        %v7618 = vrot.slane %v7616, 4
        %v7619 = vor.u32 %v7618, %v7614
        %v7620 = vrot.slane %v7619, 4
        %v7622 = vshll.u32 %v7325, 16
        %v7624 = vrot.slane %v7622, 5
        %v7625 = vsel %vm1002, %v7620, %v7624
        %v7627 = vshrl.u32 %v7326, 16
        %v7629 = vrot.slane %v7627, 4
        %v7630 = vshll.u32 %v7326, 16
        %v7632 = vrot.slane %v7630, 5
        %v7633 = vor.u32 %v7629, %v7632
        %v7634 = vrot.slane %v7633, 4
        %v7636 = vshll.u32 %v7327, 16
        %v7638 = vrot.slane %v7636, 5
        %v7639 = vsel %vm1002, %v7634, %v7638
        %v7640 = vshrl.u32 %v7327, 16
        %v7642 = vrot.slane %v7640, 4
        %v7643 = vor.u32 %v7642, %v7638
        %v7644 = vrot.slane %v7643, 4
        %v7646 = vshll.u32 %v7328, 16
        %v7648 = vrot.slane %v7646, 5
        %v7649 = vsel %vm1002, %v7644, %v7648
        %v7651 = vshrl.u32 %v7329, 16
        %v7653 = vrot.slane %v7651, 4
        %v7654 = vshll.u32 %v7329, 16
        %v7656 = vrot.slane %v7654, 5
        %v7657 = vor.u32 %v7653, %v7656
        %v7658 = vrot.slane %v7657, 4
        %v7660 = vshll.u32 %v7330, 16
        %v7662 = vrot.slane %v7660, 5
        %v7663 = vsel %vm1002, %v7658, %v7662
        %v7664 = vshrl.u32 %v7330, 16
        %v7666 = vrot.slane %v7664, 4
        %v7667 = vor.u32 %v7666, %v7662
        %v7668 = vrot.slane %v7667, 4
        %v7670 = vshll.u32 %v7331, 16
        %v7672 = vrot.slane %v7670, 5
        %v7673 = vsel %vm1002, %v7668, %v7672
        %v7675 = vshrl.u32 %v7332, 16
        %v7677 = vrot.slane %v7675, 4
        %v7678 = vshll.u32 %v7332, 16
        %v7680 = vrot.slane %v7678, 5
        %v7681 = vor.u32 %v7677, %v7680
        %v7682 = vrot.slane %v7681, 4
        %v7684 = vshll.u32 %v7333, 16
        %v7686 = vrot.slane %v7684, 5
        %v7687 = vsel %vm1002, %v7682, %v7686
        %v7688 = vshrl.u32 %v7333, 16
        %v7690 = vrot.slane %v7688, 4
        %v7691 = vor.u32 %v7690, %v7686
        %v7692 = vrot.slane %v7691, 4
        %v7694 = vshll.u32 %v7334, 16
        %v7696 = vrot.slane %v7694, 5
        %v7697 = vsel %vm1002, %v7692, %v7696
        %v7699 = vshrl.u32 %v7335, 16
        %v7701 = vrot.slane %v7699, 4
        %v7702 = vshll.u32 %v7335, 16
        %v7704 = vrot.slane %v7702, 5
        %v7705 = vor.u32 %v7701, %v7704
        %v7706 = vrot.slane %v7705, 4
        %v7708 = vshll.u32 %v7336, 16
        %v7710 = vrot.slane %v7708, 5
        %v7711 = vsel %vm1002, %v7706, %v7710
        %v7712 = vshrl.u32 %v7336, 16
        %v7714 = vrot.slane %v7712, 4
        %v7715 = vor.u32 %v7714, %v7710
        %v7716 = vrot.slane %v7715, 4
        %v7718 = vshll.u32 %v7337, 16
        %v7720 = vrot.slane %v7718, 5
        %v7721 = vsel %vm1002, %v7716, %v7720
        %v7722 = vunpack.c.l.b16 %v7351
        %v7723 = vunpack.c.l.b16 %v7361
        %v7724 = vunpack.c.l.b16 %v7375
        %v7725 = vunpack.c.l.b16 %v7385
        %v7726 = vunpack.c.l.b16 %v7399
        %v7727 = vunpack.c.l.b16 %v7409
        %v7728 = vunpack.c.l.b16 %v7423
        %v7729 = vunpack.c.l.b16 %v7433
        %v7730 = vunpack.c.l.b16 %v7447
        %v7731 = vunpack.c.l.b16 %v7457
        %v7732 = vunpack.c.l.b16 %v7471
        %v7733 = vunpack.c.l.b16 %v7481
        %v7734 = vunpack.c.l.b16 %v7495
        %v7735 = vunpack.c.l.b16 %v7505
        %v7736 = vunpack.c.l.b16 %v7519
        %v7737 = vunpack.c.l.b16 %v7529
        %v7738 = vunpack.c.l.b16 %v7543
        %v7739 = vunpack.c.l.b16 %v7553
        %v7740 = vunpack.c.l.b16 %v7567
        %v7741 = vunpack.c.l.b16 %v7577
        %v7742 = vunpack.c.l.b16 %v7591
        %v7743 = vunpack.c.l.b16 %v7601
        %v7744 = vunpack.c.l.b16 %v7615
        %v7745 = vunpack.c.l.b16 %v7625
        %v7746 = vunpack.c.l.b16 %v7639
        %v7747 = vunpack.c.l.b16 %v7649
        %v7748 = vunpack.c.l.b16 %v7663
        %v7749 = vunpack.c.l.b16 %v7673
        %v7750 = vunpack.c.l.b16 %v7687
        %v7751 = vunpack.c.l.b16 %v7697
        %v7752 = vunpack.c.l.b16 %v7711
        %v7753 = vunpack.c.l.b16 %v7721
        %v7754 = vpack.c.b16 %v7723, %v7722
        %v7755 = vpack.c.b16 %v7725, %v7724
        %v7756 = vpack.c.b16 %v7727, %v7726
        %v7757 = vpack.c.b16 %v7729, %v7728
        %v7758 = vpack.c.b16 %v7731, %v7730
        %v7759 = vpack.c.b16 %v7733, %v7732
        %v7760 = vpack.c.b16 %v7735, %v7734
        %v7761 = vpack.c.b16 %v7737, %v7736
        %v7762 = vpack.c.b16 %v7739, %v7738
        %v7763 = vpack.c.b16 %v7741, %v7740
        %v7764 = vpack.c.b16 %v7743, %v7742
        %v7765 = vpack.c.b16 %v7745, %v7744
        %v7766 = vpack.c.b16 %v7747, %v7746
        %v7767 = vpack.c.b16 %v7749, %v7748
        %v7768 = vpack.c.b16 %v7751, %v7750
        %v7769 = vpack.c.b16 %v7753, %v7752
        %7770 = vrot.lane.b32.xlu0 %v7754, 96
        %v7771 = vpop.permute.xlu0 %7770
        %7772 = vrot.lane.b32.xlu0 %v7755, 96
        %v7773 = vpop.permute.xlu0 %7772
        %7774 = vrot.lane.b32.xlu0 %v7756, 96
        %v7775 = vpop.permute.xlu0 %7774
        %7776 = vrot.lane.b32.xlu0 %v7757, 96
        %v7777 = vpop.permute.xlu0 %7776
        %7778 = vrot.lane.b32.xlu0 %v7758, 96
        %v7779 = vpop.permute.xlu0 %7778
        %7780 = vrot.lane.b32.xlu0 %v7759, 96
        %v7781 = vpop.permute.xlu0 %7780
        %7782 = vrot.lane.b32.xlu0 %v7760, 96
        %v7783 = vpop.permute.xlu0 %7782
        %7784 = vrot.lane.b32.xlu0 %v7761, 96
        %v7785 = vpop.permute.xlu0 %7784
        %7786 = vrot.lane.b32.xlu0 %v7762, 96
        %v7787 = vpop.permute.xlu0 %7786
        %7788 = vrot.lane.b32.xlu0 %v7763, 96
        %v7789 = vpop.permute.xlu0 %7788
        %7790 = vrot.lane.b32.xlu0 %v7764, 96
        %v7791 = vpop.permute.xlu0 %7790
        %7792 = vrot.lane.b32.xlu0 %v7765, 96
        %v7793 = vpop.permute.xlu0 %7792
        %7794 = vrot.lane.b32.xlu0 %v7766, 96
        %v7795 = vpop.permute.xlu0 %7794
        %7796 = vrot.lane.b32.xlu0 %v7767, 96
        %v7797 = vpop.permute.xlu0 %7796
        %7798 = vrot.lane.b32.xlu0 %v7768, 96
        %v7799 = vpop.permute.xlu0 %7798
        %7800 = vrot.lane.b32.xlu0 %v7769, 96
        %v7801 = vpop.permute.xlu0 %7800
        %7818 = vst.msk [vmem:[#allocation5 + $0x8] sm:$0xff] %vm1984, %v7771
        %7819 = vst.msk [vmem:[#allocation5 + $0x20] sm:$0xff] %vm1984, %v7773
        %7820 = vst.msk [vmem:[#allocation5 + $0x38] sm:$0xff] %vm1984, %v7775
        %7821 = vst.msk [vmem:[#allocation5 + $0x50] sm:$0xff] %vm1984, %v7777
        %7822 = vst.msk [vmem:[#allocation5 + $0x68] sm:$0xff] %vm1984, %v7779
        %7823 = vst.msk [vmem:[#allocation5 + $0x80] sm:$0xff] %vm1984, %v7781
        %7824 = vst.msk [vmem:[#allocation5 + $0x98] sm:$0xff] %vm1984, %v7783
        %7825 = vst.msk [vmem:[#allocation5 + $0xb0] sm:$0xff] %vm1984, %v7785
        %7826 = vst.msk [vmem:[#allocation5 + $0xc8] sm:$0xff] %vm1984, %v7787
        %7827 = vst.msk [vmem:[#allocation5 + $0xe0] sm:$0xff] %vm1984, %v7789
        %7828 = vst.msk [vmem:[#allocation5 + $0xf8] sm:$0xff] %vm1984, %v7791
        %7829 = vst.msk [vmem:[#allocation5 + $0x110] sm:$0xff] %vm1984, %v7793
        %7830 = vst.msk [vmem:[#allocation5 + $0x128] sm:$0xff] %vm1984, %v7795
        %7831 = vst.msk [vmem:[#allocation5 + $0x140] sm:$0xff] %vm1984, %v7797
        %7832 = vst.msk [vmem:[#allocation5 + $0x158] sm:$0xff] %vm1984, %v7799
        %7833 = vst.msk [vmem:[#allocation5 + $0x170] sm:$0xff] %vm1984, %v7801
        %v7834 = vld [vmem:[%s7113] sm:$0xe]
        %v7835 = vld [vmem:[%s7113 + $0x4] sm:$0xf]
        %v7836 = vld [vmem:[%s7113 + $0x8] sm:$0x1]
        %v7837 = vld [vmem:[%s7113 + $0xc] sm:$0xe]
        %v7838 = vld [vmem:[%s7113 + $0x10] sm:$0xf]
        %v7839 = vld [vmem:[%s7113 + $0x14] sm:$0x1]
        %v7840 = vld [vmem:[%s7113 + $0x18] sm:$0xe]
        %v7841 = vld [vmem:[%s7113 + $0x1c] sm:$0xf]
        %v7842 = vld [vmem:[%s7113 + $0x20] sm:$0x1]
        %v7843 = vld [vmem:[%s7113 + $0x24] sm:$0xe]
        %v7844 = vld [vmem:[%s7113 + $0x28] sm:$0xf]
        %v7845 = vld [vmem:[%s7113 + $0x2c] sm:$0x1]
        %v7846 = vld [vmem:[%s7113 + $0x30] sm:$0xe]
        %v7847 = vld [vmem:[%s7113 + $0x34] sm:$0xf]
        %v7848 = vld [vmem:[%s7113 + $0x38] sm:$0x1]
        %v7849 = vld [vmem:[%s7113 + $0x3c] sm:$0xe]
        %v7850 = vld [vmem:[%s7113 + $0x40] sm:$0xf]
        %v7851 = vld [vmem:[%s7113 + $0x44] sm:$0x1]
        %v7852 = vld [vmem:[%s7113 + $0x48] sm:$0xe]
        %v7853 = vld [vmem:[%s7113 + $0x4c] sm:$0xf]
        %v7854 = vld [vmem:[%s7113 + $0x50] sm:$0x1]
        %v7855 = vld [vmem:[%s7113 + $0x54] sm:$0xe]
        %v7856 = vld [vmem:[%s7113 + $0x58] sm:$0xf]
        %v7857 = vld [vmem:[%s7113 + $0x5c] sm:$0x1]
        %v7858 = vld [vmem:[%s7113 + $0x60] sm:$0xe]
        %v7859 = vld [vmem:[%s7113 + $0x64] sm:$0xf]
        %v7860 = vld [vmem:[%s7113 + $0x68] sm:$0x1]
        %v7861 = vld [vmem:[%s7113 + $0x6c] sm:$0xe]
        %v7862 = vld [vmem:[%s7113 + $0x70] sm:$0xf]
        %v7863 = vld [vmem:[%s7113 + $0x74] sm:$0x1]
        %v7864 = vld [vmem:[%s7113 + $0x78] sm:$0xe]
        %v7865 = vld [vmem:[%s7113 + $0x7c] sm:$0xf]
        %v7866 = vld [vmem:[%s7113 + $0x80] sm:$0x1]
        %v7867 = vld [vmem:[%s7113 + $0x84] sm:$0xe]
        %v7868 = vld [vmem:[%s7113 + $0x88] sm:$0xf]
        %v7869 = vld [vmem:[%s7113 + $0x8c] sm:$0x1]
        %v7870 = vld [vmem:[%s7113 + $0x90] sm:$0xe]
        %v7871 = vld [vmem:[%s7113 + $0x94] sm:$0xf]
        %v7872 = vld [vmem:[%s7113 + $0x98] sm:$0x1]
        %v7873 = vld [vmem:[%s7113 + $0x9c] sm:$0xe]
        %v7874 = vld [vmem:[%s7113 + $0xa0] sm:$0xf]
        %v7875 = vld [vmem:[%s7113 + $0xa4] sm:$0x1]
        %v7876 = vld [vmem:[%s7113 + $0xa8] sm:$0xe]
        %v7877 = vld [vmem:[%s7113 + $0xac] sm:$0xf]
        %v7878 = vld [vmem:[%s7113 + $0xb0] sm:$0x1]
        %v7879 = vld [vmem:[%s7113 + $0xb4] sm:$0xe]
        %v7880 = vld [vmem:[%s7113 + $0xb8] sm:$0xf]
        %v7881 = vld [vmem:[%s7113 + $0xbc] sm:$0x1]
        %v7930 = vrot.slane %v7834, 5
        %v7931 = vrot.slane %v7930, 4
        %v7932 = vrot.slane %v7835, 5
        %v7933 = vsel %vm1598, %v7931, %v7932
        %v7934 = vrot.slane %v7932, 4
        %v7935 = vrot.slane %v7836, 5
        %v7936 = vsel %vm1598, %v7934, %v7935
        %v7937 = vrot.slane %v7837, 5
        %v7938 = vrot.slane %v7937, 4
        %v7939 = vrot.slane %v7838, 5
        %v7940 = vsel %vm1598, %v7938, %v7939
        %v7941 = vrot.slane %v7939, 4
        %v7942 = vrot.slane %v7839, 5
        %v7943 = vsel %vm1598, %v7941, %v7942
        %v7944 = vrot.slane %v7840, 5
        %v7945 = vrot.slane %v7944, 4
        %v7946 = vrot.slane %v7841, 5
        %v7947 = vsel %vm1598, %v7945, %v7946
        %v7948 = vrot.slane %v7946, 4
        %v7949 = vrot.slane %v7842, 5
        %v7950 = vsel %vm1598, %v7948, %v7949
        %v7951 = vrot.slane %v7843, 5
        %v7952 = vrot.slane %v7951, 4
        %v7953 = vrot.slane %v7844, 5
        %v7954 = vsel %vm1598, %v7952, %v7953
        %v7955 = vrot.slane %v7953, 4
        %v7956 = vrot.slane %v7845, 5
        %v7957 = vsel %vm1598, %v7955, %v7956
        %v7958 = vrot.slane %v7846, 5
        %v7959 = vrot.slane %v7958, 4
        %v7960 = vrot.slane %v7847, 5
        %v7961 = vsel %vm1598, %v7959, %v7960
        %v7962 = vrot.slane %v7960, 4
        %v7963 = vrot.slane %v7848, 5
        %v7964 = vsel %vm1598, %v7962, %v7963
        %v7965 = vrot.slane %v7849, 5
        %v7966 = vrot.slane %v7965, 4
        %v7967 = vrot.slane %v7850, 5
        %v7968 = vsel %vm1598, %v7966, %v7967
        %v7969 = vrot.slane %v7967, 4
        %v7970 = vrot.slane %v7851, 5
        %v7971 = vsel %vm1598, %v7969, %v7970
        %v7972 = vrot.slane %v7852, 5
        %v7973 = vrot.slane %v7972, 4
        %v7974 = vrot.slane %v7853, 5
        %v7975 = vsel %vm1598, %v7973, %v7974
        %v7976 = vrot.slane %v7974, 4
        %v7977 = vrot.slane %v7854, 5
        %v7978 = vsel %vm1598, %v7976, %v7977
        %v7979 = vrot.slane %v7855, 5
        %v7980 = vrot.slane %v7979, 4
        %v7981 = vrot.slane %v7856, 5
        %v7982 = vsel %vm1598, %v7980, %v7981
        %v7983 = vrot.slane %v7981, 4
        %v7984 = vrot.slane %v7857, 5
        %v7985 = vsel %vm1598, %v7983, %v7984
        %v7986 = vrot.slane %v7858, 5
        %v7987 = vrot.slane %v7986, 4
        %v7988 = vrot.slane %v7859, 5
        %v7989 = vsel %vm1598, %v7987, %v7988
        %v7990 = vrot.slane %v7988, 4
        %v7991 = vrot.slane %v7860, 5
        %v7992 = vsel %vm1598, %v7990, %v7991
        %v7993 = vrot.slane %v7861, 5
        %v7994 = vrot.slane %v7993, 4
        %v7995 = vrot.slane %v7862, 5
        %v7996 = vsel %vm1598, %v7994, %v7995
        %v7997 = vrot.slane %v7995, 4
        %v7998 = vrot.slane %v7863, 5
        %v7999 = vsel %vm1598, %v7997, %v7998
        %v8000 = vrot.slane %v7864, 5
        %v8001 = vrot.slane %v8000, 4
        %v8002 = vrot.slane %v7865, 5
        %v8003 = vsel %vm1598, %v8001, %v8002
        %v8004 = vrot.slane %v8002, 4
        %v8005 = vrot.slane %v7866, 5
        %v8006 = vsel %vm1598, %v8004, %v8005
        %v8007 = vrot.slane %v7867, 5
        %v8008 = vrot.slane %v8007, 4
        %v8009 = vrot.slane %v7868, 5
        %v8010 = vsel %vm1598, %v8008, %v8009
        %v8011 = vrot.slane %v8009, 4
        %v8012 = vrot.slane %v7869, 5
        %v8013 = vsel %vm1598, %v8011, %v8012
        %v8014 = vrot.slane %v7870, 5
        %v8015 = vrot.slane %v8014, 4
        %v8016 = vrot.slane %v7871, 5
        %v8017 = vsel %vm1598, %v8015, %v8016
        %v8018 = vrot.slane %v8016, 4
        %v8019 = vrot.slane %v7872, 5
        %v8020 = vsel %vm1598, %v8018, %v8019
        %v8021 = vrot.slane %v7873, 5
        %v8022 = vrot.slane %v8021, 4
        %v8023 = vrot.slane %v7874, 5
        %v8024 = vsel %vm1598, %v8022, %v8023
        %v8025 = vrot.slane %v8023, 4
        %v8026 = vrot.slane %v7875, 5
        %v8027 = vsel %vm1598, %v8025, %v8026
        %v8028 = vrot.slane %v7876, 5
        %v8029 = vrot.slane %v8028, 4
        %v8030 = vrot.slane %v7877, 5
        %v8031 = vsel %vm1598, %v8029, %v8030
        %v8032 = vrot.slane %v8030, 4
        %v8033 = vrot.slane %v7878, 5
        %v8034 = vsel %vm1598, %v8032, %v8033
        %v8035 = vrot.slane %v7879, 5
        %v8036 = vrot.slane %v8035, 4
        %v8037 = vrot.slane %v7880, 5
        %v8038 = vsel %vm1598, %v8036, %v8037
        %v8039 = vrot.slane %v8037, 4
        %v8040 = vrot.slane %v7881, 5
        %v8041 = vsel %vm1598, %v8039, %v8040
        %v8042 = vunpack.c.l.b16 %v7933
        %v8043 = vunpack.c.l.b16 %v7936
        %v8044 = vunpack.c.l.b16 %v7940
        %v8045 = vunpack.c.l.b16 %v7943
        %v8046 = vunpack.c.l.b16 %v7947
        %v8047 = vunpack.c.l.b16 %v7950
        %v8048 = vunpack.c.l.b16 %v7954
        %v8049 = vunpack.c.l.b16 %v7957
        %v8050 = vunpack.c.l.b16 %v7961
        %v8051 = vunpack.c.l.b16 %v7964
        %v8052 = vunpack.c.l.b16 %v7968
        %v8053 = vunpack.c.l.b16 %v7971
        %v8054 = vunpack.c.l.b16 %v7975
        %v8055 = vunpack.c.l.b16 %v7978
        %v8056 = vunpack.c.l.b16 %v7982
        %v8057 = vunpack.c.l.b16 %v7985
        %v8058 = vunpack.c.l.b16 %v7989
        %v8059 = vunpack.c.l.b16 %v7992
        %v8060 = vunpack.c.l.b16 %v7996
        %v8061 = vunpack.c.l.b16 %v7999
        %v8062 = vunpack.c.l.b16 %v8003
        %v8063 = vunpack.c.l.b16 %v8006
        %v8064 = vunpack.c.l.b16 %v8010
        %v8065 = vunpack.c.l.b16 %v8013
        %v8066 = vunpack.c.l.b16 %v8017
        %v8067 = vunpack.c.l.b16 %v8020
        %v8068 = vunpack.c.l.b16 %v8024
        %v8069 = vunpack.c.l.b16 %v8027
        %v8070 = vunpack.c.l.b16 %v8031
        %v8071 = vunpack.c.l.b16 %v8034
        %v8072 = vunpack.c.l.b16 %v8038
        %v8073 = vunpack.c.l.b16 %v8041
        %v8074 = vpack.c.b16 %v8043, %v8042
        %v8075 = vpack.c.b16 %v8045, %v8044
        %v8076 = vpack.c.b16 %v8047, %v8046
        %v8077 = vpack.c.b16 %v8049, %v8048
        %v8078 = vpack.c.b16 %v8051, %v8050
        %v8079 = vpack.c.b16 %v8053, %v8052
        %v8080 = vpack.c.b16 %v8055, %v8054
        %v8081 = vpack.c.b16 %v8057, %v8056
        %v8082 = vpack.c.b16 %v8059, %v8058
        %v8083 = vpack.c.b16 %v8061, %v8060
        %v8084 = vpack.c.b16 %v8063, %v8062
        %v8085 = vpack.c.b16 %v8065, %v8064
        %v8086 = vpack.c.b16 %v8067, %v8066
        %v8087 = vpack.c.b16 %v8069, %v8068
        %v8088 = vpack.c.b16 %v8071, %v8070
        %v8089 = vpack.c.b16 %v8073, %v8072
        %8106 = vst.msk [vmem:[#allocation5 + $0x10] sm:$0xff] %vm935, %v8074
        %8107 = vst.msk [vmem:[#allocation5 + $0x28] sm:$0xff] %vm935, %v8075
        %8108 = vst.msk [vmem:[#allocation5 + $0x40] sm:$0xff] %vm935, %v8076
        %8109 = vst.msk [vmem:[#allocation5 + $0x58] sm:$0xff] %vm935, %v8077
        %8110 = vst.msk [vmem:[#allocation5 + $0x70] sm:$0xff] %vm935, %v8078
        %8111 = vst.msk [vmem:[#allocation5 + $0x88] sm:$0xff] %vm935, %v8079
        %8112 = vst.msk [vmem:[#allocation5 + $0xa0] sm:$0xff] %vm935, %v8080
        %8113 = vst.msk [vmem:[#allocation5 + $0xb8] sm:$0xff] %vm935, %v8081
        %8114 = vst.msk [vmem:[#allocation5 + $0xd0] sm:$0xff] %vm935, %v8082
        %8115 = vst.msk [vmem:[#allocation5 + $0xe8] sm:$0xff] %vm935, %v8083
        %8116 = vst.msk [vmem:[#allocation5 + $0x100] sm:$0xff] %vm935, %v8084
        %8117 = vst.msk [vmem:[#allocation5 + $0x118] sm:$0xff] %vm935, %v8085
        %8118 = vst.msk [vmem:[#allocation5 + $0x130] sm:$0xff] %vm935, %v8086
        %8119 = vst.msk [vmem:[#allocation5 + $0x148] sm:$0xff] %vm935, %v8087
        %8120 = vst.msk [vmem:[#allocation5 + $0x160] sm:$0xff] %vm935, %v8088
        %8121 = vst.msk [vmem:[#allocation5 + $0x178] sm:$0xff] %vm935, %v8089
        %v8122 = vld [vmem:[#allocation5] sm:$0xff]
        %v8123 = vld [vmem:[#allocation5 + $0x8] sm:$0xff]
        %v8124 = vld [vmem:[#allocation5 + $0x10] sm:$0xff]
        %v8125 = vld [vmem:[#allocation5 + $0x18] sm:$0xff]
        %v8126 = vld [vmem:[#allocation5 + $0x20] sm:$0xff]
        %v8127 = vld [vmem:[#allocation5 + $0x28] sm:$0xff]
        %v8128 = vld [vmem:[#allocation5 + $0x30] sm:$0xff]
        %v8129 = vld [vmem:[#allocation5 + $0x38] sm:$0xff]
        %v8130 = vld [vmem:[#allocation5 + $0x40] sm:$0xff]
        %v8131 = vld [vmem:[#allocation5 + $0x48] sm:$0xff]
        %v8132 = vld [vmem:[#allocation5 + $0x50] sm:$0xff]
        %v8133 = vld [vmem:[#allocation5 + $0x58] sm:$0xff]
        %v8134 = vld [vmem:[#allocation5 + $0x60] sm:$0xff]
        %v8135 = vld [vmem:[#allocation5 + $0x68] sm:$0xff]
        %v8136 = vld [vmem:[#allocation5 + $0x70] sm:$0xff]
        %v8137 = vld [vmem:[#allocation5 + $0x78] sm:$0xff]
        %v8138 = vld [vmem:[#allocation5 + $0x80] sm:$0xff]
        %v8139 = vld [vmem:[#allocation5 + $0x88] sm:$0xff]
        %v8140 = vld [vmem:[#allocation5 + $0x90] sm:$0xff]
        %v8141 = vld [vmem:[#allocation5 + $0x98] sm:$0xff]
        %v8142 = vld [vmem:[#allocation5 + $0xa0] sm:$0xff]
        %v8143 = vld [vmem:[#allocation5 + $0xa8] sm:$0xff]
        %v8144 = vld [vmem:[#allocation5 + $0xb0] sm:$0xff]
        %v8145 = vld [vmem:[#allocation5 + $0xb8] sm:$0xff]
        %v8146 = vld [vmem:[#allocation5 + $0xc0] sm:$0xff]
        %v8147 = vld [vmem:[#allocation5 + $0xc8] sm:$0xff]
        %v8148 = vld [vmem:[#allocation5 + $0xd0] sm:$0xff]
        %v8149 = vld [vmem:[#allocation5 + $0xd8] sm:$0xff]
        %v8150 = vld [vmem:[#allocation5 + $0xe0] sm:$0xff]
        %v8151 = vld [vmem:[#allocation5 + $0xe8] sm:$0xff]
        %v8152 = vld [vmem:[#allocation5 + $0xf0] sm:$0xff]
        %v8153 = vld [vmem:[#allocation5 + $0xf8] sm:$0xff]
        %v8154 = vld [vmem:[#allocation5 + $0x100] sm:$0xff]
        %v8155 = vld [vmem:[#allocation5 + $0x108] sm:$0xff]
        %v8156 = vld [vmem:[#allocation5 + $0x110] sm:$0xff]
        %v8157 = vld [vmem:[#allocation5 + $0x118] sm:$0xff]
        %v8158 = vld [vmem:[#allocation5 + $0x120] sm:$0xff]
        %v8159 = vld [vmem:[#allocation5 + $0x128] sm:$0xff]
        %v8160 = vld [vmem:[#allocation5 + $0x130] sm:$0xff]
        %v8161 = vld [vmem:[#allocation5 + $0x138] sm:$0xff]
        %v8162 = vld [vmem:[#allocation5 + $0x140] sm:$0xff]
        %v8163 = vld [vmem:[#allocation5 + $0x148] sm:$0xff]
        %v8164 = vld [vmem:[#allocation5 + $0x150] sm:$0xff]
        %v8165 = vld [vmem:[#allocation5 + $0x158] sm:$0xff]
        %v8166 = vld [vmem:[#allocation5 + $0x160] sm:$0xff]
        %v8167 = vld [vmem:[#allocation5 + $0x168] sm:$0xff]
        %v8168 = vld [vmem:[#allocation5 + $0x170] sm:$0xff]
        %v8169 = vld [vmem:[#allocation5 + $0x178] sm:$0xff]
        %v8170 = vld [vmem:[%s4] sm:$0xf]
        %v8171 = vld [vmem:[%s4 + $0x4] sm:$0xf]
        %v8172 = vld [vmem:[%s4 + $0x8] sm:$0xf]
        %v8173 = vld [vmem:[%s4 + $0xc] sm:$0xf]
        %v8174 = vld [vmem:[%s4 + $0x10] sm:$0xf]
        %v8175 = vld [vmem:[%s4 + $0x14] sm:$0xf]
        %v8176 = vld [vmem:[%s4 + $0x18] sm:$0xf]
        %v8177 = vld [vmem:[%s4 + $0x1c] sm:$0xf]
        %v8178 = vld [vmem:[%s4 + $0x20] sm:$0xf]
        %v8179 = vld [vmem:[%s4 + $0x24] sm:$0xf]
        %v8180 = vld [vmem:[%s4 + $0x28] sm:$0xf]
        %v8181 = vld [vmem:[%s4 + $0x2c] sm:$0xf]
        %v8182 = vld [vmem:[%s4 + $0x30] sm:$0xf]
        %v8183 = vld [vmem:[%s4 + $0x34] sm:$0xf]
        %v8184 = vld [vmem:[%s4 + $0x38] sm:$0xf]
        %v8185 = vld [vmem:[%s4 + $0x3c] sm:$0xf]
        %v8186 = vld [vmem:[%s4 + $0x40] sm:$0xf]
        %v8187 = vld [vmem:[%s4 + $0x44] sm:$0xf]
        %v8188 = vld [vmem:[%s4 + $0x48] sm:$0xf]
        %v8189 = vld [vmem:[%s4 + $0x4c] sm:$0xf]
        %v8190 = vld [vmem:[%s4 + $0x50] sm:$0xf]
        %v8191 = vld [vmem:[%s4 + $0x54] sm:$0xf]
        %v8192 = vld [vmem:[%s4 + $0x58] sm:$0xf]
        %v8193 = vld [vmem:[%s4 + $0x5c] sm:$0xf]
        %v8194 = vld [vmem:[%s4 + $0x60] sm:$0xf]
        %v8195 = vld [vmem:[%s4 + $0x64] sm:$0xf]
        %v8196 = vld [vmem:[%s4 + $0x68] sm:$0xf]
        %v8197 = vld [vmem:[%s4 + $0x6c] sm:$0xf]
        %v8198 = vld [vmem:[%s4 + $0x70] sm:$0xf]
        %v8199 = vld [vmem:[%s4 + $0x74] sm:$0xf]
        %v8200 = vld [vmem:[%s4 + $0x78] sm:$0xf]
        %v8201 = vld [vmem:[%s4 + $0x7c] sm:$0xf]
        %v8202 = vld [vmem:[%s4 + $0x80] sm:$0xf]
        %v8203 = vld [vmem:[%s4 + $0x84] sm:$0xf]
        %v8204 = vld [vmem:[%s4 + $0x88] sm:$0xf]
        %v8205 = vld [vmem:[%s4 + $0x8c] sm:$0xf]
        %v8242 = vunpack.c.l.b16 %v8170
        %v8243 = vunpack.c.l.b16 %v8171
        %v8244 = vunpack.c.l.b16 %v8172
        %v8245 = vunpack.c.l.b16 %v8173
        %v8246 = vunpack.c.l.b16 %v8174
        %v8247 = vunpack.c.l.b16 %v8175
        %v8248 = vunpack.c.l.b16 %v8176
        %v8249 = vunpack.c.l.b16 %v8177
        %v8250 = vunpack.c.l.b16 %v8178
        %v8251 = vunpack.c.l.b16 %v8179
        %v8252 = vunpack.c.l.b16 %v8180
        %v8253 = vunpack.c.l.b16 %v8181
        %v8254 = vunpack.c.l.b16 %v8182
        %v8255 = vunpack.c.l.b16 %v8183
        %v8256 = vunpack.c.l.b16 %v8184
        %v8257 = vunpack.c.l.b16 %v8185
        %v8258 = vunpack.c.l.b16 %v8186
        %v8259 = vunpack.c.l.b16 %v8187
        %v8260 = vunpack.c.l.b16 %v8188
        %v8261 = vunpack.c.l.b16 %v8189
        %v8262 = vunpack.c.l.b16 %v8190
        %v8263 = vunpack.c.l.b16 %v8191
        %v8264 = vunpack.c.l.b16 %v8192
        %v8265 = vunpack.c.l.b16 %v8193
        %v8266 = vunpack.c.l.b16 %v8194
        %v8267 = vunpack.c.l.b16 %v8195
        %v8268 = vunpack.c.l.b16 %v8196
        %v8269 = vunpack.c.l.b16 %v8197
        %v8270 = vunpack.c.l.b16 %v8198
        %v8271 = vunpack.c.l.b16 %v8199
        %v8272 = vunpack.c.l.b16 %v8200
        %v8273 = vunpack.c.l.b16 %v8201
        %v8274 = vunpack.c.l.b16 %v8202
        %v8275 = vunpack.c.l.b16 %v8203
        %v8276 = vunpack.c.l.b16 %v8204
        %v8277 = vunpack.c.l.b16 %v8205
        %v8278 = vpack.c.b16 %v8243, %v8242
        %v8279 = vpack.c.b16 %v8245, %v8244
        %v8280 = vpack.c.b16 %v8247, %v8246
        %v8281 = vpack.c.b16 %v8249, %v8248
        %v8282 = vpack.c.b16 %v8251, %v8250
        %v8283 = vpack.c.b16 %v8253, %v8252
        %v8284 = vpack.c.b16 %v8255, %v8254
        %v8285 = vpack.c.b16 %v8257, %v8256
        %v8286 = vpack.c.b16 %v8259, %v8258
        %v8287 = vpack.c.b16 %v8261, %v8260
        %v8288 = vpack.c.b16 %v8263, %v8262
        %v8289 = vpack.c.b16 %v8265, %v8264
        %v8290 = vpack.c.b16 %v8267, %v8266
        %v8291 = vpack.c.b16 %v8269, %v8268
        %v8292 = vpack.c.b16 %v8271, %v8270
        %v8293 = vpack.c.b16 %v8273, %v8272
        %v8294 = vpack.c.b16 %v8275, %v8274
        %v8295 = vpack.c.b16 %v8277, %v8276
        %v8315 = vsel %vm935, %v8124, 0
        %v8318 = vsel %vm935, %v8127, 0
        %v8321 = vsel %vm935, %v8130, 0
        %v8324 = vsel %vm935, %v8133, 0
        %v8327 = vsel %vm935, %v8136, 0
        %v8330 = vsel %vm935, %v8139, 0
        %v8333 = vsel %vm935, %v8142, 0
        %v8336 = vsel %vm935, %v8145, 0
        %v8339 = vsel %vm935, %v8148, 0
        %v8342 = vsel %vm935, %v8151, 0
        %v8345 = vsel %vm935, %v8154, 0
        %v8348 = vsel %vm935, %v8157, 0
        %v8351 = vsel %vm935, %v8160, 0
        %v8354 = vsel %vm935, %v8163, 0
        %v8357 = vsel %vm935, %v8166, 0
        %v8360 = vsel %vm935, %v8169, 0
        %8362 = vmatprep.subr.bf16.mxu0 0
        %8363 = vmatpush1.bf16.msra.mxu0 %v8278
        %8364 = vmatprep.subr.bf16.mxu0 0
        %8365 = vmatpush1.bf16.msra.mxu0 %v8279
        %8366 = vmatprep.subr.bf16.mxu0 0
        %8367 = vmatpush1.bf16.msra.mxu0 %v8280
        %8368 = vmatprep.subr.bf16.mxu0 0
        %8369 = vmatpush1.bf16.msra.mxu0 %v8281
        %8370 = vmatprep.subr.bf16.mxu0 0
        %8371 = vmatpush1.bf16.msra.mxu0 %v8282
        %8372 = vmatprep.subr.bf16.mxu0 0
        %8373 = vmatpush1.bf16.msra.mxu0 %v8283
        %8374 = vmatprep.subr.bf16.mxu0 0
        %8375 = vmatpush1.bf16.msra.mxu0 %v8284
        %8376 = vmatprep.subr.bf16.mxu0 0
        %8377 = vmatpush1.bf16.msra.mxu0 %v8285
        %8378 = vmatprep.subr.bf16.mxu0 0
        %8379 = vmatpush1.bf16.msra.mxu0 %v8286
        %8380 = vmatprep.subr.bf16.mxu0 0
        %8381 = vmatpush1.bf16.msra.mxu0 %v8287
        %8382 = vmatprep.subr.bf16.mxu0 0
        %8383 = vmatpush1.bf16.msra.mxu0 %v8288
        %8384 = vmatprep.subr.bf16.mxu0 0
        %8385 = vmatpush1.bf16.msra.mxu0 %v8289
        %8386 = vmatprep.subr.bf16.mxu0 0
        %8387 = vmatpush1.bf16.msra.mxu0 %v8290
        %8388 = vmatprep.subr.bf16.mxu0 0
        %8389 = vmatpush1.bf16.msra.mxu0 %v8291
        %8390 = vmatprep.subr.bf16.mxu0 0
        %8391 = vmatpush1.bf16.msra.mxu0 %v8292
        %8392 = vmatprep.subr.bf16.mxu0 0
        %8393 = vmatpush1.bf16.msra.mxu0 %v8293
        %8394 = vmatprep.mubr.bf16.mxu0 %v8123
        %8395 = vmatmul.mubr.bf16.gmra.mrb[0].mxu0 %v8122
        %v8396 = vpop.f32.mrb[0].mxu0
        %v8397 = vadd.f32 0.0, %v8396
        %v8398 = vpop.f32.mrb[0].mxu0
        %v8399 = vpop.f32.mrb[0].mxu0
        %v8400 = vadd.f32 0.0, %v8399
        %v8401 = vpop.f32.mrb[0].mxu0
        %8402 = vmatprep.mubr.bf16.mxu0 %v8126
        %8403 = vmatmul.mubr.bf16.gmra.mrb[0].mxu0 %v8125
        %v8404 = vpop.f32.mrb[0].mxu0
        %v8405 = vadd.f32 0.0, %v8404
        %v8406 = vpop.f32.mrb[0].mxu0
        %v8407 = vpop.f32.mrb[0].mxu0
        %v8408 = vadd.f32 0.0, %v8407
        %v8409 = vpop.f32.mrb[0].mxu0
        %8410 = vmatprep.mubr.bf16.mxu0 %v8129
        %8411 = vmatmul.mubr.bf16.gmra.mrb[0].mxu0 %v8128
        %v8412 = vpop.f32.mrb[0].mxu0
        %v8413 = vadd.f32 0.0, %v8412
        %v8414 = vpop.f32.mrb[0].mxu0
        %v8415 = vpop.f32.mrb[0].mxu0
        %v8416 = vadd.f32 0.0, %v8415
        %v8417 = vpop.f32.mrb[0].mxu0
        %8418 = vmatprep.mubr.bf16.mxu0 %v8132
        %8419 = vmatmul.mubr.bf16.gmra.mrb[0].mxu0 %v8131
        %v8420 = vpop.f32.mrb[0].mxu0
        %v8421 = vadd.f32 0.0, %v8420
        %v8422 = vpop.f32.mrb[0].mxu0
        %v8423 = vpop.f32.mrb[0].mxu0
        %v8424 = vadd.f32 0.0, %v8423
        %v8425 = vpop.f32.mrb[0].mxu0
        %8426 = vmatprep.mubr.bf16.mxu0 %v8135
        %8427 = vmatmul.mubr.bf16.gmra.mrb[0].mxu0 %v8134
        %v8428 = vpop.f32.mrb[0].mxu0
        %v8429 = vadd.f32 0.0, %v8428
        %v8430 = vpop.f32.mrb[0].mxu0
        %v8431 = vpop.f32.mrb[0].mxu0
        %v8432 = vadd.f32 0.0, %v8431
        %v8433 = vpop.f32.mrb[0].mxu0
        %8434 = vmatprep.mubr.bf16.mxu0 %v8138
        %8435 = vmatmul.mubr.bf16.gmra.mrb[0].mxu0 %v8137
        %v8436 = vpop.f32.mrb[0].mxu0
        %v8437 = vadd.f32 0.0, %v8436
        %v8438 = vpop.f32.mrb[0].mxu0
        %v8439 = vpop.f32.mrb[0].mxu0
        %v8440 = vadd.f32 0.0, %v8439
        %v8441 = vpop.f32.mrb[0].mxu0
        %8442 = vmatprep.mubr.bf16.mxu0 %v8141
        %8443 = vmatmul.mubr.bf16.gmra.mrb[0].mxu0 %v8140
        %v8444 = vpop.f32.mrb[0].mxu0
        %v8445 = vadd.f32 0.0, %v8444
        %v8446 = vpop.f32.mrb[0].mxu0
        %v8447 = vpop.f32.mrb[0].mxu0
        %v8448 = vadd.f32 0.0, %v8447
        %v8449 = vpop.f32.mrb[0].mxu0
        %8450 = vmatprep.mubr.bf16.mxu0 %v8144
        %8451 = vmatmul.mubr.bf16.gmra.mrb[0].mxu0 %v8143
        %v8452 = vpop.f32.mrb[0].mxu0
        %v8453 = vadd.f32 0.0, %v8452
        %v8454 = vpop.f32.mrb[0].mxu0
        %v8455 = vpop.f32.mrb[0].mxu0
        %v8456 = vadd.f32 0.0, %v8455
        %v8457 = vpop.f32.mrb[0].mxu0
        %8458 = vmatprep.mubr.bf16.mxu0 %v8147
        %8459 = vmatmul.mubr.bf16.gmra.mrb[0].mxu0 %v8146
        %v8460 = vpop.f32.mrb[0].mxu0
        %v8461 = vadd.f32 0.0, %v8460
        %v8462 = vpop.f32.mrb[0].mxu0
        %v8463 = vpop.f32.mrb[0].mxu0
        %v8464 = vadd.f32 0.0, %v8463
        %v8465 = vpop.f32.mrb[0].mxu0
        %8466 = vmatprep.mubr.bf16.mxu0 %v8150
        %8467 = vmatmul.mubr.bf16.gmra.mrb[0].mxu0 %v8149
        %v8468 = vpop.f32.mrb[0].mxu0
        %v8469 = vadd.f32 0.0, %v8468
        %v8470 = vpop.f32.mrb[0].mxu0
        %v8471 = vpop.f32.mrb[0].mxu0
        %v8472 = vadd.f32 0.0, %v8471
        %v8473 = vpop.f32.mrb[0].mxu0
        %8474 = vmatprep.mubr.bf16.mxu0 %v8153
        %8475 = vmatmul.mubr.bf16.gmra.mrb[0].mxu0 %v8152
        %v8476 = vpop.f32.mrb[0].mxu0
        %v8477 = vadd.f32 0.0, %v8476
        %v8478 = vpop.f32.mrb[0].mxu0
        %v8479 = vpop.f32.mrb[0].mxu0
        %v8480 = vadd.f32 0.0, %v8479
        %v8481 = vpop.f32.mrb[0].mxu0
        %8482 = vmatprep.mubr.bf16.mxu0 %v8156
        %8483 = vmatmul.mubr.bf16.gmra.mrb[0].mxu0 %v8155
        %v8484 = vpop.f32.mrb[0].mxu0
        %v8485 = vadd.f32 0.0, %v8484
        %v8486 = vpop.f32.mrb[0].mxu0
        %v8487 = vpop.f32.mrb[0].mxu0
        %v8488 = vadd.f32 0.0, %v8487
        %v8489 = vpop.f32.mrb[0].mxu0
        %8490 = vmatprep.mubr.bf16.mxu0 %v8159
        %8491 = vmatmul.mubr.bf16.gmra.mrb[0].mxu0 %v8158
        %v8492 = vpop.f32.mrb[0].mxu0
        %v8493 = vadd.f32 0.0, %v8492
        %v8494 = vpop.f32.mrb[0].mxu0
        %v8495 = vpop.f32.mrb[0].mxu0
        %v8496 = vadd.f32 0.0, %v8495
        %v8497 = vpop.f32.mrb[0].mxu0
        %8498 = vmatprep.mubr.bf16.mxu0 %v8162
        %8499 = vmatmul.mubr.bf16.gmra.mrb[0].mxu0 %v8161
        %v8500 = vpop.f32.mrb[0].mxu0
        %v8501 = vadd.f32 0.0, %v8500
        %v8502 = vpop.f32.mrb[0].mxu0
        %v8503 = vpop.f32.mrb[0].mxu0
        %v8504 = vadd.f32 0.0, %v8503
        %v8505 = vpop.f32.mrb[0].mxu0
        %8506 = vmatprep.mubr.bf16.mxu0 %v8165
        %8507 = vmatmul.mubr.bf16.gmra.mrb[0].mxu0 %v8164
        %v8508 = vpop.f32.mrb[0].mxu0
        %v8509 = vadd.f32 0.0, %v8508
        %v8510 = vpop.f32.mrb[0].mxu0
        %v8511 = vpop.f32.mrb[0].mxu0
        %v8512 = vadd.f32 0.0, %v8511
        %v8513 = vpop.f32.mrb[0].mxu0
        %8514 = vmatprep.mubr.bf16.mxu0 %v8168
        %8515 = vmatmul.mubr.bf16.gmra.mrb[0].mxu0 %v8167
        %v8516 = vpop.f32.mrb[0].mxu0
        %v8517 = vadd.f32 0.0, %v8516
        %v8518 = vpop.f32.mrb[0].mxu0
        %v8519 = vpop.f32.mrb[0].mxu0
        %v8520 = vadd.f32 0.0, %v8519
        %v8521 = vpop.f32.mrb[0].mxu0
        %8522 = vdwg.mxu0
        %8523 = vmatprep.subr.bf16.mxu0 0
        %8524 = vmatpush1.bf16.msra.mxu0 %v8294
        %8525 = vmatprep.subr.bf16.mxu0 0
        %8526 = vmatpush1.bf16.msra.mxu0 %v8295
        %8527 = vmatprep.subr.bf16.mxu0 0
        %8528 = vmatpush1.bf16.msra.mxu0 0
        %8529 = vmatprep.subr.bf16.mxu0 0
        %8530 = vmatpush1.bf16.msra.mxu0 0
        %8531 = vmatprep.subr.bf16.mxu0 0
        %8532 = vmatpush1.bf16.msra.mxu0 0
        %8533 = vmatprep.subr.bf16.mxu0 0
        %8534 = vmatpush1.bf16.msra.mxu0 0
        %8535 = vmatprep.subr.bf16.mxu0 0
        %8536 = vmatpush1.bf16.msra.mxu0 0
        %8537 = vmatprep.subr.bf16.mxu0 0
        %8538 = vmatpush1.bf16.msra.mxu0 0
        %8539 = vmatprep.subr.bf16.mxu0 0
        %8540 = vmatpush1.bf16.msra.mxu0 0
        %8541 = vmatprep.subr.bf16.mxu0 0
        %8542 = vmatpush1.bf16.msra.mxu0 0
        %8543 = vmatprep.subr.bf16.mxu0 0
        %8544 = vmatpush1.bf16.msra.mxu0 0
        %8545 = vmatprep.subr.bf16.mxu0 0
        %8546 = vmatpush1.bf16.msra.mxu0 0
        %8547 = vmatprep.subr.bf16.mxu0 0
        %8548 = vmatpush1.bf16.msra.mxu0 0
        %8549 = vmatprep.subr.bf16.mxu0 0
        %8550 = vmatpush1.bf16.msra.mxu0 0
        %8551 = vmatprep.subr.bf16.mxu0 0
        %8552 = vmatpush1.bf16.msra.mxu0 0
        %8553 = vmatprep.subr.bf16.mxu0 0
        %8554 = vmatpush1.bf16.msra.mxu0 0
        %8555 = vmatprep.mubr.bf16.mxu0 0
        %8556 = vmatmul.mubr.bf16.gmra.mrb[0].mxu0 %v8315
        %v8557 = vpop.f32.mrb[0].mxu0
        %v8558 = vadd.f32 %v8397, %v8557
        %v8559 = vpop.f32.mrb[0].mxu0
        %v8560 = vpop.f32.mrb[0].mxu0
        %v8561 = vadd.f32 %v8400, %v8560
        %v8562 = vpop.f32.mrb[0].mxu0
        %8563 = vmatprep.mubr.bf16.mxu0 0
        %8564 = vmatmul.mubr.bf16.gmra.mrb[0].mxu0 %v8318
        %v8565 = vpop.f32.mrb[0].mxu0
        %v8566 = vadd.f32 %v8405, %v8565
        %v8567 = vpop.f32.mrb[0].mxu0
        %v8568 = vpop.f32.mrb[0].mxu0
        %v8569 = vadd.f32 %v8408, %v8568
        %v8570 = vpop.f32.mrb[0].mxu0
        %8571 = vmatprep.mubr.bf16.mxu0 0
        %8572 = vmatmul.mubr.bf16.gmra.mrb[0].mxu0 %v8321
        %v8573 = vpop.f32.mrb[0].mxu0
        %v8574 = vadd.f32 %v8413, %v8573
        %v8575 = vpop.f32.mrb[0].mxu0
        %v8576 = vpop.f32.mrb[0].mxu0
        %v8577 = vadd.f32 %v8416, %v8576
        %v8578 = vpop.f32.mrb[0].mxu0
        %8579 = vmatprep.mubr.bf16.mxu0 0
        %8580 = vmatmul.mubr.bf16.gmra.mrb[0].mxu0 %v8324
        %v8581 = vpop.f32.mrb[0].mxu0
        %v8582 = vadd.f32 %v8421, %v8581
        %v8583 = vpop.f32.mrb[0].mxu0
        %v8584 = vpop.f32.mrb[0].mxu0
        %v8585 = vadd.f32 %v8424, %v8584
        %v8586 = vpop.f32.mrb[0].mxu0
        %8587 = vmatprep.mubr.bf16.mxu0 0
        %8588 = vmatmul.mubr.bf16.gmra.mrb[0].mxu0 %v8327
        %v8589 = vpop.f32.mrb[0].mxu0
        %v8590 = vadd.f32 %v8429, %v8589
        %v8591 = vpop.f32.mrb[0].mxu0
        %v8592 = vpop.f32.mrb[0].mxu0
        %v8593 = vadd.f32 %v8432, %v8592
        %v8594 = vpop.f32.mrb[0].mxu0
        %8595 = vmatprep.mubr.bf16.mxu0 0
        %8596 = vmatmul.mubr.bf16.gmra.mrb[0].mxu0 %v8330
        %v8597 = vpop.f32.mrb[0].mxu0
        %v8598 = vadd.f32 %v8437, %v8597
        %v8599 = vpop.f32.mrb[0].mxu0
        %v8600 = vpop.f32.mrb[0].mxu0
        %v8601 = vadd.f32 %v8440, %v8600
        %v8602 = vpop.f32.mrb[0].mxu0
        %8603 = vmatprep.mubr.bf16.mxu0 0
        %8604 = vmatmul.mubr.bf16.gmra.mrb[0].mxu0 %v8333
        %v8605 = vpop.f32.mrb[0].mxu0
        %v8606 = vadd.f32 %v8445, %v8605
        %v8607 = vpop.f32.mrb[0].mxu0
        %v8608 = vpop.f32.mrb[0].mxu0
        %v8609 = vadd.f32 %v8448, %v8608
        %v8610 = vpop.f32.mrb[0].mxu0
        %8611 = vmatprep.mubr.bf16.mxu0 0
        %8612 = vmatmul.mubr.bf16.gmra.mrb[0].mxu0 %v8336
        %v8613 = vpop.f32.mrb[0].mxu0
        %v8614 = vadd.f32 %v8453, %v8613
        %v8615 = vpop.f32.mrb[0].mxu0
        %v8616 = vpop.f32.mrb[0].mxu0
        %v8617 = vadd.f32 %v8456, %v8616
        %v8618 = vpop.f32.mrb[0].mxu0
        %8619 = vmatprep.mubr.bf16.mxu0 0
        %8620 = vmatmul.mubr.bf16.gmra.mrb[0].mxu0 %v8339
        %v8621 = vpop.f32.mrb[0].mxu0
        %v8622 = vadd.f32 %v8461, %v8621
        %v8623 = vpop.f32.mrb[0].mxu0
        %v8624 = vpop.f32.mrb[0].mxu0
        %v8625 = vadd.f32 %v8464, %v8624
        %v8626 = vpop.f32.mrb[0].mxu0
        %8627 = vmatprep.mubr.bf16.mxu0 0
        %8628 = vmatmul.mubr.bf16.gmra.mrb[0].mxu0 %v8342
        %v8629 = vpop.f32.mrb[0].mxu0
        %v8630 = vadd.f32 %v8469, %v8629
        %v8631 = vpop.f32.mrb[0].mxu0
        %v8632 = vpop.f32.mrb[0].mxu0
        %v8633 = vadd.f32 %v8472, %v8632
        %v8634 = vpop.f32.mrb[0].mxu0
        %8635 = vmatprep.mubr.bf16.mxu0 0
        %8636 = vmatmul.mubr.bf16.gmra.mrb[0].mxu0 %v8345
        %v8637 = vpop.f32.mrb[0].mxu0
        %v8638 = vadd.f32 %v8477, %v8637
        %v8639 = vpop.f32.mrb[0].mxu0
        %v8640 = vpop.f32.mrb[0].mxu0
        %v8641 = vadd.f32 %v8480, %v8640
        %v8642 = vpop.f32.mrb[0].mxu0
        %8643 = vmatprep.mubr.bf16.mxu0 0
        %8644 = vmatmul.mubr.bf16.gmra.mrb[0].mxu0 %v8348
        %v8645 = vpop.f32.mrb[0].mxu0
        %v8646 = vadd.f32 %v8485, %v8645
        %v8647 = vpop.f32.mrb[0].mxu0
        %v8648 = vpop.f32.mrb[0].mxu0
        %v8649 = vadd.f32 %v8488, %v8648
        %v8650 = vpop.f32.mrb[0].mxu0
        %8651 = vmatprep.mubr.bf16.mxu0 0
        %8652 = vmatmul.mubr.bf16.gmra.mrb[0].mxu0 %v8351
        %v8653 = vpop.f32.mrb[0].mxu0
        %v8654 = vadd.f32 %v8493, %v8653
        %v8655 = vpop.f32.mrb[0].mxu0
        %v8656 = vpop.f32.mrb[0].mxu0
        %v8657 = vadd.f32 %v8496, %v8656
        %v8658 = vpop.f32.mrb[0].mxu0
        %8659 = vmatprep.mubr.bf16.mxu0 0
        %8660 = vmatmul.mubr.bf16.gmra.mrb[0].mxu0 %v8354
        %v8661 = vpop.f32.mrb[0].mxu0
        %v8662 = vadd.f32 %v8501, %v8661
        %v8663 = vpop.f32.mrb[0].mxu0
        %v8664 = vpop.f32.mrb[0].mxu0
        %v8665 = vadd.f32 %v8504, %v8664
        %v8666 = vpop.f32.mrb[0].mxu0
        %8667 = vmatprep.mubr.bf16.mxu0 0
        %8668 = vmatmul.mubr.bf16.gmra.mrb[0].mxu0 %v8357
        %v8669 = vpop.f32.mrb[0].mxu0
        %v8670 = vadd.f32 %v8509, %v8669
        %v8671 = vpop.f32.mrb[0].mxu0
        %v8672 = vpop.f32.mrb[0].mxu0
        %v8673 = vadd.f32 %v8512, %v8672
        %v8674 = vpop.f32.mrb[0].mxu0
        %8675 = vmatprep.mubr.bf16.mxu0 0
        %8676 = vmatmul.mubr.bf16.gmra.mrb[0].mxu0 %v8360
        %v8677 = vpop.f32.mrb[0].mxu0
        %v8678 = vadd.f32 %v8517, %v8677
        %v8679 = vpop.f32.mrb[0].mxu0
        %v8680 = vpop.f32.mrb[0].mxu0
        %v8681 = vadd.f32 %v8520, %v8680
        %v8682 = vpop.f32.mrb[0].mxu0
        %8683 = vdwg.mxu0
        %v8684 = vld [vmem:[%s5] sm:$0x1]
        %v8686 = vlaneseq
        %v8687 = vshrl.u32 %v8686, 7
        %v8688 = vsub.s32 0, %v8687
        %v8689 = vrot.slane %v8684, %v8688
        %v8691 = vmul.f32 %v8558, %v8689
        %v8692 = vmul.f32 %v8561, %v8689
        %v8693 = vmul.f32 %v8566, %v8689
        %v8694 = vmul.f32 %v8569, %v8689
        %v8695 = vmul.f32 %v8574, %v8689
        %v8696 = vmul.f32 %v8577, %v8689
        %v8697 = vmul.f32 %v8582, %v8689
        %v8698 = vmul.f32 %v8585, %v8689
        %v8699 = vmul.f32 %v8590, %v8689
        %v8700 = vmul.f32 %v8593, %v8689
        %v8701 = vmul.f32 %v8598, %v8689
        %v8702 = vmul.f32 %v8601, %v8689
        %v8703 = vmul.f32 %v8606, %v8689
        %v8704 = vmul.f32 %v8609, %v8689
        %v8705 = vmul.f32 %v8614, %v8689
        %v8706 = vmul.f32 %v8617, %v8689
        %v8707 = vmul.f32 %v8622, %v8689
        %v8708 = vmul.f32 %v8625, %v8689
        %v8709 = vmul.f32 %v8630, %v8689
        %v8710 = vmul.f32 %v8633, %v8689
        %v8711 = vmul.f32 %v8638, %v8689
        %v8712 = vmul.f32 %v8641, %v8689
        %v8713 = vmul.f32 %v8646, %v8689
        %v8714 = vmul.f32 %v8649, %v8689
        %v8715 = vmul.f32 %v8654, %v8689
        %v8716 = vmul.f32 %v8657, %v8689
        %v8717 = vmul.f32 %v8662, %v8689
        %v8718 = vmul.f32 %v8665, %v8689
        %v8719 = vmul.f32 %v8670, %v8689
        %v8720 = vmul.f32 %v8673, %v8689
        %v8721 = vmul.f32 %v8678, %v8689
        %v8722 = vmul.f32 %v8681, %v8689
        %v8723 = vld [vmem:[%s6] sm:$0x1]
        %v8725 = vlaneseq
        %v8726 = vshrl.u32 %v8725, 7
        %v8727 = vsub.s32 0, %v8726
        %v8728 = vrot.slane %v8723, %v8727
        %v8730 = vadd.f32 %v8691, %v8728
        %v8731 = vadd.f32 %v8692, %v8728
        %v8732 = vadd.f32 %v8693, %v8728
        %v8733 = vadd.f32 %v8694, %v8728
        %v8734 = vadd.f32 %v8695, %v8728
        %v8735 = vadd.f32 %v8696, %v8728
        %v8736 = vadd.f32 %v8697, %v8728
        %v8737 = vadd.f32 %v8698, %v8728
        %v8738 = vadd.f32 %v8699, %v8728
        %v8739 = vadd.f32 %v8700, %v8728
        %v8740 = vadd.f32 %v8701, %v8728
        %v8741 = vadd.f32 %v8702, %v8728
        %v8742 = vadd.f32 %v8703, %v8728
        %v8743 = vadd.f32 %v8704, %v8728
        %v8744 = vadd.f32 %v8705, %v8728
        %v8745 = vadd.f32 %v8706, %v8728
        %v8746 = vadd.f32 %v8707, %v8728
        %v8747 = vadd.f32 %v8708, %v8728
        %v8748 = vadd.f32 %v8709, %v8728
        %v8749 = vadd.f32 %v8710, %v8728
        %v8750 = vadd.f32 %v8711, %v8728
        %v8751 = vadd.f32 %v8712, %v8728
        %v8752 = vadd.f32 %v8713, %v8728
        %v8753 = vadd.f32 %v8714, %v8728
        %v8754 = vadd.f32 %v8715, %v8728
        %v8755 = vadd.f32 %v8716, %v8728
        %v8756 = vadd.f32 %v8717, %v8728
        %v8757 = vadd.f32 %v8718, %v8728
        %v8758 = vadd.f32 %v8719, %v8728
        %v8759 = vadd.f32 %v8720, %v8728
        %v8760 = vadd.f32 %v8721, %v8728
        %v8761 = vadd.f32 %v8722, %v8728
        %v8762 = vunpack.c.l.bf16 %v278
        %v8763 = vunpack.c.l.bf16 %v279
        %v8764 = vunpack.c.l.bf16 %v280
        %v8765 = vunpack.c.l.bf16 %v281
        %v8766 = vunpack.c.l.bf16 %v282
        %v8767 = vunpack.c.l.bf16 %v283
        %v8768 = vunpack.c.l.bf16 %v284
        %v8769 = vunpack.c.l.bf16 %v285
        %v8770 = vunpack.c.l.bf16 %v286
        %v8771 = vunpack.c.l.bf16 %v287
        %v8772 = vunpack.c.l.bf16 %v288
        %v8773 = vunpack.c.l.bf16 %v289
        %v8774 = vunpack.c.l.bf16 %v290
        %v8775 = vunpack.c.l.bf16 %v291
        %v8776 = vunpack.c.l.bf16 %v292
        %v8777 = vunpack.c.l.bf16 %v293
        %v8778 = vunpack.c.l.bf16 %v294
        %v8779 = vunpack.c.l.bf16 %v295
        %v8780 = vunpack.c.l.bf16 %v296
        %v8781 = vunpack.c.l.bf16 %v297
        %v8782 = vunpack.c.l.bf16 %v298
        %v8783 = vunpack.c.l.bf16 %v299
        %v8784 = vunpack.c.l.bf16 %v300
        %v8785 = vunpack.c.l.bf16 %v301
        %v8786 = vunpack.c.l.bf16 %v302
        %v8787 = vunpack.c.l.bf16 %v303
        %v8788 = vunpack.c.l.bf16 %v304
        %v8789 = vunpack.c.l.bf16 %v305
        %v8790 = vunpack.c.l.bf16 %v306
        %v8791 = vunpack.c.l.bf16 %v307
        %v8792 = vunpack.c.l.bf16 %v308
        %v8793 = vunpack.c.l.bf16 %v309
        %v8794 = vadd.f32 %v8730, %v8762
        %v8795 = vadd.f32 %v8731, %v8763
        %v8796 = vadd.f32 %v8732, %v8764
        %v8797 = vadd.f32 %v8733, %v8765
        %v8798 = vadd.f32 %v8734, %v8766
        %v8799 = vadd.f32 %v8735, %v8767
        %v8800 = vadd.f32 %v8736, %v8768
        %v8801 = vadd.f32 %v8737, %v8769
        %v8802 = vadd.f32 %v8738, %v8770
        %v8803 = vadd.f32 %v8739, %v8771
        %v8804 = vadd.f32 %v8740, %v8772
        %v8805 = vadd.f32 %v8741, %v8773
        %v8806 = vadd.f32 %v8742, %v8774
        %v8807 = vadd.f32 %v8743, %v8775
        %v8808 = vadd.f32 %v8744, %v8776
        %v8809 = vadd.f32 %v8745, %v8777
        %v8810 = vadd.f32 %v8746, %v8778
        %v8811 = vadd.f32 %v8747, %v8779
        %v8812 = vadd.f32 %v8748, %v8780
        %v8813 = vadd.f32 %v8749, %v8781
        %v8814 = vadd.f32 %v8750, %v8782
        %v8815 = vadd.f32 %v8751, %v8783
        %v8816 = vadd.f32 %v8752, %v8784
        %v8817 = vadd.f32 %v8753, %v8785
        %v8818 = vadd.f32 %v8754, %v8786
        %v8819 = vadd.f32 %v8755, %v8787
        %v8820 = vadd.f32 %v8756, %v8788
        %v8821 = vadd.f32 %v8757, %v8789
        %v8822 = vadd.f32 %v8758, %v8790
        %v8823 = vadd.f32 %v8759, %v8791
        %v8824 = vadd.f32 %v8760, %v8792
        %v8825 = vadd.f32 %v8761, %v8793
        %v8826 = vmax.f32 %v8794, 0.0
        %v8827 = vmax.f32 %v8795, 0.0
        %v8828 = vmax.f32 %v8796, 0.0
        %v8829 = vmax.f32 %v8797, 0.0
        %v8830 = vmax.f32 %v8798, 0.0
        %v8831 = vmax.f32 %v8799, 0.0
        %v8832 = vmax.f32 %v8800, 0.0
        %v8833 = vmax.f32 %v8801, 0.0
        %v8834 = vmax.f32 %v8802, 0.0
        %v8835 = vmax.f32 %v8803, 0.0
        %v8836 = vmax.f32 %v8804, 0.0
        %v8837 = vmax.f32 %v8805, 0.0
        %v8838 = vmax.f32 %v8806, 0.0
        %v8839 = vmax.f32 %v8807, 0.0
        %v8840 = vmax.f32 %v8808, 0.0
        %v8841 = vmax.f32 %v8809, 0.0
        %v8842 = vmax.f32 %v8810, 0.0
        %v8843 = vmax.f32 %v8811, 0.0
        %v8844 = vmax.f32 %v8812, 0.0
        %v8845 = vmax.f32 %v8813, 0.0
        %v8846 = vmax.f32 %v8814, 0.0
        %v8847 = vmax.f32 %v8815, 0.0
        %v8848 = vmax.f32 %v8816, 0.0
        %v8849 = vmax.f32 %v8817, 0.0
        %v8850 = vmax.f32 %v8818, 0.0
        %v8851 = vmax.f32 %v8819, 0.0
        %v8852 = vmax.f32 %v8820, 0.0
        %v8853 = vmax.f32 %v8821, 0.0
        %v8854 = vmax.f32 %v8822, 0.0
        %v8855 = vmax.f32 %v8823, 0.0
        %v8856 = vmax.f32 %v8824, 0.0
        %v8857 = vmax.f32 %v8825, 0.0
        %8858 = vst.msk [vmem:[%s271] sm:$0xff] %vm935, %v8826
        %8859 = vst.msk [vmem:[%s271 + $0x8] sm:$0xff] %vm935, %v8827
        %8860 = vst.msk [vmem:[%s271 + $0x10] sm:$0xff] %vm935, %v8828
        %8861 = vst.msk [vmem:[%s271 + $0x18] sm:$0xff] %vm935, %v8829
        %8862 = vst.msk [vmem:[%s271 + $0x20] sm:$0xff] %vm935, %v8830
        %8863 = vst.msk [vmem:[%s271 + $0x28] sm:$0xff] %vm935, %v8831
        %8864 = vst.msk [vmem:[%s271 + $0x30] sm:$0xff] %vm935, %v8832
        %8865 = vst.msk [vmem:[%s271 + $0x38] sm:$0xff] %vm935, %v8833
        %8866 = vst.msk [vmem:[%s271 + $0x40] sm:$0xff] %vm935, %v8834
        %8867 = vst.msk [vmem:[%s271 + $0x48] sm:$0xff] %vm935, %v8835
        %8868 = vst.msk [vmem:[%s271 + $0x50] sm:$0xff] %vm935, %v8836
        %8869 = vst.msk [vmem:[%s271 + $0x58] sm:$0xff] %vm935, %v8837
        %8870 = vst.msk [vmem:[%s271 + $0x60] sm:$0xff] %vm935, %v8838
        %8871 = vst.msk [vmem:[%s271 + $0x68] sm:$0xff] %vm935, %v8839
        %8872 = vst.msk [vmem:[%s271 + $0x70] sm:$0xff] %vm935, %v8840
        %8873 = vst.msk [vmem:[%s271 + $0x78] sm:$0xff] %vm935, %v8841
        %8874 = vst.msk [vmem:[%s271 + $0x80] sm:$0xff] %vm935, %v8842
        %8875 = vst.msk [vmem:[%s271 + $0x88] sm:$0xff] %vm935, %v8843
        %8876 = vst.msk [vmem:[%s271 + $0x90] sm:$0xff] %vm935, %v8844
        %8877 = vst.msk [vmem:[%s271 + $0x98] sm:$0xff] %vm935, %v8845
        %8878 = vst.msk [vmem:[%s271 + $0xa0] sm:$0xff] %vm935, %v8846
        %8879 = vst.msk [vmem:[%s271 + $0xa8] sm:$0xff] %vm935, %v8847
        %8880 = vst.msk [vmem:[%s271 + $0xb0] sm:$0xff] %vm935, %v8848
        %8881 = vst.msk [vmem:[%s271 + $0xb8] sm:$0xff] %vm935, %v8849
        %8882 = vst.msk [vmem:[%s271 + $0xc0] sm:$0xff] %vm935, %v8850
        %8883 = vst.msk [vmem:[%s271 + $0xc8] sm:$0xff] %vm935, %v8851
        %8884 = vst.msk [vmem:[%s271 + $0xd0] sm:$0xff] %vm935, %v8852
        %8885 = vst.msk [vmem:[%s271 + $0xd8] sm:$0xff] %vm935, %v8853
        %8886 = vst.msk [vmem:[%s271 + $0xe0] sm:$0xff] %vm935, %v8854
        %8887 = vst.msk [vmem:[%s271 + $0xe8] sm:$0xff] %vm935, %v8855
        %8888 = vst.msk [vmem:[%s271 + $0xf0] sm:$0xff] %vm935, %v8856
        %8889 = vst.msk [vmem:[%s271 + $0xf8] sm:$0xff] %vm935, %v8857
        %s8890 = sand.u32 %s181, 1
        %s8891 = scalar_lea.sflag [#allocation7], %s8890
        %s8892 = sand.u32 %s181, 1
        %s8893 = smul.addr %s8892, 256
        %s8894 = scalar_lea.vmem [#allocation6], %s8893
        // Predicated region
        $region49: #{residual_forward.1} parent=47 // pred_check
          %p8895 = pneg %p191
        $region50: #{residual_forward.1} parent=47 // pred_check_branch
          %8897 = sbr.rel (%p8895) target = $region52
        $region51: #{residual_forward.1} parent=47 // pred_region
          %s8899 = ssub.s32 4096, 4096
          %8900 = vsyncadd %s8891, %s8899
          %s8901 = smul.addr %s21, 32
          %s8902 = smul.addr %s8901, 128
          %s8903 = scalar_lea.hbm %s7, %s8902
          %s8904 = sshll.u32 %s8894, 4
          %s8905 = int_to_ptr.vmem [resolvable:$true] %s8904
          %8910 = dma.vmem_to_hbm [thread:$0]  %s8905, 4096, %s8903, %s8891, 128, 128, 8
        $region52: #{residual_forward.1} parent=47 // pred_fallthru
          _
      $region48: #{residual_forward.1} parent=5 // pred_fallthru
        _
      %p8911 = scmp.le.s32.totalorder 2, %s16
      // Predicated region
      $region53: #{residual_forward.1} parent=5 // pred_check
        %p8912 = pneg %p8911
      $region54: #{residual_forward.1} parent=5 // pred_check_branch
        %8914 = sbr.rel (%p8912) target = $region56
      $region55: #{residual_forward.1} parent=5 // pred_region
        %s8915 = ssub.s32 %s16, 2
        // Predicated region
        $region57: #{residual_forward.1} parent=55 // pred_check
          %p8916 = pneg %p197
        $region58: #{residual_forward.1} parent=55 // pred_check_branch
          %8918 = sbr.rel (%p8916) target = $region60
        $region59: #{residual_forward.1} parent=55 // pred_region
          %s8919 = sand.u32 %s182, 1
          %s8920 = scalar_lea.sflag [#allocation7], %s8919
          %s8921 = sand.u32 %s182, 1
          %s8922 = smul.addr %s8921, 256
          %s8923 = scalar_lea.vmem [#allocation6], %s8922
          %8924 = dma.done %s8920, 4096
        $region60: #{residual_forward.1} parent=55 // pred_fallthru
          _
      $region56: #{residual_forward.1} parent=5 // pred_fallthru
        _
    $region6: #{residual_forward.1} parent=1 // loop_footer
      %s20 = sadd.s32 1, %s16
    $region7: #{residual_forward.1} parent=1 // loop_footer_branch
      %15 = sbr.rel target = $region3
    $region8: #{residual_forward.1} parent=1 // loop_exit
      _
    %8925 = vsyncpa [#allocation7], 1
    %s8926 = scalar_lea.sflag [#allocation7], 1
    %8927 = vsyncpa %s8926, 1

</llo_original>
